<compile_context>
chip_gen: v5e
topology: v5e:2x2
jax: 0.10.0
libtpu: 0.0.40
codegen_flags: <defaults>
</compile_context>

<pallas_src>
import jax
import jax.numpy as jnp
import numpy as np
from jax.experimental import pallas as pl
from jax.experimental.pallas import tpu as pltpu


# ------------------------------ Pallas kernels ------------------------------ #

def _conv_matmul_kernel(p_ref, w_ref, b_ref, o_ref):
    """One M-tile of relu(p @ w + b).  p:(tm,K) bf16, w:(K,Cout) bf16, b:(1,Cout) f32."""
    y = jnp.dot(p_ref[...], w_ref[...], preferred_element_type=jnp.float32)
    y = jnp.maximum(y + b_ref[...], 0.0)          # f32 epilogue
    o_ref[...] = y.astype(o_ref.dtype)


def _pick_tm(m):
    # Split large M so the im2col input pipelines (and can shard across 2 TCs on v7x).
    if m >= 1024 and m % 4 == 0 and (m // 4) % 8 == 0:
        return m // 4
    return m


def conv_matmul(p, w, b):
    """relu(p @ w + b): p:(M,K) bf16, w:(K,Cout) bf16, b:(1,Cout) f32 -> (M,Cout) bf16."""
    m, k = p.shape
    _, cout = w.shape
    tm = _pick_tm(m)
    return pl.pallas_call(
        _conv_matmul_kernel,
        out_shape=jax.ShapeDtypeStruct((m, cout), jnp.bfloat16),
        grid=(m // tm,),
        in_specs=[
            pl.BlockSpec((tm, k), lambda i: (i, 0)),
            pl.BlockSpec((k, cout), lambda i: (0, 0)),
            pl.BlockSpec((1, cout), lambda i: (0, 0)),
        ],
        out_specs=pl.BlockSpec((tm, cout), lambda i: (i, 0)),
        compiler_params=pltpu.CompilerParams(dimension_semantics=("parallel",)),
    )(p, w, b)


def _fc_head_kernel(x_ref, w1_ref, b1_ref, w2_ref, b2_ref, o_ref, acc_ref):
    """Fused fc2(relu(fc1(x))); fc1's reduction dim is streamed via the grid."""
    @pl.when(pl.program_id(0) == 0)
    def _():
        acc_ref[...] = jnp.zeros_like(acc_ref)

    acc_ref[...] += jnp.dot(x_ref[...], w1_ref[...],
                            preferred_element_type=jnp.float32)

    @pl.when(pl.program_id(0) == pl.num_programs(0) - 1)
    def _():
        h = jnp.maximum(acc_ref[...] + b1_ref[...], 0.0)          # f32 epilogue
        y = jnp.dot(h.astype(w2_ref.dtype), w2_ref[...],
                    preferred_element_type=jnp.float32)
        o_ref[...] = (y + b2_ref[...]).astype(o_ref.dtype)


def fc_head(x, w1, b1, w2, b2, *, tk=640):
    """x:(M,3200) bf16, w1:(3200,1024) bf16, w2:(1024,2) bf16 -> (M,2) f32."""
    m, k = x.shape
    _, h = w1.shape
    _, o = w2.shape
    assert k % tk == 0 and tk % 128 == 0, (k, tk)
    return pl.pallas_call(
        _fc_head_kernel,
        out_shape=jax.ShapeDtypeStruct((m, o), jnp.float32),
        grid=(k // tk,),
        in_specs=[
            pl.BlockSpec((m, tk), lambda j: (0, j)),      # activation K-chunks
            pl.BlockSpec((tk, h), lambda j: (j, 0)),      # fc1 weight streamed
            pl.BlockSpec((1, h), lambda j: (0, 0)),
            pl.BlockSpec((h, o), lambda j: (0, 0)),
            pl.BlockSpec((1, o), lambda j: (0, 0)),
        ],
        out_specs=pl.BlockSpec((m, o), lambda j: (0, 0)),
        scratch_shapes=[pltpu.VMEM((m, h), jnp.float32)],
        compiler_params=pltpu.CompilerParams(dimension_semantics=("arbitrary",)),
    )(x, w1, b1, w2, b2)


# ------------------------------- conv wrapper ------------------------------- #

def _im2col_nhwc(x, kernel, stride, padding):
    """x:(N,H,W,C) -> patches (N*Ho*Wo, KH*KW*C) in (kh, kw, ci) feature order."""
    n, hdim, wdim, c = x.shape
    ho = (hdim + 2 * padding - kernel) // stride + 1
    wo = (wdim + 2 * padding - kernel) // stride + 1
    xp = jnp.pad(x, ((0, 0), (padding, padding), (padding, padding), (0, 0)))
    cols = []
    for kh in range(kernel):
        for kw in range(kernel):
            cols.append(jax.lax.slice(
                xp,
                (0, kh, kw, 0),
                (n, kh + (ho - 1) * stride + 1, kw + (wo - 1) * stride + 1, c),
                (1, stride, stride, 1)))
    p = jnp.stack(cols, axis=3)                   # (N, Ho, Wo, KH*KW, C)
    return p.reshape(n * ho * wo, kernel * kernel * c), (n, ho, wo)


def conv2d_relu_nhwc(x, w, b, *, kernel, stride, padding):
    p, (n, ho, wo) = _im2col_nhwc(x, kernel, stride, padding)
    cout = w.shape[1]
    y = conv_matmul(p, w, b)                      # Pallas hot path
    return y.reshape(n, ho, wo, cout)             # free row-major reshape


# -------------------------------- the model --------------------------------- #

_CONV_CFG = (("c1", 1, 16, 7, 2, 3),
             ("c2", 16, 32, 5, 2, 2),
             ("c3", 32, 64, 5, 2, 2),
             ("c4", 64, 64, 5, 2, 2))


def init_params(key):
    """PyTorch-layout parameters (Conv2d: (Cout,Cin,KH,KW); Linear: (out,in))."""
    ks = jax.random.split(key, 12)

    def w_init(k, shape, fan_in):
        return jax.random.normal(k, shape, jnp.float32) / jnp.sqrt(float(fan_in))

    def b_init(k, nfeat, fan_in):
        bound = 1.0 / jnp.sqrt(float(fan_in))
        return jax.random.uniform(k, (nfeat,), jnp.float32, -bound, bound)

    return {
        "c1w": w_init(ks[0], (16, 1, 7, 7), 1 * 7 * 7),
        "c1b": b_init(ks[1], 16, 1 * 7 * 7),
        "c2w": w_init(ks[2], (32, 16, 5, 5), 16 * 5 * 5),
        "c2b": b_init(ks[3], 32, 16 * 5 * 5),
        "c3w": w_init(ks[4], (64, 32, 5, 5), 32 * 5 * 5),
        "c3b": b_init(ks[5], 64, 32 * 5 * 5),
        "c4w": w_init(ks[6], (64, 64, 5, 5), 64 * 5 * 5),
        "c4b": b_init(ks[7], 64, 64 * 5 * 5),
        "fc1w": w_init(ks[8], (1024, 10 * 5 * 64), 10 * 5 * 64),
        "fc1b": b_init(ks[9], 1024, 10 * 5 * 64),
        "fc2w": w_init(ks[10], (2, 1024), 1024),
        "fc2b": b_init(ks[11], 2, 1024),
    }


def prepare_params(tp):
    """One-time re-layout of PyTorch-style params into kernel-ready layout (outside jit)."""
    prepped = {}
    for name, cin, cout, k, _, _ in _CONV_CFG:
        w = tp[name + "w"]                                         # (Cout,Cin,KH,KW)
        prepped[name + "w"] = (jnp.transpose(w, (2, 3, 1, 0))       # (KH,KW,Cin,Cout)
                               .reshape(k * k * cin, cout)
                               .astype(jnp.bfloat16))
        prepped[name + "b"] = tp[name + "b"].reshape(1, cout).astype(jnp.float32)

    # Fold the PyTorch C-major flatten (c,h,w of the NCHW view) into fc1's input
    # dim so the NHWC (h,w,c) flatten used here matches torch semantics exactly.
    c, hh, ww = 64, 5, 10
    w1 = (tp["fc1w"].reshape(1024, c, hh, ww)
          .transpose(0, 2, 3, 1)
          .reshape(1024, hh * ww * c))
    prepped["fc1w"] = jnp.asarray(w1.T, jnp.bfloat16)               # (3200, 1024)
    prepped["fc1b"] = tp["fc1b"].reshape(1, 1024).astype(jnp.float32)
    prepped["fc2w"] = jnp.asarray(tp["fc2w"].T, jnp.bfloat16)       # (1024, 2)
    prepped["fc2b"] = tp["fc2b"].reshape(1, 2).astype(jnp.float32)
    return prepped


def initial_net_forward(params, x):
    """x: (N, 1, 80, 160) NCHW (torch interface) -> (N, 2)."""
    x = jnp.transpose(x, (0, 2, 3, 1)).astype(jnp.bfloat16)         # NHWC once, bf16
    for name, _, _, k, s, p in _CONV_CFG:
        x = conv2d_relu_nhwc(x, params[name + "w"], params[name + "b"],
                             kernel=k, stride=s, padding=p)
    n = x.shape[0]
    x = x.reshape(n, -1)                                            # (h,w,c) flatten
    return fc_head(x, params["fc1w"], params["fc1b"],
                   params["fc2w"], params["fc2b"])


def _ref_forward(params, x):
    """Pure-jnp reference using the same param layout / dtypes (no Pallas)."""
    x = jnp.transpose(x, (0, 2, 3, 1)).astype(jnp.bfloat16)
    for name, _, cout, k, s, p in _CONV_CFG:
        pt, (n, ho, wo) = _im2col_nhwc(x, k, s, p)
        y = jnp.dot(pt, params[name + "w"], preferred_element_type=jnp.float32)
        y = jnp.maximum(y + params[name + "b"], 0.0).astype(jnp.bfloat16)
        x = y.reshape(n, ho, wo, cout)
    xf = x.reshape(x.shape[0], -1)
    h = jnp.dot(xf, params["fc1w"], preferred_element_type=jnp.float32) + params["fc1b"]
    h = jnp.maximum(h, 0.0).astype(jnp.bfloat16)
    return jnp.dot(h, params["fc2w"], preferred_element_type=jnp.float32) + params["fc2b"]


# ---------------------------------- main ------------------------------------ #

if __name__ == "__main__":
    key = jax.random.PRNGKey(0)
    k_param, k_x = jax.random.split(key)
    params = prepare_params(init_params(k_param))      # one-time, outside jit

    # Spatial size 80x160 is fixed by fc1 = Linear(10*5*64, 1024)
    # (four stride-2 convs: 80x160 -> 40x80 -> 20x40 -> 10x20 -> 5x10).
    x = jax.random.normal(k_x, (2, 1, 80, 160), jnp.float32)

    fwd = jax.jit(initial_net_forward)
    out = jax.block_until_ready(fwd(params, x))

    assert out.shape == (2, 2), out.shape
    assert out.dtype == jnp.float32

    ref = jax.block_until_ready(jax.jit(_ref_forward)(params, x))
    np.testing.assert_allclose(np.asarray(out), np.asarray(ref), rtol=2e-2, atol=2e-2)

    print("KERNEL_OK")
</pallas_src>

<mosaic_0001>
module attributes {stable_mosaic.version = 11 : i64} {
  func.func @_conv_matmul_kernel(%arg0: i32, %arg1: memref<1600x49xbf16, #tpu.memory_space<vmem>>, %arg2: memref<49x16xbf16, #tpu.memory_space<vmem>>, %arg3: memref<1x16xf32, #tpu.memory_space<vmem>>, %arg4: memref<1600x16xbf16, #tpu.memory_space<vmem>>) attributes {dimension_semantics = [#tpu.dimension_semantics<parallel>], iteration_bounds = array<i64: 4>, scalar_prefetch = 0 : i64, scratch_operands = 0 : i64, tpu.core_type = #tpu.core_type<tc>, window_params = [{transform_indices = @transform_0, window_bounds = array<i64: 1600, 49>}, {pipeline_mode = #tpu.pipeline_mode<synchronous>, transform_indices = @transform_1, window_bounds = array<i64: 49, 16>}, {pipeline_mode = #tpu.pipeline_mode<synchronous>, transform_indices = @transform_2, window_bounds = array<i64: 1, 16>}, {transform_indices = @transform_3, window_bounds = array<i64: 1600, 16>}]} {
    %c0 = arith.constant 0 : index
    %c0_0 = arith.constant 0 : index
    %0 = vector.load %arg1[%c0, %c0_0] : memref<1600x49xbf16, #tpu.memory_space<vmem>>, vector<1600x49xbf16>
    %c0_1 = arith.constant 0 : index
    %c0_2 = arith.constant 0 : index
    %1 = vector.load %arg2[%c0_1, %c0_2] : memref<49x16xbf16, #tpu.memory_space<vmem>>, vector<49x16xbf16>
    %cst = arith.constant dense<0.000000e+00> : vector<1600x16xf32>
    %2 = tpu.matmul %0, %1, %cst {dimension_numbers = #tpu.dot_dimension_numbers<[1], [0], [0], [1], [0, 0, 1, 1], [], []>} : vector<1600x49xbf16>, vector<49x16xbf16>, vector<1600x16xf32> -> vector<1600x16xf32>
    %c0_3 = arith.constant 0 : index
    %c0_4 = arith.constant 0 : index
    %3 = vector.load %arg3[%c0_3, %c0_4] : memref<1x16xf32, #tpu.memory_space<vmem>>, vector<1x16xf32>
    %4 = vector.broadcast %3 : vector<1x16xf32> to vector<1600x16xf32>
    %5 = arith.addf %2, %4 : vector<1600x16xf32>
    %cst_5 = arith.constant 0.000000e+00 : f32
    %6 = vector.broadcast %cst_5 : f32 to vector<1600x16xf32>
    %7 = arith.maximumf %5, %6 : vector<1600x16xf32>
    %8 = arith.truncf %7 : vector<1600x16xf32> to vector<1600x16xbf16>
    %c0_6 = arith.constant 0 : index
    %c0_7 = arith.constant 0 : index
    %9 = vector.load %arg4[%c0_6, %c0_7] : memref<1600x16xbf16, #tpu.memory_space<vmem>>, vector<1600x16xbf16>
    tpu.vector_store %arg4[%c0_6, %c0_7], %8 {strides = array<i32>} : memref<1600x16xbf16, #tpu.memory_space<vmem>>, vector<1600x16xbf16>,
    return
  }
  func.func @transform_0(%arg0: i32) -> (i32, i32) {
    %c0_i32 = arith.constant 0 : i32
    %c0_i32_0 = arith.constant 0 : i32
    return %arg0, %c0_i32 : i32, i32
  }
  func.func @transform_1(%arg0: i32) -> (i32, i32) {
    %c0_i32 = arith.constant 0 : i32
    %c0_i32_0 = arith.constant 0 : i32
    %c0_i32_1 = arith.constant 0 : i32
    return %c0_i32, %c0_i32_0 : i32, i32
  }
  func.func @transform_2(%arg0: i32) -> (i32, i32) {
    %c0_i32 = arith.constant 0 : i32
    %c0_i32_0 = arith.constant 0 : i32
    %c0_i32_1 = arith.constant 0 : i32
    return %c0_i32, %c0_i32_0 : i32, i32
  }
  func.func @transform_3(%arg0: i32) -> (i32, i32) {
    %c0_i32 = arith.constant 0 : i32
    %c0_i32_0 = arith.constant 0 : i32
    return %arg0, %c0_i32 : i32, i32
  }
}

module attributes {stable_mosaic.version = 11 : i64} {
  func.func @_conv_matmul_kernel(%arg0: i32, %arg1: memref<400x400xbf16, #tpu.memory_space<vmem>>, %arg2: memref<400x32xbf16, #tpu.memory_space<vmem>>, %arg3: memref<1x32xf32, #tpu.memory_space<vmem>>, %arg4: memref<400x32xbf16, #tpu.memory_space<vmem>>) attributes {dimension_semantics = [#tpu.dimension_semantics<parallel>], iteration_bounds = array<i64: 4>, scalar_prefetch = 0 : i64, scratch_operands = 0 : i64, tpu.core_type = #tpu.core_type<tc>, window_params = [{transform_indices = @transform_0, window_bounds = array<i64: 400, 400>}, {pipeline_mode = #tpu.pipeline_mode<synchronous>, transform_indices = @transform_1, window_bounds = array<i64: 400, 32>}, {pipeline_mode = #tpu.pipeline_mode<synchronous>, transform_indices = @transform_2, window_bounds = array<i64: 1, 32>}, {transform_indices = @transform_3, window_bounds = array<i64: 400, 32>}]} {
    %c0 = arith.constant 0 : index
    %c0_0 = arith.constant 0 : index
    %0 = vector.load %arg1[%c0, %c0_0] : memref<400x400xbf16, #tpu.memory_space<vmem>>, vector<400x400xbf16>
    %c0_1 = arith.constant 0 : index
    %c0_2 = arith.constant 0 : index
    %1 = vector.load %arg2[%c0_1, %c0_2] : memref<400x32xbf16, #tpu.memory_space<vmem>>, vector<400x32xbf16>
    %cst = arith.constant dense<0.000000e+00> : vector<400x32xf32>
    %2 = tpu.matmul %0, %1, %cst {dimension_numbers = #tpu.dot_dimension_numbers<[1], [0], [0], [1], [0, 0, 1, 1], [], []>} : vector<400x400xbf16>, vector<400x32xbf16>, vector<400x32xf32> -> vector<400x32xf32>
    %c0_3 = arith.constant 0 : index
    %c0_4 = arith.constant 0 : index
    %3 = vector.load %arg3[%c0_3, %c0_4] : memref<1x32xf32, #tpu.memory_space<vmem>>, vector<1x32xf32>
    %4 = vector.broadcast %3 : vector<1x32xf32> to vector<400x32xf32>
    %5 = arith.addf %2, %4 : vector<400x32xf32>
    %cst_5 = arith.constant 0.000000e+00 : f32
    %6 = vector.broadcast %cst_5 : f32 to vector<400x32xf32>
    %7 = arith.maximumf %5, %6 : vector<400x32xf32>
    %8 = arith.truncf %7 : vector<400x32xf32> to vector<400x32xbf16>
    %c0_6 = arith.constant 0 : index
    %c0_7 = arith.constant 0 : index
    %9 = vector.load %arg4[%c0_6, %c0_7] : memref<400x32xbf16, #tpu.memory_space<vmem>>, vector<400x32xbf16>
    tpu.vector_store %arg4[%c0_6, %c0_7], %8 {strides = array<i32>} : memref<400x32xbf16, #tpu.memory_space<vmem>>, vector<400x32xbf16>,
    return
  }
  func.func @transform_0(%arg0: i32) -> (i32, i32) {
    %c0_i32 = arith.constant 0 : i32
    %c0_i32_0 = arith.constant 0 : i32
    return %arg0, %c0_i32 : i32, i32
  }
  func.func @transform_1(%arg0: i32) -> (i32, i32) {
    %c0_i32 = arith.constant 0 : i32
    %c0_i32_0 = arith.constant 0 : i32
    %c0_i32_1 = arith.constant 0 : i32
    return %c0_i32, %c0_i32_0 : i32, i32
  }
  func.func @transform_2(%arg0: i32) -> (i32, i32) {
    %c0_i32 = arith.constant 0 : i32
    %c0_i32_0 = arith.constant 0 : i32
    %c0_i32_1 = arith.constant 0 : i32
    return %c0_i32, %c0_i32_0 : i32, i32
  }
  func.func @transform_3(%arg0: i32) -> (i32, i32) {
    %c0_i32 = arith.constant 0 : i32
    %c0_i32_0 = arith.constant 0 : i32
    return %arg0, %c0_i32 : i32, i32
  }
}

module attributes {stable_mosaic.version = 11 : i64} {
  func.func @_conv_matmul_kernel(%arg0: i32, %arg1: memref<400x800xbf16, #tpu.memory_space<vmem>>, %arg2: memref<800x64xbf16, #tpu.memory_space<vmem>>, %arg3: memref<1x64xf32, #tpu.memory_space<vmem>>, %arg4: memref<400x64xbf16, #tpu.memory_space<vmem>>) attributes {dimension_semantics = [#tpu.dimension_semantics<parallel>], iteration_bounds = array<i64: 1>, scalar_prefetch = 0 : i64, scratch_operands = 0 : i64, tpu.core_type = #tpu.core_type<tc>, window_params = [{transform_indices = @transform_0, window_bounds = array<i64: 400, 800>}, {pipeline_mode = #tpu.pipeline_mode<synchronous>, transform_indices = @transform_1, window_bounds = array<i64: 800, 64>}, {pipeline_mode = #tpu.pipeline_mode<synchronous>, transform_indices = @transform_2, window_bounds = array<i64: 1, 64>}, {transform_indices = @transform_3, window_bounds = array<i64: 400, 64>}]} {
    %c0 = arith.constant 0 : index
    %c0_0 = arith.constant 0 : index
    %0 = vector.load %arg1[%c0, %c0_0] : memref<400x800xbf16, #tpu.memory_space<vmem>>, vector<400x800xbf16>
    %c0_1 = arith.constant 0 : index
    %c0_2 = arith.constant 0 : index
    %1 = vector.load %arg2[%c0_1, %c0_2] : memref<800x64xbf16, #tpu.memory_space<vmem>>, vector<800x64xbf16>
    %cst = arith.constant dense<0.000000e+00> : vector<400x64xf32>
    %2 = tpu.matmul %0, %1, %cst {dimension_numbers = #tpu.dot_dimension_numbers<[1], [0], [0], [1], [0, 0, 1, 1], [], []>} : vector<400x800xbf16>, vector<800x64xbf16>, vector<400x64xf32> -> vector<400x64xf32>
    %c0_3 = arith.constant 0 : index
    %c0_4 = arith.constant 0 : index
    %3 = vector.load %arg3[%c0_3, %c0_4] : memref<1x64xf32, #tpu.memory_space<vmem>>, vector<1x64xf32>
    %4 = vector.broadcast %3 : vector<1x64xf32> to vector<400x64xf32>
    %5 = arith.addf %2, %4 : vector<400x64xf32>
    %cst_5 = arith.constant 0.000000e+00 : f32
    %6 = vector.broadcast %cst_5 : f32 to vector<400x64xf32>
    %7 = arith.maximumf %5, %6 : vector<400x64xf32>
    %8 = arith.truncf %7 : vector<400x64xf32> to vector<400x64xbf16>
    %c0_6 = arith.constant 0 : index
    %c0_7 = arith.constant 0 : index
    %9 = vector.load %arg4[%c0_6, %c0_7] : memref<400x64xbf16, #tpu.memory_space<vmem>>, vector<400x64xbf16>
    tpu.vector_store %arg4[%c0_6, %c0_7], %8 {strides = array<i32>} : memref<400x64xbf16, #tpu.memory_space<vmem>>, vector<400x64xbf16>,
    return
  }
  func.func @transform_0(%arg0: i32) -> (i32, i32) {
    %c0_i32 = arith.constant 0 : i32
    %c0_i32_0 = arith.constant 0 : i32
    return %arg0, %c0_i32 : i32, i32
  }
  func.func @transform_1(%arg0: i32) -> (i32, i32) {
    %c0_i32 = arith.constant 0 : i32
    %c0_i32_0 = arith.constant 0 : i32
    %c0_i32_1 = arith.constant 0 : i32
    return %c0_i32, %c0_i32_0 : i32, i32
  }
  func.func @transform_2(%arg0: i32) -> (i32, i32) {
    %c0_i32 = arith.constant 0 : i32
    %c0_i32_0 = arith.constant 0 : i32
    %c0_i32_1 = arith.constant 0 : i32
    return %c0_i32, %c0_i32_0 : i32, i32
  }
  func.func @transform_3(%arg0: i32) -> (i32, i32) {
    %c0_i32 = arith.constant 0 : i32
    %c0_i32_0 = arith.constant 0 : i32
    return %arg0, %c0_i32 : i32, i32
  }
}

module attributes {stable_mosaic.version = 11 : i64} {
  func.func @_conv_matmul_kernel(%arg0: i32, %arg1: memref<100x1600xbf16, #tpu.memory_space<vmem>>, %arg2: memref<1600x64xbf16, #tpu.memory_space<vmem>>, %arg3: memref<1x64xf32, #tpu.memory_space<vmem>>, %arg4: memref<100x64xbf16, #tpu.memory_space<vmem>>) attributes {dimension_semantics = [#tpu.dimension_semantics<parallel>], iteration_bounds = array<i64: 1>, scalar_prefetch = 0 : i64, scratch_operands = 0 : i64, tpu.core_type = #tpu.core_type<tc>, window_params = [{transform_indices = @transform_0, window_bounds = array<i64: 100, 1600>}, {pipeline_mode = #tpu.pipeline_mode<synchronous>, transform_indices = @transform_1, window_bounds = array<i64: 1600, 64>}, {pipeline_mode = #tpu.pipeline_mode<synchronous>, transform_indices = @transform_2, window_bounds = array<i64: 1, 64>}, {transform_indices = @transform_3, window_bounds = array<i64: 100, 64>}]} {
    %c0 = arith.constant 0 : index
    %c0_0 = arith.constant 0 : index
    %0 = vector.load %arg1[%c0, %c0_0] : memref<100x1600xbf16, #tpu.memory_space<vmem>>, vector<100x1600xbf16>
    %c0_1 = arith.constant 0 : index
    %c0_2 = arith.constant 0 : index
    %1 = vector.load %arg2[%c0_1, %c0_2] : memref<1600x64xbf16, #tpu.memory_space<vmem>>, vector<1600x64xbf16>
    %cst = arith.constant dense<0.000000e+00> : vector<100x64xf32>
    %2 = tpu.matmul %0, %1, %cst {dimension_numbers = #tpu.dot_dimension_numbers<[1], [0], [0], [1], [0, 0, 1, 1], [], []>} : vector<100x1600xbf16>, vector<1600x64xbf16>, vector<100x64xf32> -> vector<100x64xf32>
    %c0_3 = arith.constant 0 : index
    %c0_4 = arith.constant 0 : index
    %3 = vector.load %arg3[%c0_3, %c0_4] : memref<1x64xf32, #tpu.memory_space<vmem>>, vector<1x64xf32>
    %4 = vector.broadcast %3 : vector<1x64xf32> to vector<100x64xf32>
    %5 = arith.addf %2, %4 : vector<100x64xf32>
    %cst_5 = arith.constant 0.000000e+00 : f32
    %6 = vector.broadcast %cst_5 : f32 to vector<100x64xf32>
    %7 = arith.maximumf %5, %6 : vector<100x64xf32>
    %8 = arith.truncf %7 : vector<100x64xf32> to vector<100x64xbf16>
    %c0_6 = arith.constant 0 : index
    %c0_7 = arith.constant 0 : index
    %9 = vector.load %arg4[%c0_6, %c0_7] : memref<100x64xbf16, #tpu.memory_space<vmem>>, vector<100x64xbf16>
    tpu.vector_store %arg4[%c0_6, %c0_7], %8 {strides = array<i32>} : memref<100x64xbf16, #tpu.memory_space<vmem>>, vector<100x64xbf16>,
    return
  }
  func.func @transform_0(%arg0: i32) -> (i32, i32) {
    %c0_i32 = arith.constant 0 : i32
    %c0_i32_0 = arith.constant 0 : i32
    return %arg0, %c0_i32 : i32, i32
  }
  func.func @transform_1(%arg0: i32) -> (i32, i32) {
    %c0_i32 = arith.constant 0 : i32
    %c0_i32_0 = arith.constant 0 : i32
    %c0_i32_1 = arith.constant 0 : i32
    return %c0_i32, %c0_i32_0 : i32, i32
  }
  func.func @transform_2(%arg0: i32) -> (i32, i32) {
    %c0_i32 = arith.constant 0 : i32
    %c0_i32_0 = arith.constant 0 : i32
    %c0_i32_1 = arith.constant 0 : i32
    return %c0_i32, %c0_i32_0 : i32, i32
  }
  func.func @transform_3(%arg0: i32) -> (i32, i32) {
    %c0_i32 = arith.constant 0 : i32
    %c0_i32_0 = arith.constant 0 : i32
    return %arg0, %c0_i32 : i32, i32
  }
}

module attributes {stable_mosaic.version = 11 : i64} {
  func.func @_fc_head_kernel(%arg0: i32, %arg1: memref<2x640xbf16, #tpu.memory_space<vmem>>, %arg2: memref<640x1024xbf16, #tpu.memory_space<vmem>>, %arg3: memref<1x1024xf32, #tpu.memory_space<vmem>>, %arg4: memref<1024x2xbf16, #tpu.memory_space<vmem>>, %arg5: memref<1x2xf32, #tpu.memory_space<vmem>>, %arg6: memref<2x2xf32, #tpu.memory_space<vmem>>, %arg7: memref<2x1024xf32, #tpu.memory_space<vmem>>) attributes {dimension_semantics = [#tpu.dimension_semantics<arbitrary>], iteration_bounds = array<i64: 5>, scalar_prefetch = 0 : i64, scratch_operands = 1 : i64, tpu.core_type = #tpu.core_type<tc>, window_params = [{transform_indices = @transform_0, window_bounds = array<i64: 2, 640>}, {transform_indices = @transform_1, window_bounds = array<i64: 640, 1024>}, {pipeline_mode = #tpu.pipeline_mode<synchronous>, transform_indices = @transform_2, window_bounds = array<i64: 1, 1024>}, {pipeline_mode = #tpu.pipeline_mode<synchronous>, transform_indices = @transform_3, window_bounds = array<i64: 1024, 2>}, {pipeline_mode = #tpu.pipeline_mode<synchronous>, transform_indices = @transform_4, window_bounds = array<i64: 1, 2>}, {pipeline_mode = #tpu.pipeline_mode<synchronous>, transform_indices = @transform_5, window_bounds = array<i64: 2, 2>}]} {
    %c0_i32 = arith.constant 0 : i32
    %0 = arith.cmpi eq, %arg0, %c0_i32 : i32
    %1 = arith.extui %0 : i1 to i32
    %c0_i32_0 = arith.constant 0 : i32
    %2 = arith.cmpi ne, %1, %c0_i32_0 : i32
    scf.if %2 {
      %cst_9 = arith.constant 0.000000e+00 : f32
      %12 = vector.broadcast %cst_9 : f32 to vector<2x1024xf32>
      %c0_10 = arith.constant 0 : index
      %c0_11 = arith.constant 0 : index
      %13 = vector.load %arg7[%c0_10, %c0_11] : memref<2x1024xf32, #tpu.memory_space<vmem>>, vector<2x1024xf32>
      tpu.vector_store %arg7[%c0_10, %c0_11], %12 {strides = array<i32>} : memref<2x1024xf32, #tpu.memory_space<vmem>>, vector<2x1024xf32>,
    } else {
    }
    %c0 = arith.constant 0 : index
    %c0_1 = arith.constant 0 : index
    %3 = vector.load %arg7[%c0, %c0_1] : memref<2x1024xf32, #tpu.memory_space<vmem>>, vector<2x1024xf32>
    %c0_2 = arith.constant 0 : index
    %c0_3 = arith.constant 0 : index
    %4 = vector.load %arg1[%c0_2, %c0_3] : memref<2x640xbf16, #tpu.memory_space<vmem>>, vector<2x640xbf16>
    %c0_4 = arith.constant 0 : index
    %c0_5 = arith.constant 0 : index
    %5 = vector.load %arg2[%c0_4, %c0_5] : memref<640x1024xbf16, #tpu.memory_space<vmem>>, vector<640x1024xbf16>
    %cst = arith.constant dense<0.000000e+00> : vector<2x1024xf32>
    %6 = tpu.matmul %4, %5, %cst {dimension_numbers = #tpu.dot_dimension_numbers<[1], [0], [0], [1], [0, 0, 1, 1], [], []>} : vector<2x640xbf16>, vector<640x1024xbf16>, vector<2x1024xf32> -> vector<2x1024xf32>
    %7 = arith.addf %3, %6 : vector<2x1024xf32>
    %c0_6 = arith.constant 0 : index
    %c0_7 = arith.constant 0 : index
    %8 = vector.load %arg7[%c0_6, %c0_7] : memref<2x1024xf32, #tpu.memory_space<vmem>>, vector<2x1024xf32>
    tpu.vector_store %arg7[%c0_6, %c0_7], %7 {strides = array<i32>} : memref<2x1024xf32, #tpu.memory_space<vmem>>, vector<2x1024xf32>,
    %c4_i32 = arith.constant 4 : i32
    %9 = arith.cmpi eq, %arg0, %c4_i32 : i32
    %10 = arith.extui %9 : i1 to i32
    %c0_i32_8 = arith.constant 0 : i32
    %11 = arith.cmpi ne, %10, %c0_i32_8 : i32
    scf.if %11 {
      %c0_9 = arith.constant 0 : index
      %c0_10 = arith.constant 0 : index
      %12 = vector.load %arg7[%c0_9, %c0_10] : memref<2x1024xf32, #tpu.memory_space<vmem>>, vector<2x1024xf32>
      %c0_11 = arith.constant 0 : index
      %c0_12 = arith.constant 0 : index
      %13 = vector.load %arg3[%c0_11, %c0_12] : memref<1x1024xf32, #tpu.memory_space<vmem>>, vector<1x1024xf32>
      %14 = vector.broadcast %13 : vector<1x1024xf32> to vector<2x1024xf32>
      %15 = arith.addf %12, %14 : vector<2x1024xf32>
      %cst_13 = arith.constant 0.000000e+00 : f32
      %16 = vector.broadcast %cst_13 : f32 to vector<2x1024xf32>
      %17 = arith.maximumf %15, %16 : vector<2x1024xf32>
      %18 = arith.truncf %17 : vector<2x1024xf32> to vector<2x1024xbf16>
      %c0_14 = arith.constant 0 : index
      %c0_15 = arith.constant 0 : index
      %19 = vector.load %arg4[%c0_14, %c0_15] : memref<1024x2xbf16, #tpu.memory_space<vmem>>, vector<1024x2xbf16>
      %cst_16 = arith.constant dense<0.000000e+00> : vector<2x2xf32>
      %20 = tpu.matmul %18, %19, %cst_16 {dimension_numbers = #tpu.dot_dimension_numbers<[1], [0], [0], [1], [0, 0, 1, 1], [], []>} : vector<2x1024xbf16>, vector<1024x2xbf16>, vector<2x2xf32> -> vector<2x2xf32>
      %c0_17 = arith.constant 0 : index
      %c0_18 = arith.constant 0 : index
      %21 = vector.load %arg5[%c0_17, %c0_18] : memref<1x2xf32, #tpu.memory_space<vmem>>, vector<1x2xf32>
      %22 = vector.broadcast %21 : vector<1x2xf32> to vector<2x2xf32>
      %23 = arith.addf %20, %22 : vector<2x2xf32>
      %c0_19 = arith.constant 0 : index
      %c0_20 = arith.constant 0 : index
      %24 = vector.load %arg6[%c0_19, %c0_20] : memref<2x2xf32, #tpu.memory_space<vmem>>, vector<2x2xf32>
      tpu.vector_store %arg6[%c0_19, %c0_20], %23 {strides = array<i32>} : memref<2x2xf32, #tpu.memory_space<vmem>>, vector<2x2xf32>,
    } else {
    }
    return
  }
  func.func @transform_0(%arg0: i32) -> (i32, i32) {
    %c0_i32 = arith.constant 0 : i32
    %c0_i32_0 = arith.constant 0 : i32
    return %c0_i32, %arg0 : i32, i32
  }
  func.func @transform_1(%arg0: i32) -> (i32, i32) {
    %c0_i32 = arith.constant 0 : i32
    %c0_i32_0 = arith.constant 0 : i32
    return %arg0, %c0_i32 : i32, i32
  }
  func.func @transform_2(%arg0: i32) -> (i32, i32) {
    %c0_i32 = arith.constant 0 : i32
    %c0_i32_0 = arith.constant 0 : i32
    %c0_i32_1 = arith.constant 0 : i32
    return %c0_i32, %c0_i32_0 : i32, i32
  }
  func.func @transform_3(%arg0: i32) -> (i32, i32) {
    %c0_i32 = arith.constant 0 : i32
    %c0_i32_0 = arith.constant 0 : i32
    %c0_i32_1 = arith.constant 0 : i32
    return %c0_i32, %c0_i32_0 : i32, i32
  }
  func.func @transform_4(%arg0: i32) -> (i32, i32) {
    %c0_i32 = arith.constant 0 : i32
    %c0_i32_0 = arith.constant 0 : i32
    %c0_i32_1 = arith.constant 0 : i32
    return %c0_i32, %c0_i32_0 : i32, i32
  }
  func.func @transform_5(%arg0: i32) -> (i32, i32) {
    %c0_i32 = arith.constant 0 : i32
    %c0_i32_0 = arith.constant 0 : i32
    %c0_i32_1 = arith.constant 0 : i32
    return %c0_i32, %c0_i32_0 : i32, i32
  }
}

</mosaic_0001>

<llo_original>
// kernel: initial_net_forward.5
$region0: #{initial_net_forward.5}
  #allocation0 [shape = 'u32[]', space=smem, size = 0x4, offset = 0x4, fixed_abs, tag = 'smem constant byte address 0x4 - core index']
  #allocation1 [shape = 'u32[72,128]{1,0:T(1,128)}', space=vmem, size = 0x9000, scoped, tag = 'internal scratch']
  %s0 = inlined_call_operand.vmem [shape: bf16[6400,49], index: 0, kind: input, shape index: {}]
  %s1 = inlined_call_operand.vmem [shape: bf16[49,16], index: 1, kind: input, shape index: {}]
  %s2 = inlined_call_operand.vmem [shape: f32[1,16], index: 2, kind: input, shape index: {}]
  %s3 = inlined_call_operand.vmem [shape: bf16[6400,16], index: 3, kind: output, shape index: {}]
  %s4 = sld [smem:[#allocation0]]
  $region45: #{initial_net_forward.5} parent=0
    _
  %s6 = ssub.s32 1, %s4
  %s7 = scalar_select 0, %s6, %s4
  loop: start=0, step=1, limit=6
  $region2: #{initial_net_forward.5} parent=0 // loop_pre_header
    _
  $region3: #{initial_net_forward.5} parent=0 // loop_header
    %s9 = sphi 0, %s13
    %p10 = scmp.ge.s32.totalorder %s9, 6
    %s19 = sphi 0, %s21
    %s22 = sphi 0, %s19
    %s23 = sphi 0, %s22
    %s39 = sphi 0, %s23
    %s43 = sphi 0, %s43
    %s45 = sphi 0, %s43
    %s46 = sphi 0, %s45
    %s60 = sphi 0, %s46
    %s64 = sphi 0, %s64
    %s66 = sphi 0, %s64
    %s67 = sphi 0, %s66
    %s81 = sphi 0, %s67
    %s87 = sphi 0, %s89
    %s90 = sphi 0, %s87
    %s91 = sphi 0, %s90
    %s107 = sphi 0, %s91
  $region4: #{initial_net_forward.5} parent=0 // loop_header_branch
    %12 = sbr.rel (%p10) target = $region8
  $region5: #{initial_net_forward.5} parent=0 // loop_body
    %s14 = ssub.s32 %s9, 1
    %s15 = ssub.s32 %s9, 2
    %s16 = sadd.s32 %s9, 1
    %s17 = ssub.s32 %s9, %s16
    %p18 = scmp.eq.s32.totalorder %s17, 0
    %s20 = sadd.s32 %s19, 1
    %s21 = scalar_select %p18, %s19, %s20
    %p24 = pneg %p18
    %p25 = scmp.eq.s32.totalorder %s9, 3
    %p26 = por %p24, %p25
    %p27 = scmp.ne.s32.totalorder %s19, %s22
    %p28 = scmp.eq.s32.totalorder %s9, 0
    %p29 = por %p27, %p28
    %p30 = scmp.ne.s32.totalorder %s19, %s22
    %p31 = scmp.eq.s32.totalorder %s14, 3
    %p32 = por %p30, %p31
    %p33 = scmp.ne.s32.totalorder %s22, %s23
    %p34 = scmp.eq.s32.totalorder %s14, 0
    %p35 = por %p33, %p34
    %p36 = scmp.ne.s32.totalorder %s22, %s23
    %p37 = scmp.eq.s32.totalorder %s15, 3
    %p38 = por %p36, %p37
    %p40 = scmp.ne.s32.totalorder %s23, %s39
    %p41 = scmp.eq.s32.totalorder %s15, 0
    %p42 = por %p40, %p41
    %s44 = sadd.s32 %s43, 1
    %p47 = scmp.eq.s32.totalorder %s9, 3
    %p48 = scmp.ne.s32.totalorder %s43, %s45
    %p49 = scmp.eq.s32.totalorder %s9, 0
    %p50 = por %p48, %p49
    %p51 = scmp.ne.s32.totalorder %s43, %s45
    %p52 = scmp.eq.s32.totalorder %s14, 3
    %p53 = por %p51, %p52
    %p54 = scmp.ne.s32.totalorder %s45, %s46
    %p55 = scmp.eq.s32.totalorder %s14, 0
    %p56 = por %p54, %p55
    %p57 = scmp.ne.s32.totalorder %s45, %s46
    %p58 = scmp.eq.s32.totalorder %s15, 3
    %p59 = por %p57, %p58
    %p61 = scmp.ne.s32.totalorder %s46, %s60
    %p62 = scmp.eq.s32.totalorder %s15, 0
    %p63 = por %p61, %p62
    %s65 = sadd.s32 %s64, 1
    %p68 = scmp.eq.s32.totalorder %s9, 3
    %p69 = scmp.ne.s32.totalorder %s64, %s66
    %p70 = scmp.eq.s32.totalorder %s9, 0
    %p71 = por %p69, %p70
    %p72 = scmp.ne.s32.totalorder %s64, %s66
    %p73 = scmp.eq.s32.totalorder %s14, 3
    %p74 = por %p72, %p73
    %p75 = scmp.ne.s32.totalorder %s66, %s67
    %p76 = scmp.eq.s32.totalorder %s14, 0
    %p77 = por %p75, %p76
    %p78 = scmp.ne.s32.totalorder %s66, %s67
    %p79 = scmp.eq.s32.totalorder %s15, 3
    %p80 = por %p78, %p79
    %p82 = scmp.ne.s32.totalorder %s67, %s81
    %p83 = scmp.eq.s32.totalorder %s15, 0
    %p84 = por %p82, %p83
    %s85 = ssub.s32 %s9, %s16
    %p86 = scmp.eq.s32.totalorder %s85, 0
    %s88 = sadd.s32 %s87, 1
    %s89 = scalar_select %p86, %s87, %s88
    %p92 = pneg %p86
    %p93 = scmp.eq.s32.totalorder %s9, 3
    %p94 = por %p92, %p93
    %p95 = scmp.ne.s32.totalorder %s87, %s90
    %p96 = scmp.eq.s32.totalorder %s9, 0
    %p97 = por %p95, %p96
    %p98 = scmp.ne.s32.totalorder %s87, %s90
    %p99 = scmp.eq.s32.totalorder %s14, 3
    %p100 = por %p98, %p99
    %p101 = scmp.ne.s32.totalorder %s90, %s91
    %p102 = scmp.eq.s32.totalorder %s14, 0
    %p103 = por %p101, %p102
    %p104 = scmp.ne.s32.totalorder %s90, %s91
    %p105 = scmp.eq.s32.totalorder %s15, 3
    %p106 = por %p104, %p105
    %p108 = scmp.ne.s32.totalorder %s91, %s107
    %p109 = scmp.eq.s32.totalorder %s15, 0
    %p110 = por %p108, %p109
    %p111 = scmp.le.s32.totalorder 1, %s9
    %p112 = scmp.lt.s32.totalorder %s9, 5
    %p113 = pnand %p111, %p112
    %p114 = pneg %p113
    // Predicated region
    $region9: #{initial_net_forward.5} parent=5 // pred_check
      _
    $region10: #{initial_net_forward.5} parent=5 // pred_check_branch
      %116 = sbr.rel (%p113) target = $region12
    $region11: #{initial_net_forward.5} parent=5 // pred_region
      %s117 = ssub.s32 %s9, 1
      // Predicated region
      $region13: #{initial_net_forward.5} parent=11 // pred_check
        %p118 = pneg %p56
      $region14: #{initial_net_forward.5} parent=11 // pred_check_branch
        %120 = sbr.rel (%p118) target = $region16
      $region15: #{initial_net_forward.5} parent=11 // pred_region
        _
      $region16: #{initial_net_forward.5} parent=11 // pred_fallthru
        _
      // Predicated region
      $region17: #{initial_net_forward.5} parent=11 // pred_check
        %p121 = pneg %p77
      $region18: #{initial_net_forward.5} parent=11 // pred_check_branch
        %123 = sbr.rel (%p121) target = $region20
      $region19: #{initial_net_forward.5} parent=11 // pred_region
        _
      $region20: #{initial_net_forward.5} parent=11 // pred_fallthru
        _
    $region12: #{initial_net_forward.5} parent=5 // pred_fallthru
      _
    %p124 = scmp.lt.s32.totalorder %s9, 4
    // Predicated region
    $region21: #{initial_net_forward.5} parent=5 // pred_check
      %p125 = pneg %p124
    $region22: #{initial_net_forward.5} parent=5 // pred_check_branch
      %127 = sbr.rel (%p125) target = $region24
    $region23: #{initial_net_forward.5} parent=5 // pred_region
      // Predicated region
      $region25: #{initial_net_forward.5} parent=23 // pred_check
        %p128 = pneg %p29
      $region26: #{initial_net_forward.5} parent=23 // pred_check_branch
        %130 = sbr.rel (%p128) target = $region28
      $region27: #{initial_net_forward.5} parent=23 // pred_region
        %s131 = smul.u32 200, %s9
        %p132 = scmp.lt.s32.totalorder %s131, 799
        %s133 = scalar_select %p132, %s131, 799
        %s134 = smul.addr %s133, 4
        %s135 = scalar_lea.vmem %s0, %s134
        %s136 = smul.u32 200, %s9
      $region28: #{initial_net_forward.5} parent=23 // pred_fallthru
        _
    $region24: #{initial_net_forward.5} parent=5 // pred_fallthru
      _
    %p137 = scmp.le.s32.totalorder 1, %s9
    %p138 = scmp.lt.s32.totalorder %s9, 5
    %p139 = pnand %p137, %p138
    %p140 = pneg %p139
    // Predicated region
    $region29: #{initial_net_forward.5} parent=5 // pred_check
      _
    $region30: #{initial_net_forward.5} parent=5 // pred_check_branch
      %142 = sbr.rel (%p139) target = $region32
    $region31: #{initial_net_forward.5} parent=5 // pred_region
      %s143 = ssub.s32 %s9, 1
      %s144 = smul.u32 200, %s14
      %p145 = scmp.lt.s32.totalorder %s144, 799
      %s146 = scalar_select %p145, %s144, 799
      %s147 = smul.addr %s146, 4
      %s148 = scalar_lea.vmem %s0, %s147
      %p149 = pneg %p35
      %p150 = pneg %p32
      %p151 = pneg %p56
      %p152 = pneg %p53
      %p153 = pneg %p77
      %p154 = pneg %p74
      %p155 = pneg %p103
      %p156 = pneg %p100
      %s157 = smul.u32 200, %s14
      %p158 = scmp.lt.s32.totalorder %s157, 799
      %s159 = scalar_select %p158, %s157, 799
      %s160 = smul.addr %s159, 4
      %s161 = scalar_lea.vmem %s3, %s160
      %s162 = smul.u32 200, %s14
      %p163 = scmp.lt.s32.totalorder %s162, 799
      %s164 = scalar_select %p163, %s162, 799
      %s165 = smul.addr %s164, 4
      %s166 = scalar_lea.vmem %s0, %s165
      %s167 = smul.u32 200, %s14
      %s168 = smul.u32 200, %s14
      %p169 = scmp.lt.s32.totalorder %s168, 799
      %s170 = scalar_select %p169, %s168, 799
      %s171 = smul.addr %s170, 4
      %s172 = scalar_lea.vmem %s3, %s171
      %s173 = smul.u32 200, %s14
      %v175 = vld [vmem:[%s166] sm:$0xf]
      %v176 = vld [vmem:[%s166 + $0x4] sm:$0xf]
      %v177 = vld [vmem:[%s166 + $0x8] sm:$0xf]
      %v178 = vld [vmem:[%s166 + $0xc] sm:$0xf]
      %v179 = vld [vmem:[%s166 + $0x10] sm:$0xf]
      %v180 = vld [vmem:[%s166 + $0x14] sm:$0xf]
      %v181 = vld [vmem:[%s166 + $0x18] sm:$0xf]
      %v182 = vld [vmem:[%s166 + $0x1c] sm:$0xf]
      %v183 = vld [vmem:[%s166 + $0x20] sm:$0xf]
      %v184 = vld [vmem:[%s166 + $0x24] sm:$0xf]
      %v185 = vld [vmem:[%s166 + $0x28] sm:$0xf]
      %v186 = vld [vmem:[%s166 + $0x2c] sm:$0xf]
      %v187 = vld [vmem:[%s166 + $0x30] sm:$0xf]
      %v188 = vld [vmem:[%s166 + $0x34] sm:$0xf]
      %v189 = vld [vmem:[%s166 + $0x38] sm:$0xf]
      %v190 = vld [vmem:[%s166 + $0x3c] sm:$0xf]
      %v191 = vld [vmem:[%s166 + $0x40] sm:$0xf]
      %v192 = vld [vmem:[%s166 + $0x44] sm:$0xf]
      %v193 = vld [vmem:[%s166 + $0x48] sm:$0xf]
      %v194 = vld [vmem:[%s166 + $0x4c] sm:$0xf]
      %v195 = vld [vmem:[%s166 + $0x50] sm:$0xf]
      %v196 = vld [vmem:[%s166 + $0x54] sm:$0xf]
      %v197 = vld [vmem:[%s166 + $0x58] sm:$0xf]
      %v198 = vld [vmem:[%s166 + $0x5c] sm:$0xf]
      %v199 = vld [vmem:[%s166 + $0x60] sm:$0xf]
      %v200 = vld [vmem:[%s166 + $0x64] sm:$0xf]
      %v201 = vld [vmem:[%s166 + $0x68] sm:$0xf]
      %v202 = vld [vmem:[%s166 + $0x6c] sm:$0xf]
      %v203 = vld [vmem:[%s166 + $0x70] sm:$0xf]
      %v204 = vld [vmem:[%s166 + $0x74] sm:$0xf]
      %v205 = vld [vmem:[%s166 + $0x78] sm:$0xf]
      %v206 = vld [vmem:[%s166 + $0x7c] sm:$0xf]
      %v207 = vld [vmem:[%s166 + $0x80] sm:$0xf]
      %v208 = vld [vmem:[%s166 + $0x84] sm:$0xf]
      %v209 = vld [vmem:[%s166 + $0x88] sm:$0xf]
      %v210 = vld [vmem:[%s166 + $0x8c] sm:$0xf]
      %v211 = vld [vmem:[%s166 + $0x90] sm:$0xf]
      %v212 = vld [vmem:[%s166 + $0x94] sm:$0xf]
      %v213 = vld [vmem:[%s166 + $0x98] sm:$0xf]
      %v214 = vld [vmem:[%s166 + $0x9c] sm:$0xf]
      %v215 = vld [vmem:[%s166 + $0xa0] sm:$0xf]
      %v216 = vld [vmem:[%s166 + $0xa4] sm:$0xf]
      %v217 = vld [vmem:[%s166 + $0xa8] sm:$0xf]
      %v218 = vld [vmem:[%s166 + $0xac] sm:$0xf]
      %v219 = vld [vmem:[%s166 + $0xb0] sm:$0xf]
      %v220 = vld [vmem:[%s166 + $0xb4] sm:$0xf]
      %v221 = vld [vmem:[%s166 + $0xb8] sm:$0xf]
      %v222 = vld [vmem:[%s166 + $0xbc] sm:$0xf]
      %v223 = vld [vmem:[%s166 + $0xc0] sm:$0xf]
      %v224 = vld [vmem:[%s166 + $0xc4] sm:$0xf]
      %v225 = vld [vmem:[%s166 + $0xc8] sm:$0xf]
      %v226 = vld [vmem:[%s166 + $0xcc] sm:$0xf]
      %v227 = vld [vmem:[%s166 + $0xd0] sm:$0xf]
      %v228 = vld [vmem:[%s166 + $0xd4] sm:$0xf]
      %v229 = vld [vmem:[%s166 + $0xd8] sm:$0xf]
      %v230 = vld [vmem:[%s166 + $0xdc] sm:$0xf]
      %v231 = vld [vmem:[%s166 + $0xe0] sm:$0xf]
      %v232 = vld [vmem:[%s166 + $0xe4] sm:$0xf]
      %v233 = vld [vmem:[%s166 + $0xe8] sm:$0xf]
      %v234 = vld [vmem:[%s166 + $0xec] sm:$0xf]
      %v235 = vld [vmem:[%s166 + $0xf0] sm:$0xf]
      %v236 = vld [vmem:[%s166 + $0xf4] sm:$0xf]
      %v237 = vld [vmem:[%s166 + $0xf8] sm:$0xf]
      %v238 = vld [vmem:[%s166 + $0xfc] sm:$0xf]
      %v239 = vld [vmem:[%s166 + $0x100] sm:$0xf]
      %v240 = vld [vmem:[%s166 + $0x104] sm:$0xf]
      %v241 = vld [vmem:[%s166 + $0x108] sm:$0xf]
      %v242 = vld [vmem:[%s166 + $0x10c] sm:$0xf]
      %v243 = vld [vmem:[%s166 + $0x110] sm:$0xf]
      %v244 = vld [vmem:[%s166 + $0x114] sm:$0xf]
      %v245 = vld [vmem:[%s166 + $0x118] sm:$0xf]
      %v246 = vld [vmem:[%s166 + $0x11c] sm:$0xf]
      %v247 = vld [vmem:[%s166 + $0x120] sm:$0xf]
      %v248 = vld [vmem:[%s166 + $0x124] sm:$0xf]
      %v249 = vld [vmem:[%s166 + $0x128] sm:$0xf]
      %v250 = vld [vmem:[%s166 + $0x12c] sm:$0xf]
      %v251 = vld [vmem:[%s166 + $0x130] sm:$0xf]
      %v252 = vld [vmem:[%s166 + $0x134] sm:$0xf]
      %v253 = vld [vmem:[%s166 + $0x138] sm:$0xf]
      %v254 = vld [vmem:[%s166 + $0x13c] sm:$0xf]
      %v255 = vld [vmem:[%s166 + $0x140] sm:$0xf]
      %v256 = vld [vmem:[%s166 + $0x144] sm:$0xf]
      %v257 = vld [vmem:[%s166 + $0x148] sm:$0xf]
      %v258 = vld [vmem:[%s166 + $0x14c] sm:$0xf]
      %v259 = vld [vmem:[%s166 + $0x150] sm:$0xf]
      %v260 = vld [vmem:[%s166 + $0x154] sm:$0xf]
      %v261 = vld [vmem:[%s166 + $0x158] sm:$0xf]
      %v262 = vld [vmem:[%s166 + $0x15c] sm:$0xf]
      %v263 = vld [vmem:[%s166 + $0x160] sm:$0xf]
      %v264 = vld [vmem:[%s166 + $0x164] sm:$0xf]
      %v265 = vld [vmem:[%s166 + $0x168] sm:$0xf]
      %v266 = vld [vmem:[%s166 + $0x16c] sm:$0xf]
      %v267 = vld [vmem:[%s166 + $0x170] sm:$0xf]
      %v268 = vld [vmem:[%s166 + $0x174] sm:$0xf]
      %v269 = vld [vmem:[%s166 + $0x178] sm:$0xf]
      %v270 = vld [vmem:[%s166 + $0x17c] sm:$0xf]
      %v271 = vld [vmem:[%s166 + $0x180] sm:$0xf]
      %v272 = vld [vmem:[%s166 + $0x184] sm:$0xf]
      %v273 = vld [vmem:[%s166 + $0x188] sm:$0xf]
      %v274 = vld [vmem:[%s166 + $0x18c] sm:$0xf]
      %v275 = vld [vmem:[%s166 + $0x190] sm:$0xf]
      %v276 = vld [vmem:[%s166 + $0x194] sm:$0xf]
      %v277 = vld [vmem:[%s166 + $0x198] sm:$0xf]
      %v278 = vld [vmem:[%s166 + $0x19c] sm:$0xf]
      %v279 = vld [vmem:[%s166 + $0x1a0] sm:$0xf]
      %v280 = vld [vmem:[%s166 + $0x1a4] sm:$0xf]
      %v281 = vld [vmem:[%s166 + $0x1a8] sm:$0xf]
      %v282 = vld [vmem:[%s166 + $0x1ac] sm:$0xf]
      %v283 = vld [vmem:[%s166 + $0x1b0] sm:$0xf]
      %v284 = vld [vmem:[%s166 + $0x1b4] sm:$0xf]
      %v285 = vld [vmem:[%s166 + $0x1b8] sm:$0xf]
      %v286 = vld [vmem:[%s166 + $0x1bc] sm:$0xf]
      %v287 = vld [vmem:[%s166 + $0x1c0] sm:$0xf]
      %v288 = vld [vmem:[%s166 + $0x1c4] sm:$0xf]
      %v289 = vld [vmem:[%s166 + $0x1c8] sm:$0xf]
      %v290 = vld [vmem:[%s166 + $0x1cc] sm:$0xf]
      %v291 = vld [vmem:[%s166 + $0x1d0] sm:$0xf]
      %v292 = vld [vmem:[%s166 + $0x1d4] sm:$0xf]
      %v293 = vld [vmem:[%s166 + $0x1d8] sm:$0xf]
      %v294 = vld [vmem:[%s166 + $0x1dc] sm:$0xf]
      %v295 = vld [vmem:[%s166 + $0x1e0] sm:$0xf]
      %v296 = vld [vmem:[%s166 + $0x1e4] sm:$0xf]
      %v297 = vld [vmem:[%s166 + $0x1e8] sm:$0xf]
      %v298 = vld [vmem:[%s166 + $0x1ec] sm:$0xf]
      %v299 = vld [vmem:[%s166 + $0x1f0] sm:$0xf]
      %v300 = vld [vmem:[%s166 + $0x1f4] sm:$0xf]
      %v301 = vld [vmem:[%s166 + $0x1f8] sm:$0xf]
      %v302 = vld [vmem:[%s166 + $0x1fc] sm:$0xf]
      %v303 = vld [vmem:[%s166 + $0x200] sm:$0xf]
      %v304 = vld [vmem:[%s166 + $0x204] sm:$0xf]
      %v305 = vld [vmem:[%s166 + $0x208] sm:$0xf]
      %v306 = vld [vmem:[%s166 + $0x20c] sm:$0xf]
      %v307 = vld [vmem:[%s166 + $0x210] sm:$0xf]
      %v308 = vld [vmem:[%s166 + $0x214] sm:$0xf]
      %v309 = vld [vmem:[%s166 + $0x218] sm:$0xf]
      %v310 = vld [vmem:[%s166 + $0x21c] sm:$0xf]
      %v311 = vld [vmem:[%s166 + $0x220] sm:$0xf]
      %v312 = vld [vmem:[%s166 + $0x224] sm:$0xf]
      %v313 = vld [vmem:[%s166 + $0x228] sm:$0xf]
      %v314 = vld [vmem:[%s166 + $0x22c] sm:$0xf]
      %v315 = vld [vmem:[%s166 + $0x230] sm:$0xf]
      %v316 = vld [vmem:[%s166 + $0x234] sm:$0xf]
      %v317 = vld [vmem:[%s166 + $0x238] sm:$0xf]
      %v318 = vld [vmem:[%s166 + $0x23c] sm:$0xf]
      %v319 = vld [vmem:[%s166 + $0x240] sm:$0xf]
      %v320 = vld [vmem:[%s166 + $0x244] sm:$0xf]
      %v321 = vld [vmem:[%s166 + $0x248] sm:$0xf]
      %v322 = vld [vmem:[%s166 + $0x24c] sm:$0xf]
      %v323 = vld [vmem:[%s166 + $0x250] sm:$0xf]
      %v324 = vld [vmem:[%s166 + $0x254] sm:$0xf]
      %v325 = vld [vmem:[%s166 + $0x258] sm:$0xf]
      %v326 = vld [vmem:[%s166 + $0x25c] sm:$0xf]
      %v327 = vld [vmem:[%s166 + $0x260] sm:$0xf]
      %v328 = vld [vmem:[%s166 + $0x264] sm:$0xf]
      %v329 = vld [vmem:[%s166 + $0x268] sm:$0xf]
      %v330 = vld [vmem:[%s166 + $0x26c] sm:$0xf]
      %v331 = vld [vmem:[%s166 + $0x270] sm:$0xf]
      %v332 = vld [vmem:[%s166 + $0x274] sm:$0xf]
      %v333 = vld [vmem:[%s166 + $0x278] sm:$0xf]
      %v334 = vld [vmem:[%s166 + $0x27c] sm:$0xf]
      %v335 = vld [vmem:[%s166 + $0x280] sm:$0xf]
      %v336 = vld [vmem:[%s166 + $0x284] sm:$0xf]
      %v337 = vld [vmem:[%s166 + $0x288] sm:$0xf]
      %v338 = vld [vmem:[%s166 + $0x28c] sm:$0xf]
      %v339 = vld [vmem:[%s166 + $0x290] sm:$0xf]
      %v340 = vld [vmem:[%s166 + $0x294] sm:$0xf]
      %v341 = vld [vmem:[%s166 + $0x298] sm:$0xf]
      %v342 = vld [vmem:[%s166 + $0x29c] sm:$0xf]
      %v343 = vld [vmem:[%s166 + $0x2a0] sm:$0xf]
      %v344 = vld [vmem:[%s166 + $0x2a4] sm:$0xf]
      %v345 = vld [vmem:[%s166 + $0x2a8] sm:$0xf]
      %v346 = vld [vmem:[%s166 + $0x2ac] sm:$0xf]
      %v347 = vld [vmem:[%s166 + $0x2b0] sm:$0xf]
      %v348 = vld [vmem:[%s166 + $0x2b4] sm:$0xf]
      %v349 = vld [vmem:[%s166 + $0x2b8] sm:$0xf]
      %v350 = vld [vmem:[%s166 + $0x2bc] sm:$0xf]
      %v351 = vld [vmem:[%s166 + $0x2c0] sm:$0xf]
      %v352 = vld [vmem:[%s166 + $0x2c4] sm:$0xf]
      %v353 = vld [vmem:[%s166 + $0x2c8] sm:$0xf]
      %v354 = vld [vmem:[%s166 + $0x2cc] sm:$0xf]
      %v355 = vld [vmem:[%s166 + $0x2d0] sm:$0xf]
      %v356 = vld [vmem:[%s166 + $0x2d4] sm:$0xf]
      %v357 = vld [vmem:[%s166 + $0x2d8] sm:$0xf]
      %v358 = vld [vmem:[%s166 + $0x2dc] sm:$0xf]
      %v359 = vld [vmem:[%s166 + $0x2e0] sm:$0xf]
      %v360 = vld [vmem:[%s166 + $0x2e4] sm:$0xf]
      %v361 = vld [vmem:[%s166 + $0x2e8] sm:$0xf]
      %v362 = vld [vmem:[%s166 + $0x2ec] sm:$0xf]
      %v363 = vld [vmem:[%s166 + $0x2f0] sm:$0xf]
      %v364 = vld [vmem:[%s166 + $0x2f4] sm:$0xf]
      %v365 = vld [vmem:[%s166 + $0x2f8] sm:$0xf]
      %v366 = vld [vmem:[%s166 + $0x2fc] sm:$0xf]
      %v367 = vld [vmem:[%s166 + $0x300] sm:$0xf]
      %v368 = vld [vmem:[%s166 + $0x304] sm:$0xf]
      %v369 = vld [vmem:[%s166 + $0x308] sm:$0xf]
      %v370 = vld [vmem:[%s166 + $0x30c] sm:$0xf]
      %v371 = vld [vmem:[%s166 + $0x310] sm:$0xf]
      %v372 = vld [vmem:[%s166 + $0x314] sm:$0xf]
      %v373 = vld [vmem:[%s166 + $0x318] sm:$0xf]
      %v374 = vld [vmem:[%s166 + $0x31c] sm:$0xf]
      %v375 = vld [vmem:[%s1] sm:$0xf]
      %v376 = vld [vmem:[%s1 + $0x4] sm:$0xf]
      %v377 = vld [vmem:[%s1 + $0x8] sm:$0xf]
      %v378 = vld [vmem:[%s1 + $0xc] sm:$0xf]
      %v379 = vld [vmem:[%s1 + $0x10] sm:$0xf]
      %v380 = vld [vmem:[%s1 + $0x14] sm:$0xf]
      %v381 = vld [vmem:[%s1 + $0x18] sm:$0x1]
      %v382 = vld [vmem:[%s2] sm:$0x1]
      %v384 = vperm.slane %v382, 0
      %v586 = vunpack.c.l.b16 %v175
      %v587 = vunpack.c.l.b16 %v176
      %v588 = vunpack.c.l.b16 %v177
      %v589 = vunpack.c.l.b16 %v178
      %v590 = vunpack.c.l.b16 %v179
      %v591 = vunpack.c.l.b16 %v180
      %v592 = vunpack.c.l.b16 %v181
      %v593 = vunpack.c.l.b16 %v182
      %v594 = vunpack.c.l.b16 %v183
      %v595 = vunpack.c.l.b16 %v184
      %v596 = vunpack.c.l.b16 %v185
      %v597 = vunpack.c.l.b16 %v186
      %v598 = vunpack.c.l.b16 %v187
      %v599 = vunpack.c.l.b16 %v188
      %v600 = vunpack.c.l.b16 %v189
      %v601 = vunpack.c.l.b16 %v190
      %v602 = vunpack.c.l.b16 %v191
      %v603 = vunpack.c.l.b16 %v192
      %v604 = vunpack.c.l.b16 %v193
      %v605 = vunpack.c.l.b16 %v194
      %v606 = vunpack.c.l.b16 %v195
      %v607 = vunpack.c.l.b16 %v196
      %v608 = vunpack.c.l.b16 %v197
      %v609 = vunpack.c.l.b16 %v198
      %v610 = vunpack.c.l.b16 %v199
      %v611 = vunpack.c.l.b16 %v200
      %v612 = vunpack.c.l.b16 %v201
      %v613 = vunpack.c.l.b16 %v202
      %v614 = vunpack.c.l.b16 %v203
      %v615 = vunpack.c.l.b16 %v204
      %v616 = vunpack.c.l.b16 %v205
      %v617 = vunpack.c.l.b16 %v206
      %v618 = vunpack.c.l.b16 %v207
      %v619 = vunpack.c.l.b16 %v208
      %v620 = vunpack.c.l.b16 %v209
      %v621 = vunpack.c.l.b16 %v210
      %v622 = vunpack.c.l.b16 %v211
      %v623 = vunpack.c.l.b16 %v212
      %v624 = vunpack.c.l.b16 %v213
      %v625 = vunpack.c.l.b16 %v214
      %v626 = vunpack.c.l.b16 %v215
      %v627 = vunpack.c.l.b16 %v216
      %v628 = vunpack.c.l.b16 %v217
      %v629 = vunpack.c.l.b16 %v218
      %v630 = vunpack.c.l.b16 %v219
      %v631 = vunpack.c.l.b16 %v220
      %v632 = vunpack.c.l.b16 %v221
      %v633 = vunpack.c.l.b16 %v222
      %v634 = vunpack.c.l.b16 %v223
      %v635 = vunpack.c.l.b16 %v224
      %v636 = vunpack.c.l.b16 %v225
      %v637 = vunpack.c.l.b16 %v226
      %v638 = vunpack.c.l.b16 %v227
      %v639 = vunpack.c.l.b16 %v228
      %v640 = vunpack.c.l.b16 %v229
      %v641 = vunpack.c.l.b16 %v230
      %v642 = vunpack.c.l.b16 %v231
      %v643 = vunpack.c.l.b16 %v232
      %v644 = vunpack.c.l.b16 %v233
      %v645 = vunpack.c.l.b16 %v234
      %v646 = vunpack.c.l.b16 %v235
      %v647 = vunpack.c.l.b16 %v236
      %v648 = vunpack.c.l.b16 %v237
      %v649 = vunpack.c.l.b16 %v238
      %v650 = vunpack.c.l.b16 %v239
      %v651 = vunpack.c.l.b16 %v240
      %v652 = vunpack.c.l.b16 %v241
      %v653 = vunpack.c.l.b16 %v242
      %v654 = vunpack.c.l.b16 %v243
      %v655 = vunpack.c.l.b16 %v244
      %v656 = vunpack.c.l.b16 %v245
      %v657 = vunpack.c.l.b16 %v246
      %v658 = vunpack.c.l.b16 %v247
      %v659 = vunpack.c.l.b16 %v248
      %v660 = vunpack.c.l.b16 %v249
      %v661 = vunpack.c.l.b16 %v250
      %v662 = vunpack.c.l.b16 %v251
      %v663 = vunpack.c.l.b16 %v252
      %v664 = vunpack.c.l.b16 %v253
      %v665 = vunpack.c.l.b16 %v254
      %v666 = vunpack.c.l.b16 %v255
      %v667 = vunpack.c.l.b16 %v256
      %v668 = vunpack.c.l.b16 %v257
      %v669 = vunpack.c.l.b16 %v258
      %v670 = vunpack.c.l.b16 %v259
      %v671 = vunpack.c.l.b16 %v260
      %v672 = vunpack.c.l.b16 %v261
      %v673 = vunpack.c.l.b16 %v262
      %v674 = vunpack.c.l.b16 %v263
      %v675 = vunpack.c.l.b16 %v264
      %v676 = vunpack.c.l.b16 %v265
      %v677 = vunpack.c.l.b16 %v266
      %v678 = vunpack.c.l.b16 %v267
      %v679 = vunpack.c.l.b16 %v268
      %v680 = vunpack.c.l.b16 %v269
      %v681 = vunpack.c.l.b16 %v270
      %v682 = vunpack.c.l.b16 %v271
      %v683 = vunpack.c.l.b16 %v272
      %v684 = vunpack.c.l.b16 %v273
      %v685 = vunpack.c.l.b16 %v274
      %v686 = vunpack.c.l.b16 %v275
      %v687 = vunpack.c.l.b16 %v276
      %v688 = vunpack.c.l.b16 %v277
      %v689 = vunpack.c.l.b16 %v278
      %v690 = vunpack.c.l.b16 %v279
      %v691 = vunpack.c.l.b16 %v280
      %v692 = vunpack.c.l.b16 %v281
      %v693 = vunpack.c.l.b16 %v282
      %v694 = vunpack.c.l.b16 %v283
      %v695 = vunpack.c.l.b16 %v284
      %v696 = vunpack.c.l.b16 %v285
      %v697 = vunpack.c.l.b16 %v286
      %v698 = vunpack.c.l.b16 %v287
      %v699 = vunpack.c.l.b16 %v288
      %v700 = vunpack.c.l.b16 %v289
      %v701 = vunpack.c.l.b16 %v290
      %v702 = vunpack.c.l.b16 %v291
      %v703 = vunpack.c.l.b16 %v292
      %v704 = vunpack.c.l.b16 %v293
      %v705 = vunpack.c.l.b16 %v294
      %v706 = vunpack.c.l.b16 %v295
      %v707 = vunpack.c.l.b16 %v296
      %v708 = vunpack.c.l.b16 %v297
      %v709 = vunpack.c.l.b16 %v298
      %v710 = vunpack.c.l.b16 %v299
      %v711 = vunpack.c.l.b16 %v300
      %v712 = vunpack.c.l.b16 %v301
      %v713 = vunpack.c.l.b16 %v302
      %v714 = vunpack.c.l.b16 %v303
      %v715 = vunpack.c.l.b16 %v304
      %v716 = vunpack.c.l.b16 %v305
      %v717 = vunpack.c.l.b16 %v306
      %v718 = vunpack.c.l.b16 %v307
      %v719 = vunpack.c.l.b16 %v308
      %v720 = vunpack.c.l.b16 %v309
      %v721 = vunpack.c.l.b16 %v310
      %v722 = vunpack.c.l.b16 %v311
      %v723 = vunpack.c.l.b16 %v312
      %v724 = vunpack.c.l.b16 %v313
      %v725 = vunpack.c.l.b16 %v314
      %v726 = vunpack.c.l.b16 %v315
      %v727 = vunpack.c.l.b16 %v316
      %v728 = vunpack.c.l.b16 %v317
      %v729 = vunpack.c.l.b16 %v318
      %v730 = vunpack.c.l.b16 %v319
      %v731 = vunpack.c.l.b16 %v320
      %v732 = vunpack.c.l.b16 %v321
      %v733 = vunpack.c.l.b16 %v322
      %v734 = vunpack.c.l.b16 %v323
      %v735 = vunpack.c.l.b16 %v324
      %v736 = vunpack.c.l.b16 %v325
      %v737 = vunpack.c.l.b16 %v326
      %v738 = vunpack.c.l.b16 %v327
      %v739 = vunpack.c.l.b16 %v328
      %v740 = vunpack.c.l.b16 %v329
      %v741 = vunpack.c.l.b16 %v330
      %v742 = vunpack.c.l.b16 %v331
      %v743 = vunpack.c.l.b16 %v332
      %v744 = vunpack.c.l.b16 %v333
      %v745 = vunpack.c.l.b16 %v334
      %v746 = vunpack.c.l.b16 %v335
      %v747 = vunpack.c.l.b16 %v336
      %v748 = vunpack.c.l.b16 %v337
      %v749 = vunpack.c.l.b16 %v338
      %v750 = vunpack.c.l.b16 %v339
      %v751 = vunpack.c.l.b16 %v340
      %v752 = vunpack.c.l.b16 %v341
      %v753 = vunpack.c.l.b16 %v342
      %v754 = vunpack.c.l.b16 %v343
      %v755 = vunpack.c.l.b16 %v344
      %v756 = vunpack.c.l.b16 %v345
      %v757 = vunpack.c.l.b16 %v346
      %v758 = vunpack.c.l.b16 %v347
      %v759 = vunpack.c.l.b16 %v348
      %v760 = vunpack.c.l.b16 %v349
      %v761 = vunpack.c.l.b16 %v350
      %v762 = vunpack.c.l.b16 %v351
      %v763 = vunpack.c.l.b16 %v352
      %v764 = vunpack.c.l.b16 %v353
      %v765 = vunpack.c.l.b16 %v354
      %v766 = vunpack.c.l.b16 %v355
      %v767 = vunpack.c.l.b16 %v356
      %v768 = vunpack.c.l.b16 %v357
      %v769 = vunpack.c.l.b16 %v358
      %v770 = vunpack.c.l.b16 %v359
      %v771 = vunpack.c.l.b16 %v360
      %v772 = vunpack.c.l.b16 %v361
      %v773 = vunpack.c.l.b16 %v362
      %v774 = vunpack.c.l.b16 %v363
      %v775 = vunpack.c.l.b16 %v364
      %v776 = vunpack.c.l.b16 %v365
      %v777 = vunpack.c.l.b16 %v366
      %v778 = vunpack.c.l.b16 %v367
      %v779 = vunpack.c.l.b16 %v368
      %v780 = vunpack.c.l.b16 %v369
      %v781 = vunpack.c.l.b16 %v370
      %v782 = vunpack.c.l.b16 %v371
      %v783 = vunpack.c.l.b16 %v372
      %v784 = vunpack.c.l.b16 %v373
      %v785 = vunpack.c.l.b16 %v374
      %v786 = vpack.c.b16 %v587, %v586
      %v787 = vpack.c.b16 %v589, %v588
      %v788 = vpack.c.b16 %v591, %v590
      %v789 = vpack.c.b16 %v593, %v592
      %v790 = vpack.c.b16 %v595, %v594
      %v791 = vpack.c.b16 %v597, %v596
      %v792 = vpack.c.b16 %v599, %v598
      %v793 = vpack.c.b16 %v601, %v600
      %v794 = vpack.c.b16 %v603, %v602
      %v795 = vpack.c.b16 %v605, %v604
      %v796 = vpack.c.b16 %v607, %v606
      %v797 = vpack.c.b16 %v609, %v608
      %v798 = vpack.c.b16 %v611, %v610
      %v799 = vpack.c.b16 %v613, %v612
      %v800 = vpack.c.b16 %v615, %v614
      %v801 = vpack.c.b16 %v617, %v616
      %v802 = vpack.c.b16 %v619, %v618
      %v803 = vpack.c.b16 %v621, %v620
      %v804 = vpack.c.b16 %v623, %v622
      %v805 = vpack.c.b16 %v625, %v624
      %v806 = vpack.c.b16 %v627, %v626
      %v807 = vpack.c.b16 %v629, %v628
      %v808 = vpack.c.b16 %v631, %v630
      %v809 = vpack.c.b16 %v633, %v632
      %v810 = vpack.c.b16 %v635, %v634
      %v811 = vpack.c.b16 %v637, %v636
      %v812 = vpack.c.b16 %v639, %v638
      %v813 = vpack.c.b16 %v641, %v640
      %v814 = vpack.c.b16 %v643, %v642
      %v815 = vpack.c.b16 %v645, %v644
      %v816 = vpack.c.b16 %v647, %v646
      %v817 = vpack.c.b16 %v649, %v648
      %v818 = vpack.c.b16 %v651, %v650
      %v819 = vpack.c.b16 %v653, %v652
      %v820 = vpack.c.b16 %v655, %v654
      %v821 = vpack.c.b16 %v657, %v656
      %v822 = vpack.c.b16 %v659, %v658
      %v823 = vpack.c.b16 %v661, %v660
      %v824 = vpack.c.b16 %v663, %v662
      %v825 = vpack.c.b16 %v665, %v664
      %v826 = vpack.c.b16 %v667, %v666
      %v827 = vpack.c.b16 %v669, %v668
      %v828 = vpack.c.b16 %v671, %v670
      %v829 = vpack.c.b16 %v673, %v672
      %v830 = vpack.c.b16 %v675, %v674
      %v831 = vpack.c.b16 %v677, %v676
      %v832 = vpack.c.b16 %v679, %v678
      %v833 = vpack.c.b16 %v681, %v680
      %v834 = vpack.c.b16 %v683, %v682
      %v835 = vpack.c.b16 %v685, %v684
      %v836 = vpack.c.b16 %v687, %v686
      %v837 = vpack.c.b16 %v689, %v688
      %v838 = vpack.c.b16 %v691, %v690
      %v839 = vpack.c.b16 %v693, %v692
      %v840 = vpack.c.b16 %v695, %v694
      %v841 = vpack.c.b16 %v697, %v696
      %v842 = vpack.c.b16 %v699, %v698
      %v843 = vpack.c.b16 %v701, %v700
      %v844 = vpack.c.b16 %v703, %v702
      %v845 = vpack.c.b16 %v705, %v704
      %v846 = vpack.c.b16 %v707, %v706
      %v847 = vpack.c.b16 %v709, %v708
      %v848 = vpack.c.b16 %v711, %v710
      %v849 = vpack.c.b16 %v713, %v712
      %v850 = vpack.c.b16 %v715, %v714
      %v851 = vpack.c.b16 %v717, %v716
      %v852 = vpack.c.b16 %v719, %v718
      %v853 = vpack.c.b16 %v721, %v720
      %v854 = vpack.c.b16 %v723, %v722
      %v855 = vpack.c.b16 %v725, %v724
      %v856 = vpack.c.b16 %v727, %v726
      %v857 = vpack.c.b16 %v729, %v728
      %v858 = vpack.c.b16 %v731, %v730
      %v859 = vpack.c.b16 %v733, %v732
      %v860 = vpack.c.b16 %v735, %v734
      %v861 = vpack.c.b16 %v737, %v736
      %v862 = vpack.c.b16 %v739, %v738
      %v863 = vpack.c.b16 %v741, %v740
      %v864 = vpack.c.b16 %v743, %v742
      %v865 = vpack.c.b16 %v745, %v744
      %v866 = vpack.c.b16 %v747, %v746
      %v867 = vpack.c.b16 %v749, %v748
      %v868 = vpack.c.b16 %v751, %v750
      %v869 = vpack.c.b16 %v753, %v752
      %v870 = vpack.c.b16 %v755, %v754
      %v871 = vpack.c.b16 %v757, %v756
      %v872 = vpack.c.b16 %v759, %v758
      %v873 = vpack.c.b16 %v761, %v760
      %v874 = vpack.c.b16 %v763, %v762
      %v875 = vpack.c.b16 %v765, %v764
      %v876 = vpack.c.b16 %v767, %v766
      %v877 = vpack.c.b16 %v769, %v768
      %v878 = vpack.c.b16 %v771, %v770
      %v879 = vpack.c.b16 %v773, %v772
      %v880 = vpack.c.b16 %v775, %v774
      %v881 = vpack.c.b16 %v777, %v776
      %v882 = vpack.c.b16 %v779, %v778
      %v883 = vpack.c.b16 %v781, %v780
      %v884 = vpack.c.b16 %v783, %v782
      %v885 = vpack.c.b16 %v785, %v784
      %v893 = vunpack.c.l.b16 %v375
      %v894 = vunpack.c.l.b16 %v376
      %v895 = vunpack.c.l.b16 %v377
      %v896 = vunpack.c.l.b16 %v378
      %v897 = vunpack.c.l.b16 %v379
      %v898 = vunpack.c.l.b16 %v380
      %v899 = vunpack.c.l.b16 %v381
      %v900 = vpack.c.b16 %v894, %v893
      %v901 = vpack.c.b16 %v896, %v895
      %v902 = vpack.c.b16 %v898, %v897
      %v903 = vpack.c.b16 %v899, %v899
      %vm907 = vcmask 400384
      %v909 = vsel %vm907, %v786, 0
      %v912 = vsel %vm907, %v787, 0
      %v915 = vsel %vm907, %v788, 0
      %v918 = vsel %vm907, %v789, 0
      %v921 = vsel %vm907, %v790, 0
      %v924 = vsel %vm907, %v791, 0
      %v927 = vsel %vm907, %v792, 0
      %v930 = vsel %vm907, %v793, 0
      %v933 = vsel %vm907, %v794, 0
      %v936 = vsel %vm907, %v795, 0
      %v939 = vsel %vm907, %v796, 0
      %v942 = vsel %vm907, %v797, 0
      %v945 = vsel %vm907, %v798, 0
      %v948 = vsel %vm907, %v799, 0
      %v951 = vsel %vm907, %v800, 0
      %v954 = vsel %vm907, %v801, 0
      %v957 = vsel %vm907, %v802, 0
      %v960 = vsel %vm907, %v803, 0
      %v963 = vsel %vm907, %v804, 0
      %v966 = vsel %vm907, %v805, 0
      %v969 = vsel %vm907, %v806, 0
      %v972 = vsel %vm907, %v807, 0
      %v975 = vsel %vm907, %v808, 0
      %v978 = vsel %vm907, %v809, 0
      %v981 = vsel %vm907, %v810, 0
      %v984 = vsel %vm907, %v811, 0
      %v987 = vsel %vm907, %v812, 0
      %v990 = vsel %vm907, %v813, 0
      %v993 = vsel %vm907, %v814, 0
      %v996 = vsel %vm907, %v815, 0
      %v999 = vsel %vm907, %v816, 0
      %v1002 = vsel %vm907, %v817, 0
      %v1005 = vsel %vm907, %v818, 0
      %v1008 = vsel %vm907, %v819, 0
      %v1011 = vsel %vm907, %v820, 0
      %v1014 = vsel %vm907, %v821, 0
      %v1017 = vsel %vm907, %v822, 0
      %v1020 = vsel %vm907, %v823, 0
      %v1023 = vsel %vm907, %v824, 0
      %v1026 = vsel %vm907, %v825, 0
      %v1029 = vsel %vm907, %v826, 0
      %v1032 = vsel %vm907, %v827, 0
      %v1035 = vsel %vm907, %v828, 0
      %v1038 = vsel %vm907, %v829, 0
      %v1041 = vsel %vm907, %v830, 0
      %v1044 = vsel %vm907, %v831, 0
      %v1047 = vsel %vm907, %v832, 0
      %v1050 = vsel %vm907, %v833, 0
      %v1053 = vsel %vm907, %v834, 0
      %v1056 = vsel %vm907, %v835, 0
      %v1059 = vsel %vm907, %v836, 0
      %v1062 = vsel %vm907, %v837, 0
      %v1065 = vsel %vm907, %v838, 0
      %v1068 = vsel %vm907, %v839, 0
      %v1071 = vsel %vm907, %v840, 0
      %v1074 = vsel %vm907, %v841, 0
      %v1077 = vsel %vm907, %v842, 0
      %v1080 = vsel %vm907, %v843, 0
      %v1083 = vsel %vm907, %v844, 0
      %v1086 = vsel %vm907, %v845, 0
      %v1089 = vsel %vm907, %v846, 0
      %v1092 = vsel %vm907, %v847, 0
      %v1095 = vsel %vm907, %v848, 0
      %v1098 = vsel %vm907, %v849, 0
      %v1101 = vsel %vm907, %v850, 0
      %v1104 = vsel %vm907, %v851, 0
      %v1107 = vsel %vm907, %v852, 0
      %v1110 = vsel %vm907, %v853, 0
      %v1113 = vsel %vm907, %v854, 0
      %v1116 = vsel %vm907, %v855, 0
      %v1119 = vsel %vm907, %v856, 0
      %v1122 = vsel %vm907, %v857, 0
      %v1125 = vsel %vm907, %v858, 0
      %v1128 = vsel %vm907, %v859, 0
      %v1131 = vsel %vm907, %v860, 0
      %v1134 = vsel %vm907, %v861, 0
      %v1137 = vsel %vm907, %v862, 0
      %v1140 = vsel %vm907, %v863, 0
      %v1143 = vsel %vm907, %v864, 0
      %v1146 = vsel %vm907, %v865, 0
      %v1149 = vsel %vm907, %v866, 0
      %v1152 = vsel %vm907, %v867, 0
      %v1155 = vsel %vm907, %v868, 0
      %v1158 = vsel %vm907, %v869, 0
      %v1161 = vsel %vm907, %v870, 0
      %v1164 = vsel %vm907, %v871, 0
      %v1167 = vsel %vm907, %v872, 0
      %v1170 = vsel %vm907, %v873, 0
      %v1173 = vsel %vm907, %v874, 0
      %v1176 = vsel %vm907, %v875, 0
      %v1179 = vsel %vm907, %v876, 0
      %v1182 = vsel %vm907, %v877, 0
      %v1185 = vsel %vm907, %v878, 0
      %v1188 = vsel %vm907, %v879, 0
      %v1191 = vsel %vm907, %v880, 0
      %v1194 = vsel %vm907, %v881, 0
      %v1197 = vsel %vm907, %v882, 0
      %v1200 = vsel %vm907, %v883, 0
      %v1203 = vsel %vm907, %v884, 0
      %v1206 = vsel %vm907, %v885, 0
      %vm1208 = vcmask 1040384
      %v1209 = vsel 0, 4294967295, 65535
      %v1210 = vsel %vm1208, %v1209, 0
      %v1212 = vand.u32 %v903, %v1210
      %1214 = vmatpush.bf16.msra.mxu0 0
      %1215 = vmatpush.bf16.msra.mxu0 0
      %1216 = vmatpush.bf16.msra.mxu0 0
      %1217 = vmatpush.bf16.msra.mxu0 0
      %1218 = vmatpush.bf16.msra.mxu0 %v1212
      %1219 = vmatpush.bf16.msra.mxu0 %v902
      %1220 = vmatpush.bf16.msra.mxu0 %v901
      %1221 = vmatpush.bf16.msra.mxu0 %v900
      %1222 = vmatmul.bf16.gmra.mxu0 %v909
      %v1223 = vpop.f32.mrf.mxu0
      %v1224 = vadd.f32 %v384, %v1223
      %v1225 = vpop.f32.mrf.mxu0
      %v1226 = vadd.f32 %v384, %v1225
      %1227 = vmatmul.bf16.gmra.mxu0 %v912
      %v1228 = vpop.f32.mrf.mxu0
      %v1229 = vadd.f32 %v384, %v1228
      %v1230 = vpop.f32.mrf.mxu0
      %v1231 = vadd.f32 %v384, %v1230
      %1232 = vmatmul.bf16.gmra.mxu0 %v915
      %v1233 = vpop.f32.mrf.mxu0
      %v1234 = vadd.f32 %v384, %v1233
      %v1235 = vpop.f32.mrf.mxu0
      %v1236 = vadd.f32 %v384, %v1235
      %1237 = vmatmul.bf16.gmra.mxu0 %v918
      %v1238 = vpop.f32.mrf.mxu0
      %v1239 = vadd.f32 %v384, %v1238
      %v1240 = vpop.f32.mrf.mxu0
      %v1241 = vadd.f32 %v384, %v1240
      %1242 = vmatmul.bf16.gmra.mxu0 %v921
      %v1243 = vpop.f32.mrf.mxu0
      %v1244 = vadd.f32 %v384, %v1243
      %v1245 = vpop.f32.mrf.mxu0
      %v1246 = vadd.f32 %v384, %v1245
      %1247 = vmatmul.bf16.gmra.mxu0 %v924
      %v1248 = vpop.f32.mrf.mxu0
      %v1249 = vadd.f32 %v384, %v1248
      %v1250 = vpop.f32.mrf.mxu0
      %v1251 = vadd.f32 %v384, %v1250
      %1252 = vmatmul.bf16.gmra.mxu0 %v927
      %v1253 = vpop.f32.mrf.mxu0
      %v1254 = vadd.f32 %v384, %v1253
      %v1255 = vpop.f32.mrf.mxu0
      %v1256 = vadd.f32 %v384, %v1255
      %1257 = vmatmul.bf16.gmra.mxu0 %v930
      %v1258 = vpop.f32.mrf.mxu0
      %v1259 = vadd.f32 %v384, %v1258
      %v1260 = vpop.f32.mrf.mxu0
      %v1261 = vadd.f32 %v384, %v1260
      %1262 = vmatmul.bf16.gmra.mxu0 %v933
      %v1263 = vpop.f32.mrf.mxu0
      %v1264 = vadd.f32 %v384, %v1263
      %v1265 = vpop.f32.mrf.mxu0
      %v1266 = vadd.f32 %v384, %v1265
      %1267 = vmatmul.bf16.gmra.mxu0 %v936
      %v1268 = vpop.f32.mrf.mxu0
      %v1269 = vadd.f32 %v384, %v1268
      %v1270 = vpop.f32.mrf.mxu0
      %v1271 = vadd.f32 %v384, %v1270
      %1272 = vmatmul.bf16.gmra.mxu0 %v939
      %v1273 = vpop.f32.mrf.mxu0
      %v1274 = vadd.f32 %v384, %v1273
      %v1275 = vpop.f32.mrf.mxu0
      %v1276 = vadd.f32 %v384, %v1275
      %1277 = vmatmul.bf16.gmra.mxu0 %v942
      %v1278 = vpop.f32.mrf.mxu0
      %v1279 = vadd.f32 %v384, %v1278
      %v1280 = vpop.f32.mrf.mxu0
      %v1281 = vadd.f32 %v384, %v1280
      %1282 = vmatmul.bf16.gmra.mxu0 %v945
      %v1283 = vpop.f32.mrf.mxu0
      %v1284 = vadd.f32 %v384, %v1283
      %v1285 = vpop.f32.mrf.mxu0
      %v1286 = vadd.f32 %v384, %v1285
      %1287 = vmatmul.bf16.gmra.mxu0 %v948
      %v1288 = vpop.f32.mrf.mxu0
      %v1289 = vadd.f32 %v384, %v1288
      %v1290 = vpop.f32.mrf.mxu0
      %v1291 = vadd.f32 %v384, %v1290
      %1292 = vmatmul.bf16.gmra.mxu0 %v951
      %v1293 = vpop.f32.mrf.mxu0
      %v1294 = vadd.f32 %v384, %v1293
      %v1295 = vpop.f32.mrf.mxu0
      %v1296 = vadd.f32 %v384, %v1295
      %1297 = vmatmul.bf16.gmra.mxu0 %v954
      %v1298 = vpop.f32.mrf.mxu0
      %v1299 = vadd.f32 %v384, %v1298
      %v1300 = vpop.f32.mrf.mxu0
      %v1301 = vadd.f32 %v384, %v1300
      %1302 = vmatmul.bf16.gmra.mxu0 %v957
      %v1303 = vpop.f32.mrf.mxu0
      %v1304 = vadd.f32 %v384, %v1303
      %v1305 = vpop.f32.mrf.mxu0
      %v1306 = vadd.f32 %v384, %v1305
      %1307 = vmatmul.bf16.gmra.mxu0 %v960
      %v1308 = vpop.f32.mrf.mxu0
      %v1309 = vadd.f32 %v384, %v1308
      %v1310 = vpop.f32.mrf.mxu0
      %v1311 = vadd.f32 %v384, %v1310
      %1312 = vmatmul.bf16.gmra.mxu0 %v963
      %v1313 = vpop.f32.mrf.mxu0
      %v1314 = vadd.f32 %v384, %v1313
      %v1315 = vpop.f32.mrf.mxu0
      %v1316 = vadd.f32 %v384, %v1315
      %1317 = vmatmul.bf16.gmra.mxu0 %v966
      %v1318 = vpop.f32.mrf.mxu0
      %v1319 = vadd.f32 %v384, %v1318
      %v1320 = vpop.f32.mrf.mxu0
      %v1321 = vadd.f32 %v384, %v1320
      %1322 = vmatmul.bf16.gmra.mxu0 %v969
      %v1323 = vpop.f32.mrf.mxu0
      %v1324 = vadd.f32 %v384, %v1323
      %v1325 = vpop.f32.mrf.mxu0
      %v1326 = vadd.f32 %v384, %v1325
      %1327 = vmatmul.bf16.gmra.mxu0 %v972
      %v1328 = vpop.f32.mrf.mxu0
      %v1329 = vadd.f32 %v384, %v1328
      %v1330 = vpop.f32.mrf.mxu0
      %v1331 = vadd.f32 %v384, %v1330
      %1332 = vmatmul.bf16.gmra.mxu0 %v975
      %v1333 = vpop.f32.mrf.mxu0
      %v1334 = vadd.f32 %v384, %v1333
      %v1335 = vpop.f32.mrf.mxu0
      %v1336 = vadd.f32 %v384, %v1335
      %1337 = vmatmul.bf16.gmra.mxu0 %v978
      %v1338 = vpop.f32.mrf.mxu0
      %v1339 = vadd.f32 %v384, %v1338
      %v1340 = vpop.f32.mrf.mxu0
      %v1341 = vadd.f32 %v384, %v1340
      %1342 = vmatmul.bf16.gmra.mxu0 %v981
      %v1343 = vpop.f32.mrf.mxu0
      %v1344 = vadd.f32 %v384, %v1343
      %v1345 = vpop.f32.mrf.mxu0
      %v1346 = vadd.f32 %v384, %v1345
      %1347 = vmatmul.bf16.gmra.mxu0 %v984
      %v1348 = vpop.f32.mrf.mxu0
      %v1349 = vadd.f32 %v384, %v1348
      %v1350 = vpop.f32.mrf.mxu0
      %v1351 = vadd.f32 %v384, %v1350
      %1352 = vmatmul.bf16.gmra.mxu0 %v987
      %v1353 = vpop.f32.mrf.mxu0
      %v1354 = vadd.f32 %v384, %v1353
      %v1355 = vpop.f32.mrf.mxu0
      %v1356 = vadd.f32 %v384, %v1355
      %1357 = vmatmul.bf16.gmra.mxu0 %v990
      %v1358 = vpop.f32.mrf.mxu0
      %v1359 = vadd.f32 %v384, %v1358
      %v1360 = vpop.f32.mrf.mxu0
      %v1361 = vadd.f32 %v384, %v1360
      %1362 = vmatmul.bf16.gmra.mxu0 %v993
      %v1363 = vpop.f32.mrf.mxu0
      %v1364 = vadd.f32 %v384, %v1363
      %v1365 = vpop.f32.mrf.mxu0
      %v1366 = vadd.f32 %v384, %v1365
      %1367 = vmatmul.bf16.gmra.mxu0 %v996
      %v1368 = vpop.f32.mrf.mxu0
      %v1369 = vadd.f32 %v384, %v1368
      %v1370 = vpop.f32.mrf.mxu0
      %v1371 = vadd.f32 %v384, %v1370
      %1372 = vmatmul.bf16.gmra.mxu0 %v999
      %v1373 = vpop.f32.mrf.mxu0
      %v1374 = vadd.f32 %v384, %v1373
      %v1375 = vpop.f32.mrf.mxu0
      %v1376 = vadd.f32 %v384, %v1375
      %1377 = vmatmul.bf16.gmra.mxu0 %v1002
      %v1378 = vpop.f32.mrf.mxu0
      %v1379 = vadd.f32 %v384, %v1378
      %v1380 = vpop.f32.mrf.mxu0
      %v1381 = vadd.f32 %v384, %v1380
      %1382 = vmatmul.bf16.gmra.mxu0 %v1005
      %v1383 = vpop.f32.mrf.mxu0
      %v1384 = vadd.f32 %v384, %v1383
      %v1385 = vpop.f32.mrf.mxu0
      %v1386 = vadd.f32 %v384, %v1385
      %1387 = vmatmul.bf16.gmra.mxu0 %v1008
      %v1388 = vpop.f32.mrf.mxu0
      %v1389 = vadd.f32 %v384, %v1388
      %v1390 = vpop.f32.mrf.mxu0
      %v1391 = vadd.f32 %v384, %v1390
      %1392 = vmatmul.bf16.gmra.mxu0 %v1011
      %v1393 = vpop.f32.mrf.mxu0
      %v1394 = vadd.f32 %v384, %v1393
      %v1395 = vpop.f32.mrf.mxu0
      %v1396 = vadd.f32 %v384, %v1395
      %1397 = vmatmul.bf16.gmra.mxu0 %v1014
      %v1398 = vpop.f32.mrf.mxu0
      %v1399 = vadd.f32 %v384, %v1398
      %v1400 = vpop.f32.mrf.mxu0
      %v1401 = vadd.f32 %v384, %v1400
      %1402 = vmatmul.bf16.gmra.mxu0 %v1017
      %v1403 = vpop.f32.mrf.mxu0
      %v1404 = vadd.f32 %v384, %v1403
      %v1405 = vpop.f32.mrf.mxu0
      %v1406 = vadd.f32 %v384, %v1405
      %1407 = vmatmul.bf16.gmra.mxu0 %v1020
      %v1408 = vpop.f32.mrf.mxu0
      %v1409 = vadd.f32 %v384, %v1408
      %v1410 = vpop.f32.mrf.mxu0
      %v1411 = vadd.f32 %v384, %v1410
      %1412 = vmatmul.bf16.gmra.mxu0 %v1023
      %v1413 = vpop.f32.mrf.mxu0
      %v1414 = vadd.f32 %v384, %v1413
      %v1415 = vpop.f32.mrf.mxu0
      %v1416 = vadd.f32 %v384, %v1415
      %1417 = vmatmul.bf16.gmra.mxu0 %v1026
      %v1418 = vpop.f32.mrf.mxu0
      %v1419 = vadd.f32 %v384, %v1418
      %v1420 = vpop.f32.mrf.mxu0
      %v1421 = vadd.f32 %v384, %v1420
      %1422 = vmatmul.bf16.gmra.mxu0 %v1029
      %v1423 = vpop.f32.mrf.mxu0
      %v1424 = vadd.f32 %v384, %v1423
      %v1425 = vpop.f32.mrf.mxu0
      %v1426 = vadd.f32 %v384, %v1425
      %1427 = vmatmul.bf16.gmra.mxu0 %v1032
      %v1428 = vpop.f32.mrf.mxu0
      %v1429 = vadd.f32 %v384, %v1428
      %v1430 = vpop.f32.mrf.mxu0
      %v1431 = vadd.f32 %v384, %v1430
      %1432 = vmatmul.bf16.gmra.mxu0 %v1035
      %v1433 = vpop.f32.mrf.mxu0
      %v1434 = vadd.f32 %v384, %v1433
      %v1435 = vpop.f32.mrf.mxu0
      %v1436 = vadd.f32 %v384, %v1435
      %1437 = vmatmul.bf16.gmra.mxu0 %v1038
      %v1438 = vpop.f32.mrf.mxu0
      %v1439 = vadd.f32 %v384, %v1438
      %v1440 = vpop.f32.mrf.mxu0
      %v1441 = vadd.f32 %v384, %v1440
      %1442 = vmatmul.bf16.gmra.mxu0 %v1041
      %v1443 = vpop.f32.mrf.mxu0
      %v1444 = vadd.f32 %v384, %v1443
      %v1445 = vpop.f32.mrf.mxu0
      %v1446 = vadd.f32 %v384, %v1445
      %1447 = vmatmul.bf16.gmra.mxu0 %v1044
      %v1448 = vpop.f32.mrf.mxu0
      %v1449 = vadd.f32 %v384, %v1448
      %v1450 = vpop.f32.mrf.mxu0
      %v1451 = vadd.f32 %v384, %v1450
      %1452 = vmatmul.bf16.gmra.mxu0 %v1047
      %v1453 = vpop.f32.mrf.mxu0
      %v1454 = vadd.f32 %v384, %v1453
      %v1455 = vpop.f32.mrf.mxu0
      %v1456 = vadd.f32 %v384, %v1455
      %1457 = vmatmul.bf16.gmra.mxu0 %v1050
      %v1458 = vpop.f32.mrf.mxu0
      %v1459 = vadd.f32 %v384, %v1458
      %v1460 = vpop.f32.mrf.mxu0
      %v1461 = vadd.f32 %v384, %v1460
      %1462 = vmatmul.bf16.gmra.mxu0 %v1053
      %v1463 = vpop.f32.mrf.mxu0
      %v1464 = vadd.f32 %v384, %v1463
      %v1465 = vpop.f32.mrf.mxu0
      %v1466 = vadd.f32 %v384, %v1465
      %1467 = vmatmul.bf16.gmra.mxu0 %v1056
      %v1468 = vpop.f32.mrf.mxu0
      %v1469 = vadd.f32 %v384, %v1468
      %v1470 = vpop.f32.mrf.mxu0
      %v1471 = vadd.f32 %v384, %v1470
      %1472 = vmatmul.bf16.gmra.mxu0 %v1059
      %v1473 = vpop.f32.mrf.mxu0
      %v1474 = vadd.f32 %v384, %v1473
      %v1475 = vpop.f32.mrf.mxu0
      %v1476 = vadd.f32 %v384, %v1475
      %1477 = vmatmul.bf16.gmra.mxu0 %v1062
      %v1478 = vpop.f32.mrf.mxu0
      %v1479 = vadd.f32 %v384, %v1478
      %v1480 = vpop.f32.mrf.mxu0
      %v1481 = vadd.f32 %v384, %v1480
      %1482 = vmatmul.bf16.gmra.mxu0 %v1065
      %v1483 = vpop.f32.mrf.mxu0
      %v1484 = vadd.f32 %v384, %v1483
      %v1485 = vpop.f32.mrf.mxu0
      %v1486 = vadd.f32 %v384, %v1485
      %1487 = vmatmul.bf16.gmra.mxu0 %v1068
      %v1488 = vpop.f32.mrf.mxu0
      %v1489 = vadd.f32 %v384, %v1488
      %v1490 = vpop.f32.mrf.mxu0
      %v1491 = vadd.f32 %v384, %v1490
      %1492 = vmatmul.bf16.gmra.mxu0 %v1071
      %v1493 = vpop.f32.mrf.mxu0
      %v1494 = vadd.f32 %v384, %v1493
      %v1495 = vpop.f32.mrf.mxu0
      %v1496 = vadd.f32 %v384, %v1495
      %1497 = vmatmul.bf16.gmra.mxu0 %v1074
      %v1498 = vpop.f32.mrf.mxu0
      %v1499 = vadd.f32 %v384, %v1498
      %v1500 = vpop.f32.mrf.mxu0
      %v1501 = vadd.f32 %v384, %v1500
      %1502 = vmatmul.bf16.gmra.mxu0 %v1077
      %v1503 = vpop.f32.mrf.mxu0
      %v1504 = vadd.f32 %v384, %v1503
      %v1505 = vpop.f32.mrf.mxu0
      %v1506 = vadd.f32 %v384, %v1505
      %1507 = vmatmul.bf16.gmra.mxu0 %v1080
      %v1508 = vpop.f32.mrf.mxu0
      %v1509 = vadd.f32 %v384, %v1508
      %v1510 = vpop.f32.mrf.mxu0
      %v1511 = vadd.f32 %v384, %v1510
      %1512 = vmatmul.bf16.gmra.mxu0 %v1083
      %v1513 = vpop.f32.mrf.mxu0
      %v1514 = vadd.f32 %v384, %v1513
      %v1515 = vpop.f32.mrf.mxu0
      %v1516 = vadd.f32 %v384, %v1515
      %1517 = vmatmul.bf16.gmra.mxu0 %v1086
      %v1518 = vpop.f32.mrf.mxu0
      %v1519 = vadd.f32 %v384, %v1518
      %v1520 = vpop.f32.mrf.mxu0
      %v1521 = vadd.f32 %v384, %v1520
      %1522 = vmatmul.bf16.gmra.mxu0 %v1089
      %v1523 = vpop.f32.mrf.mxu0
      %v1524 = vadd.f32 %v384, %v1523
      %v1525 = vpop.f32.mrf.mxu0
      %v1526 = vadd.f32 %v384, %v1525
      %1527 = vmatmul.bf16.gmra.mxu0 %v1092
      %v1528 = vpop.f32.mrf.mxu0
      %v1529 = vadd.f32 %v384, %v1528
      %v1530 = vpop.f32.mrf.mxu0
      %v1531 = vadd.f32 %v384, %v1530
      %1532 = vmatmul.bf16.gmra.mxu0 %v1095
      %v1533 = vpop.f32.mrf.mxu0
      %v1534 = vadd.f32 %v384, %v1533
      %v1535 = vpop.f32.mrf.mxu0
      %v1536 = vadd.f32 %v384, %v1535
      %1537 = vmatmul.bf16.gmra.mxu0 %v1098
      %v1538 = vpop.f32.mrf.mxu0
      %v1539 = vadd.f32 %v384, %v1538
      %v1540 = vpop.f32.mrf.mxu0
      %v1541 = vadd.f32 %v384, %v1540
      %1542 = vmatmul.bf16.gmra.mxu0 %v1101
      %v1543 = vpop.f32.mrf.mxu0
      %v1544 = vadd.f32 %v384, %v1543
      %v1545 = vpop.f32.mrf.mxu0
      %v1546 = vadd.f32 %v384, %v1545
      %1547 = vmatmul.bf16.gmra.mxu0 %v1104
      %v1548 = vpop.f32.mrf.mxu0
      %v1549 = vadd.f32 %v384, %v1548
      %v1550 = vpop.f32.mrf.mxu0
      %v1551 = vadd.f32 %v384, %v1550
      %1552 = vmatmul.bf16.gmra.mxu0 %v1107
      %v1553 = vpop.f32.mrf.mxu0
      %v1554 = vadd.f32 %v384, %v1553
      %v1555 = vpop.f32.mrf.mxu0
      %v1556 = vadd.f32 %v384, %v1555
      %1557 = vmatmul.bf16.gmra.mxu0 %v1110
      %v1558 = vpop.f32.mrf.mxu0
      %v1559 = vadd.f32 %v384, %v1558
      %v1560 = vpop.f32.mrf.mxu0
      %v1561 = vadd.f32 %v384, %v1560
      %1562 = vmatmul.bf16.gmra.mxu0 %v1113
      %v1563 = vpop.f32.mrf.mxu0
      %v1564 = vadd.f32 %v384, %v1563
      %v1565 = vpop.f32.mrf.mxu0
      %v1566 = vadd.f32 %v384, %v1565
      %1567 = vmatmul.bf16.gmra.mxu0 %v1116
      %v1568 = vpop.f32.mrf.mxu0
      %v1569 = vadd.f32 %v384, %v1568
      %v1570 = vpop.f32.mrf.mxu0
      %v1571 = vadd.f32 %v384, %v1570
      %1572 = vmatmul.bf16.gmra.mxu0 %v1119
      %v1573 = vpop.f32.mrf.mxu0
      %v1574 = vadd.f32 %v384, %v1573
      %v1575 = vpop.f32.mrf.mxu0
      %v1576 = vadd.f32 %v384, %v1575
      %1577 = vmatmul.bf16.gmra.mxu0 %v1122
      %v1578 = vpop.f32.mrf.mxu0
      %v1579 = vadd.f32 %v384, %v1578
      %v1580 = vpop.f32.mrf.mxu0
      %v1581 = vadd.f32 %v384, %v1580
      %1582 = vmatmul.bf16.gmra.mxu0 %v1125
      %v1583 = vpop.f32.mrf.mxu0
      %v1584 = vadd.f32 %v384, %v1583
      %v1585 = vpop.f32.mrf.mxu0
      %v1586 = vadd.f32 %v384, %v1585
      %1587 = vmatmul.bf16.gmra.mxu0 %v1128
      %v1588 = vpop.f32.mrf.mxu0
      %v1589 = vadd.f32 %v384, %v1588
      %v1590 = vpop.f32.mrf.mxu0
      %v1591 = vadd.f32 %v384, %v1590
      %1592 = vmatmul.bf16.gmra.mxu0 %v1131
      %v1593 = vpop.f32.mrf.mxu0
      %v1594 = vadd.f32 %v384, %v1593
      %v1595 = vpop.f32.mrf.mxu0
      %v1596 = vadd.f32 %v384, %v1595
      %1597 = vmatmul.bf16.gmra.mxu0 %v1134
      %v1598 = vpop.f32.mrf.mxu0
      %v1599 = vadd.f32 %v384, %v1598
      %v1600 = vpop.f32.mrf.mxu0
      %v1601 = vadd.f32 %v384, %v1600
      %1602 = vmatmul.bf16.gmra.mxu0 %v1137
      %v1603 = vpop.f32.mrf.mxu0
      %v1604 = vadd.f32 %v384, %v1603
      %v1605 = vpop.f32.mrf.mxu0
      %v1606 = vadd.f32 %v384, %v1605
      %1607 = vmatmul.bf16.gmra.mxu0 %v1140
      %v1608 = vpop.f32.mrf.mxu0
      %v1609 = vadd.f32 %v384, %v1608
      %v1610 = vpop.f32.mrf.mxu0
      %v1611 = vadd.f32 %v384, %v1610
      %1612 = vmatmul.bf16.gmra.mxu0 %v1143
      %v1613 = vpop.f32.mrf.mxu0
      %v1614 = vadd.f32 %v384, %v1613
      %v1615 = vpop.f32.mrf.mxu0
      %v1616 = vadd.f32 %v384, %v1615
      %1617 = vmatmul.bf16.gmra.mxu0 %v1146
      %v1618 = vpop.f32.mrf.mxu0
      %v1619 = vadd.f32 %v384, %v1618
      %v1620 = vpop.f32.mrf.mxu0
      %v1621 = vadd.f32 %v384, %v1620
      %1622 = vmatmul.bf16.gmra.mxu0 %v1149
      %v1623 = vpop.f32.mrf.mxu0
      %v1624 = vadd.f32 %v384, %v1623
      %v1625 = vpop.f32.mrf.mxu0
      %v1626 = vadd.f32 %v384, %v1625
      %1627 = vmatmul.bf16.gmra.mxu0 %v1152
      %v1628 = vpop.f32.mrf.mxu0
      %v1629 = vadd.f32 %v384, %v1628
      %v1630 = vpop.f32.mrf.mxu0
      %v1631 = vadd.f32 %v384, %v1630
      %1632 = vmatmul.bf16.gmra.mxu0 %v1155
      %v1633 = vpop.f32.mrf.mxu0
      %v1634 = vadd.f32 %v384, %v1633
      %v1635 = vpop.f32.mrf.mxu0
      %v1636 = vadd.f32 %v384, %v1635
      %1637 = vmatmul.bf16.gmra.mxu0 %v1158
      %v1638 = vpop.f32.mrf.mxu0
      %v1639 = vadd.f32 %v384, %v1638
      %v1640 = vpop.f32.mrf.mxu0
      %v1641 = vadd.f32 %v384, %v1640
      %1642 = vmatmul.bf16.gmra.mxu0 %v1161
      %v1643 = vpop.f32.mrf.mxu0
      %v1644 = vadd.f32 %v384, %v1643
      %v1645 = vpop.f32.mrf.mxu0
      %v1646 = vadd.f32 %v384, %v1645
      %1647 = vmatmul.bf16.gmra.mxu0 %v1164
      %v1648 = vpop.f32.mrf.mxu0
      %v1649 = vadd.f32 %v384, %v1648
      %v1650 = vpop.f32.mrf.mxu0
      %v1651 = vadd.f32 %v384, %v1650
      %1652 = vmatmul.bf16.gmra.mxu0 %v1167
      %v1653 = vpop.f32.mrf.mxu0
      %v1654 = vadd.f32 %v384, %v1653
      %v1655 = vpop.f32.mrf.mxu0
      %v1656 = vadd.f32 %v384, %v1655
      %1657 = vmatmul.bf16.gmra.mxu0 %v1170
      %v1658 = vpop.f32.mrf.mxu0
      %v1659 = vadd.f32 %v384, %v1658
      %v1660 = vpop.f32.mrf.mxu0
      %v1661 = vadd.f32 %v384, %v1660
      %1662 = vmatmul.bf16.gmra.mxu0 %v1173
      %v1663 = vpop.f32.mrf.mxu0
      %v1664 = vadd.f32 %v384, %v1663
      %v1665 = vpop.f32.mrf.mxu0
      %v1666 = vadd.f32 %v384, %v1665
      %1667 = vmatmul.bf16.gmra.mxu0 %v1176
      %v1668 = vpop.f32.mrf.mxu0
      %v1669 = vadd.f32 %v384, %v1668
      %v1670 = vpop.f32.mrf.mxu0
      %v1671 = vadd.f32 %v384, %v1670
      %1672 = vmatmul.bf16.gmra.mxu0 %v1179
      %v1673 = vpop.f32.mrf.mxu0
      %v1674 = vadd.f32 %v384, %v1673
      %v1675 = vpop.f32.mrf.mxu0
      %v1676 = vadd.f32 %v384, %v1675
      %1677 = vmatmul.bf16.gmra.mxu0 %v1182
      %v1678 = vpop.f32.mrf.mxu0
      %v1679 = vadd.f32 %v384, %v1678
      %v1680 = vpop.f32.mrf.mxu0
      %v1681 = vadd.f32 %v384, %v1680
      %1682 = vmatmul.bf16.gmra.mxu0 %v1185
      %v1683 = vpop.f32.mrf.mxu0
      %v1684 = vadd.f32 %v384, %v1683
      %v1685 = vpop.f32.mrf.mxu0
      %v1686 = vadd.f32 %v384, %v1685
      %1687 = vmatmul.bf16.gmra.mxu0 %v1188
      %v1688 = vpop.f32.mrf.mxu0
      %v1689 = vadd.f32 %v384, %v1688
      %v1690 = vpop.f32.mrf.mxu0
      %v1691 = vadd.f32 %v384, %v1690
      %1692 = vmatmul.bf16.gmra.mxu0 %v1191
      %v1693 = vpop.f32.mrf.mxu0
      %v1694 = vadd.f32 %v384, %v1693
      %v1695 = vpop.f32.mrf.mxu0
      %v1696 = vadd.f32 %v384, %v1695
      %1697 = vmatmul.bf16.gmra.mxu0 %v1194
      %v1698 = vpop.f32.mrf.mxu0
      %v1699 = vadd.f32 %v384, %v1698
      %v1700 = vpop.f32.mrf.mxu0
      %v1701 = vadd.f32 %v384, %v1700
      %1702 = vmatmul.bf16.gmra.mxu0 %v1197
      %v1703 = vpop.f32.mrf.mxu0
      %v1704 = vadd.f32 %v384, %v1703
      %v1705 = vpop.f32.mrf.mxu0
      %v1706 = vadd.f32 %v384, %v1705
      %1707 = vmatmul.bf16.gmra.mxu0 %v1200
      %v1708 = vpop.f32.mrf.mxu0
      %v1709 = vadd.f32 %v384, %v1708
      %v1710 = vpop.f32.mrf.mxu0
      %v1711 = vadd.f32 %v384, %v1710
      %1712 = vmatmul.bf16.gmra.mxu0 %v1203
      %v1713 = vpop.f32.mrf.mxu0
      %v1714 = vadd.f32 %v384, %v1713
      %v1715 = vpop.f32.mrf.mxu0
      %v1716 = vadd.f32 %v384, %v1715
      %1717 = vmatmul.bf16.gmra.mxu0 %v1206
      %v1718 = vpop.f32.mrf.mxu0
      %v1719 = vadd.f32 %v384, %v1718
      %v1720 = vpop.f32.mrf.mxu0
      %v1721 = vadd.f32 %v384, %v1720
      %1722 = vdwg.mxu0
      %v1723 = vmax.f32 %v1224, 0.0
      %v1724 = vmax.f32 %v1226, 0.0
      %v1725 = vmax.f32 %v1229, 0.0
      %v1726 = vmax.f32 %v1231, 0.0
      %v1727 = vmax.f32 %v1234, 0.0
      %v1728 = vmax.f32 %v1236, 0.0
      %v1729 = vmax.f32 %v1239, 0.0
      %v1730 = vmax.f32 %v1241, 0.0
      %v1731 = vmax.f32 %v1244, 0.0
      %v1732 = vmax.f32 %v1246, 0.0
      %v1733 = vmax.f32 %v1249, 0.0
      %v1734 = vmax.f32 %v1251, 0.0
      %v1735 = vmax.f32 %v1254, 0.0
      %v1736 = vmax.f32 %v1256, 0.0
      %v1737 = vmax.f32 %v1259, 0.0
      %v1738 = vmax.f32 %v1261, 0.0
      %v1739 = vmax.f32 %v1264, 0.0
      %v1740 = vmax.f32 %v1266, 0.0
      %v1741 = vmax.f32 %v1269, 0.0
      %v1742 = vmax.f32 %v1271, 0.0
      %v1743 = vmax.f32 %v1274, 0.0
      %v1744 = vmax.f32 %v1276, 0.0
      %v1745 = vmax.f32 %v1279, 0.0
      %v1746 = vmax.f32 %v1281, 0.0
      %v1747 = vmax.f32 %v1284, 0.0
      %v1748 = vmax.f32 %v1286, 0.0
      %v1749 = vmax.f32 %v1289, 0.0
      %v1750 = vmax.f32 %v1291, 0.0
      %v1751 = vmax.f32 %v1294, 0.0
      %v1752 = vmax.f32 %v1296, 0.0
      %v1753 = vmax.f32 %v1299, 0.0
      %v1754 = vmax.f32 %v1301, 0.0
      %v1755 = vmax.f32 %v1304, 0.0
      %v1756 = vmax.f32 %v1306, 0.0
      %v1757 = vmax.f32 %v1309, 0.0
      %v1758 = vmax.f32 %v1311, 0.0
      %v1759 = vmax.f32 %v1314, 0.0
      %v1760 = vmax.f32 %v1316, 0.0
      %v1761 = vmax.f32 %v1319, 0.0
      %v1762 = vmax.f32 %v1321, 0.0
      %v1763 = vmax.f32 %v1324, 0.0
      %v1764 = vmax.f32 %v1326, 0.0
      %v1765 = vmax.f32 %v1329, 0.0
      %v1766 = vmax.f32 %v1331, 0.0
      %v1767 = vmax.f32 %v1334, 0.0
      %v1768 = vmax.f32 %v1336, 0.0
      %v1769 = vmax.f32 %v1339, 0.0
      %v1770 = vmax.f32 %v1341, 0.0
      %v1771 = vmax.f32 %v1344, 0.0
      %v1772 = vmax.f32 %v1346, 0.0
      %v1773 = vmax.f32 %v1349, 0.0
      %v1774 = vmax.f32 %v1351, 0.0
      %v1775 = vmax.f32 %v1354, 0.0
      %v1776 = vmax.f32 %v1356, 0.0
      %v1777 = vmax.f32 %v1359, 0.0
      %v1778 = vmax.f32 %v1361, 0.0
      %v1779 = vmax.f32 %v1364, 0.0
      %v1780 = vmax.f32 %v1366, 0.0
      %v1781 = vmax.f32 %v1369, 0.0
      %v1782 = vmax.f32 %v1371, 0.0
      %v1783 = vmax.f32 %v1374, 0.0
      %v1784 = vmax.f32 %v1376, 0.0
      %v1785 = vmax.f32 %v1379, 0.0
      %v1786 = vmax.f32 %v1381, 0.0
      %v1787 = vmax.f32 %v1384, 0.0
      %v1788 = vmax.f32 %v1386, 0.0
      %v1789 = vmax.f32 %v1389, 0.0
      %v1790 = vmax.f32 %v1391, 0.0
      %v1791 = vmax.f32 %v1394, 0.0
      %v1792 = vmax.f32 %v1396, 0.0
      %v1793 = vmax.f32 %v1399, 0.0
      %v1794 = vmax.f32 %v1401, 0.0
      %v1795 = vmax.f32 %v1404, 0.0
      %v1796 = vmax.f32 %v1406, 0.0
      %v1797 = vmax.f32 %v1409, 0.0
      %v1798 = vmax.f32 %v1411, 0.0
      %v1799 = vmax.f32 %v1414, 0.0
      %v1800 = vmax.f32 %v1416, 0.0
      %v1801 = vmax.f32 %v1419, 0.0
      %v1802 = vmax.f32 %v1421, 0.0
      %v1803 = vmax.f32 %v1424, 0.0
      %v1804 = vmax.f32 %v1426, 0.0
      %v1805 = vmax.f32 %v1429, 0.0
      %v1806 = vmax.f32 %v1431, 0.0
      %v1807 = vmax.f32 %v1434, 0.0
      %v1808 = vmax.f32 %v1436, 0.0
      %v1809 = vmax.f32 %v1439, 0.0
      %v1810 = vmax.f32 %v1441, 0.0
      %v1811 = vmax.f32 %v1444, 0.0
      %v1812 = vmax.f32 %v1446, 0.0
      %v1813 = vmax.f32 %v1449, 0.0
      %v1814 = vmax.f32 %v1451, 0.0
      %v1815 = vmax.f32 %v1454, 0.0
      %v1816 = vmax.f32 %v1456, 0.0
      %v1817 = vmax.f32 %v1459, 0.0
      %v1818 = vmax.f32 %v1461, 0.0
      %v1819 = vmax.f32 %v1464, 0.0
      %v1820 = vmax.f32 %v1466, 0.0
      %v1821 = vmax.f32 %v1469, 0.0
      %v1822 = vmax.f32 %v1471, 0.0
      %v1823 = vmax.f32 %v1474, 0.0
      %v1824 = vmax.f32 %v1476, 0.0
      %v1825 = vmax.f32 %v1479, 0.0
      %v1826 = vmax.f32 %v1481, 0.0
      %v1827 = vmax.f32 %v1484, 0.0
      %v1828 = vmax.f32 %v1486, 0.0
      %v1829 = vmax.f32 %v1489, 0.0
      %v1830 = vmax.f32 %v1491, 0.0
      %v1831 = vmax.f32 %v1494, 0.0
      %v1832 = vmax.f32 %v1496, 0.0
      %v1833 = vmax.f32 %v1499, 0.0
      %v1834 = vmax.f32 %v1501, 0.0
      %v1835 = vmax.f32 %v1504, 0.0
      %v1836 = vmax.f32 %v1506, 0.0
      %v1837 = vmax.f32 %v1509, 0.0
      %v1838 = vmax.f32 %v1511, 0.0
      %v1839 = vmax.f32 %v1514, 0.0
      %v1840 = vmax.f32 %v1516, 0.0
      %v1841 = vmax.f32 %v1519, 0.0
      %v1842 = vmax.f32 %v1521, 0.0
      %v1843 = vmax.f32 %v1524, 0.0
      %v1844 = vmax.f32 %v1526, 0.0
      %v1845 = vmax.f32 %v1529, 0.0
      %v1846 = vmax.f32 %v1531, 0.0
      %v1847 = vmax.f32 %v1534, 0.0
      %v1848 = vmax.f32 %v1536, 0.0
      %v1849 = vmax.f32 %v1539, 0.0
      %v1850 = vmax.f32 %v1541, 0.0
      %v1851 = vmax.f32 %v1544, 0.0
      %v1852 = vmax.f32 %v1546, 0.0
      %v1853 = vmax.f32 %v1549, 0.0
      %v1854 = vmax.f32 %v1551, 0.0
      %v1855 = vmax.f32 %v1554, 0.0
      %v1856 = vmax.f32 %v1556, 0.0
      %v1857 = vmax.f32 %v1559, 0.0
      %v1858 = vmax.f32 %v1561, 0.0
      %v1859 = vmax.f32 %v1564, 0.0
      %v1860 = vmax.f32 %v1566, 0.0
      %v1861 = vmax.f32 %v1569, 0.0
      %v1862 = vmax.f32 %v1571, 0.0
      %v1863 = vmax.f32 %v1574, 0.0
      %v1864 = vmax.f32 %v1576, 0.0
      %v1865 = vmax.f32 %v1579, 0.0
      %v1866 = vmax.f32 %v1581, 0.0
      %v1867 = vmax.f32 %v1584, 0.0
      %v1868 = vmax.f32 %v1586, 0.0
      %v1869 = vmax.f32 %v1589, 0.0
      %v1870 = vmax.f32 %v1591, 0.0
      %v1871 = vmax.f32 %v1594, 0.0
      %v1872 = vmax.f32 %v1596, 0.0
      %v1873 = vmax.f32 %v1599, 0.0
      %v1874 = vmax.f32 %v1601, 0.0
      %v1875 = vmax.f32 %v1604, 0.0
      %v1876 = vmax.f32 %v1606, 0.0
      %v1877 = vmax.f32 %v1609, 0.0
      %v1878 = vmax.f32 %v1611, 0.0
      %v1879 = vmax.f32 %v1614, 0.0
      %v1880 = vmax.f32 %v1616, 0.0
      %v1881 = vmax.f32 %v1619, 0.0
      %v1882 = vmax.f32 %v1621, 0.0
      %v1883 = vmax.f32 %v1624, 0.0
      %v1884 = vmax.f32 %v1626, 0.0
      %v1885 = vmax.f32 %v1629, 0.0
      %v1886 = vmax.f32 %v1631, 0.0
      %v1887 = vmax.f32 %v1634, 0.0
      %v1888 = vmax.f32 %v1636, 0.0
      %v1889 = vmax.f32 %v1639, 0.0
      %v1890 = vmax.f32 %v1641, 0.0
      %v1891 = vmax.f32 %v1644, 0.0
      %v1892 = vmax.f32 %v1646, 0.0
      %v1893 = vmax.f32 %v1649, 0.0
      %v1894 = vmax.f32 %v1651, 0.0
      %v1895 = vmax.f32 %v1654, 0.0
      %v1896 = vmax.f32 %v1656, 0.0
      %v1897 = vmax.f32 %v1659, 0.0
      %v1898 = vmax.f32 %v1661, 0.0
      %v1899 = vmax.f32 %v1664, 0.0
      %v1900 = vmax.f32 %v1666, 0.0
      %v1901 = vmax.f32 %v1669, 0.0
      %v1902 = vmax.f32 %v1671, 0.0
      %v1903 = vmax.f32 %v1674, 0.0
      %v1904 = vmax.f32 %v1676, 0.0
      %v1905 = vmax.f32 %v1679, 0.0
      %v1906 = vmax.f32 %v1681, 0.0
      %v1907 = vmax.f32 %v1684, 0.0
      %v1908 = vmax.f32 %v1686, 0.0
      %v1909 = vmax.f32 %v1689, 0.0
      %v1910 = vmax.f32 %v1691, 0.0
      %v1911 = vmax.f32 %v1694, 0.0
      %v1912 = vmax.f32 %v1696, 0.0
      %v1913 = vmax.f32 %v1699, 0.0
      %v1914 = vmax.f32 %v1701, 0.0
      %v1915 = vmax.f32 %v1704, 0.0
      %v1916 = vmax.f32 %v1706, 0.0
      %v1917 = vmax.f32 %v1709, 0.0
      %v1918 = vmax.f32 %v1711, 0.0
      %v1919 = vmax.f32 %v1714, 0.0
      %v1920 = vmax.f32 %v1716, 0.0
      %v1921 = vmax.f32 %v1719, 0.0
      %v1922 = vmax.f32 %v1721, 0.0
      %v1923 = vpack.c.bf16 %v1723, %v1723
      %v1924 = vpack.c.bf16 %v1724, %v1724
      %v1925 = vpack.c.bf16 %v1725, %v1725
      %v1926 = vpack.c.bf16 %v1726, %v1726
      %v1927 = vpack.c.bf16 %v1727, %v1727
      %v1928 = vpack.c.bf16 %v1728, %v1728
      %v1929 = vpack.c.bf16 %v1729, %v1729
      %v1930 = vpack.c.bf16 %v1730, %v1730
      %v1931 = vpack.c.bf16 %v1731, %v1731
      %v1932 = vpack.c.bf16 %v1732, %v1732
      %v1933 = vpack.c.bf16 %v1733, %v1733
      %v1934 = vpack.c.bf16 %v1734, %v1734
      %v1935 = vpack.c.bf16 %v1735, %v1735
      %v1936 = vpack.c.bf16 %v1736, %v1736
      %v1937 = vpack.c.bf16 %v1737, %v1737
      %v1938 = vpack.c.bf16 %v1738, %v1738
      %v1939 = vpack.c.bf16 %v1739, %v1739
      %v1940 = vpack.c.bf16 %v1740, %v1740
      %v1941 = vpack.c.bf16 %v1741, %v1741
      %v1942 = vpack.c.bf16 %v1742, %v1742
      %v1943 = vpack.c.bf16 %v1743, %v1743
      %v1944 = vpack.c.bf16 %v1744, %v1744
      %v1945 = vpack.c.bf16 %v1745, %v1745
      %v1946 = vpack.c.bf16 %v1746, %v1746
      %v1947 = vpack.c.bf16 %v1747, %v1747
      %v1948 = vpack.c.bf16 %v1748, %v1748
      %v1949 = vpack.c.bf16 %v1749, %v1749
      %v1950 = vpack.c.bf16 %v1750, %v1750
      %v1951 = vpack.c.bf16 %v1751, %v1751
      %v1952 = vpack.c.bf16 %v1752, %v1752
      %v1953 = vpack.c.bf16 %v1753, %v1753
      %v1954 = vpack.c.bf16 %v1754, %v1754
      %v1955 = vpack.c.bf16 %v1755, %v1755
      %v1956 = vpack.c.bf16 %v1756, %v1756
      %v1957 = vpack.c.bf16 %v1757, %v1757
      %v1958 = vpack.c.bf16 %v1758, %v1758
      %v1959 = vpack.c.bf16 %v1759, %v1759
      %v1960 = vpack.c.bf16 %v1760, %v1760
      %v1961 = vpack.c.bf16 %v1761, %v1761
      %v1962 = vpack.c.bf16 %v1762, %v1762
      %v1963 = vpack.c.bf16 %v1763, %v1763
      %v1964 = vpack.c.bf16 %v1764, %v1764
      %v1965 = vpack.c.bf16 %v1765, %v1765
      %v1966 = vpack.c.bf16 %v1766, %v1766
      %v1967 = vpack.c.bf16 %v1767, %v1767
      %v1968 = vpack.c.bf16 %v1768, %v1768
      %v1969 = vpack.c.bf16 %v1769, %v1769
      %v1970 = vpack.c.bf16 %v1770, %v1770
      %v1971 = vpack.c.bf16 %v1771, %v1771
      %v1972 = vpack.c.bf16 %v1772, %v1772
      %v1973 = vpack.c.bf16 %v1773, %v1773
      %v1974 = vpack.c.bf16 %v1774, %v1774
      %v1975 = vpack.c.bf16 %v1775, %v1775
      %v1976 = vpack.c.bf16 %v1776, %v1776
      %v1977 = vpack.c.bf16 %v1777, %v1777
      %v1978 = vpack.c.bf16 %v1778, %v1778
      %v1979 = vpack.c.bf16 %v1779, %v1779
      %v1980 = vpack.c.bf16 %v1780, %v1780
      %v1981 = vpack.c.bf16 %v1781, %v1781
      %v1982 = vpack.c.bf16 %v1782, %v1782
      %v1983 = vpack.c.bf16 %v1783, %v1783
      %v1984 = vpack.c.bf16 %v1784, %v1784
      %v1985 = vpack.c.bf16 %v1785, %v1785
      %v1986 = vpack.c.bf16 %v1786, %v1786
      %v1987 = vpack.c.bf16 %v1787, %v1787
      %v1988 = vpack.c.bf16 %v1788, %v1788
      %v1989 = vpack.c.bf16 %v1789, %v1789
      %v1990 = vpack.c.bf16 %v1790, %v1790
      %v1991 = vpack.c.bf16 %v1791, %v1791
      %v1992 = vpack.c.bf16 %v1792, %v1792
      %v1993 = vpack.c.bf16 %v1793, %v1793
      %v1994 = vpack.c.bf16 %v1794, %v1794
      %v1995 = vpack.c.bf16 %v1795, %v1795
      %v1996 = vpack.c.bf16 %v1796, %v1796
      %v1997 = vpack.c.bf16 %v1797, %v1797
      %v1998 = vpack.c.bf16 %v1798, %v1798
      %v1999 = vpack.c.bf16 %v1799, %v1799
      %v2000 = vpack.c.bf16 %v1800, %v1800
      %v2001 = vpack.c.bf16 %v1801, %v1801
      %v2002 = vpack.c.bf16 %v1802, %v1802
      %v2003 = vpack.c.bf16 %v1803, %v1803
      %v2004 = vpack.c.bf16 %v1804, %v1804
      %v2005 = vpack.c.bf16 %v1805, %v1805
      %v2006 = vpack.c.bf16 %v1806, %v1806
      %v2007 = vpack.c.bf16 %v1807, %v1807
      %v2008 = vpack.c.bf16 %v1808, %v1808
      %v2009 = vpack.c.bf16 %v1809, %v1809
      %v2010 = vpack.c.bf16 %v1810, %v1810
      %v2011 = vpack.c.bf16 %v1811, %v1811
      %v2012 = vpack.c.bf16 %v1812, %v1812
      %v2013 = vpack.c.bf16 %v1813, %v1813
      %v2014 = vpack.c.bf16 %v1814, %v1814
      %v2015 = vpack.c.bf16 %v1815, %v1815
      %v2016 = vpack.c.bf16 %v1816, %v1816
      %v2017 = vpack.c.bf16 %v1817, %v1817
      %v2018 = vpack.c.bf16 %v1818, %v1818
      %v2019 = vpack.c.bf16 %v1819, %v1819
      %v2020 = vpack.c.bf16 %v1820, %v1820
      %v2021 = vpack.c.bf16 %v1821, %v1821
      %v2022 = vpack.c.bf16 %v1822, %v1822
      %v2023 = vpack.c.bf16 %v1823, %v1823
      %v2024 = vpack.c.bf16 %v1824, %v1824
      %v2025 = vpack.c.bf16 %v1825, %v1825
      %v2026 = vpack.c.bf16 %v1826, %v1826
      %v2027 = vpack.c.bf16 %v1827, %v1827
      %v2028 = vpack.c.bf16 %v1828, %v1828
      %v2029 = vpack.c.bf16 %v1829, %v1829
      %v2030 = vpack.c.bf16 %v1830, %v1830
      %v2031 = vpack.c.bf16 %v1831, %v1831
      %v2032 = vpack.c.bf16 %v1832, %v1832
      %v2033 = vpack.c.bf16 %v1833, %v1833
      %v2034 = vpack.c.bf16 %v1834, %v1834
      %v2035 = vpack.c.bf16 %v1835, %v1835
      %v2036 = vpack.c.bf16 %v1836, %v1836
      %v2037 = vpack.c.bf16 %v1837, %v1837
      %v2038 = vpack.c.bf16 %v1838, %v1838
      %v2039 = vpack.c.bf16 %v1839, %v1839
      %v2040 = vpack.c.bf16 %v1840, %v1840
      %v2041 = vpack.c.bf16 %v1841, %v1841
      %v2042 = vpack.c.bf16 %v1842, %v1842
      %v2043 = vpack.c.bf16 %v1843, %v1843
      %v2044 = vpack.c.bf16 %v1844, %v1844
      %v2045 = vpack.c.bf16 %v1845, %v1845
      %v2046 = vpack.c.bf16 %v1846, %v1846
      %v2047 = vpack.c.bf16 %v1847, %v1847
      %v2048 = vpack.c.bf16 %v1848, %v1848
      %v2049 = vpack.c.bf16 %v1849, %v1849
      %v2050 = vpack.c.bf16 %v1850, %v1850
      %v2051 = vpack.c.bf16 %v1851, %v1851
      %v2052 = vpack.c.bf16 %v1852, %v1852
      %v2053 = vpack.c.bf16 %v1853, %v1853
      %v2054 = vpack.c.bf16 %v1854, %v1854
      %v2055 = vpack.c.bf16 %v1855, %v1855
      %v2056 = vpack.c.bf16 %v1856, %v1856
      %v2057 = vpack.c.bf16 %v1857, %v1857
      %v2058 = vpack.c.bf16 %v1858, %v1858
      %v2059 = vpack.c.bf16 %v1859, %v1859
      %v2060 = vpack.c.bf16 %v1860, %v1860
      %v2061 = vpack.c.bf16 %v1861, %v1861
      %v2062 = vpack.c.bf16 %v1862, %v1862
      %v2063 = vpack.c.bf16 %v1863, %v1863
      %v2064 = vpack.c.bf16 %v1864, %v1864
      %v2065 = vpack.c.bf16 %v1865, %v1865
      %v2066 = vpack.c.bf16 %v1866, %v1866
      %v2067 = vpack.c.bf16 %v1867, %v1867
      %v2068 = vpack.c.bf16 %v1868, %v1868
      %v2069 = vpack.c.bf16 %v1869, %v1869
      %v2070 = vpack.c.bf16 %v1870, %v1870
      %v2071 = vpack.c.bf16 %v1871, %v1871
      %v2072 = vpack.c.bf16 %v1872, %v1872
      %v2073 = vpack.c.bf16 %v1873, %v1873
      %v2074 = vpack.c.bf16 %v1874, %v1874
      %v2075 = vpack.c.bf16 %v1875, %v1875
      %v2076 = vpack.c.bf16 %v1876, %v1876
      %v2077 = vpack.c.bf16 %v1877, %v1877
      %v2078 = vpack.c.bf16 %v1878, %v1878
      %v2079 = vpack.c.bf16 %v1879, %v1879
      %v2080 = vpack.c.bf16 %v1880, %v1880
      %v2081 = vpack.c.bf16 %v1881, %v1881
      %v2082 = vpack.c.bf16 %v1882, %v1882
      %v2083 = vpack.c.bf16 %v1883, %v1883
      %v2084 = vpack.c.bf16 %v1884, %v1884
      %v2085 = vpack.c.bf16 %v1885, %v1885
      %v2086 = vpack.c.bf16 %v1886, %v1886
      %v2087 = vpack.c.bf16 %v1887, %v1887
      %v2088 = vpack.c.bf16 %v1888, %v1888
      %v2089 = vpack.c.bf16 %v1889, %v1889
      %v2090 = vpack.c.bf16 %v1890, %v1890
      %v2091 = vpack.c.bf16 %v1891, %v1891
      %v2092 = vpack.c.bf16 %v1892, %v1892
      %v2093 = vpack.c.bf16 %v1893, %v1893
      %v2094 = vpack.c.bf16 %v1894, %v1894
      %v2095 = vpack.c.bf16 %v1895, %v1895
      %v2096 = vpack.c.bf16 %v1896, %v1896
      %v2097 = vpack.c.bf16 %v1897, %v1897
      %v2098 = vpack.c.bf16 %v1898, %v1898
      %v2099 = vpack.c.bf16 %v1899, %v1899
      %v2100 = vpack.c.bf16 %v1900, %v1900
      %v2101 = vpack.c.bf16 %v1901, %v1901
      %v2102 = vpack.c.bf16 %v1902, %v1902
      %v2103 = vpack.c.bf16 %v1903, %v1903
      %v2104 = vpack.c.bf16 %v1904, %v1904
      %v2105 = vpack.c.bf16 %v1905, %v1905
      %v2106 = vpack.c.bf16 %v1906, %v1906
      %v2107 = vpack.c.bf16 %v1907, %v1907
      %v2108 = vpack.c.bf16 %v1908, %v1908
      %v2109 = vpack.c.bf16 %v1909, %v1909
      %v2110 = vpack.c.bf16 %v1910, %v1910
      %v2111 = vpack.c.bf16 %v1911, %v1911
      %v2112 = vpack.c.bf16 %v1912, %v1912
      %v2113 = vpack.c.bf16 %v1913, %v1913
      %v2114 = vpack.c.bf16 %v1914, %v1914
      %v2115 = vpack.c.bf16 %v1915, %v1915
      %v2116 = vpack.c.bf16 %v1916, %v1916
      %v2117 = vpack.c.bf16 %v1917, %v1917
      %v2118 = vpack.c.bf16 %v1918, %v1918
      %v2119 = vpack.c.bf16 %v1919, %v1919
      %v2120 = vpack.c.bf16 %v1920, %v1920
      %v2121 = vpack.c.bf16 %v1921, %v1921
      %v2122 = vpack.c.bf16 %v1922, %v1922
      %vm2123 = vcmask 125952
      %2124 = vst.msk [vmem:[%s172] sm:$0xf] %vm2123, %v1923
      %2125 = vst.msk [vmem:[%s172 + $0x4] sm:$0xf] %vm2123, %v1924
      %2126 = vst.msk [vmem:[%s172 + $0x8] sm:$0xf] %vm2123, %v1925
      %2127 = vst.msk [vmem:[%s172 + $0xc] sm:$0xf] %vm2123, %v1926
      %2128 = vst.msk [vmem:[%s172 + $0x10] sm:$0xf] %vm2123, %v1927
      %2129 = vst.msk [vmem:[%s172 + $0x14] sm:$0xf] %vm2123, %v1928
      %2130 = vst.msk [vmem:[%s172 + $0x18] sm:$0xf] %vm2123, %v1929
      %2131 = vst.msk [vmem:[%s172 + $0x1c] sm:$0xf] %vm2123, %v1930
      %2132 = vst.msk [vmem:[%s172 + $0x20] sm:$0xf] %vm2123, %v1931
      %2133 = vst.msk [vmem:[%s172 + $0x24] sm:$0xf] %vm2123, %v1932
      %2134 = vst.msk [vmem:[%s172 + $0x28] sm:$0xf] %vm2123, %v1933
      %2135 = vst.msk [vmem:[%s172 + $0x2c] sm:$0xf] %vm2123, %v1934
      %2136 = vst.msk [vmem:[%s172 + $0x30] sm:$0xf] %vm2123, %v1935
      %2137 = vst.msk [vmem:[%s172 + $0x34] sm:$0xf] %vm2123, %v1936
      %2138 = vst.msk [vmem:[%s172 + $0x38] sm:$0xf] %vm2123, %v1937
      %2139 = vst.msk [vmem:[%s172 + $0x3c] sm:$0xf] %vm2123, %v1938
      %2140 = vst.msk [vmem:[%s172 + $0x40] sm:$0xf] %vm2123, %v1939
      %2141 = vst.msk [vmem:[%s172 + $0x44] sm:$0xf] %vm2123, %v1940
      %2142 = vst.msk [vmem:[%s172 + $0x48] sm:$0xf] %vm2123, %v1941
      %2143 = vst.msk [vmem:[%s172 + $0x4c] sm:$0xf] %vm2123, %v1942
      %2144 = vst.msk [vmem:[%s172 + $0x50] sm:$0xf] %vm2123, %v1943
      %2145 = vst.msk [vmem:[%s172 + $0x54] sm:$0xf] %vm2123, %v1944
      %2146 = vst.msk [vmem:[%s172 + $0x58] sm:$0xf] %vm2123, %v1945
      %2147 = vst.msk [vmem:[%s172 + $0x5c] sm:$0xf] %vm2123, %v1946
      %2148 = vst.msk [vmem:[%s172 + $0x60] sm:$0xf] %vm2123, %v1947
      %2149 = vst.msk [vmem:[%s172 + $0x64] sm:$0xf] %vm2123, %v1948
      %2150 = vst.msk [vmem:[%s172 + $0x68] sm:$0xf] %vm2123, %v1949
      %2151 = vst.msk [vmem:[%s172 + $0x6c] sm:$0xf] %vm2123, %v1950
      %2152 = vst.msk [vmem:[%s172 + $0x70] sm:$0xf] %vm2123, %v1951
      %2153 = vst.msk [vmem:[%s172 + $0x74] sm:$0xf] %vm2123, %v1952
      %2154 = vst.msk [vmem:[%s172 + $0x78] sm:$0xf] %vm2123, %v1953
      %2155 = vst.msk [vmem:[%s172 + $0x7c] sm:$0xf] %vm2123, %v1954
      %2156 = vst.msk [vmem:[%s172 + $0x80] sm:$0xf] %vm2123, %v1955
      %2157 = vst.msk [vmem:[%s172 + $0x84] sm:$0xf] %vm2123, %v1956
      %2158 = vst.msk [vmem:[%s172 + $0x88] sm:$0xf] %vm2123, %v1957
      %2159 = vst.msk [vmem:[%s172 + $0x8c] sm:$0xf] %vm2123, %v1958
      %2160 = vst.msk [vmem:[%s172 + $0x90] sm:$0xf] %vm2123, %v1959
      %2161 = vst.msk [vmem:[%s172 + $0x94] sm:$0xf] %vm2123, %v1960
      %2162 = vst.msk [vmem:[%s172 + $0x98] sm:$0xf] %vm2123, %v1961
      %2163 = vst.msk [vmem:[%s172 + $0x9c] sm:$0xf] %vm2123, %v1962
      %2164 = vst.msk [vmem:[%s172 + $0xa0] sm:$0xf] %vm2123, %v1963
      %2165 = vst.msk [vmem:[%s172 + $0xa4] sm:$0xf] %vm2123, %v1964
      %2166 = vst.msk [vmem:[%s172 + $0xa8] sm:$0xf] %vm2123, %v1965
      %2167 = vst.msk [vmem:[%s172 + $0xac] sm:$0xf] %vm2123, %v1966
      %2168 = vst.msk [vmem:[%s172 + $0xb0] sm:$0xf] %vm2123, %v1967
      %2169 = vst.msk [vmem:[%s172 + $0xb4] sm:$0xf] %vm2123, %v1968
      %2170 = vst.msk [vmem:[%s172 + $0xb8] sm:$0xf] %vm2123, %v1969
      %2171 = vst.msk [vmem:[%s172 + $0xbc] sm:$0xf] %vm2123, %v1970
      %2172 = vst.msk [vmem:[%s172 + $0xc0] sm:$0xf] %vm2123, %v1971
      %2173 = vst.msk [vmem:[%s172 + $0xc4] sm:$0xf] %vm2123, %v1972
      %2174 = vst.msk [vmem:[%s172 + $0xc8] sm:$0xf] %vm2123, %v1973
      %2175 = vst.msk [vmem:[%s172 + $0xcc] sm:$0xf] %vm2123, %v1974
      %2176 = vst.msk [vmem:[%s172 + $0xd0] sm:$0xf] %vm2123, %v1975
      %2177 = vst.msk [vmem:[%s172 + $0xd4] sm:$0xf] %vm2123, %v1976
      %2178 = vst.msk [vmem:[%s172 + $0xd8] sm:$0xf] %vm2123, %v1977
      %2179 = vst.msk [vmem:[%s172 + $0xdc] sm:$0xf] %vm2123, %v1978
      %2180 = vst.msk [vmem:[%s172 + $0xe0] sm:$0xf] %vm2123, %v1979
      %2181 = vst.msk [vmem:[%s172 + $0xe4] sm:$0xf] %vm2123, %v1980
      %2182 = vst.msk [vmem:[%s172 + $0xe8] sm:$0xf] %vm2123, %v1981
      %2183 = vst.msk [vmem:[%s172 + $0xec] sm:$0xf] %vm2123, %v1982
      %2184 = vst.msk [vmem:[%s172 + $0xf0] sm:$0xf] %vm2123, %v1983
      %2185 = vst.msk [vmem:[%s172 + $0xf4] sm:$0xf] %vm2123, %v1984
      %2186 = vst.msk [vmem:[%s172 + $0xf8] sm:$0xf] %vm2123, %v1985
      %2187 = vst.msk [vmem:[%s172 + $0xfc] sm:$0xf] %vm2123, %v1986
      %2188 = vst.msk [vmem:[%s172 + $0x100] sm:$0xf] %vm2123, %v1987
      %2189 = vst.msk [vmem:[%s172 + $0x104] sm:$0xf] %vm2123, %v1988
      %2190 = vst.msk [vmem:[%s172 + $0x108] sm:$0xf] %vm2123, %v1989
      %2191 = vst.msk [vmem:[%s172 + $0x10c] sm:$0xf] %vm2123, %v1990
      %2192 = vst.msk [vmem:[%s172 + $0x110] sm:$0xf] %vm2123, %v1991
      %2193 = vst.msk [vmem:[%s172 + $0x114] sm:$0xf] %vm2123, %v1992
      %2194 = vst.msk [vmem:[%s172 + $0x118] sm:$0xf] %vm2123, %v1993
      %2195 = vst.msk [vmem:[%s172 + $0x11c] sm:$0xf] %vm2123, %v1994
      %2196 = vst.msk [vmem:[%s172 + $0x120] sm:$0xf] %vm2123, %v1995
      %2197 = vst.msk [vmem:[%s172 + $0x124] sm:$0xf] %vm2123, %v1996
      %2198 = vst.msk [vmem:[%s172 + $0x128] sm:$0xf] %vm2123, %v1997
      %2199 = vst.msk [vmem:[%s172 + $0x12c] sm:$0xf] %vm2123, %v1998
      %2200 = vst.msk [vmem:[%s172 + $0x130] sm:$0xf] %vm2123, %v1999
      %2201 = vst.msk [vmem:[%s172 + $0x134] sm:$0xf] %vm2123, %v2000
      %2202 = vst.msk [vmem:[%s172 + $0x138] sm:$0xf] %vm2123, %v2001
      %2203 = vst.msk [vmem:[%s172 + $0x13c] sm:$0xf] %vm2123, %v2002
      %2204 = vst.msk [vmem:[%s172 + $0x140] sm:$0xf] %vm2123, %v2003
      %2205 = vst.msk [vmem:[%s172 + $0x144] sm:$0xf] %vm2123, %v2004
      %2206 = vst.msk [vmem:[%s172 + $0x148] sm:$0xf] %vm2123, %v2005
      %2207 = vst.msk [vmem:[%s172 + $0x14c] sm:$0xf] %vm2123, %v2006
      %2208 = vst.msk [vmem:[%s172 + $0x150] sm:$0xf] %vm2123, %v2007
      %2209 = vst.msk [vmem:[%s172 + $0x154] sm:$0xf] %vm2123, %v2008
      %2210 = vst.msk [vmem:[%s172 + $0x158] sm:$0xf] %vm2123, %v2009
      %2211 = vst.msk [vmem:[%s172 + $0x15c] sm:$0xf] %vm2123, %v2010
      %2212 = vst.msk [vmem:[%s172 + $0x160] sm:$0xf] %vm2123, %v2011
      %2213 = vst.msk [vmem:[%s172 + $0x164] sm:$0xf] %vm2123, %v2012
      %2214 = vst.msk [vmem:[%s172 + $0x168] sm:$0xf] %vm2123, %v2013
      %2215 = vst.msk [vmem:[%s172 + $0x16c] sm:$0xf] %vm2123, %v2014
      %2216 = vst.msk [vmem:[%s172 + $0x170] sm:$0xf] %vm2123, %v2015
      %2217 = vst.msk [vmem:[%s172 + $0x174] sm:$0xf] %vm2123, %v2016
      %2218 = vst.msk [vmem:[%s172 + $0x178] sm:$0xf] %vm2123, %v2017
      %2219 = vst.msk [vmem:[%s172 + $0x17c] sm:$0xf] %vm2123, %v2018
      %2220 = vst.msk [vmem:[%s172 + $0x180] sm:$0xf] %vm2123, %v2019
      %2221 = vst.msk [vmem:[%s172 + $0x184] sm:$0xf] %vm2123, %v2020
      %2222 = vst.msk [vmem:[%s172 + $0x188] sm:$0xf] %vm2123, %v2021
      %2223 = vst.msk [vmem:[%s172 + $0x18c] sm:$0xf] %vm2123, %v2022
      %2224 = vst.msk [vmem:[%s172 + $0x190] sm:$0xf] %vm2123, %v2023
      %2225 = vst.msk [vmem:[%s172 + $0x194] sm:$0xf] %vm2123, %v2024
      %2226 = vst.msk [vmem:[%s172 + $0x198] sm:$0xf] %vm2123, %v2025
      %2227 = vst.msk [vmem:[%s172 + $0x19c] sm:$0xf] %vm2123, %v2026
      %2228 = vst.msk [vmem:[%s172 + $0x1a0] sm:$0xf] %vm2123, %v2027
      %2229 = vst.msk [vmem:[%s172 + $0x1a4] sm:$0xf] %vm2123, %v2028
      %2230 = vst.msk [vmem:[%s172 + $0x1a8] sm:$0xf] %vm2123, %v2029
      %2231 = vst.msk [vmem:[%s172 + $0x1ac] sm:$0xf] %vm2123, %v2030
      %2232 = vst.msk [vmem:[%s172 + $0x1b0] sm:$0xf] %vm2123, %v2031
      %2233 = vst.msk [vmem:[%s172 + $0x1b4] sm:$0xf] %vm2123, %v2032
      %2234 = vst.msk [vmem:[%s172 + $0x1b8] sm:$0xf] %vm2123, %v2033
      %2235 = vst.msk [vmem:[%s172 + $0x1bc] sm:$0xf] %vm2123, %v2034
      %2236 = vst.msk [vmem:[%s172 + $0x1c0] sm:$0xf] %vm2123, %v2035
      %2237 = vst.msk [vmem:[%s172 + $0x1c4] sm:$0xf] %vm2123, %v2036
      %2238 = vst.msk [vmem:[%s172 + $0x1c8] sm:$0xf] %vm2123, %v2037
      %2239 = vst.msk [vmem:[%s172 + $0x1cc] sm:$0xf] %vm2123, %v2038
      %2240 = vst.msk [vmem:[%s172 + $0x1d0] sm:$0xf] %vm2123, %v2039
      %2241 = vst.msk [vmem:[%s172 + $0x1d4] sm:$0xf] %vm2123, %v2040
      %2242 = vst.msk [vmem:[%s172 + $0x1d8] sm:$0xf] %vm2123, %v2041
      %2243 = vst.msk [vmem:[%s172 + $0x1dc] sm:$0xf] %vm2123, %v2042
      %2244 = vst.msk [vmem:[%s172 + $0x1e0] sm:$0xf] %vm2123, %v2043
      %2245 = vst.msk [vmem:[%s172 + $0x1e4] sm:$0xf] %vm2123, %v2044
      %2246 = vst.msk [vmem:[%s172 + $0x1e8] sm:$0xf] %vm2123, %v2045
      %2247 = vst.msk [vmem:[%s172 + $0x1ec] sm:$0xf] %vm2123, %v2046
      %2248 = vst.msk [vmem:[%s172 + $0x1f0] sm:$0xf] %vm2123, %v2047
      %2249 = vst.msk [vmem:[%s172 + $0x1f4] sm:$0xf] %vm2123, %v2048
      %2250 = vst.msk [vmem:[%s172 + $0x1f8] sm:$0xf] %vm2123, %v2049
      %2251 = vst.msk [vmem:[%s172 + $0x1fc] sm:$0xf] %vm2123, %v2050
      %2252 = vst.msk [vmem:[%s172 + $0x200] sm:$0xf] %vm2123, %v2051
      %2253 = vst.msk [vmem:[%s172 + $0x204] sm:$0xf] %vm2123, %v2052
      %2254 = vst.msk [vmem:[%s172 + $0x208] sm:$0xf] %vm2123, %v2053
      %2255 = vst.msk [vmem:[%s172 + $0x20c] sm:$0xf] %vm2123, %v2054
      %2256 = vst.msk [vmem:[%s172 + $0x210] sm:$0xf] %vm2123, %v2055
      %2257 = vst.msk [vmem:[%s172 + $0x214] sm:$0xf] %vm2123, %v2056
      %2258 = vst.msk [vmem:[%s172 + $0x218] sm:$0xf] %vm2123, %v2057
      %2259 = vst.msk [vmem:[%s172 + $0x21c] sm:$0xf] %vm2123, %v2058
      %2260 = vst.msk [vmem:[%s172 + $0x220] sm:$0xf] %vm2123, %v2059
      %2261 = vst.msk [vmem:[%s172 + $0x224] sm:$0xf] %vm2123, %v2060
      %2262 = vst.msk [vmem:[%s172 + $0x228] sm:$0xf] %vm2123, %v2061
      %2263 = vst.msk [vmem:[%s172 + $0x22c] sm:$0xf] %vm2123, %v2062
      %2264 = vst.msk [vmem:[%s172 + $0x230] sm:$0xf] %vm2123, %v2063
      %2265 = vst.msk [vmem:[%s172 + $0x234] sm:$0xf] %vm2123, %v2064
      %2266 = vst.msk [vmem:[%s172 + $0x238] sm:$0xf] %vm2123, %v2065
      %2267 = vst.msk [vmem:[%s172 + $0x23c] sm:$0xf] %vm2123, %v2066
      %2268 = vst.msk [vmem:[%s172 + $0x240] sm:$0xf] %vm2123, %v2067
      %2269 = vst.msk [vmem:[%s172 + $0x244] sm:$0xf] %vm2123, %v2068
      %2270 = vst.msk [vmem:[%s172 + $0x248] sm:$0xf] %vm2123, %v2069
      %2271 = vst.msk [vmem:[%s172 + $0x24c] sm:$0xf] %vm2123, %v2070
      %2272 = vst.msk [vmem:[%s172 + $0x250] sm:$0xf] %vm2123, %v2071
      %2273 = vst.msk [vmem:[%s172 + $0x254] sm:$0xf] %vm2123, %v2072
      %2274 = vst.msk [vmem:[%s172 + $0x258] sm:$0xf] %vm2123, %v2073
      %2275 = vst.msk [vmem:[%s172 + $0x25c] sm:$0xf] %vm2123, %v2074
      %2276 = vst.msk [vmem:[%s172 + $0x260] sm:$0xf] %vm2123, %v2075
      %2277 = vst.msk [vmem:[%s172 + $0x264] sm:$0xf] %vm2123, %v2076
      %2278 = vst.msk [vmem:[%s172 + $0x268] sm:$0xf] %vm2123, %v2077
      %2279 = vst.msk [vmem:[%s172 + $0x26c] sm:$0xf] %vm2123, %v2078
      %2280 = vst.msk [vmem:[%s172 + $0x270] sm:$0xf] %vm2123, %v2079
      %2281 = vst.msk [vmem:[%s172 + $0x274] sm:$0xf] %vm2123, %v2080
      %2282 = vst.msk [vmem:[%s172 + $0x278] sm:$0xf] %vm2123, %v2081
      %2283 = vst.msk [vmem:[%s172 + $0x27c] sm:$0xf] %vm2123, %v2082
      %2284 = vst.msk [vmem:[%s172 + $0x280] sm:$0xf] %vm2123, %v2083
      %2285 = vst.msk [vmem:[%s172 + $0x284] sm:$0xf] %vm2123, %v2084
      %2286 = vst.msk [vmem:[%s172 + $0x288] sm:$0xf] %vm2123, %v2085
      %2287 = vst.msk [vmem:[%s172 + $0x28c] sm:$0xf] %vm2123, %v2086
      %2288 = vst.msk [vmem:[%s172 + $0x290] sm:$0xf] %vm2123, %v2087
      %2289 = vst.msk [vmem:[%s172 + $0x294] sm:$0xf] %vm2123, %v2088
      %2290 = vst.msk [vmem:[%s172 + $0x298] sm:$0xf] %vm2123, %v2089
      %2291 = vst.msk [vmem:[%s172 + $0x29c] sm:$0xf] %vm2123, %v2090
      %2292 = vst.msk [vmem:[%s172 + $0x2a0] sm:$0xf] %vm2123, %v2091
      %2293 = vst.msk [vmem:[%s172 + $0x2a4] sm:$0xf] %vm2123, %v2092
      %2294 = vst.msk [vmem:[%s172 + $0x2a8] sm:$0xf] %vm2123, %v2093
      %2295 = vst.msk [vmem:[%s172 + $0x2ac] sm:$0xf] %vm2123, %v2094
      %2296 = vst.msk [vmem:[%s172 + $0x2b0] sm:$0xf] %vm2123, %v2095
      %2297 = vst.msk [vmem:[%s172 + $0x2b4] sm:$0xf] %vm2123, %v2096
      %2298 = vst.msk [vmem:[%s172 + $0x2b8] sm:$0xf] %vm2123, %v2097
      %2299 = vst.msk [vmem:[%s172 + $0x2bc] sm:$0xf] %vm2123, %v2098
      %2300 = vst.msk [vmem:[%s172 + $0x2c0] sm:$0xf] %vm2123, %v2099
      %2301 = vst.msk [vmem:[%s172 + $0x2c4] sm:$0xf] %vm2123, %v2100
      %2302 = vst.msk [vmem:[%s172 + $0x2c8] sm:$0xf] %vm2123, %v2101
      %2303 = vst.msk [vmem:[%s172 + $0x2cc] sm:$0xf] %vm2123, %v2102
      %2304 = vst.msk [vmem:[%s172 + $0x2d0] sm:$0xf] %vm2123, %v2103
      %2305 = vst.msk [vmem:[%s172 + $0x2d4] sm:$0xf] %vm2123, %v2104
      %2306 = vst.msk [vmem:[%s172 + $0x2d8] sm:$0xf] %vm2123, %v2105
      %2307 = vst.msk [vmem:[%s172 + $0x2dc] sm:$0xf] %vm2123, %v2106
      %2308 = vst.msk [vmem:[%s172 + $0x2e0] sm:$0xf] %vm2123, %v2107
      %2309 = vst.msk [vmem:[%s172 + $0x2e4] sm:$0xf] %vm2123, %v2108
      %2310 = vst.msk [vmem:[%s172 + $0x2e8] sm:$0xf] %vm2123, %v2109
      %2311 = vst.msk [vmem:[%s172 + $0x2ec] sm:$0xf] %vm2123, %v2110
      %2312 = vst.msk [vmem:[%s172 + $0x2f0] sm:$0xf] %vm2123, %v2111
      %2313 = vst.msk [vmem:[%s172 + $0x2f4] sm:$0xf] %vm2123, %v2112
      %2314 = vst.msk [vmem:[%s172 + $0x2f8] sm:$0xf] %vm2123, %v2113
      %2315 = vst.msk [vmem:[%s172 + $0x2fc] sm:$0xf] %vm2123, %v2114
      %2316 = vst.msk [vmem:[%s172 + $0x300] sm:$0xf] %vm2123, %v2115
      %2317 = vst.msk [vmem:[%s172 + $0x304] sm:$0xf] %vm2123, %v2116
      %2318 = vst.msk [vmem:[%s172 + $0x308] sm:$0xf] %vm2123, %v2117
      %2319 = vst.msk [vmem:[%s172 + $0x30c] sm:$0xf] %vm2123, %v2118
      %2320 = vst.msk [vmem:[%s172 + $0x310] sm:$0xf] %vm2123, %v2119
      %2321 = vst.msk [vmem:[%s172 + $0x314] sm:$0xf] %vm2123, %v2120
      %2322 = vst.msk [vmem:[%s172 + $0x318] sm:$0xf] %vm2123, %v2121
      %2323 = vst.msk [vmem:[%s172 + $0x31c] sm:$0xf] %vm2123, %v2122
      %s2324 = smul.u32 200, %s14
      %p2325 = scmp.lt.s32.totalorder %s2324, 799
      %s2326 = scalar_select %p2325, %s2324, 799
      %s2327 = smul.addr %s2326, 4
      %s2328 = scalar_lea.vmem %s3, %s2327
      // Predicated region
      $region33: #{initial_net_forward.5} parent=31 // pred_check
        %p2329 = pneg %p100
      $region34: #{initial_net_forward.5} parent=31 // pred_check_branch
        %2331 = sbr.rel (%p2329) target = $region36
      $region35: #{initial_net_forward.5} parent=31 // pred_region
        %s2332 = smul.u32 200, %s14
      $region36: #{initial_net_forward.5} parent=31 // pred_fallthru
        _
    $region32: #{initial_net_forward.5} parent=5 // pred_fallthru
      _
    %p2333 = scmp.le.s32.totalorder 2, %s9
    // Predicated region
    $region37: #{initial_net_forward.5} parent=5 // pred_check
      %p2334 = pneg %p2333
    $region38: #{initial_net_forward.5} parent=5 // pred_check_branch
      %2336 = sbr.rel (%p2334) target = $region40
    $region39: #{initial_net_forward.5} parent=5 // pred_region
      %s2337 = ssub.s32 %s9, 2
      // Predicated region
      $region41: #{initial_net_forward.5} parent=39 // pred_check
        %p2338 = pneg %p106
      $region42: #{initial_net_forward.5} parent=39 // pred_check_branch
        %2340 = sbr.rel (%p2338) target = $region44
      $region43: #{initial_net_forward.5} parent=39 // pred_region
        %s2341 = smul.u32 200, %s15
        %p2342 = scmp.lt.s32.totalorder %s2341, 799
        %s2343 = scalar_select %p2342, %s2341, 799
        %s2344 = smul.addr %s2343, 4
        %s2345 = scalar_lea.vmem %s3, %s2344
      $region44: #{initial_net_forward.5} parent=39 // pred_fallthru
        _
    $region40: #{initial_net_forward.5} parent=5 // pred_fallthru
      _
  $region6: #{initial_net_forward.5} parent=0 // loop_footer
    %s13 = sadd.s32 1, %s9
  $region7: #{initial_net_forward.5} parent=0 // loop_footer_branch
    %8 = sbr.rel target = $region3
  $region8: #{initial_net_forward.5} parent=0 // loop_exit
    _

// kernel: initial_net_forward.6
$region0: #{initial_net_forward.6}
  #allocation0 [shape = 'u32[]', space=smem, size = 0x4, offset = 0x4, fixed_abs, tag = 'smem constant byte address 0x4 - core index']
  #allocation1 [shape = 'u32[72,128]{1,0:T(1,128)}', space=vmem, size = 0x9000, scoped, tag = 'internal scratch']
  %s0 = inlined_call_operand.vmem [shape: bf16[1600,400], index: 0, kind: input, shape index: {}]
  %s1 = inlined_call_operand.vmem [shape: bf16[400,32], index: 1, kind: input, shape index: {}]
  %s2 = inlined_call_operand.vmem [shape: f32[1,32], index: 2, kind: input, shape index: {}]
  %s3 = inlined_call_operand.vmem [shape: bf16[1600,32], index: 3, kind: output, shape index: {}]
  %s4 = sld [smem:[#allocation0]]
  $region45: #{initial_net_forward.6} parent=0
    _
  %s6 = ssub.s32 1, %s4
  %s7 = scalar_select 0, %s6, %s4
  loop: start=0, step=1, limit=6
  $region2: #{initial_net_forward.6} parent=0 // loop_pre_header
    _
  $region3: #{initial_net_forward.6} parent=0 // loop_header
    %s9 = sphi 0, %s13
    %p10 = scmp.ge.s32.totalorder %s9, 6
    %s19 = sphi 0, %s21
    %s22 = sphi 0, %s19
    %s23 = sphi 0, %s22
    %s39 = sphi 0, %s23
    %s43 = sphi 0, %s43
    %s45 = sphi 0, %s43
    %s46 = sphi 0, %s45
    %s60 = sphi 0, %s46
    %s64 = sphi 0, %s64
    %s66 = sphi 0, %s64
    %s67 = sphi 0, %s66
    %s81 = sphi 0, %s67
    %s87 = sphi 0, %s89
    %s90 = sphi 0, %s87
    %s91 = sphi 0, %s90
    %s107 = sphi 0, %s91
  $region4: #{initial_net_forward.6} parent=0 // loop_header_branch
    %12 = sbr.rel (%p10) target = $region8
  $region5: #{initial_net_forward.6} parent=0 // loop_body
    %s14 = ssub.s32 %s9, 1
    %s15 = ssub.s32 %s9, 2
    %s16 = sadd.s32 %s9, 1
    %s17 = ssub.s32 %s9, %s16
    %p18 = scmp.eq.s32.totalorder %s17, 0
    %s20 = sadd.s32 %s19, 1
    %s21 = scalar_select %p18, %s19, %s20
    %p24 = pneg %p18
    %p25 = scmp.eq.s32.totalorder %s9, 3
    %p26 = por %p24, %p25
    %p27 = scmp.ne.s32.totalorder %s19, %s22
    %p28 = scmp.eq.s32.totalorder %s9, 0
    %p29 = por %p27, %p28
    %p30 = scmp.ne.s32.totalorder %s19, %s22
    %p31 = scmp.eq.s32.totalorder %s14, 3
    %p32 = por %p30, %p31
    %p33 = scmp.ne.s32.totalorder %s22, %s23
    %p34 = scmp.eq.s32.totalorder %s14, 0
    %p35 = por %p33, %p34
    %p36 = scmp.ne.s32.totalorder %s22, %s23
    %p37 = scmp.eq.s32.totalorder %s15, 3
    %p38 = por %p36, %p37
    %p40 = scmp.ne.s32.totalorder %s23, %s39
    %p41 = scmp.eq.s32.totalorder %s15, 0
    %p42 = por %p40, %p41
    %s44 = sadd.s32 %s43, 1
    %p47 = scmp.eq.s32.totalorder %s9, 3
    %p48 = scmp.ne.s32.totalorder %s43, %s45
    %p49 = scmp.eq.s32.totalorder %s9, 0
    %p50 = por %p48, %p49
    %p51 = scmp.ne.s32.totalorder %s43, %s45
    %p52 = scmp.eq.s32.totalorder %s14, 3
    %p53 = por %p51, %p52
    %p54 = scmp.ne.s32.totalorder %s45, %s46
    %p55 = scmp.eq.s32.totalorder %s14, 0
    %p56 = por %p54, %p55
    %p57 = scmp.ne.s32.totalorder %s45, %s46
    %p58 = scmp.eq.s32.totalorder %s15, 3
    %p59 = por %p57, %p58
    %p61 = scmp.ne.s32.totalorder %s46, %s60
    %p62 = scmp.eq.s32.totalorder %s15, 0
    %p63 = por %p61, %p62
    %s65 = sadd.s32 %s64, 1
    %p68 = scmp.eq.s32.totalorder %s9, 3
    %p69 = scmp.ne.s32.totalorder %s64, %s66
    %p70 = scmp.eq.s32.totalorder %s9, 0
    %p71 = por %p69, %p70
    %p72 = scmp.ne.s32.totalorder %s64, %s66
    %p73 = scmp.eq.s32.totalorder %s14, 3
    %p74 = por %p72, %p73
    %p75 = scmp.ne.s32.totalorder %s66, %s67
    %p76 = scmp.eq.s32.totalorder %s14, 0
    %p77 = por %p75, %p76
    %p78 = scmp.ne.s32.totalorder %s66, %s67
    %p79 = scmp.eq.s32.totalorder %s15, 3
    %p80 = por %p78, %p79
    %p82 = scmp.ne.s32.totalorder %s67, %s81
    %p83 = scmp.eq.s32.totalorder %s15, 0
    %p84 = por %p82, %p83
    %s85 = ssub.s32 %s9, %s16
    %p86 = scmp.eq.s32.totalorder %s85, 0
    %s88 = sadd.s32 %s87, 1
    %s89 = scalar_select %p86, %s87, %s88
    %p92 = pneg %p86
    %p93 = scmp.eq.s32.totalorder %s9, 3
    %p94 = por %p92, %p93
    %p95 = scmp.ne.s32.totalorder %s87, %s90
    %p96 = scmp.eq.s32.totalorder %s9, 0
    %p97 = por %p95, %p96
    %p98 = scmp.ne.s32.totalorder %s87, %s90
    %p99 = scmp.eq.s32.totalorder %s14, 3
    %p100 = por %p98, %p99
    %p101 = scmp.ne.s32.totalorder %s90, %s91
    %p102 = scmp.eq.s32.totalorder %s14, 0
    %p103 = por %p101, %p102
    %p104 = scmp.ne.s32.totalorder %s90, %s91
    %p105 = scmp.eq.s32.totalorder %s15, 3
    %p106 = por %p104, %p105
    %p108 = scmp.ne.s32.totalorder %s91, %s107
    %p109 = scmp.eq.s32.totalorder %s15, 0
    %p110 = por %p108, %p109
    %p111 = scmp.le.s32.totalorder 1, %s9
    %p112 = scmp.lt.s32.totalorder %s9, 5
    %p113 = pnand %p111, %p112
    %p114 = pneg %p113
    // Predicated region
    $region9: #{initial_net_forward.6} parent=5 // pred_check
      _
    $region10: #{initial_net_forward.6} parent=5 // pred_check_branch
      %116 = sbr.rel (%p113) target = $region12
    $region11: #{initial_net_forward.6} parent=5 // pred_region
      %s117 = ssub.s32 %s9, 1
      // Predicated region
      $region13: #{initial_net_forward.6} parent=11 // pred_check
        %p118 = pneg %p56
      $region14: #{initial_net_forward.6} parent=11 // pred_check_branch
        %120 = sbr.rel (%p118) target = $region16
      $region15: #{initial_net_forward.6} parent=11 // pred_region
        _
      $region16: #{initial_net_forward.6} parent=11 // pred_fallthru
        _
      // Predicated region
      $region17: #{initial_net_forward.6} parent=11 // pred_check
        %p121 = pneg %p77
      $region18: #{initial_net_forward.6} parent=11 // pred_check_branch
        %123 = sbr.rel (%p121) target = $region20
      $region19: #{initial_net_forward.6} parent=11 // pred_region
        _
      $region20: #{initial_net_forward.6} parent=11 // pred_fallthru
        _
    $region12: #{initial_net_forward.6} parent=5 // pred_fallthru
      _
    %p124 = scmp.lt.s32.totalorder %s9, 4
    // Predicated region
    $region21: #{initial_net_forward.6} parent=5 // pred_check
      %p125 = pneg %p124
    $region22: #{initial_net_forward.6} parent=5 // pred_check_branch
      %127 = sbr.rel (%p125) target = $region24
    $region23: #{initial_net_forward.6} parent=5 // pred_region
      // Predicated region
      $region25: #{initial_net_forward.6} parent=23 // pred_check
        %p128 = pneg %p29
      $region26: #{initial_net_forward.6} parent=23 // pred_check_branch
        %130 = sbr.rel (%p128) target = $region28
      $region27: #{initial_net_forward.6} parent=23 // pred_region
        %s131 = smul.u32 50, %s9
        %p132 = scmp.lt.s32.totalorder %s131, 199
        %s133 = scalar_select %p132, %s131, 199
        %s134 = smul.addr %s133, 4
        %s135 = smul.addr %s134, 4
        %s136 = scalar_lea.vmem %s0, %s135
        %s137 = smul.u32 50, %s9
      $region28: #{initial_net_forward.6} parent=23 // pred_fallthru
        _
    $region24: #{initial_net_forward.6} parent=5 // pred_fallthru
      _
    %p138 = scmp.le.s32.totalorder 1, %s9
    %p139 = scmp.lt.s32.totalorder %s9, 5
    %p140 = pnand %p138, %p139
    %p141 = pneg %p140
    // Predicated region
    $region29: #{initial_net_forward.6} parent=5 // pred_check
      _
    $region30: #{initial_net_forward.6} parent=5 // pred_check_branch
      %143 = sbr.rel (%p140) target = $region32
    $region31: #{initial_net_forward.6} parent=5 // pred_region
      %s144 = ssub.s32 %s9, 1
      %s145 = smul.u32 50, %s14
      %p146 = scmp.lt.s32.totalorder %s145, 199
      %s147 = scalar_select %p146, %s145, 199
      %s148 = smul.addr %s147, 4
      %s149 = smul.addr %s148, 4
      %s150 = scalar_lea.vmem %s0, %s149
      %p151 = pneg %p35
      %p152 = pneg %p32
      %p153 = pneg %p56
      %p154 = pneg %p53
      %p155 = pneg %p77
      %p156 = pneg %p74
      %p157 = pneg %p103
      %p158 = pneg %p100
      %s159 = smul.u32 50, %s14
      %p160 = scmp.lt.s32.totalorder %s159, 199
      %s161 = scalar_select %p160, %s159, 199
      %s162 = smul.addr %s161, 4
      %s163 = scalar_lea.vmem %s3, %s162
      %s164 = smul.u32 50, %s14
      %p165 = scmp.lt.s32.totalorder %s164, 199
      %s166 = scalar_select %p165, %s164, 199
      %s167 = smul.addr %s166, 4
      %s168 = smul.addr %s167, 4
      %s169 = scalar_lea.vmem %s0, %s168
      %s170 = smul.u32 50, %s14
      %s171 = smul.u32 50, %s14
      %p172 = scmp.lt.s32.totalorder %s171, 199
      %s173 = scalar_select %p172, %s171, 199
      %s174 = smul.addr %s173, 4
      %s175 = scalar_lea.vmem %s3, %s174
      %s176 = smul.u32 50, %s14
      %v178 = vld [vmem:[%s169] sm:$0xff]
      %v179 = vld [vmem:[%s169 + $0x8] sm:$0xff]
      %v180 = vld [vmem:[%s169 + $0x10] sm:$0xff]
      %v181 = vld [vmem:[%s169 + $0x18] sm:$0xff]
      %v182 = vld [vmem:[%s169 + $0x20] sm:$0xff]
      %v183 = vld [vmem:[%s169 + $0x28] sm:$0xff]
      %v184 = vld [vmem:[%s169 + $0x30] sm:$0xff]
      %v185 = vld [vmem:[%s169 + $0x38] sm:$0xff]
      %v186 = vld [vmem:[%s169 + $0x40] sm:$0xff]
      %v187 = vld [vmem:[%s169 + $0x48] sm:$0xff]
      %v188 = vld [vmem:[%s169 + $0x50] sm:$0xff]
      %v189 = vld [vmem:[%s169 + $0x58] sm:$0xff]
      %v190 = vld [vmem:[%s169 + $0x60] sm:$0xff]
      %v191 = vld [vmem:[%s169 + $0x68] sm:$0xff]
      %v192 = vld [vmem:[%s169 + $0x70] sm:$0xff]
      %v193 = vld [vmem:[%s169 + $0x78] sm:$0xff]
      %v194 = vld [vmem:[%s169 + $0x80] sm:$0xff]
      %v195 = vld [vmem:[%s169 + $0x88] sm:$0xff]
      %v196 = vld [vmem:[%s169 + $0x90] sm:$0xff]
      %v197 = vld [vmem:[%s169 + $0x98] sm:$0xff]
      %v198 = vld [vmem:[%s169 + $0xa0] sm:$0xff]
      %v199 = vld [vmem:[%s169 + $0xa8] sm:$0xff]
      %v200 = vld [vmem:[%s169 + $0xb0] sm:$0xff]
      %v201 = vld [vmem:[%s169 + $0xb8] sm:$0xff]
      %v202 = vld [vmem:[%s169 + $0xc0] sm:$0xff]
      %v203 = vld [vmem:[%s169 + $0xc8] sm:$0xff]
      %v204 = vld [vmem:[%s169 + $0xd0] sm:$0xff]
      %v205 = vld [vmem:[%s169 + $0xd8] sm:$0xff]
      %v206 = vld [vmem:[%s169 + $0xe0] sm:$0xff]
      %v207 = vld [vmem:[%s169 + $0xe8] sm:$0xff]
      %v208 = vld [vmem:[%s169 + $0xf0] sm:$0xff]
      %v209 = vld [vmem:[%s169 + $0xf8] sm:$0xff]
      %v210 = vld [vmem:[%s169 + $0x100] sm:$0xff]
      %v211 = vld [vmem:[%s169 + $0x108] sm:$0xff]
      %v212 = vld [vmem:[%s169 + $0x110] sm:$0xff]
      %v213 = vld [vmem:[%s169 + $0x118] sm:$0xff]
      %v214 = vld [vmem:[%s169 + $0x120] sm:$0xff]
      %v215 = vld [vmem:[%s169 + $0x128] sm:$0xff]
      %v216 = vld [vmem:[%s169 + $0x130] sm:$0xff]
      %v217 = vld [vmem:[%s169 + $0x138] sm:$0xff]
      %v218 = vld [vmem:[%s169 + $0x140] sm:$0xff]
      %v219 = vld [vmem:[%s169 + $0x148] sm:$0xff]
      %v220 = vld [vmem:[%s169 + $0x150] sm:$0xff]
      %v221 = vld [vmem:[%s169 + $0x158] sm:$0xff]
      %v222 = vld [vmem:[%s169 + $0x160] sm:$0xff]
      %v223 = vld [vmem:[%s169 + $0x168] sm:$0xff]
      %v224 = vld [vmem:[%s169 + $0x170] sm:$0xff]
      %v225 = vld [vmem:[%s169 + $0x178] sm:$0xff]
      %v226 = vld [vmem:[%s169 + $0x180] sm:$0xff]
      %v227 = vld [vmem:[%s169 + $0x188] sm:$0xff]
      %v228 = vld [vmem:[%s169 + $0x190] sm:$0xff]
      %v229 = vld [vmem:[%s169 + $0x198] sm:$0xff]
      %v230 = vld [vmem:[%s169 + $0x1a0] sm:$0xff]
      %v231 = vld [vmem:[%s169 + $0x1a8] sm:$0xff]
      %v232 = vld [vmem:[%s169 + $0x1b0] sm:$0xff]
      %v233 = vld [vmem:[%s169 + $0x1b8] sm:$0xff]
      %v234 = vld [vmem:[%s169 + $0x1c0] sm:$0xff]
      %v235 = vld [vmem:[%s169 + $0x1c8] sm:$0xff]
      %v236 = vld [vmem:[%s169 + $0x1d0] sm:$0xff]
      %v237 = vld [vmem:[%s169 + $0x1d8] sm:$0xff]
      %v238 = vld [vmem:[%s169 + $0x1e0] sm:$0xff]
      %v239 = vld [vmem:[%s169 + $0x1e8] sm:$0xff]
      %v240 = vld [vmem:[%s169 + $0x1f0] sm:$0xff]
      %v241 = vld [vmem:[%s169 + $0x1f8] sm:$0xff]
      %v242 = vld [vmem:[%s169 + $0x200] sm:$0xff]
      %v243 = vld [vmem:[%s169 + $0x208] sm:$0xff]
      %v244 = vld [vmem:[%s169 + $0x210] sm:$0xff]
      %v245 = vld [vmem:[%s169 + $0x218] sm:$0xff]
      %v246 = vld [vmem:[%s169 + $0x220] sm:$0xff]
      %v247 = vld [vmem:[%s169 + $0x228] sm:$0xff]
      %v248 = vld [vmem:[%s169 + $0x230] sm:$0xff]
      %v249 = vld [vmem:[%s169 + $0x238] sm:$0xff]
      %v250 = vld [vmem:[%s169 + $0x240] sm:$0xff]
      %v251 = vld [vmem:[%s169 + $0x248] sm:$0xff]
      %v252 = vld [vmem:[%s169 + $0x250] sm:$0xff]
      %v253 = vld [vmem:[%s169 + $0x258] sm:$0xff]
      %v254 = vld [vmem:[%s169 + $0x260] sm:$0xff]
      %v255 = vld [vmem:[%s169 + $0x268] sm:$0xff]
      %v256 = vld [vmem:[%s169 + $0x270] sm:$0xff]
      %v257 = vld [vmem:[%s169 + $0x278] sm:$0xff]
      %v258 = vld [vmem:[%s169 + $0x280] sm:$0xff]
      %v259 = vld [vmem:[%s169 + $0x288] sm:$0xff]
      %v260 = vld [vmem:[%s169 + $0x290] sm:$0xff]
      %v261 = vld [vmem:[%s169 + $0x298] sm:$0xff]
      %v262 = vld [vmem:[%s169 + $0x2a0] sm:$0xff]
      %v263 = vld [vmem:[%s169 + $0x2a8] sm:$0xff]
      %v264 = vld [vmem:[%s169 + $0x2b0] sm:$0xff]
      %v265 = vld [vmem:[%s169 + $0x2b8] sm:$0xff]
      %v266 = vld [vmem:[%s169 + $0x2c0] sm:$0xff]
      %v267 = vld [vmem:[%s169 + $0x2c8] sm:$0xff]
      %v268 = vld [vmem:[%s169 + $0x2d0] sm:$0xff]
      %v269 = vld [vmem:[%s169 + $0x2d8] sm:$0xff]
      %v270 = vld [vmem:[%s169 + $0x2e0] sm:$0xff]
      %v271 = vld [vmem:[%s169 + $0x2e8] sm:$0xff]
      %v272 = vld [vmem:[%s169 + $0x2f0] sm:$0xff]
      %v273 = vld [vmem:[%s169 + $0x2f8] sm:$0xff]
      %v274 = vld [vmem:[%s169 + $0x300] sm:$0xff]
      %v275 = vld [vmem:[%s169 + $0x308] sm:$0xff]
      %v276 = vld [vmem:[%s169 + $0x310] sm:$0xff]
      %v277 = vld [vmem:[%s169 + $0x318] sm:$0xff]
      %v278 = vld [vmem:[%s1] sm:$0xf]
      %v279 = vld [vmem:[%s1 + $0x4] sm:$0xf]
      %v280 = vld [vmem:[%s1 + $0x8] sm:$0xf]
      %v281 = vld [vmem:[%s1 + $0xc] sm:$0xf]
      %v282 = vld [vmem:[%s1 + $0x10] sm:$0xf]
      %v283 = vld [vmem:[%s1 + $0x14] sm:$0xf]
      %v284 = vld [vmem:[%s1 + $0x18] sm:$0xf]
      %v285 = vld [vmem:[%s1 + $0x1c] sm:$0xf]
      %v286 = vld [vmem:[%s1 + $0x20] sm:$0xf]
      %v287 = vld [vmem:[%s1 + $0x24] sm:$0xf]
      %v288 = vld [vmem:[%s1 + $0x28] sm:$0xf]
      %v289 = vld [vmem:[%s1 + $0x2c] sm:$0xf]
      %v290 = vld [vmem:[%s1 + $0x30] sm:$0xf]
      %v291 = vld [vmem:[%s1 + $0x34] sm:$0xf]
      %v292 = vld [vmem:[%s1 + $0x38] sm:$0xf]
      %v293 = vld [vmem:[%s1 + $0x3c] sm:$0xf]
      %v294 = vld [vmem:[%s1 + $0x40] sm:$0xf]
      %v295 = vld [vmem:[%s1 + $0x44] sm:$0xf]
      %v296 = vld [vmem:[%s1 + $0x48] sm:$0xf]
      %v297 = vld [vmem:[%s1 + $0x4c] sm:$0xf]
      %v298 = vld [vmem:[%s1 + $0x50] sm:$0xf]
      %v299 = vld [vmem:[%s1 + $0x54] sm:$0xf]
      %v300 = vld [vmem:[%s1 + $0x58] sm:$0xf]
      %v301 = vld [vmem:[%s1 + $0x5c] sm:$0xf]
      %v302 = vld [vmem:[%s1 + $0x60] sm:$0xf]
      %v303 = vld [vmem:[%s1 + $0x64] sm:$0xf]
      %v304 = vld [vmem:[%s1 + $0x68] sm:$0xf]
      %v305 = vld [vmem:[%s1 + $0x6c] sm:$0xf]
      %v306 = vld [vmem:[%s1 + $0x70] sm:$0xf]
      %v307 = vld [vmem:[%s1 + $0x74] sm:$0xf]
      %v308 = vld [vmem:[%s1 + $0x78] sm:$0xf]
      %v309 = vld [vmem:[%s1 + $0x7c] sm:$0xf]
      %v310 = vld [vmem:[%s1 + $0x80] sm:$0xf]
      %v311 = vld [vmem:[%s1 + $0x84] sm:$0xf]
      %v312 = vld [vmem:[%s1 + $0x88] sm:$0xf]
      %v313 = vld [vmem:[%s1 + $0x8c] sm:$0xf]
      %v314 = vld [vmem:[%s1 + $0x90] sm:$0xf]
      %v315 = vld [vmem:[%s1 + $0x94] sm:$0xf]
      %v316 = vld [vmem:[%s1 + $0x98] sm:$0xf]
      %v317 = vld [vmem:[%s1 + $0x9c] sm:$0xf]
      %v318 = vld [vmem:[%s1 + $0xa0] sm:$0xf]
      %v319 = vld [vmem:[%s1 + $0xa4] sm:$0xf]
      %v320 = vld [vmem:[%s1 + $0xa8] sm:$0xf]
      %v321 = vld [vmem:[%s1 + $0xac] sm:$0xf]
      %v322 = vld [vmem:[%s1 + $0xb0] sm:$0xf]
      %v323 = vld [vmem:[%s1 + $0xb4] sm:$0xf]
      %v324 = vld [vmem:[%s1 + $0xb8] sm:$0xf]
      %v325 = vld [vmem:[%s1 + $0xbc] sm:$0xf]
      %v326 = vld [vmem:[%s1 + $0xc0] sm:$0xf]
      %v327 = vld [vmem:[%s1 + $0xc4] sm:$0xf]
      %v328 = vld [vmem:[%s2] sm:$0x1]
      %v330 = vperm.slane %v328, 0
      %v432 = vunpack.c.l.b16 %v178
      %v433 = vunpack.c.h.b16 %v178
      %v434 = vunpack.c.l.b16 %v179
      %v435 = vunpack.c.h.b16 %v179
      %v436 = vunpack.c.l.b16 %v180
      %v437 = vunpack.c.h.b16 %v180
      %v438 = vunpack.c.l.b16 %v181
      %v439 = vunpack.c.h.b16 %v181
      %v440 = vunpack.c.l.b16 %v182
      %v441 = vunpack.c.h.b16 %v182
      %v442 = vunpack.c.l.b16 %v183
      %v443 = vunpack.c.h.b16 %v183
      %v444 = vunpack.c.l.b16 %v184
      %v445 = vunpack.c.h.b16 %v184
      %v446 = vunpack.c.l.b16 %v185
      %v447 = vunpack.c.h.b16 %v185
      %v448 = vunpack.c.l.b16 %v186
      %v449 = vunpack.c.h.b16 %v186
      %v450 = vunpack.c.l.b16 %v187
      %v451 = vunpack.c.h.b16 %v187
      %v452 = vunpack.c.l.b16 %v188
      %v453 = vunpack.c.h.b16 %v188
      %v454 = vunpack.c.l.b16 %v189
      %v455 = vunpack.c.h.b16 %v189
      %v456 = vunpack.c.l.b16 %v190
      %v457 = vunpack.c.h.b16 %v190
      %v458 = vunpack.c.l.b16 %v191
      %v459 = vunpack.c.h.b16 %v191
      %v460 = vunpack.c.l.b16 %v192
      %v461 = vunpack.c.h.b16 %v192
      %v462 = vunpack.c.l.b16 %v193
      %v463 = vunpack.c.h.b16 %v193
      %v464 = vunpack.c.l.b16 %v194
      %v465 = vunpack.c.h.b16 %v194
      %v466 = vunpack.c.l.b16 %v195
      %v467 = vunpack.c.h.b16 %v195
      %v468 = vunpack.c.l.b16 %v196
      %v469 = vunpack.c.h.b16 %v196
      %v470 = vunpack.c.l.b16 %v197
      %v471 = vunpack.c.h.b16 %v197
      %v472 = vunpack.c.l.b16 %v198
      %v473 = vunpack.c.h.b16 %v198
      %v474 = vunpack.c.l.b16 %v199
      %v475 = vunpack.c.h.b16 %v199
      %v476 = vunpack.c.l.b16 %v200
      %v477 = vunpack.c.h.b16 %v200
      %v478 = vunpack.c.l.b16 %v201
      %v479 = vunpack.c.h.b16 %v201
      %v480 = vunpack.c.l.b16 %v202
      %v481 = vunpack.c.h.b16 %v202
      %v482 = vunpack.c.l.b16 %v203
      %v483 = vunpack.c.h.b16 %v203
      %v484 = vunpack.c.l.b16 %v204
      %v485 = vunpack.c.h.b16 %v204
      %v486 = vunpack.c.l.b16 %v205
      %v487 = vunpack.c.h.b16 %v205
      %v488 = vunpack.c.l.b16 %v206
      %v489 = vunpack.c.h.b16 %v206
      %v490 = vunpack.c.l.b16 %v207
      %v491 = vunpack.c.h.b16 %v207
      %v492 = vunpack.c.l.b16 %v208
      %v493 = vunpack.c.h.b16 %v208
      %v494 = vunpack.c.l.b16 %v209
      %v495 = vunpack.c.h.b16 %v209
      %v496 = vunpack.c.l.b16 %v210
      %v497 = vunpack.c.h.b16 %v210
      %v498 = vunpack.c.l.b16 %v211
      %v499 = vunpack.c.h.b16 %v211
      %v500 = vunpack.c.l.b16 %v212
      %v501 = vunpack.c.h.b16 %v212
      %v502 = vunpack.c.l.b16 %v213
      %v503 = vunpack.c.h.b16 %v213
      %v504 = vunpack.c.l.b16 %v214
      %v505 = vunpack.c.h.b16 %v214
      %v506 = vunpack.c.l.b16 %v215
      %v507 = vunpack.c.h.b16 %v215
      %v508 = vunpack.c.l.b16 %v216
      %v509 = vunpack.c.h.b16 %v216
      %v510 = vunpack.c.l.b16 %v217
      %v511 = vunpack.c.h.b16 %v217
      %v512 = vunpack.c.l.b16 %v218
      %v513 = vunpack.c.h.b16 %v218
      %v514 = vunpack.c.l.b16 %v219
      %v515 = vunpack.c.h.b16 %v219
      %v516 = vunpack.c.l.b16 %v220
      %v517 = vunpack.c.h.b16 %v220
      %v518 = vunpack.c.l.b16 %v221
      %v519 = vunpack.c.h.b16 %v221
      %v520 = vunpack.c.l.b16 %v222
      %v521 = vunpack.c.h.b16 %v222
      %v522 = vunpack.c.l.b16 %v223
      %v523 = vunpack.c.h.b16 %v223
      %v524 = vunpack.c.l.b16 %v224
      %v525 = vunpack.c.h.b16 %v224
      %v526 = vunpack.c.l.b16 %v225
      %v527 = vunpack.c.h.b16 %v225
      %v528 = vunpack.c.l.b16 %v226
      %v529 = vunpack.c.h.b16 %v226
      %v530 = vunpack.c.l.b16 %v227
      %v531 = vunpack.c.h.b16 %v227
      %v532 = vunpack.c.l.b16 %v228
      %v533 = vunpack.c.h.b16 %v228
      %v534 = vunpack.c.l.b16 %v229
      %v535 = vunpack.c.h.b16 %v229
      %v536 = vunpack.c.l.b16 %v230
      %v537 = vunpack.c.h.b16 %v230
      %v538 = vunpack.c.l.b16 %v231
      %v539 = vunpack.c.h.b16 %v231
      %v540 = vunpack.c.l.b16 %v232
      %v541 = vunpack.c.h.b16 %v232
      %v542 = vunpack.c.l.b16 %v233
      %v543 = vunpack.c.h.b16 %v233
      %v544 = vunpack.c.l.b16 %v234
      %v545 = vunpack.c.h.b16 %v234
      %v546 = vunpack.c.l.b16 %v235
      %v547 = vunpack.c.h.b16 %v235
      %v548 = vunpack.c.l.b16 %v236
      %v549 = vunpack.c.h.b16 %v236
      %v550 = vunpack.c.l.b16 %v237
      %v551 = vunpack.c.h.b16 %v237
      %v552 = vunpack.c.l.b16 %v238
      %v553 = vunpack.c.h.b16 %v238
      %v554 = vunpack.c.l.b16 %v239
      %v555 = vunpack.c.h.b16 %v239
      %v556 = vunpack.c.l.b16 %v240
      %v557 = vunpack.c.h.b16 %v240
      %v558 = vunpack.c.l.b16 %v241
      %v559 = vunpack.c.h.b16 %v241
      %v560 = vunpack.c.l.b16 %v242
      %v561 = vunpack.c.h.b16 %v242
      %v562 = vunpack.c.l.b16 %v243
      %v563 = vunpack.c.h.b16 %v243
      %v564 = vunpack.c.l.b16 %v244
      %v565 = vunpack.c.h.b16 %v244
      %v566 = vunpack.c.l.b16 %v245
      %v567 = vunpack.c.h.b16 %v245
      %v568 = vunpack.c.l.b16 %v246
      %v569 = vunpack.c.h.b16 %v246
      %v570 = vunpack.c.l.b16 %v247
      %v571 = vunpack.c.h.b16 %v247
      %v572 = vunpack.c.l.b16 %v248
      %v573 = vunpack.c.h.b16 %v248
      %v574 = vunpack.c.l.b16 %v249
      %v575 = vunpack.c.h.b16 %v249
      %v576 = vunpack.c.l.b16 %v250
      %v577 = vunpack.c.h.b16 %v250
      %v578 = vunpack.c.l.b16 %v251
      %v579 = vunpack.c.h.b16 %v251
      %v580 = vunpack.c.l.b16 %v252
      %v581 = vunpack.c.h.b16 %v252
      %v582 = vunpack.c.l.b16 %v253
      %v583 = vunpack.c.h.b16 %v253
      %v584 = vunpack.c.l.b16 %v254
      %v585 = vunpack.c.h.b16 %v254
      %v586 = vunpack.c.l.b16 %v255
      %v587 = vunpack.c.h.b16 %v255
      %v588 = vunpack.c.l.b16 %v256
      %v589 = vunpack.c.h.b16 %v256
      %v590 = vunpack.c.l.b16 %v257
      %v591 = vunpack.c.h.b16 %v257
      %v592 = vunpack.c.l.b16 %v258
      %v593 = vunpack.c.h.b16 %v258
      %v594 = vunpack.c.l.b16 %v259
      %v595 = vunpack.c.h.b16 %v259
      %v596 = vunpack.c.l.b16 %v260
      %v597 = vunpack.c.h.b16 %v260
      %v598 = vunpack.c.l.b16 %v261
      %v599 = vunpack.c.h.b16 %v261
      %v600 = vunpack.c.l.b16 %v262
      %v601 = vunpack.c.h.b16 %v262
      %v602 = vunpack.c.l.b16 %v263
      %v603 = vunpack.c.h.b16 %v263
      %v604 = vunpack.c.l.b16 %v264
      %v605 = vunpack.c.h.b16 %v264
      %v606 = vunpack.c.l.b16 %v265
      %v607 = vunpack.c.h.b16 %v265
      %v608 = vunpack.c.l.b16 %v266
      %v609 = vunpack.c.h.b16 %v266
      %v610 = vunpack.c.l.b16 %v267
      %v611 = vunpack.c.h.b16 %v267
      %v612 = vunpack.c.l.b16 %v268
      %v613 = vunpack.c.h.b16 %v268
      %v614 = vunpack.c.l.b16 %v269
      %v615 = vunpack.c.h.b16 %v269
      %v616 = vunpack.c.l.b16 %v270
      %v617 = vunpack.c.h.b16 %v270
      %v618 = vunpack.c.l.b16 %v271
      %v619 = vunpack.c.h.b16 %v271
      %v620 = vunpack.c.l.b16 %v272
      %v621 = vunpack.c.h.b16 %v272
      %v622 = vunpack.c.l.b16 %v273
      %v623 = vunpack.c.h.b16 %v273
      %v624 = vunpack.c.l.b16 %v274
      %v625 = vunpack.c.h.b16 %v274
      %v626 = vunpack.c.l.b16 %v275
      %v627 = vunpack.c.h.b16 %v275
      %v628 = vunpack.c.l.b16 %v276
      %v629 = vunpack.c.h.b16 %v276
      %v630 = vunpack.c.l.b16 %v277
      %v631 = vunpack.c.h.b16 %v277
      %v632 = vpack.c.b16 %v436, %v432
      %v633 = vpack.c.b16 %v437, %v433
      %v634 = vpack.c.b16 %v438, %v434
      %v635 = vpack.c.b16 %v439, %v435
      %v636 = vpack.c.b16 %v444, %v440
      %v637 = vpack.c.b16 %v445, %v441
      %v638 = vpack.c.b16 %v446, %v442
      %v639 = vpack.c.b16 %v447, %v443
      %v640 = vpack.c.b16 %v452, %v448
      %v641 = vpack.c.b16 %v453, %v449
      %v642 = vpack.c.b16 %v454, %v450
      %v643 = vpack.c.b16 %v455, %v451
      %v644 = vpack.c.b16 %v460, %v456
      %v645 = vpack.c.b16 %v461, %v457
      %v646 = vpack.c.b16 %v462, %v458
      %v647 = vpack.c.b16 %v463, %v459
      %v648 = vpack.c.b16 %v468, %v464
      %v649 = vpack.c.b16 %v469, %v465
      %v650 = vpack.c.b16 %v470, %v466
      %v651 = vpack.c.b16 %v471, %v467
      %v652 = vpack.c.b16 %v476, %v472
      %v653 = vpack.c.b16 %v477, %v473
      %v654 = vpack.c.b16 %v478, %v474
      %v655 = vpack.c.b16 %v479, %v475
      %v656 = vpack.c.b16 %v484, %v480
      %v657 = vpack.c.b16 %v485, %v481
      %v658 = vpack.c.b16 %v486, %v482
      %v659 = vpack.c.b16 %v487, %v483
      %v660 = vpack.c.b16 %v492, %v488
      %v661 = vpack.c.b16 %v493, %v489
      %v662 = vpack.c.b16 %v494, %v490
      %v663 = vpack.c.b16 %v495, %v491
      %v664 = vpack.c.b16 %v500, %v496
      %v665 = vpack.c.b16 %v501, %v497
      %v666 = vpack.c.b16 %v502, %v498
      %v667 = vpack.c.b16 %v503, %v499
      %v668 = vpack.c.b16 %v508, %v504
      %v669 = vpack.c.b16 %v509, %v505
      %v670 = vpack.c.b16 %v510, %v506
      %v671 = vpack.c.b16 %v511, %v507
      %v672 = vpack.c.b16 %v516, %v512
      %v673 = vpack.c.b16 %v517, %v513
      %v674 = vpack.c.b16 %v518, %v514
      %v675 = vpack.c.b16 %v519, %v515
      %v676 = vpack.c.b16 %v524, %v520
      %v677 = vpack.c.b16 %v525, %v521
      %v678 = vpack.c.b16 %v526, %v522
      %v679 = vpack.c.b16 %v527, %v523
      %v680 = vpack.c.b16 %v532, %v528
      %v681 = vpack.c.b16 %v533, %v529
      %v682 = vpack.c.b16 %v534, %v530
      %v683 = vpack.c.b16 %v535, %v531
      %v684 = vpack.c.b16 %v540, %v536
      %v685 = vpack.c.b16 %v541, %v537
      %v686 = vpack.c.b16 %v542, %v538
      %v687 = vpack.c.b16 %v543, %v539
      %v688 = vpack.c.b16 %v548, %v544
      %v689 = vpack.c.b16 %v549, %v545
      %v690 = vpack.c.b16 %v550, %v546
      %v691 = vpack.c.b16 %v551, %v547
      %v692 = vpack.c.b16 %v556, %v552
      %v693 = vpack.c.b16 %v557, %v553
      %v694 = vpack.c.b16 %v558, %v554
      %v695 = vpack.c.b16 %v559, %v555
      %v696 = vpack.c.b16 %v564, %v560
      %v697 = vpack.c.b16 %v565, %v561
      %v698 = vpack.c.b16 %v566, %v562
      %v699 = vpack.c.b16 %v567, %v563
      %v700 = vpack.c.b16 %v572, %v568
      %v701 = vpack.c.b16 %v573, %v569
      %v702 = vpack.c.b16 %v574, %v570
      %v703 = vpack.c.b16 %v575, %v571
      %v704 = vpack.c.b16 %v580, %v576
      %v705 = vpack.c.b16 %v581, %v577
      %v706 = vpack.c.b16 %v582, %v578
      %v707 = vpack.c.b16 %v583, %v579
      %v708 = vpack.c.b16 %v588, %v584
      %v709 = vpack.c.b16 %v589, %v585
      %v710 = vpack.c.b16 %v590, %v586
      %v711 = vpack.c.b16 %v591, %v587
      %v712 = vpack.c.b16 %v596, %v592
      %v713 = vpack.c.b16 %v597, %v593
      %v714 = vpack.c.b16 %v598, %v594
      %v715 = vpack.c.b16 %v599, %v595
      %v716 = vpack.c.b16 %v604, %v600
      %v717 = vpack.c.b16 %v605, %v601
      %v718 = vpack.c.b16 %v606, %v602
      %v719 = vpack.c.b16 %v607, %v603
      %v720 = vpack.c.b16 %v612, %v608
      %v721 = vpack.c.b16 %v613, %v609
      %v722 = vpack.c.b16 %v614, %v610
      %v723 = vpack.c.b16 %v615, %v611
      %v724 = vpack.c.b16 %v620, %v616
      %v725 = vpack.c.b16 %v621, %v617
      %v726 = vpack.c.b16 %v622, %v618
      %v727 = vpack.c.b16 %v623, %v619
      %v728 = vpack.c.b16 %v628, %v624
      %v729 = vpack.c.b16 %v629, %v625
      %v730 = vpack.c.b16 %v630, %v626
      %v731 = vpack.c.b16 %v631, %v627
      %v857 = vunpack.c.l.b16 %v278
      %v858 = vunpack.c.l.b16 %v279
      %v859 = vunpack.c.l.b16 %v280
      %v860 = vunpack.c.l.b16 %v281
      %v861 = vunpack.c.l.b16 %v282
      %v862 = vunpack.c.l.b16 %v283
      %v863 = vunpack.c.l.b16 %v284
      %v864 = vunpack.c.l.b16 %v285
      %v865 = vunpack.c.l.b16 %v286
      %v866 = vunpack.c.l.b16 %v287
      %v867 = vunpack.c.l.b16 %v288
      %v868 = vunpack.c.l.b16 %v289
      %v869 = vunpack.c.l.b16 %v290
      %v870 = vunpack.c.l.b16 %v291
      %v871 = vunpack.c.l.b16 %v292
      %v872 = vunpack.c.l.b16 %v293
      %v873 = vunpack.c.l.b16 %v294
      %v874 = vunpack.c.l.b16 %v295
      %v875 = vunpack.c.l.b16 %v296
      %v876 = vunpack.c.l.b16 %v297
      %v877 = vunpack.c.l.b16 %v298
      %v878 = vunpack.c.l.b16 %v299
      %v879 = vunpack.c.l.b16 %v300
      %v880 = vunpack.c.l.b16 %v301
      %v881 = vunpack.c.l.b16 %v302
      %v882 = vunpack.c.l.b16 %v303
      %v883 = vunpack.c.l.b16 %v304
      %v884 = vunpack.c.l.b16 %v305
      %v885 = vunpack.c.l.b16 %v306
      %v886 = vunpack.c.l.b16 %v307
      %v887 = vunpack.c.l.b16 %v308
      %v888 = vunpack.c.l.b16 %v309
      %v889 = vunpack.c.l.b16 %v310
      %v890 = vunpack.c.l.b16 %v311
      %v891 = vunpack.c.l.b16 %v312
      %v892 = vunpack.c.l.b16 %v313
      %v893 = vunpack.c.l.b16 %v314
      %v894 = vunpack.c.l.b16 %v315
      %v895 = vunpack.c.l.b16 %v316
      %v896 = vunpack.c.l.b16 %v317
      %v897 = vunpack.c.l.b16 %v318
      %v898 = vunpack.c.l.b16 %v319
      %v899 = vunpack.c.l.b16 %v320
      %v900 = vunpack.c.l.b16 %v321
      %v901 = vunpack.c.l.b16 %v322
      %v902 = vunpack.c.l.b16 %v323
      %v903 = vunpack.c.l.b16 %v324
      %v904 = vunpack.c.l.b16 %v325
      %v905 = vunpack.c.l.b16 %v326
      %v906 = vunpack.c.l.b16 %v327
      %v907 = vpack.c.b16 %v858, %v857
      %v908 = vpack.c.b16 %v860, %v859
      %v909 = vpack.c.b16 %v862, %v861
      %v910 = vpack.c.b16 %v864, %v863
      %v911 = vpack.c.b16 %v866, %v865
      %v912 = vpack.c.b16 %v868, %v867
      %v913 = vpack.c.b16 %v870, %v869
      %v914 = vpack.c.b16 %v872, %v871
      %v915 = vpack.c.b16 %v874, %v873
      %v916 = vpack.c.b16 %v876, %v875
      %v917 = vpack.c.b16 %v878, %v877
      %v918 = vpack.c.b16 %v880, %v879
      %v919 = vpack.c.b16 %v882, %v881
      %v920 = vpack.c.b16 %v884, %v883
      %v921 = vpack.c.b16 %v886, %v885
      %v922 = vpack.c.b16 %v888, %v887
      %v923 = vpack.c.b16 %v890, %v889
      %v924 = vpack.c.b16 %v892, %v891
      %v925 = vpack.c.b16 %v894, %v893
      %v926 = vpack.c.b16 %v896, %v895
      %v927 = vpack.c.b16 %v898, %v897
      %v928 = vpack.c.b16 %v900, %v899
      %v929 = vpack.c.b16 %v902, %v901
      %v930 = vpack.c.b16 %v904, %v903
      %v931 = vpack.c.b16 %v906, %v905
      %vm957 = vcmask 130048
      %v959 = vsel %vm957, %v635, 0
      %v962 = vsel %vm957, %v639, 0
      %v965 = vsel %vm957, %v643, 0
      %v968 = vsel %vm957, %v647, 0
      %v971 = vsel %vm957, %v651, 0
      %v974 = vsel %vm957, %v655, 0
      %v977 = vsel %vm957, %v659, 0
      %v980 = vsel %vm957, %v663, 0
      %v983 = vsel %vm957, %v667, 0
      %v986 = vsel %vm957, %v671, 0
      %v989 = vsel %vm957, %v675, 0
      %v992 = vsel %vm957, %v679, 0
      %v995 = vsel %vm957, %v683, 0
      %v998 = vsel %vm957, %v687, 0
      %v1001 = vsel %vm957, %v691, 0
      %v1004 = vsel %vm957, %v695, 0
      %v1007 = vsel %vm957, %v699, 0
      %v1010 = vsel %vm957, %v703, 0
      %v1013 = vsel %vm957, %v707, 0
      %v1016 = vsel %vm957, %v711, 0
      %v1019 = vsel %vm957, %v715, 0
      %v1022 = vsel %vm957, %v719, 0
      %v1025 = vsel %vm957, %v723, 0
      %v1028 = vsel %vm957, %v727, 0
      %v1031 = vsel %vm957, %v731, 0
      %1033 = vmatpush.bf16.msra.mxu0 %v914
      %1034 = vmatpush.bf16.msra.mxu0 %v913
      %1035 = vmatpush.bf16.msra.mxu0 %v912
      %1036 = vmatpush.bf16.msra.mxu0 %v911
      %1037 = vmatpush.bf16.msra.mxu0 %v910
      %1038 = vmatpush.bf16.msra.mxu0 %v909
      %1039 = vmatpush.bf16.msra.mxu0 %v908
      %1040 = vmatpush.bf16.msra.mxu0 %v907
      %1041 = vmatmul.bf16.gmra.mxu0 %v632
      %v1042 = vpop.f32.mrf.mxu0
      %v1043 = vadd.f32 %v330, %v1042
      %v1044 = vpop.f32.mrf.mxu0
      %v1045 = vadd.f32 %v330, %v1044
      %1046 = vmatmul.bf16.gmra.mxu0 %v636
      %v1047 = vpop.f32.mrf.mxu0
      %v1048 = vadd.f32 %v330, %v1047
      %v1049 = vpop.f32.mrf.mxu0
      %v1050 = vadd.f32 %v330, %v1049
      %1051 = vmatmul.bf16.gmra.mxu0 %v640
      %v1052 = vpop.f32.mrf.mxu0
      %v1053 = vadd.f32 %v330, %v1052
      %v1054 = vpop.f32.mrf.mxu0
      %v1055 = vadd.f32 %v330, %v1054
      %1056 = vmatmul.bf16.gmra.mxu0 %v644
      %v1057 = vpop.f32.mrf.mxu0
      %v1058 = vadd.f32 %v330, %v1057
      %v1059 = vpop.f32.mrf.mxu0
      %v1060 = vadd.f32 %v330, %v1059
      %1061 = vmatmul.bf16.gmra.mxu0 %v648
      %v1062 = vpop.f32.mrf.mxu0
      %v1063 = vadd.f32 %v330, %v1062
      %v1064 = vpop.f32.mrf.mxu0
      %v1065 = vadd.f32 %v330, %v1064
      %1066 = vmatmul.bf16.gmra.mxu0 %v652
      %v1067 = vpop.f32.mrf.mxu0
      %v1068 = vadd.f32 %v330, %v1067
      %v1069 = vpop.f32.mrf.mxu0
      %v1070 = vadd.f32 %v330, %v1069
      %1071 = vmatmul.bf16.gmra.mxu0 %v656
      %v1072 = vpop.f32.mrf.mxu0
      %v1073 = vadd.f32 %v330, %v1072
      %v1074 = vpop.f32.mrf.mxu0
      %v1075 = vadd.f32 %v330, %v1074
      %1076 = vmatmul.bf16.gmra.mxu0 %v660
      %v1077 = vpop.f32.mrf.mxu0
      %v1078 = vadd.f32 %v330, %v1077
      %v1079 = vpop.f32.mrf.mxu0
      %v1080 = vadd.f32 %v330, %v1079
      %1081 = vmatmul.bf16.gmra.mxu0 %v664
      %v1082 = vpop.f32.mrf.mxu0
      %v1083 = vadd.f32 %v330, %v1082
      %v1084 = vpop.f32.mrf.mxu0
      %v1085 = vadd.f32 %v330, %v1084
      %1086 = vmatmul.bf16.gmra.mxu0 %v668
      %v1087 = vpop.f32.mrf.mxu0
      %v1088 = vadd.f32 %v330, %v1087
      %v1089 = vpop.f32.mrf.mxu0
      %v1090 = vadd.f32 %v330, %v1089
      %1091 = vmatmul.bf16.gmra.mxu0 %v672
      %v1092 = vpop.f32.mrf.mxu0
      %v1093 = vadd.f32 %v330, %v1092
      %v1094 = vpop.f32.mrf.mxu0
      %v1095 = vadd.f32 %v330, %v1094
      %1096 = vmatmul.bf16.gmra.mxu0 %v676
      %v1097 = vpop.f32.mrf.mxu0
      %v1098 = vadd.f32 %v330, %v1097
      %v1099 = vpop.f32.mrf.mxu0
      %v1100 = vadd.f32 %v330, %v1099
      %1101 = vmatmul.bf16.gmra.mxu0 %v680
      %v1102 = vpop.f32.mrf.mxu0
      %v1103 = vadd.f32 %v330, %v1102
      %v1104 = vpop.f32.mrf.mxu0
      %v1105 = vadd.f32 %v330, %v1104
      %1106 = vmatmul.bf16.gmra.mxu0 %v684
      %v1107 = vpop.f32.mrf.mxu0
      %v1108 = vadd.f32 %v330, %v1107
      %v1109 = vpop.f32.mrf.mxu0
      %v1110 = vadd.f32 %v330, %v1109
      %1111 = vmatmul.bf16.gmra.mxu0 %v688
      %v1112 = vpop.f32.mrf.mxu0
      %v1113 = vadd.f32 %v330, %v1112
      %v1114 = vpop.f32.mrf.mxu0
      %v1115 = vadd.f32 %v330, %v1114
      %1116 = vmatmul.bf16.gmra.mxu0 %v692
      %v1117 = vpop.f32.mrf.mxu0
      %v1118 = vadd.f32 %v330, %v1117
      %v1119 = vpop.f32.mrf.mxu0
      %v1120 = vadd.f32 %v330, %v1119
      %1121 = vmatmul.bf16.gmra.mxu0 %v696
      %v1122 = vpop.f32.mrf.mxu0
      %v1123 = vadd.f32 %v330, %v1122
      %v1124 = vpop.f32.mrf.mxu0
      %v1125 = vadd.f32 %v330, %v1124
      %1126 = vmatmul.bf16.gmra.mxu0 %v700
      %v1127 = vpop.f32.mrf.mxu0
      %v1128 = vadd.f32 %v330, %v1127
      %v1129 = vpop.f32.mrf.mxu0
      %v1130 = vadd.f32 %v330, %v1129
      %1131 = vmatmul.bf16.gmra.mxu0 %v704
      %v1132 = vpop.f32.mrf.mxu0
      %v1133 = vadd.f32 %v330, %v1132
      %v1134 = vpop.f32.mrf.mxu0
      %v1135 = vadd.f32 %v330, %v1134
      %1136 = vmatmul.bf16.gmra.mxu0 %v708
      %v1137 = vpop.f32.mrf.mxu0
      %v1138 = vadd.f32 %v330, %v1137
      %v1139 = vpop.f32.mrf.mxu0
      %v1140 = vadd.f32 %v330, %v1139
      %1141 = vmatmul.bf16.gmra.mxu0 %v712
      %v1142 = vpop.f32.mrf.mxu0
      %v1143 = vadd.f32 %v330, %v1142
      %v1144 = vpop.f32.mrf.mxu0
      %v1145 = vadd.f32 %v330, %v1144
      %1146 = vmatmul.bf16.gmra.mxu0 %v716
      %v1147 = vpop.f32.mrf.mxu0
      %v1148 = vadd.f32 %v330, %v1147
      %v1149 = vpop.f32.mrf.mxu0
      %v1150 = vadd.f32 %v330, %v1149
      %1151 = vmatmul.bf16.gmra.mxu0 %v720
      %v1152 = vpop.f32.mrf.mxu0
      %v1153 = vadd.f32 %v330, %v1152
      %v1154 = vpop.f32.mrf.mxu0
      %v1155 = vadd.f32 %v330, %v1154
      %1156 = vmatmul.bf16.gmra.mxu0 %v724
      %v1157 = vpop.f32.mrf.mxu0
      %v1158 = vadd.f32 %v330, %v1157
      %v1159 = vpop.f32.mrf.mxu0
      %v1160 = vadd.f32 %v330, %v1159
      %1161 = vmatmul.bf16.gmra.mxu0 %v728
      %v1162 = vpop.f32.mrf.mxu0
      %v1163 = vadd.f32 %v330, %v1162
      %v1164 = vpop.f32.mrf.mxu0
      %v1165 = vadd.f32 %v330, %v1164
      %1166 = vdwg.mxu0
      %1167 = vmatpush.bf16.msra.mxu0 %v922
      %1168 = vmatpush.bf16.msra.mxu0 %v921
      %1169 = vmatpush.bf16.msra.mxu0 %v920
      %1170 = vmatpush.bf16.msra.mxu0 %v919
      %1171 = vmatpush.bf16.msra.mxu0 %v918
      %1172 = vmatpush.bf16.msra.mxu0 %v917
      %1173 = vmatpush.bf16.msra.mxu0 %v916
      %1174 = vmatpush.bf16.msra.mxu0 %v915
      %1175 = vmatmul.bf16.gmra.mxu0 %v633
      %v1176 = vpop.f32.mrf.mxu0
      %v1177 = vadd.f32 %v1043, %v1176
      %v1178 = vpop.f32.mrf.mxu0
      %v1179 = vadd.f32 %v1045, %v1178
      %1180 = vmatmul.bf16.gmra.mxu0 %v637
      %v1181 = vpop.f32.mrf.mxu0
      %v1182 = vadd.f32 %v1048, %v1181
      %v1183 = vpop.f32.mrf.mxu0
      %v1184 = vadd.f32 %v1050, %v1183
      %1185 = vmatmul.bf16.gmra.mxu0 %v641
      %v1186 = vpop.f32.mrf.mxu0
      %v1187 = vadd.f32 %v1053, %v1186
      %v1188 = vpop.f32.mrf.mxu0
      %v1189 = vadd.f32 %v1055, %v1188
      %1190 = vmatmul.bf16.gmra.mxu0 %v645
      %v1191 = vpop.f32.mrf.mxu0
      %v1192 = vadd.f32 %v1058, %v1191
      %v1193 = vpop.f32.mrf.mxu0
      %v1194 = vadd.f32 %v1060, %v1193
      %1195 = vmatmul.bf16.gmra.mxu0 %v649
      %v1196 = vpop.f32.mrf.mxu0
      %v1197 = vadd.f32 %v1063, %v1196
      %v1198 = vpop.f32.mrf.mxu0
      %v1199 = vadd.f32 %v1065, %v1198
      %1200 = vmatmul.bf16.gmra.mxu0 %v653
      %v1201 = vpop.f32.mrf.mxu0
      %v1202 = vadd.f32 %v1068, %v1201
      %v1203 = vpop.f32.mrf.mxu0
      %v1204 = vadd.f32 %v1070, %v1203
      %1205 = vmatmul.bf16.gmra.mxu0 %v657
      %v1206 = vpop.f32.mrf.mxu0
      %v1207 = vadd.f32 %v1073, %v1206
      %v1208 = vpop.f32.mrf.mxu0
      %v1209 = vadd.f32 %v1075, %v1208
      %1210 = vmatmul.bf16.gmra.mxu0 %v661
      %v1211 = vpop.f32.mrf.mxu0
      %v1212 = vadd.f32 %v1078, %v1211
      %v1213 = vpop.f32.mrf.mxu0
      %v1214 = vadd.f32 %v1080, %v1213
      %1215 = vmatmul.bf16.gmra.mxu0 %v665
      %v1216 = vpop.f32.mrf.mxu0
      %v1217 = vadd.f32 %v1083, %v1216
      %v1218 = vpop.f32.mrf.mxu0
      %v1219 = vadd.f32 %v1085, %v1218
      %1220 = vmatmul.bf16.gmra.mxu0 %v669
      %v1221 = vpop.f32.mrf.mxu0
      %v1222 = vadd.f32 %v1088, %v1221
      %v1223 = vpop.f32.mrf.mxu0
      %v1224 = vadd.f32 %v1090, %v1223
      %1225 = vmatmul.bf16.gmra.mxu0 %v673
      %v1226 = vpop.f32.mrf.mxu0
      %v1227 = vadd.f32 %v1093, %v1226
      %v1228 = vpop.f32.mrf.mxu0
      %v1229 = vadd.f32 %v1095, %v1228
      %1230 = vmatmul.bf16.gmra.mxu0 %v677
      %v1231 = vpop.f32.mrf.mxu0
      %v1232 = vadd.f32 %v1098, %v1231
      %v1233 = vpop.f32.mrf.mxu0
      %v1234 = vadd.f32 %v1100, %v1233
      %1235 = vmatmul.bf16.gmra.mxu0 %v681
      %v1236 = vpop.f32.mrf.mxu0
      %v1237 = vadd.f32 %v1103, %v1236
      %v1238 = vpop.f32.mrf.mxu0
      %v1239 = vadd.f32 %v1105, %v1238
      %1240 = vmatmul.bf16.gmra.mxu0 %v685
      %v1241 = vpop.f32.mrf.mxu0
      %v1242 = vadd.f32 %v1108, %v1241
      %v1243 = vpop.f32.mrf.mxu0
      %v1244 = vadd.f32 %v1110, %v1243
      %1245 = vmatmul.bf16.gmra.mxu0 %v689
      %v1246 = vpop.f32.mrf.mxu0
      %v1247 = vadd.f32 %v1113, %v1246
      %v1248 = vpop.f32.mrf.mxu0
      %v1249 = vadd.f32 %v1115, %v1248
      %1250 = vmatmul.bf16.gmra.mxu0 %v693
      %v1251 = vpop.f32.mrf.mxu0
      %v1252 = vadd.f32 %v1118, %v1251
      %v1253 = vpop.f32.mrf.mxu0
      %v1254 = vadd.f32 %v1120, %v1253
      %1255 = vmatmul.bf16.gmra.mxu0 %v697
      %v1256 = vpop.f32.mrf.mxu0
      %v1257 = vadd.f32 %v1123, %v1256
      %v1258 = vpop.f32.mrf.mxu0
      %v1259 = vadd.f32 %v1125, %v1258
      %1260 = vmatmul.bf16.gmra.mxu0 %v701
      %v1261 = vpop.f32.mrf.mxu0
      %v1262 = vadd.f32 %v1128, %v1261
      %v1263 = vpop.f32.mrf.mxu0
      %v1264 = vadd.f32 %v1130, %v1263
      %1265 = vmatmul.bf16.gmra.mxu0 %v705
      %v1266 = vpop.f32.mrf.mxu0
      %v1267 = vadd.f32 %v1133, %v1266
      %v1268 = vpop.f32.mrf.mxu0
      %v1269 = vadd.f32 %v1135, %v1268
      %1270 = vmatmul.bf16.gmra.mxu0 %v709
      %v1271 = vpop.f32.mrf.mxu0
      %v1272 = vadd.f32 %v1138, %v1271
      %v1273 = vpop.f32.mrf.mxu0
      %v1274 = vadd.f32 %v1140, %v1273
      %1275 = vmatmul.bf16.gmra.mxu0 %v713
      %v1276 = vpop.f32.mrf.mxu0
      %v1277 = vadd.f32 %v1143, %v1276
      %v1278 = vpop.f32.mrf.mxu0
      %v1279 = vadd.f32 %v1145, %v1278
      %1280 = vmatmul.bf16.gmra.mxu0 %v717
      %v1281 = vpop.f32.mrf.mxu0
      %v1282 = vadd.f32 %v1148, %v1281
      %v1283 = vpop.f32.mrf.mxu0
      %v1284 = vadd.f32 %v1150, %v1283
      %1285 = vmatmul.bf16.gmra.mxu0 %v721
      %v1286 = vpop.f32.mrf.mxu0
      %v1287 = vadd.f32 %v1153, %v1286
      %v1288 = vpop.f32.mrf.mxu0
      %v1289 = vadd.f32 %v1155, %v1288
      %1290 = vmatmul.bf16.gmra.mxu0 %v725
      %v1291 = vpop.f32.mrf.mxu0
      %v1292 = vadd.f32 %v1158, %v1291
      %v1293 = vpop.f32.mrf.mxu0
      %v1294 = vadd.f32 %v1160, %v1293
      %1295 = vmatmul.bf16.gmra.mxu0 %v729
      %v1296 = vpop.f32.mrf.mxu0
      %v1297 = vadd.f32 %v1163, %v1296
      %v1298 = vpop.f32.mrf.mxu0
      %v1299 = vadd.f32 %v1165, %v1298
      %1300 = vdwg.mxu0
      %1301 = vmatpush.bf16.msra.mxu0 %v930
      %1302 = vmatpush.bf16.msra.mxu0 %v929
      %1303 = vmatpush.bf16.msra.mxu0 %v928
      %1304 = vmatpush.bf16.msra.mxu0 %v927
      %1305 = vmatpush.bf16.msra.mxu0 %v926
      %1306 = vmatpush.bf16.msra.mxu0 %v925
      %1307 = vmatpush.bf16.msra.mxu0 %v924
      %1308 = vmatpush.bf16.msra.mxu0 %v923
      %1309 = vmatmul.bf16.gmra.mxu0 %v634
      %v1310 = vpop.f32.mrf.mxu0
      %v1311 = vadd.f32 %v1177, %v1310
      %v1312 = vpop.f32.mrf.mxu0
      %v1313 = vadd.f32 %v1179, %v1312
      %1314 = vmatmul.bf16.gmra.mxu0 %v638
      %v1315 = vpop.f32.mrf.mxu0
      %v1316 = vadd.f32 %v1182, %v1315
      %v1317 = vpop.f32.mrf.mxu0
      %v1318 = vadd.f32 %v1184, %v1317
      %1319 = vmatmul.bf16.gmra.mxu0 %v642
      %v1320 = vpop.f32.mrf.mxu0
      %v1321 = vadd.f32 %v1187, %v1320
      %v1322 = vpop.f32.mrf.mxu0
      %v1323 = vadd.f32 %v1189, %v1322
      %1324 = vmatmul.bf16.gmra.mxu0 %v646
      %v1325 = vpop.f32.mrf.mxu0
      %v1326 = vadd.f32 %v1192, %v1325
      %v1327 = vpop.f32.mrf.mxu0
      %v1328 = vadd.f32 %v1194, %v1327
      %1329 = vmatmul.bf16.gmra.mxu0 %v650
      %v1330 = vpop.f32.mrf.mxu0
      %v1331 = vadd.f32 %v1197, %v1330
      %v1332 = vpop.f32.mrf.mxu0
      %v1333 = vadd.f32 %v1199, %v1332
      %1334 = vmatmul.bf16.gmra.mxu0 %v654
      %v1335 = vpop.f32.mrf.mxu0
      %v1336 = vadd.f32 %v1202, %v1335
      %v1337 = vpop.f32.mrf.mxu0
      %v1338 = vadd.f32 %v1204, %v1337
      %1339 = vmatmul.bf16.gmra.mxu0 %v658
      %v1340 = vpop.f32.mrf.mxu0
      %v1341 = vadd.f32 %v1207, %v1340
      %v1342 = vpop.f32.mrf.mxu0
      %v1343 = vadd.f32 %v1209, %v1342
      %1344 = vmatmul.bf16.gmra.mxu0 %v662
      %v1345 = vpop.f32.mrf.mxu0
      %v1346 = vadd.f32 %v1212, %v1345
      %v1347 = vpop.f32.mrf.mxu0
      %v1348 = vadd.f32 %v1214, %v1347
      %1349 = vmatmul.bf16.gmra.mxu0 %v666
      %v1350 = vpop.f32.mrf.mxu0
      %v1351 = vadd.f32 %v1217, %v1350
      %v1352 = vpop.f32.mrf.mxu0
      %v1353 = vadd.f32 %v1219, %v1352
      %1354 = vmatmul.bf16.gmra.mxu0 %v670
      %v1355 = vpop.f32.mrf.mxu0
      %v1356 = vadd.f32 %v1222, %v1355
      %v1357 = vpop.f32.mrf.mxu0
      %v1358 = vadd.f32 %v1224, %v1357
      %1359 = vmatmul.bf16.gmra.mxu0 %v674
      %v1360 = vpop.f32.mrf.mxu0
      %v1361 = vadd.f32 %v1227, %v1360
      %v1362 = vpop.f32.mrf.mxu0
      %v1363 = vadd.f32 %v1229, %v1362
      %1364 = vmatmul.bf16.gmra.mxu0 %v678
      %v1365 = vpop.f32.mrf.mxu0
      %v1366 = vadd.f32 %v1232, %v1365
      %v1367 = vpop.f32.mrf.mxu0
      %v1368 = vadd.f32 %v1234, %v1367
      %1369 = vmatmul.bf16.gmra.mxu0 %v682
      %v1370 = vpop.f32.mrf.mxu0
      %v1371 = vadd.f32 %v1237, %v1370
      %v1372 = vpop.f32.mrf.mxu0
      %v1373 = vadd.f32 %v1239, %v1372
      %1374 = vmatmul.bf16.gmra.mxu0 %v686
      %v1375 = vpop.f32.mrf.mxu0
      %v1376 = vadd.f32 %v1242, %v1375
      %v1377 = vpop.f32.mrf.mxu0
      %v1378 = vadd.f32 %v1244, %v1377
      %1379 = vmatmul.bf16.gmra.mxu0 %v690
      %v1380 = vpop.f32.mrf.mxu0
      %v1381 = vadd.f32 %v1247, %v1380
      %v1382 = vpop.f32.mrf.mxu0
      %v1383 = vadd.f32 %v1249, %v1382
      %1384 = vmatmul.bf16.gmra.mxu0 %v694
      %v1385 = vpop.f32.mrf.mxu0
      %v1386 = vadd.f32 %v1252, %v1385
      %v1387 = vpop.f32.mrf.mxu0
      %v1388 = vadd.f32 %v1254, %v1387
      %1389 = vmatmul.bf16.gmra.mxu0 %v698
      %v1390 = vpop.f32.mrf.mxu0
      %v1391 = vadd.f32 %v1257, %v1390
      %v1392 = vpop.f32.mrf.mxu0
      %v1393 = vadd.f32 %v1259, %v1392
      %1394 = vmatmul.bf16.gmra.mxu0 %v702
      %v1395 = vpop.f32.mrf.mxu0
      %v1396 = vadd.f32 %v1262, %v1395
      %v1397 = vpop.f32.mrf.mxu0
      %v1398 = vadd.f32 %v1264, %v1397
      %1399 = vmatmul.bf16.gmra.mxu0 %v706
      %v1400 = vpop.f32.mrf.mxu0
      %v1401 = vadd.f32 %v1267, %v1400
      %v1402 = vpop.f32.mrf.mxu0
      %v1403 = vadd.f32 %v1269, %v1402
      %1404 = vmatmul.bf16.gmra.mxu0 %v710
      %v1405 = vpop.f32.mrf.mxu0
      %v1406 = vadd.f32 %v1272, %v1405
      %v1407 = vpop.f32.mrf.mxu0
      %v1408 = vadd.f32 %v1274, %v1407
      %1409 = vmatmul.bf16.gmra.mxu0 %v714
      %v1410 = vpop.f32.mrf.mxu0
      %v1411 = vadd.f32 %v1277, %v1410
      %v1412 = vpop.f32.mrf.mxu0
      %v1413 = vadd.f32 %v1279, %v1412
      %1414 = vmatmul.bf16.gmra.mxu0 %v718
      %v1415 = vpop.f32.mrf.mxu0
      %v1416 = vadd.f32 %v1282, %v1415
      %v1417 = vpop.f32.mrf.mxu0
      %v1418 = vadd.f32 %v1284, %v1417
      %1419 = vmatmul.bf16.gmra.mxu0 %v722
      %v1420 = vpop.f32.mrf.mxu0
      %v1421 = vadd.f32 %v1287, %v1420
      %v1422 = vpop.f32.mrf.mxu0
      %v1423 = vadd.f32 %v1289, %v1422
      %1424 = vmatmul.bf16.gmra.mxu0 %v726
      %v1425 = vpop.f32.mrf.mxu0
      %v1426 = vadd.f32 %v1292, %v1425
      %v1427 = vpop.f32.mrf.mxu0
      %v1428 = vadd.f32 %v1294, %v1427
      %1429 = vmatmul.bf16.gmra.mxu0 %v730
      %v1430 = vpop.f32.mrf.mxu0
      %v1431 = vadd.f32 %v1297, %v1430
      %v1432 = vpop.f32.mrf.mxu0
      %v1433 = vadd.f32 %v1299, %v1432
      %1434 = vdwg.mxu0
      %1435 = vmatpush.bf16.msra.mxu0 0
      %1436 = vmatpush.bf16.msra.mxu0 0
      %1437 = vmatpush.bf16.msra.mxu0 0
      %1438 = vmatpush.bf16.msra.mxu0 0
      %1439 = vmatpush.bf16.msra.mxu0 0
      %1440 = vmatpush.bf16.msra.mxu0 0
      %1441 = vmatpush.bf16.msra.mxu0 0
      %1442 = vmatpush.bf16.msra.mxu0 %v931
      %1443 = vmatmul.bf16.gmra.mxu0 %v959
      %v1444 = vpop.f32.mrf.mxu0
      %v1445 = vadd.f32 %v1311, %v1444
      %v1446 = vpop.f32.mrf.mxu0
      %v1447 = vadd.f32 %v1313, %v1446
      %1448 = vmatmul.bf16.gmra.mxu0 %v962
      %v1449 = vpop.f32.mrf.mxu0
      %v1450 = vadd.f32 %v1316, %v1449
      %v1451 = vpop.f32.mrf.mxu0
      %v1452 = vadd.f32 %v1318, %v1451
      %1453 = vmatmul.bf16.gmra.mxu0 %v965
      %v1454 = vpop.f32.mrf.mxu0
      %v1455 = vadd.f32 %v1321, %v1454
      %v1456 = vpop.f32.mrf.mxu0
      %v1457 = vadd.f32 %v1323, %v1456
      %1458 = vmatmul.bf16.gmra.mxu0 %v968
      %v1459 = vpop.f32.mrf.mxu0
      %v1460 = vadd.f32 %v1326, %v1459
      %v1461 = vpop.f32.mrf.mxu0
      %v1462 = vadd.f32 %v1328, %v1461
      %1463 = vmatmul.bf16.gmra.mxu0 %v971
      %v1464 = vpop.f32.mrf.mxu0
      %v1465 = vadd.f32 %v1331, %v1464
      %v1466 = vpop.f32.mrf.mxu0
      %v1467 = vadd.f32 %v1333, %v1466
      %1468 = vmatmul.bf16.gmra.mxu0 %v974
      %v1469 = vpop.f32.mrf.mxu0
      %v1470 = vadd.f32 %v1336, %v1469
      %v1471 = vpop.f32.mrf.mxu0
      %v1472 = vadd.f32 %v1338, %v1471
      %1473 = vmatmul.bf16.gmra.mxu0 %v977
      %v1474 = vpop.f32.mrf.mxu0
      %v1475 = vadd.f32 %v1341, %v1474
      %v1476 = vpop.f32.mrf.mxu0
      %v1477 = vadd.f32 %v1343, %v1476
      %1478 = vmatmul.bf16.gmra.mxu0 %v980
      %v1479 = vpop.f32.mrf.mxu0
      %v1480 = vadd.f32 %v1346, %v1479
      %v1481 = vpop.f32.mrf.mxu0
      %v1482 = vadd.f32 %v1348, %v1481
      %1483 = vmatmul.bf16.gmra.mxu0 %v983
      %v1484 = vpop.f32.mrf.mxu0
      %v1485 = vadd.f32 %v1351, %v1484
      %v1486 = vpop.f32.mrf.mxu0
      %v1487 = vadd.f32 %v1353, %v1486
      %1488 = vmatmul.bf16.gmra.mxu0 %v986
      %v1489 = vpop.f32.mrf.mxu0
      %v1490 = vadd.f32 %v1356, %v1489
      %v1491 = vpop.f32.mrf.mxu0
      %v1492 = vadd.f32 %v1358, %v1491
      %1493 = vmatmul.bf16.gmra.mxu0 %v989
      %v1494 = vpop.f32.mrf.mxu0
      %v1495 = vadd.f32 %v1361, %v1494
      %v1496 = vpop.f32.mrf.mxu0
      %v1497 = vadd.f32 %v1363, %v1496
      %1498 = vmatmul.bf16.gmra.mxu0 %v992
      %v1499 = vpop.f32.mrf.mxu0
      %v1500 = vadd.f32 %v1366, %v1499
      %v1501 = vpop.f32.mrf.mxu0
      %v1502 = vadd.f32 %v1368, %v1501
      %1503 = vmatmul.bf16.gmra.mxu0 %v995
      %v1504 = vpop.f32.mrf.mxu0
      %v1505 = vadd.f32 %v1371, %v1504
      %v1506 = vpop.f32.mrf.mxu0
      %v1507 = vadd.f32 %v1373, %v1506
      %1508 = vmatmul.bf16.gmra.mxu0 %v998
      %v1509 = vpop.f32.mrf.mxu0
      %v1510 = vadd.f32 %v1376, %v1509
      %v1511 = vpop.f32.mrf.mxu0
      %v1512 = vadd.f32 %v1378, %v1511
      %1513 = vmatmul.bf16.gmra.mxu0 %v1001
      %v1514 = vpop.f32.mrf.mxu0
      %v1515 = vadd.f32 %v1381, %v1514
      %v1516 = vpop.f32.mrf.mxu0
      %v1517 = vadd.f32 %v1383, %v1516
      %1518 = vmatmul.bf16.gmra.mxu0 %v1004
      %v1519 = vpop.f32.mrf.mxu0
      %v1520 = vadd.f32 %v1386, %v1519
      %v1521 = vpop.f32.mrf.mxu0
      %v1522 = vadd.f32 %v1388, %v1521
      %1523 = vmatmul.bf16.gmra.mxu0 %v1007
      %v1524 = vpop.f32.mrf.mxu0
      %v1525 = vadd.f32 %v1391, %v1524
      %v1526 = vpop.f32.mrf.mxu0
      %v1527 = vadd.f32 %v1393, %v1526
      %1528 = vmatmul.bf16.gmra.mxu0 %v1010
      %v1529 = vpop.f32.mrf.mxu0
      %v1530 = vadd.f32 %v1396, %v1529
      %v1531 = vpop.f32.mrf.mxu0
      %v1532 = vadd.f32 %v1398, %v1531
      %1533 = vmatmul.bf16.gmra.mxu0 %v1013
      %v1534 = vpop.f32.mrf.mxu0
      %v1535 = vadd.f32 %v1401, %v1534
      %v1536 = vpop.f32.mrf.mxu0
      %v1537 = vadd.f32 %v1403, %v1536
      %1538 = vmatmul.bf16.gmra.mxu0 %v1016
      %v1539 = vpop.f32.mrf.mxu0
      %v1540 = vadd.f32 %v1406, %v1539
      %v1541 = vpop.f32.mrf.mxu0
      %v1542 = vadd.f32 %v1408, %v1541
      %1543 = vmatmul.bf16.gmra.mxu0 %v1019
      %v1544 = vpop.f32.mrf.mxu0
      %v1545 = vadd.f32 %v1411, %v1544
      %v1546 = vpop.f32.mrf.mxu0
      %v1547 = vadd.f32 %v1413, %v1546
      %1548 = vmatmul.bf16.gmra.mxu0 %v1022
      %v1549 = vpop.f32.mrf.mxu0
      %v1550 = vadd.f32 %v1416, %v1549
      %v1551 = vpop.f32.mrf.mxu0
      %v1552 = vadd.f32 %v1418, %v1551
      %1553 = vmatmul.bf16.gmra.mxu0 %v1025
      %v1554 = vpop.f32.mrf.mxu0
      %v1555 = vadd.f32 %v1421, %v1554
      %v1556 = vpop.f32.mrf.mxu0
      %v1557 = vadd.f32 %v1423, %v1556
      %1558 = vmatmul.bf16.gmra.mxu0 %v1028
      %v1559 = vpop.f32.mrf.mxu0
      %v1560 = vadd.f32 %v1426, %v1559
      %v1561 = vpop.f32.mrf.mxu0
      %v1562 = vadd.f32 %v1428, %v1561
      %1563 = vmatmul.bf16.gmra.mxu0 %v1031
      %v1564 = vpop.f32.mrf.mxu0
      %v1565 = vadd.f32 %v1431, %v1564
      %v1566 = vpop.f32.mrf.mxu0
      %v1567 = vadd.f32 %v1433, %v1566
      %1568 = vdwg.mxu0
      %v1569 = vmax.f32 %v1445, 0.0
      %v1570 = vmax.f32 %v1447, 0.0
      %v1571 = vmax.f32 %v1450, 0.0
      %v1572 = vmax.f32 %v1452, 0.0
      %v1573 = vmax.f32 %v1455, 0.0
      %v1574 = vmax.f32 %v1457, 0.0
      %v1575 = vmax.f32 %v1460, 0.0
      %v1576 = vmax.f32 %v1462, 0.0
      %v1577 = vmax.f32 %v1465, 0.0
      %v1578 = vmax.f32 %v1467, 0.0
      %v1579 = vmax.f32 %v1470, 0.0
      %v1580 = vmax.f32 %v1472, 0.0
      %v1581 = vmax.f32 %v1475, 0.0
      %v1582 = vmax.f32 %v1477, 0.0
      %v1583 = vmax.f32 %v1480, 0.0
      %v1584 = vmax.f32 %v1482, 0.0
      %v1585 = vmax.f32 %v1485, 0.0
      %v1586 = vmax.f32 %v1487, 0.0
      %v1587 = vmax.f32 %v1490, 0.0
      %v1588 = vmax.f32 %v1492, 0.0
      %v1589 = vmax.f32 %v1495, 0.0
      %v1590 = vmax.f32 %v1497, 0.0
      %v1591 = vmax.f32 %v1500, 0.0
      %v1592 = vmax.f32 %v1502, 0.0
      %v1593 = vmax.f32 %v1505, 0.0
      %v1594 = vmax.f32 %v1507, 0.0
      %v1595 = vmax.f32 %v1510, 0.0
      %v1596 = vmax.f32 %v1512, 0.0
      %v1597 = vmax.f32 %v1515, 0.0
      %v1598 = vmax.f32 %v1517, 0.0
      %v1599 = vmax.f32 %v1520, 0.0
      %v1600 = vmax.f32 %v1522, 0.0
      %v1601 = vmax.f32 %v1525, 0.0
      %v1602 = vmax.f32 %v1527, 0.0
      %v1603 = vmax.f32 %v1530, 0.0
      %v1604 = vmax.f32 %v1532, 0.0
      %v1605 = vmax.f32 %v1535, 0.0
      %v1606 = vmax.f32 %v1537, 0.0
      %v1607 = vmax.f32 %v1540, 0.0
      %v1608 = vmax.f32 %v1542, 0.0
      %v1609 = vmax.f32 %v1545, 0.0
      %v1610 = vmax.f32 %v1547, 0.0
      %v1611 = vmax.f32 %v1550, 0.0
      %v1612 = vmax.f32 %v1552, 0.0
      %v1613 = vmax.f32 %v1555, 0.0
      %v1614 = vmax.f32 %v1557, 0.0
      %v1615 = vmax.f32 %v1560, 0.0
      %v1616 = vmax.f32 %v1562, 0.0
      %v1617 = vmax.f32 %v1565, 0.0
      %v1618 = vmax.f32 %v1567, 0.0
      %v1619 = vpack.c.bf16 %v1569, %v1569
      %v1620 = vpack.c.bf16 %v1570, %v1570
      %v1621 = vpack.c.bf16 %v1571, %v1571
      %v1622 = vpack.c.bf16 %v1572, %v1572
      %v1623 = vpack.c.bf16 %v1573, %v1573
      %v1624 = vpack.c.bf16 %v1574, %v1574
      %v1625 = vpack.c.bf16 %v1575, %v1575
      %v1626 = vpack.c.bf16 %v1576, %v1576
      %v1627 = vpack.c.bf16 %v1577, %v1577
      %v1628 = vpack.c.bf16 %v1578, %v1578
      %v1629 = vpack.c.bf16 %v1579, %v1579
      %v1630 = vpack.c.bf16 %v1580, %v1580
      %v1631 = vpack.c.bf16 %v1581, %v1581
      %v1632 = vpack.c.bf16 %v1582, %v1582
      %v1633 = vpack.c.bf16 %v1583, %v1583
      %v1634 = vpack.c.bf16 %v1584, %v1584
      %v1635 = vpack.c.bf16 %v1585, %v1585
      %v1636 = vpack.c.bf16 %v1586, %v1586
      %v1637 = vpack.c.bf16 %v1587, %v1587
      %v1638 = vpack.c.bf16 %v1588, %v1588
      %v1639 = vpack.c.bf16 %v1589, %v1589
      %v1640 = vpack.c.bf16 %v1590, %v1590
      %v1641 = vpack.c.bf16 %v1591, %v1591
      %v1642 = vpack.c.bf16 %v1592, %v1592
      %v1643 = vpack.c.bf16 %v1593, %v1593
      %v1644 = vpack.c.bf16 %v1594, %v1594
      %v1645 = vpack.c.bf16 %v1595, %v1595
      %v1646 = vpack.c.bf16 %v1596, %v1596
      %v1647 = vpack.c.bf16 %v1597, %v1597
      %v1648 = vpack.c.bf16 %v1598, %v1598
      %v1649 = vpack.c.bf16 %v1599, %v1599
      %v1650 = vpack.c.bf16 %v1600, %v1600
      %v1651 = vpack.c.bf16 %v1601, %v1601
      %v1652 = vpack.c.bf16 %v1602, %v1602
      %v1653 = vpack.c.bf16 %v1603, %v1603
      %v1654 = vpack.c.bf16 %v1604, %v1604
      %v1655 = vpack.c.bf16 %v1605, %v1605
      %v1656 = vpack.c.bf16 %v1606, %v1606
      %v1657 = vpack.c.bf16 %v1607, %v1607
      %v1658 = vpack.c.bf16 %v1608, %v1608
      %v1659 = vpack.c.bf16 %v1609, %v1609
      %v1660 = vpack.c.bf16 %v1610, %v1610
      %v1661 = vpack.c.bf16 %v1611, %v1611
      %v1662 = vpack.c.bf16 %v1612, %v1612
      %v1663 = vpack.c.bf16 %v1613, %v1613
      %v1664 = vpack.c.bf16 %v1614, %v1614
      %v1665 = vpack.c.bf16 %v1615, %v1615
      %v1666 = vpack.c.bf16 %v1616, %v1616
      %v1667 = vpack.c.bf16 %v1617, %v1617
      %v1668 = vpack.c.bf16 %v1618, %v1618
      %vm1669 = vcmask 257024
      %1670 = vst.msk [vmem:[%s175] sm:$0xf] %vm1669, %v1619
      %1671 = vst.msk [vmem:[%s175 + $0x4] sm:$0xf] %vm1669, %v1620
      %1672 = vst.msk [vmem:[%s175 + $0x8] sm:$0xf] %vm1669, %v1621
      %1673 = vst.msk [vmem:[%s175 + $0xc] sm:$0xf] %vm1669, %v1622
      %1674 = vst.msk [vmem:[%s175 + $0x10] sm:$0xf] %vm1669, %v1623
      %1675 = vst.msk [vmem:[%s175 + $0x14] sm:$0xf] %vm1669, %v1624
      %1676 = vst.msk [vmem:[%s175 + $0x18] sm:$0xf] %vm1669, %v1625
      %1677 = vst.msk [vmem:[%s175 + $0x1c] sm:$0xf] %vm1669, %v1626
      %1678 = vst.msk [vmem:[%s175 + $0x20] sm:$0xf] %vm1669, %v1627
      %1679 = vst.msk [vmem:[%s175 + $0x24] sm:$0xf] %vm1669, %v1628
      %1680 = vst.msk [vmem:[%s175 + $0x28] sm:$0xf] %vm1669, %v1629
      %1681 = vst.msk [vmem:[%s175 + $0x2c] sm:$0xf] %vm1669, %v1630
      %1682 = vst.msk [vmem:[%s175 + $0x30] sm:$0xf] %vm1669, %v1631
      %1683 = vst.msk [vmem:[%s175 + $0x34] sm:$0xf] %vm1669, %v1632
      %1684 = vst.msk [vmem:[%s175 + $0x38] sm:$0xf] %vm1669, %v1633
      %1685 = vst.msk [vmem:[%s175 + $0x3c] sm:$0xf] %vm1669, %v1634
      %1686 = vst.msk [vmem:[%s175 + $0x40] sm:$0xf] %vm1669, %v1635
      %1687 = vst.msk [vmem:[%s175 + $0x44] sm:$0xf] %vm1669, %v1636
      %1688 = vst.msk [vmem:[%s175 + $0x48] sm:$0xf] %vm1669, %v1637
      %1689 = vst.msk [vmem:[%s175 + $0x4c] sm:$0xf] %vm1669, %v1638
      %1690 = vst.msk [vmem:[%s175 + $0x50] sm:$0xf] %vm1669, %v1639
      %1691 = vst.msk [vmem:[%s175 + $0x54] sm:$0xf] %vm1669, %v1640
      %1692 = vst.msk [vmem:[%s175 + $0x58] sm:$0xf] %vm1669, %v1641
      %1693 = vst.msk [vmem:[%s175 + $0x5c] sm:$0xf] %vm1669, %v1642
      %1694 = vst.msk [vmem:[%s175 + $0x60] sm:$0xf] %vm1669, %v1643
      %1695 = vst.msk [vmem:[%s175 + $0x64] sm:$0xf] %vm1669, %v1644
      %1696 = vst.msk [vmem:[%s175 + $0x68] sm:$0xf] %vm1669, %v1645
      %1697 = vst.msk [vmem:[%s175 + $0x6c] sm:$0xf] %vm1669, %v1646
      %1698 = vst.msk [vmem:[%s175 + $0x70] sm:$0xf] %vm1669, %v1647
      %1699 = vst.msk [vmem:[%s175 + $0x74] sm:$0xf] %vm1669, %v1648
      %1700 = vst.msk [vmem:[%s175 + $0x78] sm:$0xf] %vm1669, %v1649
      %1701 = vst.msk [vmem:[%s175 + $0x7c] sm:$0xf] %vm1669, %v1650
      %1702 = vst.msk [vmem:[%s175 + $0x80] sm:$0xf] %vm1669, %v1651
      %1703 = vst.msk [vmem:[%s175 + $0x84] sm:$0xf] %vm1669, %v1652
      %1704 = vst.msk [vmem:[%s175 + $0x88] sm:$0xf] %vm1669, %v1653
      %1705 = vst.msk [vmem:[%s175 + $0x8c] sm:$0xf] %vm1669, %v1654
      %1706 = vst.msk [vmem:[%s175 + $0x90] sm:$0xf] %vm1669, %v1655
      %1707 = vst.msk [vmem:[%s175 + $0x94] sm:$0xf] %vm1669, %v1656
      %1708 = vst.msk [vmem:[%s175 + $0x98] sm:$0xf] %vm1669, %v1657
      %1709 = vst.msk [vmem:[%s175 + $0x9c] sm:$0xf] %vm1669, %v1658
      %1710 = vst.msk [vmem:[%s175 + $0xa0] sm:$0xf] %vm1669, %v1659
      %1711 = vst.msk [vmem:[%s175 + $0xa4] sm:$0xf] %vm1669, %v1660
      %1712 = vst.msk [vmem:[%s175 + $0xa8] sm:$0xf] %vm1669, %v1661
      %1713 = vst.msk [vmem:[%s175 + $0xac] sm:$0xf] %vm1669, %v1662
      %1714 = vst.msk [vmem:[%s175 + $0xb0] sm:$0xf] %vm1669, %v1663
      %1715 = vst.msk [vmem:[%s175 + $0xb4] sm:$0xf] %vm1669, %v1664
      %1716 = vst.msk [vmem:[%s175 + $0xb8] sm:$0xf] %vm1669, %v1665
      %1717 = vst.msk [vmem:[%s175 + $0xbc] sm:$0xf] %vm1669, %v1666
      %1718 = vst.msk [vmem:[%s175 + $0xc0] sm:$0xf] %vm1669, %v1667
      %1719 = vst.msk [vmem:[%s175 + $0xc4] sm:$0xf] %vm1669, %v1668
      %s1720 = smul.u32 50, %s14
      %p1721 = scmp.lt.s32.totalorder %s1720, 199
      %s1722 = scalar_select %p1721, %s1720, 199
      %s1723 = smul.addr %s1722, 4
      %s1724 = scalar_lea.vmem %s3, %s1723
      // Predicated region
      $region33: #{initial_net_forward.6} parent=31 // pred_check
        %p1725 = pneg %p100
      $region34: #{initial_net_forward.6} parent=31 // pred_check_branch
        %1727 = sbr.rel (%p1725) target = $region36
      $region35: #{initial_net_forward.6} parent=31 // pred_region
        %s1728 = smul.u32 50, %s14
      $region36: #{initial_net_forward.6} parent=31 // pred_fallthru
        _
    $region32: #{initial_net_forward.6} parent=5 // pred_fallthru
      _
    %p1729 = scmp.le.s32.totalorder 2, %s9
    // Predicated region
    $region37: #{initial_net_forward.6} parent=5 // pred_check
      %p1730 = pneg %p1729
    $region38: #{initial_net_forward.6} parent=5 // pred_check_branch
      %1732 = sbr.rel (%p1730) target = $region40
    $region39: #{initial_net_forward.6} parent=5 // pred_region
      %s1733 = ssub.s32 %s9, 2
      // Predicated region
      $region41: #{initial_net_forward.6} parent=39 // pred_check
        %p1734 = pneg %p106
      $region42: #{initial_net_forward.6} parent=39 // pred_check_branch
        %1736 = sbr.rel (%p1734) target = $region44
      $region43: #{initial_net_forward.6} parent=39 // pred_region
        %s1737 = smul.u32 50, %s15
        %p1738 = scmp.lt.s32.totalorder %s1737, 199
        %s1739 = scalar_select %p1738, %s1737, 199
        %s1740 = smul.addr %s1739, 4
        %s1741 = scalar_lea.vmem %s3, %s1740
      $region44: #{initial_net_forward.6} parent=39 // pred_fallthru
        _
    $region40: #{initial_net_forward.6} parent=5 // pred_fallthru
      _
  $region6: #{initial_net_forward.6} parent=0 // loop_footer
    %s13 = sadd.s32 1, %s9
  $region7: #{initial_net_forward.6} parent=0 // loop_footer_branch
    %8 = sbr.rel target = $region3
  $region8: #{initial_net_forward.6} parent=0 // loop_exit
    _

// kernel: initial_net_forward.7
$region0: #{initial_net_forward.7}
  #allocation0 [shape = 'u32[]', space=smem, size = 0x4, offset = 0x4, fixed_abs, tag = 'smem constant byte address 0x4 - core index']
  #allocation1 [shape = 'u32[72,128]{1,0:T(1,128)}', space=vmem, size = 0x9000, scoped, tag = 'internal scratch']
  %s0 = inlined_call_operand.vmem [shape: bf16[400,800], index: 0, kind: input, shape index: {}]
  %s1 = inlined_call_operand.vmem [shape: bf16[800,64], index: 1, kind: input, shape index: {}]
  %s2 = inlined_call_operand.vmem [shape: f32[1,64], index: 2, kind: input, shape index: {}]
  %s3 = inlined_call_operand.vmem [shape: bf16[400,64], index: 3, kind: output, shape index: {}]
  %s4 = sld [smem:[#allocation0]]
  $region22: #{initial_net_forward.7} parent=0
    _
  %s6 = ssub.s32 1, %s4
  %s7 = scalar_select 0, %s6, %s4
  // Predicated region
  $region2: #{initial_net_forward.7} parent=0 // pred_check
    _
  $region3: #{initial_net_forward.7} parent=0 // pred_check_branch
    %9 = sbr.rel (0) target = $region5
  $region4: #{initial_net_forward.7} parent=0 // pred_region
    _
  $region5: #{initial_net_forward.7} parent=0 // pred_fallthru
    _
  // Predicated region
  $region6: #{initial_net_forward.7} parent=0 // pred_check
    _
  $region7: #{initial_net_forward.7} parent=0 // pred_check_branch
    %11 = sbr.rel (0) target = $region9
  $region8: #{initial_net_forward.7} parent=0 // pred_region
    _
  $region9: #{initial_net_forward.7} parent=0 // pred_fallthru
    _
  // Predicated region
  $region10: #{initial_net_forward.7} parent=0 // pred_check
    _
  $region11: #{initial_net_forward.7} parent=0 // pred_check_branch
    %13 = sbr.rel (0) target = $region13
  $region12: #{initial_net_forward.7} parent=0 // pred_region
    _
  $region13: #{initial_net_forward.7} parent=0 // pred_fallthru
    _
  %v15 = vld [vmem:[%s0] sm:$0xff]
  %v16 = vld [vmem:[%s0 + $0x8] sm:$0xff]
  %v17 = vld [vmem:[%s0 + $0x10] sm:$0xff]
  %v18 = vld [vmem:[%s0 + $0x18] sm:$0xf]
  %v19 = vld [vmem:[%s0 + $0x1c] sm:$0xff]
  %v20 = vld [vmem:[%s0 + $0x24] sm:$0xff]
  %v21 = vld [vmem:[%s0 + $0x2c] sm:$0xff]
  %v22 = vld [vmem:[%s0 + $0x34] sm:$0xf]
  %v23 = vld [vmem:[%s0 + $0x38] sm:$0xff]
  %v24 = vld [vmem:[%s0 + $0x40] sm:$0xff]
  %v25 = vld [vmem:[%s0 + $0x48] sm:$0xff]
  %v26 = vld [vmem:[%s0 + $0x50] sm:$0xf]
  %v27 = vld [vmem:[%s0 + $0x54] sm:$0xff]
  %v28 = vld [vmem:[%s0 + $0x5c] sm:$0xff]
  %v29 = vld [vmem:[%s0 + $0x64] sm:$0xff]
  %v30 = vld [vmem:[%s0 + $0x6c] sm:$0xf]
  %v31 = vld [vmem:[%s0 + $0x70] sm:$0xff]
  %v32 = vld [vmem:[%s0 + $0x78] sm:$0xff]
  %v33 = vld [vmem:[%s0 + $0x80] sm:$0xff]
  %v34 = vld [vmem:[%s0 + $0x88] sm:$0xf]
  %v35 = vld [vmem:[%s0 + $0x8c] sm:$0xff]
  %v36 = vld [vmem:[%s0 + $0x94] sm:$0xff]
  %v37 = vld [vmem:[%s0 + $0x9c] sm:$0xff]
  %v38 = vld [vmem:[%s0 + $0xa4] sm:$0xf]
  %v39 = vld [vmem:[%s0 + $0xa8] sm:$0xff]
  %v40 = vld [vmem:[%s0 + $0xb0] sm:$0xff]
  %v41 = vld [vmem:[%s0 + $0xb8] sm:$0xff]
  %v42 = vld [vmem:[%s0 + $0xc0] sm:$0xf]
  %v43 = vld [vmem:[%s0 + $0xc4] sm:$0xff]
  %v44 = vld [vmem:[%s0 + $0xcc] sm:$0xff]
  %v45 = vld [vmem:[%s0 + $0xd4] sm:$0xff]
  %v46 = vld [vmem:[%s0 + $0xdc] sm:$0xf]
  %v47 = vld [vmem:[%s0 + $0xe0] sm:$0xff]
  %v48 = vld [vmem:[%s0 + $0xe8] sm:$0xff]
  %v49 = vld [vmem:[%s0 + $0xf0] sm:$0xff]
  %v50 = vld [vmem:[%s0 + $0xf8] sm:$0xf]
  %v51 = vld [vmem:[%s0 + $0xfc] sm:$0xff]
  %v52 = vld [vmem:[%s0 + $0x104] sm:$0xff]
  %v53 = vld [vmem:[%s0 + $0x10c] sm:$0xff]
  %v54 = vld [vmem:[%s0 + $0x114] sm:$0xf]
  %v55 = vld [vmem:[%s0 + $0x118] sm:$0xff]
  %v56 = vld [vmem:[%s0 + $0x120] sm:$0xff]
  %v57 = vld [vmem:[%s0 + $0x128] sm:$0xff]
  %v58 = vld [vmem:[%s0 + $0x130] sm:$0xf]
  %v59 = vld [vmem:[%s0 + $0x134] sm:$0xff]
  %v60 = vld [vmem:[%s0 + $0x13c] sm:$0xff]
  %v61 = vld [vmem:[%s0 + $0x144] sm:$0xff]
  %v62 = vld [vmem:[%s0 + $0x14c] sm:$0xf]
  %v63 = vld [vmem:[%s0 + $0x150] sm:$0xff]
  %v64 = vld [vmem:[%s0 + $0x158] sm:$0xff]
  %v65 = vld [vmem:[%s0 + $0x160] sm:$0xff]
  %v66 = vld [vmem:[%s0 + $0x168] sm:$0xf]
  %v67 = vld [vmem:[%s0 + $0x16c] sm:$0xff]
  %v68 = vld [vmem:[%s0 + $0x174] sm:$0xff]
  %v69 = vld [vmem:[%s0 + $0x17c] sm:$0xff]
  %v70 = vld [vmem:[%s0 + $0x184] sm:$0xf]
  %v71 = vld [vmem:[%s0 + $0x188] sm:$0xff]
  %v72 = vld [vmem:[%s0 + $0x190] sm:$0xff]
  %v73 = vld [vmem:[%s0 + $0x198] sm:$0xff]
  %v74 = vld [vmem:[%s0 + $0x1a0] sm:$0xf]
  %v75 = vld [vmem:[%s0 + $0x1a4] sm:$0xff]
  %v76 = vld [vmem:[%s0 + $0x1ac] sm:$0xff]
  %v77 = vld [vmem:[%s0 + $0x1b4] sm:$0xff]
  %v78 = vld [vmem:[%s0 + $0x1bc] sm:$0xf]
  %v79 = vld [vmem:[%s0 + $0x1c0] sm:$0xff]
  %v80 = vld [vmem:[%s0 + $0x1c8] sm:$0xff]
  %v81 = vld [vmem:[%s0 + $0x1d0] sm:$0xff]
  %v82 = vld [vmem:[%s0 + $0x1d8] sm:$0xf]
  %v83 = vld [vmem:[%s0 + $0x1dc] sm:$0xff]
  %v84 = vld [vmem:[%s0 + $0x1e4] sm:$0xff]
  %v85 = vld [vmem:[%s0 + $0x1ec] sm:$0xff]
  %v86 = vld [vmem:[%s0 + $0x1f4] sm:$0xf]
  %v87 = vld [vmem:[%s0 + $0x1f8] sm:$0xff]
  %v88 = vld [vmem:[%s0 + $0x200] sm:$0xff]
  %v89 = vld [vmem:[%s0 + $0x208] sm:$0xff]
  %v90 = vld [vmem:[%s0 + $0x210] sm:$0xf]
  %v91 = vld [vmem:[%s0 + $0x214] sm:$0xff]
  %v92 = vld [vmem:[%s0 + $0x21c] sm:$0xff]
  %v93 = vld [vmem:[%s0 + $0x224] sm:$0xff]
  %v94 = vld [vmem:[%s0 + $0x22c] sm:$0xf]
  %v95 = vld [vmem:[%s0 + $0x230] sm:$0xff]
  %v96 = vld [vmem:[%s0 + $0x238] sm:$0xff]
  %v97 = vld [vmem:[%s0 + $0x240] sm:$0xff]
  %v98 = vld [vmem:[%s0 + $0x248] sm:$0xf]
  %v99 = vld [vmem:[%s0 + $0x24c] sm:$0xff]
  %v100 = vld [vmem:[%s0 + $0x254] sm:$0xff]
  %v101 = vld [vmem:[%s0 + $0x25c] sm:$0xff]
  %v102 = vld [vmem:[%s0 + $0x264] sm:$0xf]
  %v103 = vld [vmem:[%s0 + $0x268] sm:$0xff]
  %v104 = vld [vmem:[%s0 + $0x270] sm:$0xff]
  %v105 = vld [vmem:[%s0 + $0x278] sm:$0xff]
  %v106 = vld [vmem:[%s0 + $0x280] sm:$0xf]
  %v107 = vld [vmem:[%s0 + $0x284] sm:$0xff]
  %v108 = vld [vmem:[%s0 + $0x28c] sm:$0xff]
  %v109 = vld [vmem:[%s0 + $0x294] sm:$0xff]
  %v110 = vld [vmem:[%s0 + $0x29c] sm:$0xf]
  %v111 = vld [vmem:[%s0 + $0x2a0] sm:$0xff]
  %v112 = vld [vmem:[%s0 + $0x2a8] sm:$0xff]
  %v113 = vld [vmem:[%s0 + $0x2b0] sm:$0xff]
  %v114 = vld [vmem:[%s0 + $0x2b8] sm:$0xf]
  %v115 = vld [vmem:[%s0 + $0x2bc] sm:$0xff]
  %v116 = vld [vmem:[%s0 + $0x2c4] sm:$0xff]
  %v117 = vld [vmem:[%s0 + $0x2cc] sm:$0xff]
  %v118 = vld [vmem:[%s0 + $0x2d4] sm:$0xf]
  %v119 = vld [vmem:[%s0 + $0x2d8] sm:$0xff]
  %v120 = vld [vmem:[%s0 + $0x2e0] sm:$0xff]
  %v121 = vld [vmem:[%s0 + $0x2e8] sm:$0xff]
  %v122 = vld [vmem:[%s0 + $0x2f0] sm:$0xf]
  %v123 = vld [vmem:[%s0 + $0x2f4] sm:$0xff]
  %v124 = vld [vmem:[%s0 + $0x2fc] sm:$0xff]
  %v125 = vld [vmem:[%s0 + $0x304] sm:$0xff]
  %v126 = vld [vmem:[%s0 + $0x30c] sm:$0xf]
  %v127 = vld [vmem:[%s0 + $0x310] sm:$0xff]
  %v128 = vld [vmem:[%s0 + $0x318] sm:$0xff]
  %v129 = vld [vmem:[%s0 + $0x320] sm:$0xff]
  %v130 = vld [vmem:[%s0 + $0x328] sm:$0xf]
  %v131 = vld [vmem:[%s0 + $0x32c] sm:$0xff]
  %v132 = vld [vmem:[%s0 + $0x334] sm:$0xff]
  %v133 = vld [vmem:[%s0 + $0x33c] sm:$0xff]
  %v134 = vld [vmem:[%s0 + $0x344] sm:$0xf]
  %v135 = vld [vmem:[%s0 + $0x348] sm:$0xff]
  %v136 = vld [vmem:[%s0 + $0x350] sm:$0xff]
  %v137 = vld [vmem:[%s0 + $0x358] sm:$0xff]
  %v138 = vld [vmem:[%s0 + $0x360] sm:$0xf]
  %v139 = vld [vmem:[%s0 + $0x364] sm:$0xff]
  %v140 = vld [vmem:[%s0 + $0x36c] sm:$0xff]
  %v141 = vld [vmem:[%s0 + $0x374] sm:$0xff]
  %v142 = vld [vmem:[%s0 + $0x37c] sm:$0xf]
  %v143 = vld [vmem:[%s0 + $0x380] sm:$0xff]
  %v144 = vld [vmem:[%s0 + $0x388] sm:$0xff]
  %v145 = vld [vmem:[%s0 + $0x390] sm:$0xff]
  %v146 = vld [vmem:[%s0 + $0x398] sm:$0xf]
  %v147 = vld [vmem:[%s0 + $0x39c] sm:$0xff]
  %v148 = vld [vmem:[%s0 + $0x3a4] sm:$0xff]
  %v149 = vld [vmem:[%s0 + $0x3ac] sm:$0xff]
  %v150 = vld [vmem:[%s0 + $0x3b4] sm:$0xf]
  %v151 = vld [vmem:[%s0 + $0x3b8] sm:$0xff]
  %v152 = vld [vmem:[%s0 + $0x3c0] sm:$0xff]
  %v153 = vld [vmem:[%s0 + $0x3c8] sm:$0xff]
  %v154 = vld [vmem:[%s0 + $0x3d0] sm:$0xf]
  %v155 = vld [vmem:[%s0 + $0x3d4] sm:$0xff]
  %v156 = vld [vmem:[%s0 + $0x3dc] sm:$0xff]
  %v157 = vld [vmem:[%s0 + $0x3e4] sm:$0xff]
  %v158 = vld [vmem:[%s0 + $0x3ec] sm:$0xf]
  %v159 = vld [vmem:[%s0 + $0x3f0] sm:$0xff]
  %v160 = vld [vmem:[%s0 + $0x3f8] sm:$0xff]
  %v161 = vld [vmem:[%s0 + $0x400] sm:$0xff]
  %v162 = vld [vmem:[%s0 + $0x408] sm:$0xf]
  %v163 = vld [vmem:[%s0 + $0x40c] sm:$0xff]
  %v164 = vld [vmem:[%s0 + $0x414] sm:$0xff]
  %v165 = vld [vmem:[%s0 + $0x41c] sm:$0xff]
  %v166 = vld [vmem:[%s0 + $0x424] sm:$0xf]
  %v167 = vld [vmem:[%s0 + $0x428] sm:$0xff]
  %v168 = vld [vmem:[%s0 + $0x430] sm:$0xff]
  %v169 = vld [vmem:[%s0 + $0x438] sm:$0xff]
  %v170 = vld [vmem:[%s0 + $0x440] sm:$0xf]
  %v171 = vld [vmem:[%s0 + $0x444] sm:$0xff]
  %v172 = vld [vmem:[%s0 + $0x44c] sm:$0xff]
  %v173 = vld [vmem:[%s0 + $0x454] sm:$0xff]
  %v174 = vld [vmem:[%s0 + $0x45c] sm:$0xf]
  %v175 = vld [vmem:[%s0 + $0x460] sm:$0xff]
  %v176 = vld [vmem:[%s0 + $0x468] sm:$0xff]
  %v177 = vld [vmem:[%s0 + $0x470] sm:$0xff]
  %v178 = vld [vmem:[%s0 + $0x478] sm:$0xf]
  %v179 = vld [vmem:[%s0 + $0x47c] sm:$0xff]
  %v180 = vld [vmem:[%s0 + $0x484] sm:$0xff]
  %v181 = vld [vmem:[%s0 + $0x48c] sm:$0xff]
  %v182 = vld [vmem:[%s0 + $0x494] sm:$0xf]
  %v183 = vld [vmem:[%s0 + $0x498] sm:$0xff]
  %v184 = vld [vmem:[%s0 + $0x4a0] sm:$0xff]
  %v185 = vld [vmem:[%s0 + $0x4a8] sm:$0xff]
  %v186 = vld [vmem:[%s0 + $0x4b0] sm:$0xf]
  %v187 = vld [vmem:[%s0 + $0x4b4] sm:$0xff]
  %v188 = vld [vmem:[%s0 + $0x4bc] sm:$0xff]
  %v189 = vld [vmem:[%s0 + $0x4c4] sm:$0xff]
  %v190 = vld [vmem:[%s0 + $0x4cc] sm:$0xf]
  %v191 = vld [vmem:[%s0 + $0x4d0] sm:$0xff]
  %v192 = vld [vmem:[%s0 + $0x4d8] sm:$0xff]
  %v193 = vld [vmem:[%s0 + $0x4e0] sm:$0xff]
  %v194 = vld [vmem:[%s0 + $0x4e8] sm:$0xf]
  %v195 = vld [vmem:[%s0 + $0x4ec] sm:$0xff]
  %v196 = vld [vmem:[%s0 + $0x4f4] sm:$0xff]
  %v197 = vld [vmem:[%s0 + $0x4fc] sm:$0xff]
  %v198 = vld [vmem:[%s0 + $0x504] sm:$0xf]
  %v199 = vld [vmem:[%s0 + $0x508] sm:$0xff]
  %v200 = vld [vmem:[%s0 + $0x510] sm:$0xff]
  %v201 = vld [vmem:[%s0 + $0x518] sm:$0xff]
  %v202 = vld [vmem:[%s0 + $0x520] sm:$0xf]
  %v203 = vld [vmem:[%s0 + $0x524] sm:$0xff]
  %v204 = vld [vmem:[%s0 + $0x52c] sm:$0xff]
  %v205 = vld [vmem:[%s0 + $0x534] sm:$0xff]
  %v206 = vld [vmem:[%s0 + $0x53c] sm:$0xf]
  %v207 = vld [vmem:[%s0 + $0x540] sm:$0xff]
  %v208 = vld [vmem:[%s0 + $0x548] sm:$0xff]
  %v209 = vld [vmem:[%s0 + $0x550] sm:$0xff]
  %v210 = vld [vmem:[%s0 + $0x558] sm:$0xf]
  %v211 = vld [vmem:[%s0 + $0x55c] sm:$0xff]
  %v212 = vld [vmem:[%s0 + $0x564] sm:$0xff]
  %v213 = vld [vmem:[%s0 + $0x56c] sm:$0xff]
  %v214 = vld [vmem:[%s0 + $0x574] sm:$0xf]
  %v215 = vld [vmem:[%s1] sm:$0xf]
  %v216 = vld [vmem:[%s1 + $0x4] sm:$0xf]
  %v217 = vld [vmem:[%s1 + $0x8] sm:$0xf]
  %v218 = vld [vmem:[%s1 + $0xc] sm:$0xf]
  %v219 = vld [vmem:[%s1 + $0x10] sm:$0xf]
  %v220 = vld [vmem:[%s1 + $0x14] sm:$0xf]
  %v221 = vld [vmem:[%s1 + $0x18] sm:$0xf]
  %v222 = vld [vmem:[%s1 + $0x1c] sm:$0xf]
  %v223 = vld [vmem:[%s1 + $0x20] sm:$0xf]
  %v224 = vld [vmem:[%s1 + $0x24] sm:$0xf]
  %v225 = vld [vmem:[%s1 + $0x28] sm:$0xf]
  %v226 = vld [vmem:[%s1 + $0x2c] sm:$0xf]
  %v227 = vld [vmem:[%s1 + $0x30] sm:$0xf]
  %v228 = vld [vmem:[%s1 + $0x34] sm:$0xf]
  %v229 = vld [vmem:[%s1 + $0x38] sm:$0xf]
  %v230 = vld [vmem:[%s1 + $0x3c] sm:$0xf]
  %v231 = vld [vmem:[%s1 + $0x40] sm:$0xf]
  %v232 = vld [vmem:[%s1 + $0x44] sm:$0xf]
  %v233 = vld [vmem:[%s1 + $0x48] sm:$0xf]
  %v234 = vld [vmem:[%s1 + $0x4c] sm:$0xf]
  %v235 = vld [vmem:[%s1 + $0x50] sm:$0xf]
  %v236 = vld [vmem:[%s1 + $0x54] sm:$0xf]
  %v237 = vld [vmem:[%s1 + $0x58] sm:$0xf]
  %v238 = vld [vmem:[%s1 + $0x5c] sm:$0xf]
  %v239 = vld [vmem:[%s1 + $0x60] sm:$0xf]
  %v240 = vld [vmem:[%s1 + $0x64] sm:$0xf]
  %v241 = vld [vmem:[%s1 + $0x68] sm:$0xf]
  %v242 = vld [vmem:[%s1 + $0x6c] sm:$0xf]
  %v243 = vld [vmem:[%s1 + $0x70] sm:$0xf]
  %v244 = vld [vmem:[%s1 + $0x74] sm:$0xf]
  %v245 = vld [vmem:[%s1 + $0x78] sm:$0xf]
  %v246 = vld [vmem:[%s1 + $0x7c] sm:$0xf]
  %v247 = vld [vmem:[%s1 + $0x80] sm:$0xf]
  %v248 = vld [vmem:[%s1 + $0x84] sm:$0xf]
  %v249 = vld [vmem:[%s1 + $0x88] sm:$0xf]
  %v250 = vld [vmem:[%s1 + $0x8c] sm:$0xf]
  %v251 = vld [vmem:[%s1 + $0x90] sm:$0xf]
  %v252 = vld [vmem:[%s1 + $0x94] sm:$0xf]
  %v253 = vld [vmem:[%s1 + $0x98] sm:$0xf]
  %v254 = vld [vmem:[%s1 + $0x9c] sm:$0xf]
  %v255 = vld [vmem:[%s1 + $0xa0] sm:$0xf]
  %v256 = vld [vmem:[%s1 + $0xa4] sm:$0xf]
  %v257 = vld [vmem:[%s1 + $0xa8] sm:$0xf]
  %v258 = vld [vmem:[%s1 + $0xac] sm:$0xf]
  %v259 = vld [vmem:[%s1 + $0xb0] sm:$0xf]
  %v260 = vld [vmem:[%s1 + $0xb4] sm:$0xf]
  %v261 = vld [vmem:[%s1 + $0xb8] sm:$0xf]
  %v262 = vld [vmem:[%s1 + $0xbc] sm:$0xf]
  %v263 = vld [vmem:[%s1 + $0xc0] sm:$0xf]
  %v264 = vld [vmem:[%s1 + $0xc4] sm:$0xf]
  %v265 = vld [vmem:[%s1 + $0xc8] sm:$0xf]
  %v266 = vld [vmem:[%s1 + $0xcc] sm:$0xf]
  %v267 = vld [vmem:[%s1 + $0xd0] sm:$0xf]
  %v268 = vld [vmem:[%s1 + $0xd4] sm:$0xf]
  %v269 = vld [vmem:[%s1 + $0xd8] sm:$0xf]
  %v270 = vld [vmem:[%s1 + $0xdc] sm:$0xf]
  %v271 = vld [vmem:[%s1 + $0xe0] sm:$0xf]
  %v272 = vld [vmem:[%s1 + $0xe4] sm:$0xf]
  %v273 = vld [vmem:[%s1 + $0xe8] sm:$0xf]
  %v274 = vld [vmem:[%s1 + $0xec] sm:$0xf]
  %v275 = vld [vmem:[%s1 + $0xf0] sm:$0xf]
  %v276 = vld [vmem:[%s1 + $0xf4] sm:$0xf]
  %v277 = vld [vmem:[%s1 + $0xf8] sm:$0xf]
  %v278 = vld [vmem:[%s1 + $0xfc] sm:$0xf]
  %v279 = vld [vmem:[%s1 + $0x100] sm:$0xf]
  %v280 = vld [vmem:[%s1 + $0x104] sm:$0xf]
  %v281 = vld [vmem:[%s1 + $0x108] sm:$0xf]
  %v282 = vld [vmem:[%s1 + $0x10c] sm:$0xf]
  %v283 = vld [vmem:[%s1 + $0x110] sm:$0xf]
  %v284 = vld [vmem:[%s1 + $0x114] sm:$0xf]
  %v285 = vld [vmem:[%s1 + $0x118] sm:$0xf]
  %v286 = vld [vmem:[%s1 + $0x11c] sm:$0xf]
  %v287 = vld [vmem:[%s1 + $0x120] sm:$0xf]
  %v288 = vld [vmem:[%s1 + $0x124] sm:$0xf]
  %v289 = vld [vmem:[%s1 + $0x128] sm:$0xf]
  %v290 = vld [vmem:[%s1 + $0x12c] sm:$0xf]
  %v291 = vld [vmem:[%s1 + $0x130] sm:$0xf]
  %v292 = vld [vmem:[%s1 + $0x134] sm:$0xf]
  %v293 = vld [vmem:[%s1 + $0x138] sm:$0xf]
  %v294 = vld [vmem:[%s1 + $0x13c] sm:$0xf]
  %v295 = vld [vmem:[%s1 + $0x140] sm:$0xf]
  %v296 = vld [vmem:[%s1 + $0x144] sm:$0xf]
  %v297 = vld [vmem:[%s1 + $0x148] sm:$0xf]
  %v298 = vld [vmem:[%s1 + $0x14c] sm:$0xf]
  %v299 = vld [vmem:[%s1 + $0x150] sm:$0xf]
  %v300 = vld [vmem:[%s1 + $0x154] sm:$0xf]
  %v301 = vld [vmem:[%s1 + $0x158] sm:$0xf]
  %v302 = vld [vmem:[%s1 + $0x15c] sm:$0xf]
  %v303 = vld [vmem:[%s1 + $0x160] sm:$0xf]
  %v304 = vld [vmem:[%s1 + $0x164] sm:$0xf]
  %v305 = vld [vmem:[%s1 + $0x168] sm:$0xf]
  %v306 = vld [vmem:[%s1 + $0x16c] sm:$0xf]
  %v307 = vld [vmem:[%s1 + $0x170] sm:$0xf]
  %v308 = vld [vmem:[%s1 + $0x174] sm:$0xf]
  %v309 = vld [vmem:[%s1 + $0x178] sm:$0xf]
  %v310 = vld [vmem:[%s1 + $0x17c] sm:$0xf]
  %v311 = vld [vmem:[%s1 + $0x180] sm:$0xf]
  %v312 = vld [vmem:[%s1 + $0x184] sm:$0xf]
  %v313 = vld [vmem:[%s1 + $0x188] sm:$0xf]
  %v314 = vld [vmem:[%s1 + $0x18c] sm:$0xf]
  %v315 = vld [vmem:[%s2] sm:$0x1]
  %v317 = vperm.slane %v315, 0
  %v519 = vunpack.c.l.b16 %v15
  %v520 = vunpack.c.h.b16 %v15
  %v521 = vunpack.c.l.b16 %v16
  %v522 = vunpack.c.h.b16 %v16
  %v523 = vunpack.c.l.b16 %v17
  %v524 = vunpack.c.h.b16 %v17
  %v525 = vunpack.c.l.b16 %v18
  %v526 = vunpack.c.l.b16 %v19
  %v527 = vunpack.c.h.b16 %v19
  %v528 = vunpack.c.l.b16 %v20
  %v529 = vunpack.c.h.b16 %v20
  %v530 = vunpack.c.l.b16 %v21
  %v531 = vunpack.c.h.b16 %v21
  %v532 = vunpack.c.l.b16 %v22
  %v533 = vunpack.c.l.b16 %v23
  %v534 = vunpack.c.h.b16 %v23
  %v535 = vunpack.c.l.b16 %v24
  %v536 = vunpack.c.h.b16 %v24
  %v537 = vunpack.c.l.b16 %v25
  %v538 = vunpack.c.h.b16 %v25
  %v539 = vunpack.c.l.b16 %v26
  %v540 = vunpack.c.l.b16 %v27
  %v541 = vunpack.c.h.b16 %v27
  %v542 = vunpack.c.l.b16 %v28
  %v543 = vunpack.c.h.b16 %v28
  %v544 = vunpack.c.l.b16 %v29
  %v545 = vunpack.c.h.b16 %v29
  %v546 = vunpack.c.l.b16 %v30
  %v547 = vunpack.c.l.b16 %v31
  %v548 = vunpack.c.h.b16 %v31
  %v549 = vunpack.c.l.b16 %v32
  %v550 = vunpack.c.h.b16 %v32
  %v551 = vunpack.c.l.b16 %v33
  %v552 = vunpack.c.h.b16 %v33
  %v553 = vunpack.c.l.b16 %v34
  %v554 = vunpack.c.l.b16 %v35
  %v555 = vunpack.c.h.b16 %v35
  %v556 = vunpack.c.l.b16 %v36
  %v557 = vunpack.c.h.b16 %v36
  %v558 = vunpack.c.l.b16 %v37
  %v559 = vunpack.c.h.b16 %v37
  %v560 = vunpack.c.l.b16 %v38
  %v561 = vunpack.c.l.b16 %v39
  %v562 = vunpack.c.h.b16 %v39
  %v563 = vunpack.c.l.b16 %v40
  %v564 = vunpack.c.h.b16 %v40
  %v565 = vunpack.c.l.b16 %v41
  %v566 = vunpack.c.h.b16 %v41
  %v567 = vunpack.c.l.b16 %v42
  %v568 = vunpack.c.l.b16 %v43
  %v569 = vunpack.c.h.b16 %v43
  %v570 = vunpack.c.l.b16 %v44
  %v571 = vunpack.c.h.b16 %v44
  %v572 = vunpack.c.l.b16 %v45
  %v573 = vunpack.c.h.b16 %v45
  %v574 = vunpack.c.l.b16 %v46
  %v575 = vunpack.c.l.b16 %v47
  %v576 = vunpack.c.h.b16 %v47
  %v577 = vunpack.c.l.b16 %v48
  %v578 = vunpack.c.h.b16 %v48
  %v579 = vunpack.c.l.b16 %v49
  %v580 = vunpack.c.h.b16 %v49
  %v581 = vunpack.c.l.b16 %v50
  %v582 = vunpack.c.l.b16 %v51
  %v583 = vunpack.c.h.b16 %v51
  %v584 = vunpack.c.l.b16 %v52
  %v585 = vunpack.c.h.b16 %v52
  %v586 = vunpack.c.l.b16 %v53
  %v587 = vunpack.c.h.b16 %v53
  %v588 = vunpack.c.l.b16 %v54
  %v589 = vunpack.c.l.b16 %v55
  %v590 = vunpack.c.h.b16 %v55
  %v591 = vunpack.c.l.b16 %v56
  %v592 = vunpack.c.h.b16 %v56
  %v593 = vunpack.c.l.b16 %v57
  %v594 = vunpack.c.h.b16 %v57
  %v595 = vunpack.c.l.b16 %v58
  %v596 = vunpack.c.l.b16 %v59
  %v597 = vunpack.c.h.b16 %v59
  %v598 = vunpack.c.l.b16 %v60
  %v599 = vunpack.c.h.b16 %v60
  %v600 = vunpack.c.l.b16 %v61
  %v601 = vunpack.c.h.b16 %v61
  %v602 = vunpack.c.l.b16 %v62
  %v603 = vunpack.c.l.b16 %v63
  %v604 = vunpack.c.h.b16 %v63
  %v605 = vunpack.c.l.b16 %v64
  %v606 = vunpack.c.h.b16 %v64
  %v607 = vunpack.c.l.b16 %v65
  %v608 = vunpack.c.h.b16 %v65
  %v609 = vunpack.c.l.b16 %v66
  %v610 = vunpack.c.l.b16 %v67
  %v611 = vunpack.c.h.b16 %v67
  %v612 = vunpack.c.l.b16 %v68
  %v613 = vunpack.c.h.b16 %v68
  %v614 = vunpack.c.l.b16 %v69
  %v615 = vunpack.c.h.b16 %v69
  %v616 = vunpack.c.l.b16 %v70
  %v617 = vunpack.c.l.b16 %v71
  %v618 = vunpack.c.h.b16 %v71
  %v619 = vunpack.c.l.b16 %v72
  %v620 = vunpack.c.h.b16 %v72
  %v621 = vunpack.c.l.b16 %v73
  %v622 = vunpack.c.h.b16 %v73
  %v623 = vunpack.c.l.b16 %v74
  %v624 = vunpack.c.l.b16 %v75
  %v625 = vunpack.c.h.b16 %v75
  %v626 = vunpack.c.l.b16 %v76
  %v627 = vunpack.c.h.b16 %v76
  %v628 = vunpack.c.l.b16 %v77
  %v629 = vunpack.c.h.b16 %v77
  %v630 = vunpack.c.l.b16 %v78
  %v631 = vunpack.c.l.b16 %v79
  %v632 = vunpack.c.h.b16 %v79
  %v633 = vunpack.c.l.b16 %v80
  %v634 = vunpack.c.h.b16 %v80
  %v635 = vunpack.c.l.b16 %v81
  %v636 = vunpack.c.h.b16 %v81
  %v637 = vunpack.c.l.b16 %v82
  %v638 = vunpack.c.l.b16 %v83
  %v639 = vunpack.c.h.b16 %v83
  %v640 = vunpack.c.l.b16 %v84
  %v641 = vunpack.c.h.b16 %v84
  %v642 = vunpack.c.l.b16 %v85
  %v643 = vunpack.c.h.b16 %v85
  %v644 = vunpack.c.l.b16 %v86
  %v645 = vunpack.c.l.b16 %v87
  %v646 = vunpack.c.h.b16 %v87
  %v647 = vunpack.c.l.b16 %v88
  %v648 = vunpack.c.h.b16 %v88
  %v649 = vunpack.c.l.b16 %v89
  %v650 = vunpack.c.h.b16 %v89
  %v651 = vunpack.c.l.b16 %v90
  %v652 = vunpack.c.l.b16 %v91
  %v653 = vunpack.c.h.b16 %v91
  %v654 = vunpack.c.l.b16 %v92
  %v655 = vunpack.c.h.b16 %v92
  %v656 = vunpack.c.l.b16 %v93
  %v657 = vunpack.c.h.b16 %v93
  %v658 = vunpack.c.l.b16 %v94
  %v659 = vunpack.c.l.b16 %v95
  %v660 = vunpack.c.h.b16 %v95
  %v661 = vunpack.c.l.b16 %v96
  %v662 = vunpack.c.h.b16 %v96
  %v663 = vunpack.c.l.b16 %v97
  %v664 = vunpack.c.h.b16 %v97
  %v665 = vunpack.c.l.b16 %v98
  %v666 = vunpack.c.l.b16 %v99
  %v667 = vunpack.c.h.b16 %v99
  %v668 = vunpack.c.l.b16 %v100
  %v669 = vunpack.c.h.b16 %v100
  %v670 = vunpack.c.l.b16 %v101
  %v671 = vunpack.c.h.b16 %v101
  %v672 = vunpack.c.l.b16 %v102
  %v673 = vunpack.c.l.b16 %v103
  %v674 = vunpack.c.h.b16 %v103
  %v675 = vunpack.c.l.b16 %v104
  %v676 = vunpack.c.h.b16 %v104
  %v677 = vunpack.c.l.b16 %v105
  %v678 = vunpack.c.h.b16 %v105
  %v679 = vunpack.c.l.b16 %v106
  %v680 = vunpack.c.l.b16 %v107
  %v681 = vunpack.c.h.b16 %v107
  %v682 = vunpack.c.l.b16 %v108
  %v683 = vunpack.c.h.b16 %v108
  %v684 = vunpack.c.l.b16 %v109
  %v685 = vunpack.c.h.b16 %v109
  %v686 = vunpack.c.l.b16 %v110
  %v687 = vunpack.c.l.b16 %v111
  %v688 = vunpack.c.h.b16 %v111
  %v689 = vunpack.c.l.b16 %v112
  %v690 = vunpack.c.h.b16 %v112
  %v691 = vunpack.c.l.b16 %v113
  %v692 = vunpack.c.h.b16 %v113
  %v693 = vunpack.c.l.b16 %v114
  %v694 = vunpack.c.l.b16 %v115
  %v695 = vunpack.c.h.b16 %v115
  %v696 = vunpack.c.l.b16 %v116
  %v697 = vunpack.c.h.b16 %v116
  %v698 = vunpack.c.l.b16 %v117
  %v699 = vunpack.c.h.b16 %v117
  %v700 = vunpack.c.l.b16 %v118
  %v701 = vunpack.c.l.b16 %v119
  %v702 = vunpack.c.h.b16 %v119
  %v703 = vunpack.c.l.b16 %v120
  %v704 = vunpack.c.h.b16 %v120
  %v705 = vunpack.c.l.b16 %v121
  %v706 = vunpack.c.h.b16 %v121
  %v707 = vunpack.c.l.b16 %v122
  %v708 = vunpack.c.l.b16 %v123
  %v709 = vunpack.c.h.b16 %v123
  %v710 = vunpack.c.l.b16 %v124
  %v711 = vunpack.c.h.b16 %v124
  %v712 = vunpack.c.l.b16 %v125
  %v713 = vunpack.c.h.b16 %v125
  %v714 = vunpack.c.l.b16 %v126
  %v715 = vunpack.c.l.b16 %v127
  %v716 = vunpack.c.h.b16 %v127
  %v717 = vunpack.c.l.b16 %v128
  %v718 = vunpack.c.h.b16 %v128
  %v719 = vunpack.c.l.b16 %v129
  %v720 = vunpack.c.h.b16 %v129
  %v721 = vunpack.c.l.b16 %v130
  %v722 = vunpack.c.l.b16 %v131
  %v723 = vunpack.c.h.b16 %v131
  %v724 = vunpack.c.l.b16 %v132
  %v725 = vunpack.c.h.b16 %v132
  %v726 = vunpack.c.l.b16 %v133
  %v727 = vunpack.c.h.b16 %v133
  %v728 = vunpack.c.l.b16 %v134
  %v729 = vunpack.c.l.b16 %v135
  %v730 = vunpack.c.h.b16 %v135
  %v731 = vunpack.c.l.b16 %v136
  %v732 = vunpack.c.h.b16 %v136
  %v733 = vunpack.c.l.b16 %v137
  %v734 = vunpack.c.h.b16 %v137
  %v735 = vunpack.c.l.b16 %v138
  %v736 = vunpack.c.l.b16 %v139
  %v737 = vunpack.c.h.b16 %v139
  %v738 = vunpack.c.l.b16 %v140
  %v739 = vunpack.c.h.b16 %v140
  %v740 = vunpack.c.l.b16 %v141
  %v741 = vunpack.c.h.b16 %v141
  %v742 = vunpack.c.l.b16 %v142
  %v743 = vunpack.c.l.b16 %v143
  %v744 = vunpack.c.h.b16 %v143
  %v745 = vunpack.c.l.b16 %v144
  %v746 = vunpack.c.h.b16 %v144
  %v747 = vunpack.c.l.b16 %v145
  %v748 = vunpack.c.h.b16 %v145
  %v749 = vunpack.c.l.b16 %v146
  %v750 = vunpack.c.l.b16 %v147
  %v751 = vunpack.c.h.b16 %v147
  %v752 = vunpack.c.l.b16 %v148
  %v753 = vunpack.c.h.b16 %v148
  %v754 = vunpack.c.l.b16 %v149
  %v755 = vunpack.c.h.b16 %v149
  %v756 = vunpack.c.l.b16 %v150
  %v757 = vunpack.c.l.b16 %v151
  %v758 = vunpack.c.h.b16 %v151
  %v759 = vunpack.c.l.b16 %v152
  %v760 = vunpack.c.h.b16 %v152
  %v761 = vunpack.c.l.b16 %v153
  %v762 = vunpack.c.h.b16 %v153
  %v763 = vunpack.c.l.b16 %v154
  %v764 = vunpack.c.l.b16 %v155
  %v765 = vunpack.c.h.b16 %v155
  %v766 = vunpack.c.l.b16 %v156
  %v767 = vunpack.c.h.b16 %v156
  %v768 = vunpack.c.l.b16 %v157
  %v769 = vunpack.c.h.b16 %v157
  %v770 = vunpack.c.l.b16 %v158
  %v771 = vunpack.c.l.b16 %v159
  %v772 = vunpack.c.h.b16 %v159
  %v773 = vunpack.c.l.b16 %v160
  %v774 = vunpack.c.h.b16 %v160
  %v775 = vunpack.c.l.b16 %v161
  %v776 = vunpack.c.h.b16 %v161
  %v777 = vunpack.c.l.b16 %v162
  %v778 = vunpack.c.l.b16 %v163
  %v779 = vunpack.c.h.b16 %v163
  %v780 = vunpack.c.l.b16 %v164
  %v781 = vunpack.c.h.b16 %v164
  %v782 = vunpack.c.l.b16 %v165
  %v783 = vunpack.c.h.b16 %v165
  %v784 = vunpack.c.l.b16 %v166
  %v785 = vunpack.c.l.b16 %v167
  %v786 = vunpack.c.h.b16 %v167
  %v787 = vunpack.c.l.b16 %v168
  %v788 = vunpack.c.h.b16 %v168
  %v789 = vunpack.c.l.b16 %v169
  %v790 = vunpack.c.h.b16 %v169
  %v791 = vunpack.c.l.b16 %v170
  %v792 = vunpack.c.l.b16 %v171
  %v793 = vunpack.c.h.b16 %v171
  %v794 = vunpack.c.l.b16 %v172
  %v795 = vunpack.c.h.b16 %v172
  %v796 = vunpack.c.l.b16 %v173
  %v797 = vunpack.c.h.b16 %v173
  %v798 = vunpack.c.l.b16 %v174
  %v799 = vunpack.c.l.b16 %v175
  %v800 = vunpack.c.h.b16 %v175
  %v801 = vunpack.c.l.b16 %v176
  %v802 = vunpack.c.h.b16 %v176
  %v803 = vunpack.c.l.b16 %v177
  %v804 = vunpack.c.h.b16 %v177
  %v805 = vunpack.c.l.b16 %v178
  %v806 = vunpack.c.l.b16 %v179
  %v807 = vunpack.c.h.b16 %v179
  %v808 = vunpack.c.l.b16 %v180
  %v809 = vunpack.c.h.b16 %v180
  %v810 = vunpack.c.l.b16 %v181
  %v811 = vunpack.c.h.b16 %v181
  %v812 = vunpack.c.l.b16 %v182
  %v813 = vunpack.c.l.b16 %v183
  %v814 = vunpack.c.h.b16 %v183
  %v815 = vunpack.c.l.b16 %v184
  %v816 = vunpack.c.h.b16 %v184
  %v817 = vunpack.c.l.b16 %v185
  %v818 = vunpack.c.h.b16 %v185
  %v819 = vunpack.c.l.b16 %v186
  %v820 = vunpack.c.l.b16 %v187
  %v821 = vunpack.c.h.b16 %v187
  %v822 = vunpack.c.l.b16 %v188
  %v823 = vunpack.c.h.b16 %v188
  %v824 = vunpack.c.l.b16 %v189
  %v825 = vunpack.c.h.b16 %v189
  %v826 = vunpack.c.l.b16 %v190
  %v827 = vunpack.c.l.b16 %v191
  %v828 = vunpack.c.h.b16 %v191
  %v829 = vunpack.c.l.b16 %v192
  %v830 = vunpack.c.h.b16 %v192
  %v831 = vunpack.c.l.b16 %v193
  %v832 = vunpack.c.h.b16 %v193
  %v833 = vunpack.c.l.b16 %v194
  %v834 = vunpack.c.l.b16 %v195
  %v835 = vunpack.c.h.b16 %v195
  %v836 = vunpack.c.l.b16 %v196
  %v837 = vunpack.c.h.b16 %v196
  %v838 = vunpack.c.l.b16 %v197
  %v839 = vunpack.c.h.b16 %v197
  %v840 = vunpack.c.l.b16 %v198
  %v841 = vunpack.c.l.b16 %v199
  %v842 = vunpack.c.h.b16 %v199
  %v843 = vunpack.c.l.b16 %v200
  %v844 = vunpack.c.h.b16 %v200
  %v845 = vunpack.c.l.b16 %v201
  %v846 = vunpack.c.h.b16 %v201
  %v847 = vunpack.c.l.b16 %v202
  %v848 = vunpack.c.l.b16 %v203
  %v849 = vunpack.c.h.b16 %v203
  %v850 = vunpack.c.l.b16 %v204
  %v851 = vunpack.c.h.b16 %v204
  %v852 = vunpack.c.l.b16 %v205
  %v853 = vunpack.c.h.b16 %v205
  %v854 = vunpack.c.l.b16 %v206
  %v855 = vunpack.c.l.b16 %v207
  %v856 = vunpack.c.h.b16 %v207
  %v857 = vunpack.c.l.b16 %v208
  %v858 = vunpack.c.h.b16 %v208
  %v859 = vunpack.c.l.b16 %v209
  %v860 = vunpack.c.h.b16 %v209
  %v861 = vunpack.c.l.b16 %v210
  %v862 = vunpack.c.l.b16 %v211
  %v863 = vunpack.c.h.b16 %v211
  %v864 = vunpack.c.l.b16 %v212
  %v865 = vunpack.c.h.b16 %v212
  %v866 = vunpack.c.l.b16 %v213
  %v867 = vunpack.c.h.b16 %v213
  %v868 = vunpack.c.l.b16 %v214
  %v869 = vpack.c.b16 %v526, %v519
  %v870 = vpack.c.b16 %v527, %v520
  %v871 = vpack.c.b16 %v528, %v521
  %v872 = vpack.c.b16 %v529, %v522
  %v873 = vpack.c.b16 %v530, %v523
  %v874 = vpack.c.b16 %v531, %v524
  %v875 = vpack.c.b16 %v532, %v525
  %v876 = vpack.c.b16 %v540, %v533
  %v877 = vpack.c.b16 %v541, %v534
  %v878 = vpack.c.b16 %v542, %v535
  %v879 = vpack.c.b16 %v543, %v536
  %v880 = vpack.c.b16 %v544, %v537
  %v881 = vpack.c.b16 %v545, %v538
  %v882 = vpack.c.b16 %v546, %v539
  %v883 = vpack.c.b16 %v554, %v547
  %v884 = vpack.c.b16 %v555, %v548
  %v885 = vpack.c.b16 %v556, %v549
  %v886 = vpack.c.b16 %v557, %v550
  %v887 = vpack.c.b16 %v558, %v551
  %v888 = vpack.c.b16 %v559, %v552
  %v889 = vpack.c.b16 %v560, %v553
  %v890 = vpack.c.b16 %v568, %v561
  %v891 = vpack.c.b16 %v569, %v562
  %v892 = vpack.c.b16 %v570, %v563
  %v893 = vpack.c.b16 %v571, %v564
  %v894 = vpack.c.b16 %v572, %v565
  %v895 = vpack.c.b16 %v573, %v566
  %v896 = vpack.c.b16 %v574, %v567
  %v897 = vpack.c.b16 %v582, %v575
  %v898 = vpack.c.b16 %v583, %v576
  %v899 = vpack.c.b16 %v584, %v577
  %v900 = vpack.c.b16 %v585, %v578
  %v901 = vpack.c.b16 %v586, %v579
  %v902 = vpack.c.b16 %v587, %v580
  %v903 = vpack.c.b16 %v588, %v581
  %v904 = vpack.c.b16 %v596, %v589
  %v905 = vpack.c.b16 %v597, %v590
  %v906 = vpack.c.b16 %v598, %v591
  %v907 = vpack.c.b16 %v599, %v592
  %v908 = vpack.c.b16 %v600, %v593
  %v909 = vpack.c.b16 %v601, %v594
  %v910 = vpack.c.b16 %v602, %v595
  %v911 = vpack.c.b16 %v610, %v603
  %v912 = vpack.c.b16 %v611, %v604
  %v913 = vpack.c.b16 %v612, %v605
  %v914 = vpack.c.b16 %v613, %v606
  %v915 = vpack.c.b16 %v614, %v607
  %v916 = vpack.c.b16 %v615, %v608
  %v917 = vpack.c.b16 %v616, %v609
  %v918 = vpack.c.b16 %v624, %v617
  %v919 = vpack.c.b16 %v625, %v618
  %v920 = vpack.c.b16 %v626, %v619
  %v921 = vpack.c.b16 %v627, %v620
  %v922 = vpack.c.b16 %v628, %v621
  %v923 = vpack.c.b16 %v629, %v622
  %v924 = vpack.c.b16 %v630, %v623
  %v925 = vpack.c.b16 %v638, %v631
  %v926 = vpack.c.b16 %v639, %v632
  %v927 = vpack.c.b16 %v640, %v633
  %v928 = vpack.c.b16 %v641, %v634
  %v929 = vpack.c.b16 %v642, %v635
  %v930 = vpack.c.b16 %v643, %v636
  %v931 = vpack.c.b16 %v644, %v637
  %v932 = vpack.c.b16 %v652, %v645
  %v933 = vpack.c.b16 %v653, %v646
  %v934 = vpack.c.b16 %v654, %v647
  %v935 = vpack.c.b16 %v655, %v648
  %v936 = vpack.c.b16 %v656, %v649
  %v937 = vpack.c.b16 %v657, %v650
  %v938 = vpack.c.b16 %v658, %v651
  %v939 = vpack.c.b16 %v666, %v659
  %v940 = vpack.c.b16 %v667, %v660
  %v941 = vpack.c.b16 %v668, %v661
  %v942 = vpack.c.b16 %v669, %v662
  %v943 = vpack.c.b16 %v670, %v663
  %v944 = vpack.c.b16 %v671, %v664
  %v945 = vpack.c.b16 %v672, %v665
  %v946 = vpack.c.b16 %v680, %v673
  %v947 = vpack.c.b16 %v681, %v674
  %v948 = vpack.c.b16 %v682, %v675
  %v949 = vpack.c.b16 %v683, %v676
  %v950 = vpack.c.b16 %v684, %v677
  %v951 = vpack.c.b16 %v685, %v678
  %v952 = vpack.c.b16 %v686, %v679
  %v953 = vpack.c.b16 %v694, %v687
  %v954 = vpack.c.b16 %v695, %v688
  %v955 = vpack.c.b16 %v696, %v689
  %v956 = vpack.c.b16 %v697, %v690
  %v957 = vpack.c.b16 %v698, %v691
  %v958 = vpack.c.b16 %v699, %v692
  %v959 = vpack.c.b16 %v700, %v693
  %v960 = vpack.c.b16 %v708, %v701
  %v961 = vpack.c.b16 %v709, %v702
  %v962 = vpack.c.b16 %v710, %v703
  %v963 = vpack.c.b16 %v711, %v704
  %v964 = vpack.c.b16 %v712, %v705
  %v965 = vpack.c.b16 %v713, %v706
  %v966 = vpack.c.b16 %v714, %v707
  %v967 = vpack.c.b16 %v722, %v715
  %v968 = vpack.c.b16 %v723, %v716
  %v969 = vpack.c.b16 %v724, %v717
  %v970 = vpack.c.b16 %v725, %v718
  %v971 = vpack.c.b16 %v726, %v719
  %v972 = vpack.c.b16 %v727, %v720
  %v973 = vpack.c.b16 %v728, %v721
  %v974 = vpack.c.b16 %v736, %v729
  %v975 = vpack.c.b16 %v737, %v730
  %v976 = vpack.c.b16 %v738, %v731
  %v977 = vpack.c.b16 %v739, %v732
  %v978 = vpack.c.b16 %v740, %v733
  %v979 = vpack.c.b16 %v741, %v734
  %v980 = vpack.c.b16 %v742, %v735
  %v981 = vpack.c.b16 %v750, %v743
  %v982 = vpack.c.b16 %v751, %v744
  %v983 = vpack.c.b16 %v752, %v745
  %v984 = vpack.c.b16 %v753, %v746
  %v985 = vpack.c.b16 %v754, %v747
  %v986 = vpack.c.b16 %v755, %v748
  %v987 = vpack.c.b16 %v756, %v749
  %v988 = vpack.c.b16 %v764, %v757
  %v989 = vpack.c.b16 %v765, %v758
  %v990 = vpack.c.b16 %v766, %v759
  %v991 = vpack.c.b16 %v767, %v760
  %v992 = vpack.c.b16 %v768, %v761
  %v993 = vpack.c.b16 %v769, %v762
  %v994 = vpack.c.b16 %v770, %v763
  %v995 = vpack.c.b16 %v778, %v771
  %v996 = vpack.c.b16 %v779, %v772
  %v997 = vpack.c.b16 %v780, %v773
  %v998 = vpack.c.b16 %v781, %v774
  %v999 = vpack.c.b16 %v782, %v775
  %v1000 = vpack.c.b16 %v783, %v776
  %v1001 = vpack.c.b16 %v784, %v777
  %v1002 = vpack.c.b16 %v792, %v785
  %v1003 = vpack.c.b16 %v793, %v786
  %v1004 = vpack.c.b16 %v794, %v787
  %v1005 = vpack.c.b16 %v795, %v788
  %v1006 = vpack.c.b16 %v796, %v789
  %v1007 = vpack.c.b16 %v797, %v790
  %v1008 = vpack.c.b16 %v798, %v791
  %v1009 = vpack.c.b16 %v806, %v799
  %v1010 = vpack.c.b16 %v807, %v800
  %v1011 = vpack.c.b16 %v808, %v801
  %v1012 = vpack.c.b16 %v809, %v802
  %v1013 = vpack.c.b16 %v810, %v803
  %v1014 = vpack.c.b16 %v811, %v804
  %v1015 = vpack.c.b16 %v812, %v805
  %v1016 = vpack.c.b16 %v820, %v813
  %v1017 = vpack.c.b16 %v821, %v814
  %v1018 = vpack.c.b16 %v822, %v815
  %v1019 = vpack.c.b16 %v823, %v816
  %v1020 = vpack.c.b16 %v824, %v817
  %v1021 = vpack.c.b16 %v825, %v818
  %v1022 = vpack.c.b16 %v826, %v819
  %v1023 = vpack.c.b16 %v834, %v827
  %v1024 = vpack.c.b16 %v835, %v828
  %v1025 = vpack.c.b16 %v836, %v829
  %v1026 = vpack.c.b16 %v837, %v830
  %v1027 = vpack.c.b16 %v838, %v831
  %v1028 = vpack.c.b16 %v839, %v832
  %v1029 = vpack.c.b16 %v840, %v833
  %v1030 = vpack.c.b16 %v848, %v841
  %v1031 = vpack.c.b16 %v849, %v842
  %v1032 = vpack.c.b16 %v850, %v843
  %v1033 = vpack.c.b16 %v851, %v844
  %v1034 = vpack.c.b16 %v852, %v845
  %v1035 = vpack.c.b16 %v853, %v846
  %v1036 = vpack.c.b16 %v854, %v847
  %v1037 = vpack.c.b16 %v862, %v855
  %v1038 = vpack.c.b16 %v863, %v856
  %v1039 = vpack.c.b16 %v864, %v857
  %v1040 = vpack.c.b16 %v865, %v858
  %v1041 = vpack.c.b16 %v866, %v859
  %v1042 = vpack.c.b16 %v867, %v860
  %v1043 = vpack.c.b16 %v868, %v861
  %v1294 = vunpack.c.l.b16 %v215
  %v1295 = vunpack.c.l.b16 %v216
  %v1296 = vunpack.c.l.b16 %v217
  %v1297 = vunpack.c.l.b16 %v218
  %v1298 = vunpack.c.l.b16 %v219
  %v1299 = vunpack.c.l.b16 %v220
  %v1300 = vunpack.c.l.b16 %v221
  %v1301 = vunpack.c.l.b16 %v222
  %v1302 = vunpack.c.l.b16 %v223
  %v1303 = vunpack.c.l.b16 %v224
  %v1304 = vunpack.c.l.b16 %v225
  %v1305 = vunpack.c.l.b16 %v226
  %v1306 = vunpack.c.l.b16 %v227
  %v1307 = vunpack.c.l.b16 %v228
  %v1308 = vunpack.c.l.b16 %v229
  %v1309 = vunpack.c.l.b16 %v230
  %v1310 = vunpack.c.l.b16 %v231
  %v1311 = vunpack.c.l.b16 %v232
  %v1312 = vunpack.c.l.b16 %v233
  %v1313 = vunpack.c.l.b16 %v234
  %v1314 = vunpack.c.l.b16 %v235
  %v1315 = vunpack.c.l.b16 %v236
  %v1316 = vunpack.c.l.b16 %v237
  %v1317 = vunpack.c.l.b16 %v238
  %v1318 = vunpack.c.l.b16 %v239
  %v1319 = vunpack.c.l.b16 %v240
  %v1320 = vunpack.c.l.b16 %v241
  %v1321 = vunpack.c.l.b16 %v242
  %v1322 = vunpack.c.l.b16 %v243
  %v1323 = vunpack.c.l.b16 %v244
  %v1324 = vunpack.c.l.b16 %v245
  %v1325 = vunpack.c.l.b16 %v246
  %v1326 = vunpack.c.l.b16 %v247
  %v1327 = vunpack.c.l.b16 %v248
  %v1328 = vunpack.c.l.b16 %v249
  %v1329 = vunpack.c.l.b16 %v250
  %v1330 = vunpack.c.l.b16 %v251
  %v1331 = vunpack.c.l.b16 %v252
  %v1332 = vunpack.c.l.b16 %v253
  %v1333 = vunpack.c.l.b16 %v254
  %v1334 = vunpack.c.l.b16 %v255
  %v1335 = vunpack.c.l.b16 %v256
  %v1336 = vunpack.c.l.b16 %v257
  %v1337 = vunpack.c.l.b16 %v258
  %v1338 = vunpack.c.l.b16 %v259
  %v1339 = vunpack.c.l.b16 %v260
  %v1340 = vunpack.c.l.b16 %v261
  %v1341 = vunpack.c.l.b16 %v262
  %v1342 = vunpack.c.l.b16 %v263
  %v1343 = vunpack.c.l.b16 %v264
  %v1344 = vunpack.c.l.b16 %v265
  %v1345 = vunpack.c.l.b16 %v266
  %v1346 = vunpack.c.l.b16 %v267
  %v1347 = vunpack.c.l.b16 %v268
  %v1348 = vunpack.c.l.b16 %v269
  %v1349 = vunpack.c.l.b16 %v270
  %v1350 = vunpack.c.l.b16 %v271
  %v1351 = vunpack.c.l.b16 %v272
  %v1352 = vunpack.c.l.b16 %v273
  %v1353 = vunpack.c.l.b16 %v274
  %v1354 = vunpack.c.l.b16 %v275
  %v1355 = vunpack.c.l.b16 %v276
  %v1356 = vunpack.c.l.b16 %v277
  %v1357 = vunpack.c.l.b16 %v278
  %v1358 = vunpack.c.l.b16 %v279
  %v1359 = vunpack.c.l.b16 %v280
  %v1360 = vunpack.c.l.b16 %v281
  %v1361 = vunpack.c.l.b16 %v282
  %v1362 = vunpack.c.l.b16 %v283
  %v1363 = vunpack.c.l.b16 %v284
  %v1364 = vunpack.c.l.b16 %v285
  %v1365 = vunpack.c.l.b16 %v286
  %v1366 = vunpack.c.l.b16 %v287
  %v1367 = vunpack.c.l.b16 %v288
  %v1368 = vunpack.c.l.b16 %v289
  %v1369 = vunpack.c.l.b16 %v290
  %v1370 = vunpack.c.l.b16 %v291
  %v1371 = vunpack.c.l.b16 %v292
  %v1372 = vunpack.c.l.b16 %v293
  %v1373 = vunpack.c.l.b16 %v294
  %v1374 = vunpack.c.l.b16 %v295
  %v1375 = vunpack.c.l.b16 %v296
  %v1376 = vunpack.c.l.b16 %v297
  %v1377 = vunpack.c.l.b16 %v298
  %v1378 = vunpack.c.l.b16 %v299
  %v1379 = vunpack.c.l.b16 %v300
  %v1380 = vunpack.c.l.b16 %v301
  %v1381 = vunpack.c.l.b16 %v302
  %v1382 = vunpack.c.l.b16 %v303
  %v1383 = vunpack.c.l.b16 %v304
  %v1384 = vunpack.c.l.b16 %v305
  %v1385 = vunpack.c.l.b16 %v306
  %v1386 = vunpack.c.l.b16 %v307
  %v1387 = vunpack.c.l.b16 %v308
  %v1388 = vunpack.c.l.b16 %v309
  %v1389 = vunpack.c.l.b16 %v310
  %v1390 = vunpack.c.l.b16 %v311
  %v1391 = vunpack.c.l.b16 %v312
  %v1392 = vunpack.c.l.b16 %v313
  %v1393 = vunpack.c.l.b16 %v314
  %v1394 = vpack.c.b16 %v1295, %v1294
  %v1395 = vpack.c.b16 %v1297, %v1296
  %v1396 = vpack.c.b16 %v1299, %v1298
  %v1397 = vpack.c.b16 %v1301, %v1300
  %v1398 = vpack.c.b16 %v1303, %v1302
  %v1399 = vpack.c.b16 %v1305, %v1304
  %v1400 = vpack.c.b16 %v1307, %v1306
  %v1401 = vpack.c.b16 %v1309, %v1308
  %v1402 = vpack.c.b16 %v1311, %v1310
  %v1403 = vpack.c.b16 %v1313, %v1312
  %v1404 = vpack.c.b16 %v1315, %v1314
  %v1405 = vpack.c.b16 %v1317, %v1316
  %v1406 = vpack.c.b16 %v1319, %v1318
  %v1407 = vpack.c.b16 %v1321, %v1320
  %v1408 = vpack.c.b16 %v1323, %v1322
  %v1409 = vpack.c.b16 %v1325, %v1324
  %v1410 = vpack.c.b16 %v1327, %v1326
  %v1411 = vpack.c.b16 %v1329, %v1328
  %v1412 = vpack.c.b16 %v1331, %v1330
  %v1413 = vpack.c.b16 %v1333, %v1332
  %v1414 = vpack.c.b16 %v1335, %v1334
  %v1415 = vpack.c.b16 %v1337, %v1336
  %v1416 = vpack.c.b16 %v1339, %v1338
  %v1417 = vpack.c.b16 %v1341, %v1340
  %v1418 = vpack.c.b16 %v1343, %v1342
  %v1419 = vpack.c.b16 %v1345, %v1344
  %v1420 = vpack.c.b16 %v1347, %v1346
  %v1421 = vpack.c.b16 %v1349, %v1348
  %v1422 = vpack.c.b16 %v1351, %v1350
  %v1423 = vpack.c.b16 %v1353, %v1352
  %v1424 = vpack.c.b16 %v1355, %v1354
  %v1425 = vpack.c.b16 %v1357, %v1356
  %v1426 = vpack.c.b16 %v1359, %v1358
  %v1427 = vpack.c.b16 %v1361, %v1360
  %v1428 = vpack.c.b16 %v1363, %v1362
  %v1429 = vpack.c.b16 %v1365, %v1364
  %v1430 = vpack.c.b16 %v1367, %v1366
  %v1431 = vpack.c.b16 %v1369, %v1368
  %v1432 = vpack.c.b16 %v1371, %v1370
  %v1433 = vpack.c.b16 %v1373, %v1372
  %v1434 = vpack.c.b16 %v1375, %v1374
  %v1435 = vpack.c.b16 %v1377, %v1376
  %v1436 = vpack.c.b16 %v1379, %v1378
  %v1437 = vpack.c.b16 %v1381, %v1380
  %v1438 = vpack.c.b16 %v1383, %v1382
  %v1439 = vpack.c.b16 %v1385, %v1384
  %v1440 = vpack.c.b16 %v1387, %v1386
  %v1441 = vpack.c.b16 %v1389, %v1388
  %v1442 = vpack.c.b16 %v1391, %v1390
  %v1443 = vpack.c.b16 %v1393, %v1392
  %vm1494 = vcmask 261120
  %v1496 = vsel %vm1494, %v875, 0
  %v1499 = vsel %vm1494, %v882, 0
  %v1502 = vsel %vm1494, %v889, 0
  %v1505 = vsel %vm1494, %v896, 0
  %v1508 = vsel %vm1494, %v903, 0
  %v1511 = vsel %vm1494, %v910, 0
  %v1514 = vsel %vm1494, %v917, 0
  %v1517 = vsel %vm1494, %v924, 0
  %v1520 = vsel %vm1494, %v931, 0
  %v1523 = vsel %vm1494, %v938, 0
  %v1526 = vsel %vm1494, %v945, 0
  %v1529 = vsel %vm1494, %v952, 0
  %v1532 = vsel %vm1494, %v959, 0
  %v1535 = vsel %vm1494, %v966, 0
  %v1538 = vsel %vm1494, %v973, 0
  %v1541 = vsel %vm1494, %v980, 0
  %v1544 = vsel %vm1494, %v987, 0
  %v1547 = vsel %vm1494, %v994, 0
  %v1550 = vsel %vm1494, %v1001, 0
  %v1553 = vsel %vm1494, %v1008, 0
  %v1556 = vsel %vm1494, %v1015, 0
  %v1559 = vsel %vm1494, %v1022, 0
  %v1562 = vsel %vm1494, %v1029, 0
  %v1565 = vsel %vm1494, %v1036, 0
  %v1568 = vsel %vm1494, %v1043, 0
  %1570 = vmatpush.bf16.msra.mxu0 %v1401
  %1571 = vmatpush.bf16.msra.mxu0 %v1400
  %1572 = vmatpush.bf16.msra.mxu0 %v1399
  %1573 = vmatpush.bf16.msra.mxu0 %v1398
  %1574 = vmatpush.bf16.msra.mxu0 %v1397
  %1575 = vmatpush.bf16.msra.mxu0 %v1396
  %1576 = vmatpush.bf16.msra.mxu0 %v1395
  %1577 = vmatpush.bf16.msra.mxu0 %v1394
  %1578 = vmatmul.bf16.gmra.mxu0 %v869
  %v1579 = vpop.f32.mrf.mxu0
  %v1580 = vadd.f32 %v317, %v1579
  %v1581 = vpop.f32.mrf.mxu0
  %v1582 = vadd.f32 %v317, %v1581
  %1583 = vmatmul.bf16.gmra.mxu0 %v876
  %v1584 = vpop.f32.mrf.mxu0
  %v1585 = vadd.f32 %v317, %v1584
  %v1586 = vpop.f32.mrf.mxu0
  %v1587 = vadd.f32 %v317, %v1586
  %1588 = vmatmul.bf16.gmra.mxu0 %v883
  %v1589 = vpop.f32.mrf.mxu0
  %v1590 = vadd.f32 %v317, %v1589
  %v1591 = vpop.f32.mrf.mxu0
  %v1592 = vadd.f32 %v317, %v1591
  %1593 = vmatmul.bf16.gmra.mxu0 %v890
  %v1594 = vpop.f32.mrf.mxu0
  %v1595 = vadd.f32 %v317, %v1594
  %v1596 = vpop.f32.mrf.mxu0
  %v1597 = vadd.f32 %v317, %v1596
  %1598 = vmatmul.bf16.gmra.mxu0 %v897
  %v1599 = vpop.f32.mrf.mxu0
  %v1600 = vadd.f32 %v317, %v1599
  %v1601 = vpop.f32.mrf.mxu0
  %v1602 = vadd.f32 %v317, %v1601
  %1603 = vmatmul.bf16.gmra.mxu0 %v904
  %v1604 = vpop.f32.mrf.mxu0
  %v1605 = vadd.f32 %v317, %v1604
  %v1606 = vpop.f32.mrf.mxu0
  %v1607 = vadd.f32 %v317, %v1606
  %1608 = vmatmul.bf16.gmra.mxu0 %v911
  %v1609 = vpop.f32.mrf.mxu0
  %v1610 = vadd.f32 %v317, %v1609
  %v1611 = vpop.f32.mrf.mxu0
  %v1612 = vadd.f32 %v317, %v1611
  %1613 = vmatmul.bf16.gmra.mxu0 %v918
  %v1614 = vpop.f32.mrf.mxu0
  %v1615 = vadd.f32 %v317, %v1614
  %v1616 = vpop.f32.mrf.mxu0
  %v1617 = vadd.f32 %v317, %v1616
  %1618 = vmatmul.bf16.gmra.mxu0 %v925
  %v1619 = vpop.f32.mrf.mxu0
  %v1620 = vadd.f32 %v317, %v1619
  %v1621 = vpop.f32.mrf.mxu0
  %v1622 = vadd.f32 %v317, %v1621
  %1623 = vmatmul.bf16.gmra.mxu0 %v932
  %v1624 = vpop.f32.mrf.mxu0
  %v1625 = vadd.f32 %v317, %v1624
  %v1626 = vpop.f32.mrf.mxu0
  %v1627 = vadd.f32 %v317, %v1626
  %1628 = vmatmul.bf16.gmra.mxu0 %v939
  %v1629 = vpop.f32.mrf.mxu0
  %v1630 = vadd.f32 %v317, %v1629
  %v1631 = vpop.f32.mrf.mxu0
  %v1632 = vadd.f32 %v317, %v1631
  %1633 = vmatmul.bf16.gmra.mxu0 %v946
  %v1634 = vpop.f32.mrf.mxu0
  %v1635 = vadd.f32 %v317, %v1634
  %v1636 = vpop.f32.mrf.mxu0
  %v1637 = vadd.f32 %v317, %v1636
  %1638 = vmatmul.bf16.gmra.mxu0 %v953
  %v1639 = vpop.f32.mrf.mxu0
  %v1640 = vadd.f32 %v317, %v1639
  %v1641 = vpop.f32.mrf.mxu0
  %v1642 = vadd.f32 %v317, %v1641
  %1643 = vmatmul.bf16.gmra.mxu0 %v960
  %v1644 = vpop.f32.mrf.mxu0
  %v1645 = vadd.f32 %v317, %v1644
  %v1646 = vpop.f32.mrf.mxu0
  %v1647 = vadd.f32 %v317, %v1646
  %1648 = vmatmul.bf16.gmra.mxu0 %v967
  %v1649 = vpop.f32.mrf.mxu0
  %v1650 = vadd.f32 %v317, %v1649
  %v1651 = vpop.f32.mrf.mxu0
  %v1652 = vadd.f32 %v317, %v1651
  %1653 = vmatmul.bf16.gmra.mxu0 %v974
  %v1654 = vpop.f32.mrf.mxu0
  %v1655 = vadd.f32 %v317, %v1654
  %v1656 = vpop.f32.mrf.mxu0
  %v1657 = vadd.f32 %v317, %v1656
  %1658 = vmatmul.bf16.gmra.mxu0 %v981
  %v1659 = vpop.f32.mrf.mxu0
  %v1660 = vadd.f32 %v317, %v1659
  %v1661 = vpop.f32.mrf.mxu0
  %v1662 = vadd.f32 %v317, %v1661
  %1663 = vmatmul.bf16.gmra.mxu0 %v988
  %v1664 = vpop.f32.mrf.mxu0
  %v1665 = vadd.f32 %v317, %v1664
  %v1666 = vpop.f32.mrf.mxu0
  %v1667 = vadd.f32 %v317, %v1666
  %1668 = vmatmul.bf16.gmra.mxu0 %v995
  %v1669 = vpop.f32.mrf.mxu0
  %v1670 = vadd.f32 %v317, %v1669
  %v1671 = vpop.f32.mrf.mxu0
  %v1672 = vadd.f32 %v317, %v1671
  %1673 = vmatmul.bf16.gmra.mxu0 %v1002
  %v1674 = vpop.f32.mrf.mxu0
  %v1675 = vadd.f32 %v317, %v1674
  %v1676 = vpop.f32.mrf.mxu0
  %v1677 = vadd.f32 %v317, %v1676
  %1678 = vmatmul.bf16.gmra.mxu0 %v1009
  %v1679 = vpop.f32.mrf.mxu0
  %v1680 = vadd.f32 %v317, %v1679
  %v1681 = vpop.f32.mrf.mxu0
  %v1682 = vadd.f32 %v317, %v1681
  %1683 = vmatmul.bf16.gmra.mxu0 %v1016
  %v1684 = vpop.f32.mrf.mxu0
  %v1685 = vadd.f32 %v317, %v1684
  %v1686 = vpop.f32.mrf.mxu0
  %v1687 = vadd.f32 %v317, %v1686
  %1688 = vmatmul.bf16.gmra.mxu0 %v1023
  %v1689 = vpop.f32.mrf.mxu0
  %v1690 = vadd.f32 %v317, %v1689
  %v1691 = vpop.f32.mrf.mxu0
  %v1692 = vadd.f32 %v317, %v1691
  %1693 = vmatmul.bf16.gmra.mxu0 %v1030
  %v1694 = vpop.f32.mrf.mxu0
  %v1695 = vadd.f32 %v317, %v1694
  %v1696 = vpop.f32.mrf.mxu0
  %v1697 = vadd.f32 %v317, %v1696
  %1698 = vmatmul.bf16.gmra.mxu0 %v1037
  %v1699 = vpop.f32.mrf.mxu0
  %v1700 = vadd.f32 %v317, %v1699
  %v1701 = vpop.f32.mrf.mxu0
  %v1702 = vadd.f32 %v317, %v1701
  %1703 = vdwg.mxu0
  %1704 = vmatpush.bf16.msra.mxu0 %v1409
  %1705 = vmatpush.bf16.msra.mxu0 %v1408
  %1706 = vmatpush.bf16.msra.mxu0 %v1407
  %1707 = vmatpush.bf16.msra.mxu0 %v1406
  %1708 = vmatpush.bf16.msra.mxu0 %v1405
  %1709 = vmatpush.bf16.msra.mxu0 %v1404
  %1710 = vmatpush.bf16.msra.mxu0 %v1403
  %1711 = vmatpush.bf16.msra.mxu0 %v1402
  %1712 = vmatmul.bf16.gmra.mxu0 %v870
  %v1713 = vpop.f32.mrf.mxu0
  %v1714 = vadd.f32 %v1580, %v1713
  %v1715 = vpop.f32.mrf.mxu0
  %v1716 = vadd.f32 %v1582, %v1715
  %1717 = vmatmul.bf16.gmra.mxu0 %v877
  %v1718 = vpop.f32.mrf.mxu0
  %v1719 = vadd.f32 %v1585, %v1718
  %v1720 = vpop.f32.mrf.mxu0
  %v1721 = vadd.f32 %v1587, %v1720
  %1722 = vmatmul.bf16.gmra.mxu0 %v884
  %v1723 = vpop.f32.mrf.mxu0
  %v1724 = vadd.f32 %v1590, %v1723
  %v1725 = vpop.f32.mrf.mxu0
  %v1726 = vadd.f32 %v1592, %v1725
  %1727 = vmatmul.bf16.gmra.mxu0 %v891
  %v1728 = vpop.f32.mrf.mxu0
  %v1729 = vadd.f32 %v1595, %v1728
  %v1730 = vpop.f32.mrf.mxu0
  %v1731 = vadd.f32 %v1597, %v1730
  %1732 = vmatmul.bf16.gmra.mxu0 %v898
  %v1733 = vpop.f32.mrf.mxu0
  %v1734 = vadd.f32 %v1600, %v1733
  %v1735 = vpop.f32.mrf.mxu0
  %v1736 = vadd.f32 %v1602, %v1735
  %1737 = vmatmul.bf16.gmra.mxu0 %v905
  %v1738 = vpop.f32.mrf.mxu0
  %v1739 = vadd.f32 %v1605, %v1738
  %v1740 = vpop.f32.mrf.mxu0
  %v1741 = vadd.f32 %v1607, %v1740
  %1742 = vmatmul.bf16.gmra.mxu0 %v912
  %v1743 = vpop.f32.mrf.mxu0
  %v1744 = vadd.f32 %v1610, %v1743
  %v1745 = vpop.f32.mrf.mxu0
  %v1746 = vadd.f32 %v1612, %v1745
  %1747 = vmatmul.bf16.gmra.mxu0 %v919
  %v1748 = vpop.f32.mrf.mxu0
  %v1749 = vadd.f32 %v1615, %v1748
  %v1750 = vpop.f32.mrf.mxu0
  %v1751 = vadd.f32 %v1617, %v1750
  %1752 = vmatmul.bf16.gmra.mxu0 %v926
  %v1753 = vpop.f32.mrf.mxu0
  %v1754 = vadd.f32 %v1620, %v1753
  %v1755 = vpop.f32.mrf.mxu0
  %v1756 = vadd.f32 %v1622, %v1755
  %1757 = vmatmul.bf16.gmra.mxu0 %v933
  %v1758 = vpop.f32.mrf.mxu0
  %v1759 = vadd.f32 %v1625, %v1758
  %v1760 = vpop.f32.mrf.mxu0
  %v1761 = vadd.f32 %v1627, %v1760
  %1762 = vmatmul.bf16.gmra.mxu0 %v940
  %v1763 = vpop.f32.mrf.mxu0
  %v1764 = vadd.f32 %v1630, %v1763
  %v1765 = vpop.f32.mrf.mxu0
  %v1766 = vadd.f32 %v1632, %v1765
  %1767 = vmatmul.bf16.gmra.mxu0 %v947
  %v1768 = vpop.f32.mrf.mxu0
  %v1769 = vadd.f32 %v1635, %v1768
  %v1770 = vpop.f32.mrf.mxu0
  %v1771 = vadd.f32 %v1637, %v1770
  %1772 = vmatmul.bf16.gmra.mxu0 %v954
  %v1773 = vpop.f32.mrf.mxu0
  %v1774 = vadd.f32 %v1640, %v1773
  %v1775 = vpop.f32.mrf.mxu0
  %v1776 = vadd.f32 %v1642, %v1775
  %1777 = vmatmul.bf16.gmra.mxu0 %v961
  %v1778 = vpop.f32.mrf.mxu0
  %v1779 = vadd.f32 %v1645, %v1778
  %v1780 = vpop.f32.mrf.mxu0
  %v1781 = vadd.f32 %v1647, %v1780
  %1782 = vmatmul.bf16.gmra.mxu0 %v968
  %v1783 = vpop.f32.mrf.mxu0
  %v1784 = vadd.f32 %v1650, %v1783
  %v1785 = vpop.f32.mrf.mxu0
  %v1786 = vadd.f32 %v1652, %v1785
  %1787 = vmatmul.bf16.gmra.mxu0 %v975
  %v1788 = vpop.f32.mrf.mxu0
  %v1789 = vadd.f32 %v1655, %v1788
  %v1790 = vpop.f32.mrf.mxu0
  %v1791 = vadd.f32 %v1657, %v1790
  %1792 = vmatmul.bf16.gmra.mxu0 %v982
  %v1793 = vpop.f32.mrf.mxu0
  %v1794 = vadd.f32 %v1660, %v1793
  %v1795 = vpop.f32.mrf.mxu0
  %v1796 = vadd.f32 %v1662, %v1795
  %1797 = vmatmul.bf16.gmra.mxu0 %v989
  %v1798 = vpop.f32.mrf.mxu0
  %v1799 = vadd.f32 %v1665, %v1798
  %v1800 = vpop.f32.mrf.mxu0
  %v1801 = vadd.f32 %v1667, %v1800
  %1802 = vmatmul.bf16.gmra.mxu0 %v996
  %v1803 = vpop.f32.mrf.mxu0
  %v1804 = vadd.f32 %v1670, %v1803
  %v1805 = vpop.f32.mrf.mxu0
  %v1806 = vadd.f32 %v1672, %v1805
  %1807 = vmatmul.bf16.gmra.mxu0 %v1003
  %v1808 = vpop.f32.mrf.mxu0
  %v1809 = vadd.f32 %v1675, %v1808
  %v1810 = vpop.f32.mrf.mxu0
  %v1811 = vadd.f32 %v1677, %v1810
  %1812 = vmatmul.bf16.gmra.mxu0 %v1010
  %v1813 = vpop.f32.mrf.mxu0
  %v1814 = vadd.f32 %v1680, %v1813
  %v1815 = vpop.f32.mrf.mxu0
  %v1816 = vadd.f32 %v1682, %v1815
  %1817 = vmatmul.bf16.gmra.mxu0 %v1017
  %v1818 = vpop.f32.mrf.mxu0
  %v1819 = vadd.f32 %v1685, %v1818
  %v1820 = vpop.f32.mrf.mxu0
  %v1821 = vadd.f32 %v1687, %v1820
  %1822 = vmatmul.bf16.gmra.mxu0 %v1024
  %v1823 = vpop.f32.mrf.mxu0
  %v1824 = vadd.f32 %v1690, %v1823
  %v1825 = vpop.f32.mrf.mxu0
  %v1826 = vadd.f32 %v1692, %v1825
  %1827 = vmatmul.bf16.gmra.mxu0 %v1031
  %v1828 = vpop.f32.mrf.mxu0
  %v1829 = vadd.f32 %v1695, %v1828
  %v1830 = vpop.f32.mrf.mxu0
  %v1831 = vadd.f32 %v1697, %v1830
  %1832 = vmatmul.bf16.gmra.mxu0 %v1038
  %v1833 = vpop.f32.mrf.mxu0
  %v1834 = vadd.f32 %v1700, %v1833
  %v1835 = vpop.f32.mrf.mxu0
  %v1836 = vadd.f32 %v1702, %v1835
  %1837 = vdwg.mxu0
  %1838 = vmatpush.bf16.msra.mxu0 %v1417
  %1839 = vmatpush.bf16.msra.mxu0 %v1416
  %1840 = vmatpush.bf16.msra.mxu0 %v1415
  %1841 = vmatpush.bf16.msra.mxu0 %v1414
  %1842 = vmatpush.bf16.msra.mxu0 %v1413
  %1843 = vmatpush.bf16.msra.mxu0 %v1412
  %1844 = vmatpush.bf16.msra.mxu0 %v1411
  %1845 = vmatpush.bf16.msra.mxu0 %v1410
  %1846 = vmatmul.bf16.gmra.mxu0 %v871
  %v1847 = vpop.f32.mrf.mxu0
  %v1848 = vadd.f32 %v1714, %v1847
  %v1849 = vpop.f32.mrf.mxu0
  %v1850 = vadd.f32 %v1716, %v1849
  %1851 = vmatmul.bf16.gmra.mxu0 %v878
  %v1852 = vpop.f32.mrf.mxu0
  %v1853 = vadd.f32 %v1719, %v1852
  %v1854 = vpop.f32.mrf.mxu0
  %v1855 = vadd.f32 %v1721, %v1854
  %1856 = vmatmul.bf16.gmra.mxu0 %v885
  %v1857 = vpop.f32.mrf.mxu0
  %v1858 = vadd.f32 %v1724, %v1857
  %v1859 = vpop.f32.mrf.mxu0
  %v1860 = vadd.f32 %v1726, %v1859
  %1861 = vmatmul.bf16.gmra.mxu0 %v892
  %v1862 = vpop.f32.mrf.mxu0
  %v1863 = vadd.f32 %v1729, %v1862
  %v1864 = vpop.f32.mrf.mxu0
  %v1865 = vadd.f32 %v1731, %v1864
  %1866 = vmatmul.bf16.gmra.mxu0 %v899
  %v1867 = vpop.f32.mrf.mxu0
  %v1868 = vadd.f32 %v1734, %v1867
  %v1869 = vpop.f32.mrf.mxu0
  %v1870 = vadd.f32 %v1736, %v1869
  %1871 = vmatmul.bf16.gmra.mxu0 %v906
  %v1872 = vpop.f32.mrf.mxu0
  %v1873 = vadd.f32 %v1739, %v1872
  %v1874 = vpop.f32.mrf.mxu0
  %v1875 = vadd.f32 %v1741, %v1874
  %1876 = vmatmul.bf16.gmra.mxu0 %v913
  %v1877 = vpop.f32.mrf.mxu0
  %v1878 = vadd.f32 %v1744, %v1877
  %v1879 = vpop.f32.mrf.mxu0
  %v1880 = vadd.f32 %v1746, %v1879
  %1881 = vmatmul.bf16.gmra.mxu0 %v920
  %v1882 = vpop.f32.mrf.mxu0
  %v1883 = vadd.f32 %v1749, %v1882
  %v1884 = vpop.f32.mrf.mxu0
  %v1885 = vadd.f32 %v1751, %v1884
  %1886 = vmatmul.bf16.gmra.mxu0 %v927
  %v1887 = vpop.f32.mrf.mxu0
  %v1888 = vadd.f32 %v1754, %v1887
  %v1889 = vpop.f32.mrf.mxu0
  %v1890 = vadd.f32 %v1756, %v1889
  %1891 = vmatmul.bf16.gmra.mxu0 %v934
  %v1892 = vpop.f32.mrf.mxu0
  %v1893 = vadd.f32 %v1759, %v1892
  %v1894 = vpop.f32.mrf.mxu0
  %v1895 = vadd.f32 %v1761, %v1894
  %1896 = vmatmul.bf16.gmra.mxu0 %v941
  %v1897 = vpop.f32.mrf.mxu0
  %v1898 = vadd.f32 %v1764, %v1897
  %v1899 = vpop.f32.mrf.mxu0
  %v1900 = vadd.f32 %v1766, %v1899
  %1901 = vmatmul.bf16.gmra.mxu0 %v948
  %v1902 = vpop.f32.mrf.mxu0
  %v1903 = vadd.f32 %v1769, %v1902
  %v1904 = vpop.f32.mrf.mxu0
  %v1905 = vadd.f32 %v1771, %v1904
  %1906 = vmatmul.bf16.gmra.mxu0 %v955
  %v1907 = vpop.f32.mrf.mxu0
  %v1908 = vadd.f32 %v1774, %v1907
  %v1909 = vpop.f32.mrf.mxu0
  %v1910 = vadd.f32 %v1776, %v1909
  %1911 = vmatmul.bf16.gmra.mxu0 %v962
  %v1912 = vpop.f32.mrf.mxu0
  %v1913 = vadd.f32 %v1779, %v1912
  %v1914 = vpop.f32.mrf.mxu0
  %v1915 = vadd.f32 %v1781, %v1914
  %1916 = vmatmul.bf16.gmra.mxu0 %v969
  %v1917 = vpop.f32.mrf.mxu0
  %v1918 = vadd.f32 %v1784, %v1917
  %v1919 = vpop.f32.mrf.mxu0
  %v1920 = vadd.f32 %v1786, %v1919
  %1921 = vmatmul.bf16.gmra.mxu0 %v976
  %v1922 = vpop.f32.mrf.mxu0
  %v1923 = vadd.f32 %v1789, %v1922
  %v1924 = vpop.f32.mrf.mxu0
  %v1925 = vadd.f32 %v1791, %v1924
  %1926 = vmatmul.bf16.gmra.mxu0 %v983
  %v1927 = vpop.f32.mrf.mxu0
  %v1928 = vadd.f32 %v1794, %v1927
  %v1929 = vpop.f32.mrf.mxu0
  %v1930 = vadd.f32 %v1796, %v1929
  %1931 = vmatmul.bf16.gmra.mxu0 %v990
  %v1932 = vpop.f32.mrf.mxu0
  %v1933 = vadd.f32 %v1799, %v1932
  %v1934 = vpop.f32.mrf.mxu0
  %v1935 = vadd.f32 %v1801, %v1934
  %1936 = vmatmul.bf16.gmra.mxu0 %v997
  %v1937 = vpop.f32.mrf.mxu0
  %v1938 = vadd.f32 %v1804, %v1937
  %v1939 = vpop.f32.mrf.mxu0
  %v1940 = vadd.f32 %v1806, %v1939
  %1941 = vmatmul.bf16.gmra.mxu0 %v1004
  %v1942 = vpop.f32.mrf.mxu0
  %v1943 = vadd.f32 %v1809, %v1942
  %v1944 = vpop.f32.mrf.mxu0
  %v1945 = vadd.f32 %v1811, %v1944
  %1946 = vmatmul.bf16.gmra.mxu0 %v1011
  %v1947 = vpop.f32.mrf.mxu0
  %v1948 = vadd.f32 %v1814, %v1947
  %v1949 = vpop.f32.mrf.mxu0
  %v1950 = vadd.f32 %v1816, %v1949
  %1951 = vmatmul.bf16.gmra.mxu0 %v1018
  %v1952 = vpop.f32.mrf.mxu0
  %v1953 = vadd.f32 %v1819, %v1952
  %v1954 = vpop.f32.mrf.mxu0
  %v1955 = vadd.f32 %v1821, %v1954
  %1956 = vmatmul.bf16.gmra.mxu0 %v1025
  %v1957 = vpop.f32.mrf.mxu0
  %v1958 = vadd.f32 %v1824, %v1957
  %v1959 = vpop.f32.mrf.mxu0
  %v1960 = vadd.f32 %v1826, %v1959
  %1961 = vmatmul.bf16.gmra.mxu0 %v1032
  %v1962 = vpop.f32.mrf.mxu0
  %v1963 = vadd.f32 %v1829, %v1962
  %v1964 = vpop.f32.mrf.mxu0
  %v1965 = vadd.f32 %v1831, %v1964
  %1966 = vmatmul.bf16.gmra.mxu0 %v1039
  %v1967 = vpop.f32.mrf.mxu0
  %v1968 = vadd.f32 %v1834, %v1967
  %v1969 = vpop.f32.mrf.mxu0
  %v1970 = vadd.f32 %v1836, %v1969
  %1971 = vdwg.mxu0
  %1972 = vmatpush.bf16.msra.mxu0 %v1425
  %1973 = vmatpush.bf16.msra.mxu0 %v1424
  %1974 = vmatpush.bf16.msra.mxu0 %v1423
  %1975 = vmatpush.bf16.msra.mxu0 %v1422
  %1976 = vmatpush.bf16.msra.mxu0 %v1421
  %1977 = vmatpush.bf16.msra.mxu0 %v1420
  %1978 = vmatpush.bf16.msra.mxu0 %v1419
  %1979 = vmatpush.bf16.msra.mxu0 %v1418
  %1980 = vmatmul.bf16.gmra.mxu0 %v872
  %v1981 = vpop.f32.mrf.mxu0
  %v1982 = vadd.f32 %v1848, %v1981
  %v1983 = vpop.f32.mrf.mxu0
  %v1984 = vadd.f32 %v1850, %v1983
  %1985 = vmatmul.bf16.gmra.mxu0 %v879
  %v1986 = vpop.f32.mrf.mxu0
  %v1987 = vadd.f32 %v1853, %v1986
  %v1988 = vpop.f32.mrf.mxu0
  %v1989 = vadd.f32 %v1855, %v1988
  %1990 = vmatmul.bf16.gmra.mxu0 %v886
  %v1991 = vpop.f32.mrf.mxu0
  %v1992 = vadd.f32 %v1858, %v1991
  %v1993 = vpop.f32.mrf.mxu0
  %v1994 = vadd.f32 %v1860, %v1993
  %1995 = vmatmul.bf16.gmra.mxu0 %v893
  %v1996 = vpop.f32.mrf.mxu0
  %v1997 = vadd.f32 %v1863, %v1996
  %v1998 = vpop.f32.mrf.mxu0
  %v1999 = vadd.f32 %v1865, %v1998
  %2000 = vmatmul.bf16.gmra.mxu0 %v900
  %v2001 = vpop.f32.mrf.mxu0
  %v2002 = vadd.f32 %v1868, %v2001
  %v2003 = vpop.f32.mrf.mxu0
  %v2004 = vadd.f32 %v1870, %v2003
  %2005 = vmatmul.bf16.gmra.mxu0 %v907
  %v2006 = vpop.f32.mrf.mxu0
  %v2007 = vadd.f32 %v1873, %v2006
  %v2008 = vpop.f32.mrf.mxu0
  %v2009 = vadd.f32 %v1875, %v2008
  %2010 = vmatmul.bf16.gmra.mxu0 %v914
  %v2011 = vpop.f32.mrf.mxu0
  %v2012 = vadd.f32 %v1878, %v2011
  %v2013 = vpop.f32.mrf.mxu0
  %v2014 = vadd.f32 %v1880, %v2013
  %2015 = vmatmul.bf16.gmra.mxu0 %v921
  %v2016 = vpop.f32.mrf.mxu0
  %v2017 = vadd.f32 %v1883, %v2016
  %v2018 = vpop.f32.mrf.mxu0
  %v2019 = vadd.f32 %v1885, %v2018
  %2020 = vmatmul.bf16.gmra.mxu0 %v928
  %v2021 = vpop.f32.mrf.mxu0
  %v2022 = vadd.f32 %v1888, %v2021
  %v2023 = vpop.f32.mrf.mxu0
  %v2024 = vadd.f32 %v1890, %v2023
  %2025 = vmatmul.bf16.gmra.mxu0 %v935
  %v2026 = vpop.f32.mrf.mxu0
  %v2027 = vadd.f32 %v1893, %v2026
  %v2028 = vpop.f32.mrf.mxu0
  %v2029 = vadd.f32 %v1895, %v2028
  %2030 = vmatmul.bf16.gmra.mxu0 %v942
  %v2031 = vpop.f32.mrf.mxu0
  %v2032 = vadd.f32 %v1898, %v2031
  %v2033 = vpop.f32.mrf.mxu0
  %v2034 = vadd.f32 %v1900, %v2033
  %2035 = vmatmul.bf16.gmra.mxu0 %v949
  %v2036 = vpop.f32.mrf.mxu0
  %v2037 = vadd.f32 %v1903, %v2036
  %v2038 = vpop.f32.mrf.mxu0
  %v2039 = vadd.f32 %v1905, %v2038
  %2040 = vmatmul.bf16.gmra.mxu0 %v956
  %v2041 = vpop.f32.mrf.mxu0
  %v2042 = vadd.f32 %v1908, %v2041
  %v2043 = vpop.f32.mrf.mxu0
  %v2044 = vadd.f32 %v1910, %v2043
  %2045 = vmatmul.bf16.gmra.mxu0 %v963
  %v2046 = vpop.f32.mrf.mxu0
  %v2047 = vadd.f32 %v1913, %v2046
  %v2048 = vpop.f32.mrf.mxu0
  %v2049 = vadd.f32 %v1915, %v2048
  %2050 = vmatmul.bf16.gmra.mxu0 %v970
  %v2051 = vpop.f32.mrf.mxu0
  %v2052 = vadd.f32 %v1918, %v2051
  %v2053 = vpop.f32.mrf.mxu0
  %v2054 = vadd.f32 %v1920, %v2053
  %2055 = vmatmul.bf16.gmra.mxu0 %v977
  %v2056 = vpop.f32.mrf.mxu0
  %v2057 = vadd.f32 %v1923, %v2056
  %v2058 = vpop.f32.mrf.mxu0
  %v2059 = vadd.f32 %v1925, %v2058
  %2060 = vmatmul.bf16.gmra.mxu0 %v984
  %v2061 = vpop.f32.mrf.mxu0
  %v2062 = vadd.f32 %v1928, %v2061
  %v2063 = vpop.f32.mrf.mxu0
  %v2064 = vadd.f32 %v1930, %v2063
  %2065 = vmatmul.bf16.gmra.mxu0 %v991
  %v2066 = vpop.f32.mrf.mxu0
  %v2067 = vadd.f32 %v1933, %v2066
  %v2068 = vpop.f32.mrf.mxu0
  %v2069 = vadd.f32 %v1935, %v2068
  %2070 = vmatmul.bf16.gmra.mxu0 %v998
  %v2071 = vpop.f32.mrf.mxu0
  %v2072 = vadd.f32 %v1938, %v2071
  %v2073 = vpop.f32.mrf.mxu0
  %v2074 = vadd.f32 %v1940, %v2073
  %2075 = vmatmul.bf16.gmra.mxu0 %v1005
  %v2076 = vpop.f32.mrf.mxu0
  %v2077 = vadd.f32 %v1943, %v2076
  %v2078 = vpop.f32.mrf.mxu0
  %v2079 = vadd.f32 %v1945, %v2078
  %2080 = vmatmul.bf16.gmra.mxu0 %v1012
  %v2081 = vpop.f32.mrf.mxu0
  %v2082 = vadd.f32 %v1948, %v2081
  %v2083 = vpop.f32.mrf.mxu0
  %v2084 = vadd.f32 %v1950, %v2083
  %2085 = vmatmul.bf16.gmra.mxu0 %v1019
  %v2086 = vpop.f32.mrf.mxu0
  %v2087 = vadd.f32 %v1953, %v2086
  %v2088 = vpop.f32.mrf.mxu0
  %v2089 = vadd.f32 %v1955, %v2088
  %2090 = vmatmul.bf16.gmra.mxu0 %v1026
  %v2091 = vpop.f32.mrf.mxu0
  %v2092 = vadd.f32 %v1958, %v2091
  %v2093 = vpop.f32.mrf.mxu0
  %v2094 = vadd.f32 %v1960, %v2093
  %2095 = vmatmul.bf16.gmra.mxu0 %v1033
  %v2096 = vpop.f32.mrf.mxu0
  %v2097 = vadd.f32 %v1963, %v2096
  %v2098 = vpop.f32.mrf.mxu0
  %v2099 = vadd.f32 %v1965, %v2098
  %2100 = vmatmul.bf16.gmra.mxu0 %v1040
  %v2101 = vpop.f32.mrf.mxu0
  %v2102 = vadd.f32 %v1968, %v2101
  %v2103 = vpop.f32.mrf.mxu0
  %v2104 = vadd.f32 %v1970, %v2103
  %2105 = vdwg.mxu0
  %2106 = vmatpush.bf16.msra.mxu0 %v1433
  %2107 = vmatpush.bf16.msra.mxu0 %v1432
  %2108 = vmatpush.bf16.msra.mxu0 %v1431
  %2109 = vmatpush.bf16.msra.mxu0 %v1430
  %2110 = vmatpush.bf16.msra.mxu0 %v1429
  %2111 = vmatpush.bf16.msra.mxu0 %v1428
  %2112 = vmatpush.bf16.msra.mxu0 %v1427
  %2113 = vmatpush.bf16.msra.mxu0 %v1426
  %2114 = vmatmul.bf16.gmra.mxu0 %v873
  %v2115 = vpop.f32.mrf.mxu0
  %v2116 = vadd.f32 %v1982, %v2115
  %v2117 = vpop.f32.mrf.mxu0
  %v2118 = vadd.f32 %v1984, %v2117
  %2119 = vmatmul.bf16.gmra.mxu0 %v880
  %v2120 = vpop.f32.mrf.mxu0
  %v2121 = vadd.f32 %v1987, %v2120
  %v2122 = vpop.f32.mrf.mxu0
  %v2123 = vadd.f32 %v1989, %v2122
  %2124 = vmatmul.bf16.gmra.mxu0 %v887
  %v2125 = vpop.f32.mrf.mxu0
  %v2126 = vadd.f32 %v1992, %v2125
  %v2127 = vpop.f32.mrf.mxu0
  %v2128 = vadd.f32 %v1994, %v2127
  %2129 = vmatmul.bf16.gmra.mxu0 %v894
  %v2130 = vpop.f32.mrf.mxu0
  %v2131 = vadd.f32 %v1997, %v2130
  %v2132 = vpop.f32.mrf.mxu0
  %v2133 = vadd.f32 %v1999, %v2132
  %2134 = vmatmul.bf16.gmra.mxu0 %v901
  %v2135 = vpop.f32.mrf.mxu0
  %v2136 = vadd.f32 %v2002, %v2135
  %v2137 = vpop.f32.mrf.mxu0
  %v2138 = vadd.f32 %v2004, %v2137
  %2139 = vmatmul.bf16.gmra.mxu0 %v908
  %v2140 = vpop.f32.mrf.mxu0
  %v2141 = vadd.f32 %v2007, %v2140
  %v2142 = vpop.f32.mrf.mxu0
  %v2143 = vadd.f32 %v2009, %v2142
  %2144 = vmatmul.bf16.gmra.mxu0 %v915
  %v2145 = vpop.f32.mrf.mxu0
  %v2146 = vadd.f32 %v2012, %v2145
  %v2147 = vpop.f32.mrf.mxu0
  %v2148 = vadd.f32 %v2014, %v2147
  %2149 = vmatmul.bf16.gmra.mxu0 %v922
  %v2150 = vpop.f32.mrf.mxu0
  %v2151 = vadd.f32 %v2017, %v2150
  %v2152 = vpop.f32.mrf.mxu0
  %v2153 = vadd.f32 %v2019, %v2152
  %2154 = vmatmul.bf16.gmra.mxu0 %v929
  %v2155 = vpop.f32.mrf.mxu0
  %v2156 = vadd.f32 %v2022, %v2155
  %v2157 = vpop.f32.mrf.mxu0
  %v2158 = vadd.f32 %v2024, %v2157
  %2159 = vmatmul.bf16.gmra.mxu0 %v936
  %v2160 = vpop.f32.mrf.mxu0
  %v2161 = vadd.f32 %v2027, %v2160
  %v2162 = vpop.f32.mrf.mxu0
  %v2163 = vadd.f32 %v2029, %v2162
  %2164 = vmatmul.bf16.gmra.mxu0 %v943
  %v2165 = vpop.f32.mrf.mxu0
  %v2166 = vadd.f32 %v2032, %v2165
  %v2167 = vpop.f32.mrf.mxu0
  %v2168 = vadd.f32 %v2034, %v2167
  %2169 = vmatmul.bf16.gmra.mxu0 %v950
  %v2170 = vpop.f32.mrf.mxu0
  %v2171 = vadd.f32 %v2037, %v2170
  %v2172 = vpop.f32.mrf.mxu0
  %v2173 = vadd.f32 %v2039, %v2172
  %2174 = vmatmul.bf16.gmra.mxu0 %v957
  %v2175 = vpop.f32.mrf.mxu0
  %v2176 = vadd.f32 %v2042, %v2175
  %v2177 = vpop.f32.mrf.mxu0
  %v2178 = vadd.f32 %v2044, %v2177
  %2179 = vmatmul.bf16.gmra.mxu0 %v964
  %v2180 = vpop.f32.mrf.mxu0
  %v2181 = vadd.f32 %v2047, %v2180
  %v2182 = vpop.f32.mrf.mxu0
  %v2183 = vadd.f32 %v2049, %v2182
  %2184 = vmatmul.bf16.gmra.mxu0 %v971
  %v2185 = vpop.f32.mrf.mxu0
  %v2186 = vadd.f32 %v2052, %v2185
  %v2187 = vpop.f32.mrf.mxu0
  %v2188 = vadd.f32 %v2054, %v2187
  %2189 = vmatmul.bf16.gmra.mxu0 %v978
  %v2190 = vpop.f32.mrf.mxu0
  %v2191 = vadd.f32 %v2057, %v2190
  %v2192 = vpop.f32.mrf.mxu0
  %v2193 = vadd.f32 %v2059, %v2192
  %2194 = vmatmul.bf16.gmra.mxu0 %v985
  %v2195 = vpop.f32.mrf.mxu0
  %v2196 = vadd.f32 %v2062, %v2195
  %v2197 = vpop.f32.mrf.mxu0
  %v2198 = vadd.f32 %v2064, %v2197
  %2199 = vmatmul.bf16.gmra.mxu0 %v992
  %v2200 = vpop.f32.mrf.mxu0
  %v2201 = vadd.f32 %v2067, %v2200
  %v2202 = vpop.f32.mrf.mxu0
  %v2203 = vadd.f32 %v2069, %v2202
  %2204 = vmatmul.bf16.gmra.mxu0 %v999
  %v2205 = vpop.f32.mrf.mxu0
  %v2206 = vadd.f32 %v2072, %v2205
  %v2207 = vpop.f32.mrf.mxu0
  %v2208 = vadd.f32 %v2074, %v2207
  %2209 = vmatmul.bf16.gmra.mxu0 %v1006
  %v2210 = vpop.f32.mrf.mxu0
  %v2211 = vadd.f32 %v2077, %v2210
  %v2212 = vpop.f32.mrf.mxu0
  %v2213 = vadd.f32 %v2079, %v2212
  %2214 = vmatmul.bf16.gmra.mxu0 %v1013
  %v2215 = vpop.f32.mrf.mxu0
  %v2216 = vadd.f32 %v2082, %v2215
  %v2217 = vpop.f32.mrf.mxu0
  %v2218 = vadd.f32 %v2084, %v2217
  %2219 = vmatmul.bf16.gmra.mxu0 %v1020
  %v2220 = vpop.f32.mrf.mxu0
  %v2221 = vadd.f32 %v2087, %v2220
  %v2222 = vpop.f32.mrf.mxu0
  %v2223 = vadd.f32 %v2089, %v2222
  %2224 = vmatmul.bf16.gmra.mxu0 %v1027
  %v2225 = vpop.f32.mrf.mxu0
  %v2226 = vadd.f32 %v2092, %v2225
  %v2227 = vpop.f32.mrf.mxu0
  %v2228 = vadd.f32 %v2094, %v2227
  %2229 = vmatmul.bf16.gmra.mxu0 %v1034
  %v2230 = vpop.f32.mrf.mxu0
  %v2231 = vadd.f32 %v2097, %v2230
  %v2232 = vpop.f32.mrf.mxu0
  %v2233 = vadd.f32 %v2099, %v2232
  %2234 = vmatmul.bf16.gmra.mxu0 %v1041
  %v2235 = vpop.f32.mrf.mxu0
  %v2236 = vadd.f32 %v2102, %v2235
  %v2237 = vpop.f32.mrf.mxu0
  %v2238 = vadd.f32 %v2104, %v2237
  %2239 = vdwg.mxu0
  %2240 = vmatpush.bf16.msra.mxu0 %v1441
  %2241 = vmatpush.bf16.msra.mxu0 %v1440
  %2242 = vmatpush.bf16.msra.mxu0 %v1439
  %2243 = vmatpush.bf16.msra.mxu0 %v1438
  %2244 = vmatpush.bf16.msra.mxu0 %v1437
  %2245 = vmatpush.bf16.msra.mxu0 %v1436
  %2246 = vmatpush.bf16.msra.mxu0 %v1435
  %2247 = vmatpush.bf16.msra.mxu0 %v1434
  %2248 = vmatmul.bf16.gmra.mxu0 %v874
  %v2249 = vpop.f32.mrf.mxu0
  %v2250 = vadd.f32 %v2116, %v2249
  %v2251 = vpop.f32.mrf.mxu0
  %v2252 = vadd.f32 %v2118, %v2251
  %2253 = vmatmul.bf16.gmra.mxu0 %v881
  %v2254 = vpop.f32.mrf.mxu0
  %v2255 = vadd.f32 %v2121, %v2254
  %v2256 = vpop.f32.mrf.mxu0
  %v2257 = vadd.f32 %v2123, %v2256
  %2258 = vmatmul.bf16.gmra.mxu0 %v888
  %v2259 = vpop.f32.mrf.mxu0
  %v2260 = vadd.f32 %v2126, %v2259
  %v2261 = vpop.f32.mrf.mxu0
  %v2262 = vadd.f32 %v2128, %v2261
  %2263 = vmatmul.bf16.gmra.mxu0 %v895
  %v2264 = vpop.f32.mrf.mxu0
  %v2265 = vadd.f32 %v2131, %v2264
  %v2266 = vpop.f32.mrf.mxu0
  %v2267 = vadd.f32 %v2133, %v2266
  %2268 = vmatmul.bf16.gmra.mxu0 %v902
  %v2269 = vpop.f32.mrf.mxu0
  %v2270 = vadd.f32 %v2136, %v2269
  %v2271 = vpop.f32.mrf.mxu0
  %v2272 = vadd.f32 %v2138, %v2271
  %2273 = vmatmul.bf16.gmra.mxu0 %v909
  %v2274 = vpop.f32.mrf.mxu0
  %v2275 = vadd.f32 %v2141, %v2274
  %v2276 = vpop.f32.mrf.mxu0
  %v2277 = vadd.f32 %v2143, %v2276
  %2278 = vmatmul.bf16.gmra.mxu0 %v916
  %v2279 = vpop.f32.mrf.mxu0
  %v2280 = vadd.f32 %v2146, %v2279
  %v2281 = vpop.f32.mrf.mxu0
  %v2282 = vadd.f32 %v2148, %v2281
  %2283 = vmatmul.bf16.gmra.mxu0 %v923
  %v2284 = vpop.f32.mrf.mxu0
  %v2285 = vadd.f32 %v2151, %v2284
  %v2286 = vpop.f32.mrf.mxu0
  %v2287 = vadd.f32 %v2153, %v2286
  %2288 = vmatmul.bf16.gmra.mxu0 %v930
  %v2289 = vpop.f32.mrf.mxu0
  %v2290 = vadd.f32 %v2156, %v2289
  %v2291 = vpop.f32.mrf.mxu0
  %v2292 = vadd.f32 %v2158, %v2291
  %2293 = vmatmul.bf16.gmra.mxu0 %v937
  %v2294 = vpop.f32.mrf.mxu0
  %v2295 = vadd.f32 %v2161, %v2294
  %v2296 = vpop.f32.mrf.mxu0
  %v2297 = vadd.f32 %v2163, %v2296
  %2298 = vmatmul.bf16.gmra.mxu0 %v944
  %v2299 = vpop.f32.mrf.mxu0
  %v2300 = vadd.f32 %v2166, %v2299
  %v2301 = vpop.f32.mrf.mxu0
  %v2302 = vadd.f32 %v2168, %v2301
  %2303 = vmatmul.bf16.gmra.mxu0 %v951
  %v2304 = vpop.f32.mrf.mxu0
  %v2305 = vadd.f32 %v2171, %v2304
  %v2306 = vpop.f32.mrf.mxu0
  %v2307 = vadd.f32 %v2173, %v2306
  %2308 = vmatmul.bf16.gmra.mxu0 %v958
  %v2309 = vpop.f32.mrf.mxu0
  %v2310 = vadd.f32 %v2176, %v2309
  %v2311 = vpop.f32.mrf.mxu0
  %v2312 = vadd.f32 %v2178, %v2311
  %2313 = vmatmul.bf16.gmra.mxu0 %v965
  %v2314 = vpop.f32.mrf.mxu0
  %v2315 = vadd.f32 %v2181, %v2314
  %v2316 = vpop.f32.mrf.mxu0
  %v2317 = vadd.f32 %v2183, %v2316
  %2318 = vmatmul.bf16.gmra.mxu0 %v972
  %v2319 = vpop.f32.mrf.mxu0
  %v2320 = vadd.f32 %v2186, %v2319
  %v2321 = vpop.f32.mrf.mxu0
  %v2322 = vadd.f32 %v2188, %v2321
  %2323 = vmatmul.bf16.gmra.mxu0 %v979
  %v2324 = vpop.f32.mrf.mxu0
  %v2325 = vadd.f32 %v2191, %v2324
  %v2326 = vpop.f32.mrf.mxu0
  %v2327 = vadd.f32 %v2193, %v2326
  %2328 = vmatmul.bf16.gmra.mxu0 %v986
  %v2329 = vpop.f32.mrf.mxu0
  %v2330 = vadd.f32 %v2196, %v2329
  %v2331 = vpop.f32.mrf.mxu0
  %v2332 = vadd.f32 %v2198, %v2331
  %2333 = vmatmul.bf16.gmra.mxu0 %v993
  %v2334 = vpop.f32.mrf.mxu0
  %v2335 = vadd.f32 %v2201, %v2334
  %v2336 = vpop.f32.mrf.mxu0
  %v2337 = vadd.f32 %v2203, %v2336
  %2338 = vmatmul.bf16.gmra.mxu0 %v1000
  %v2339 = vpop.f32.mrf.mxu0
  %v2340 = vadd.f32 %v2206, %v2339
  %v2341 = vpop.f32.mrf.mxu0
  %v2342 = vadd.f32 %v2208, %v2341
  %2343 = vmatmul.bf16.gmra.mxu0 %v1007
  %v2344 = vpop.f32.mrf.mxu0
  %v2345 = vadd.f32 %v2211, %v2344
  %v2346 = vpop.f32.mrf.mxu0
  %v2347 = vadd.f32 %v2213, %v2346
  %2348 = vmatmul.bf16.gmra.mxu0 %v1014
  %v2349 = vpop.f32.mrf.mxu0
  %v2350 = vadd.f32 %v2216, %v2349
  %v2351 = vpop.f32.mrf.mxu0
  %v2352 = vadd.f32 %v2218, %v2351
  %2353 = vmatmul.bf16.gmra.mxu0 %v1021
  %v2354 = vpop.f32.mrf.mxu0
  %v2355 = vadd.f32 %v2221, %v2354
  %v2356 = vpop.f32.mrf.mxu0
  %v2357 = vadd.f32 %v2223, %v2356
  %2358 = vmatmul.bf16.gmra.mxu0 %v1028
  %v2359 = vpop.f32.mrf.mxu0
  %v2360 = vadd.f32 %v2226, %v2359
  %v2361 = vpop.f32.mrf.mxu0
  %v2362 = vadd.f32 %v2228, %v2361
  %2363 = vmatmul.bf16.gmra.mxu0 %v1035
  %v2364 = vpop.f32.mrf.mxu0
  %v2365 = vadd.f32 %v2231, %v2364
  %v2366 = vpop.f32.mrf.mxu0
  %v2367 = vadd.f32 %v2233, %v2366
  %2368 = vmatmul.bf16.gmra.mxu0 %v1042
  %v2369 = vpop.f32.mrf.mxu0
  %v2370 = vadd.f32 %v2236, %v2369
  %v2371 = vpop.f32.mrf.mxu0
  %v2372 = vadd.f32 %v2238, %v2371
  %2373 = vdwg.mxu0
  %2374 = vmatpush.bf16.msra.mxu0 0
  %2375 = vmatpush.bf16.msra.mxu0 0
  %2376 = vmatpush.bf16.msra.mxu0 0
  %2377 = vmatpush.bf16.msra.mxu0 0
  %2378 = vmatpush.bf16.msra.mxu0 0
  %2379 = vmatpush.bf16.msra.mxu0 0
  %2380 = vmatpush.bf16.msra.mxu0 %v1443
  %2381 = vmatpush.bf16.msra.mxu0 %v1442
  %2382 = vmatmul.bf16.gmra.mxu0 %v1496
  %v2383 = vpop.f32.mrf.mxu0
  %v2384 = vadd.f32 %v2250, %v2383
  %v2385 = vpop.f32.mrf.mxu0
  %v2386 = vadd.f32 %v2252, %v2385
  %2387 = vmatmul.bf16.gmra.mxu0 %v1499
  %v2388 = vpop.f32.mrf.mxu0
  %v2389 = vadd.f32 %v2255, %v2388
  %v2390 = vpop.f32.mrf.mxu0
  %v2391 = vadd.f32 %v2257, %v2390
  %2392 = vmatmul.bf16.gmra.mxu0 %v1502
  %v2393 = vpop.f32.mrf.mxu0
  %v2394 = vadd.f32 %v2260, %v2393
  %v2395 = vpop.f32.mrf.mxu0
  %v2396 = vadd.f32 %v2262, %v2395
  %2397 = vmatmul.bf16.gmra.mxu0 %v1505
  %v2398 = vpop.f32.mrf.mxu0
  %v2399 = vadd.f32 %v2265, %v2398
  %v2400 = vpop.f32.mrf.mxu0
  %v2401 = vadd.f32 %v2267, %v2400
  %2402 = vmatmul.bf16.gmra.mxu0 %v1508
  %v2403 = vpop.f32.mrf.mxu0
  %v2404 = vadd.f32 %v2270, %v2403
  %v2405 = vpop.f32.mrf.mxu0
  %v2406 = vadd.f32 %v2272, %v2405
  %2407 = vmatmul.bf16.gmra.mxu0 %v1511
  %v2408 = vpop.f32.mrf.mxu0
  %v2409 = vadd.f32 %v2275, %v2408
  %v2410 = vpop.f32.mrf.mxu0
  %v2411 = vadd.f32 %v2277, %v2410
  %2412 = vmatmul.bf16.gmra.mxu0 %v1514
  %v2413 = vpop.f32.mrf.mxu0
  %v2414 = vadd.f32 %v2280, %v2413
  %v2415 = vpop.f32.mrf.mxu0
  %v2416 = vadd.f32 %v2282, %v2415
  %2417 = vmatmul.bf16.gmra.mxu0 %v1517
  %v2418 = vpop.f32.mrf.mxu0
  %v2419 = vadd.f32 %v2285, %v2418
  %v2420 = vpop.f32.mrf.mxu0
  %v2421 = vadd.f32 %v2287, %v2420
  %2422 = vmatmul.bf16.gmra.mxu0 %v1520
  %v2423 = vpop.f32.mrf.mxu0
  %v2424 = vadd.f32 %v2290, %v2423
  %v2425 = vpop.f32.mrf.mxu0
  %v2426 = vadd.f32 %v2292, %v2425
  %2427 = vmatmul.bf16.gmra.mxu0 %v1523
  %v2428 = vpop.f32.mrf.mxu0
  %v2429 = vadd.f32 %v2295, %v2428
  %v2430 = vpop.f32.mrf.mxu0
  %v2431 = vadd.f32 %v2297, %v2430
  %2432 = vmatmul.bf16.gmra.mxu0 %v1526
  %v2433 = vpop.f32.mrf.mxu0
  %v2434 = vadd.f32 %v2300, %v2433
  %v2435 = vpop.f32.mrf.mxu0
  %v2436 = vadd.f32 %v2302, %v2435
  %2437 = vmatmul.bf16.gmra.mxu0 %v1529
  %v2438 = vpop.f32.mrf.mxu0
  %v2439 = vadd.f32 %v2305, %v2438
  %v2440 = vpop.f32.mrf.mxu0
  %v2441 = vadd.f32 %v2307, %v2440
  %2442 = vmatmul.bf16.gmra.mxu0 %v1532
  %v2443 = vpop.f32.mrf.mxu0
  %v2444 = vadd.f32 %v2310, %v2443
  %v2445 = vpop.f32.mrf.mxu0
  %v2446 = vadd.f32 %v2312, %v2445
  %2447 = vmatmul.bf16.gmra.mxu0 %v1535
  %v2448 = vpop.f32.mrf.mxu0
  %v2449 = vadd.f32 %v2315, %v2448
  %v2450 = vpop.f32.mrf.mxu0
  %v2451 = vadd.f32 %v2317, %v2450
  %2452 = vmatmul.bf16.gmra.mxu0 %v1538
  %v2453 = vpop.f32.mrf.mxu0
  %v2454 = vadd.f32 %v2320, %v2453
  %v2455 = vpop.f32.mrf.mxu0
  %v2456 = vadd.f32 %v2322, %v2455
  %2457 = vmatmul.bf16.gmra.mxu0 %v1541
  %v2458 = vpop.f32.mrf.mxu0
  %v2459 = vadd.f32 %v2325, %v2458
  %v2460 = vpop.f32.mrf.mxu0
  %v2461 = vadd.f32 %v2327, %v2460
  %2462 = vmatmul.bf16.gmra.mxu0 %v1544
  %v2463 = vpop.f32.mrf.mxu0
  %v2464 = vadd.f32 %v2330, %v2463
  %v2465 = vpop.f32.mrf.mxu0
  %v2466 = vadd.f32 %v2332, %v2465
  %2467 = vmatmul.bf16.gmra.mxu0 %v1547
  %v2468 = vpop.f32.mrf.mxu0
  %v2469 = vadd.f32 %v2335, %v2468
  %v2470 = vpop.f32.mrf.mxu0
  %v2471 = vadd.f32 %v2337, %v2470
  %2472 = vmatmul.bf16.gmra.mxu0 %v1550
  %v2473 = vpop.f32.mrf.mxu0
  %v2474 = vadd.f32 %v2340, %v2473
  %v2475 = vpop.f32.mrf.mxu0
  %v2476 = vadd.f32 %v2342, %v2475
  %2477 = vmatmul.bf16.gmra.mxu0 %v1553
  %v2478 = vpop.f32.mrf.mxu0
  %v2479 = vadd.f32 %v2345, %v2478
  %v2480 = vpop.f32.mrf.mxu0
  %v2481 = vadd.f32 %v2347, %v2480
  %2482 = vmatmul.bf16.gmra.mxu0 %v1556
  %v2483 = vpop.f32.mrf.mxu0
  %v2484 = vadd.f32 %v2350, %v2483
  %v2485 = vpop.f32.mrf.mxu0
  %v2486 = vadd.f32 %v2352, %v2485
  %2487 = vmatmul.bf16.gmra.mxu0 %v1559
  %v2488 = vpop.f32.mrf.mxu0
  %v2489 = vadd.f32 %v2355, %v2488
  %v2490 = vpop.f32.mrf.mxu0
  %v2491 = vadd.f32 %v2357, %v2490
  %2492 = vmatmul.bf16.gmra.mxu0 %v1562
  %v2493 = vpop.f32.mrf.mxu0
  %v2494 = vadd.f32 %v2360, %v2493
  %v2495 = vpop.f32.mrf.mxu0
  %v2496 = vadd.f32 %v2362, %v2495
  %2497 = vmatmul.bf16.gmra.mxu0 %v1565
  %v2498 = vpop.f32.mrf.mxu0
  %v2499 = vadd.f32 %v2365, %v2498
  %v2500 = vpop.f32.mrf.mxu0
  %v2501 = vadd.f32 %v2367, %v2500
  %2502 = vmatmul.bf16.gmra.mxu0 %v1568
  %v2503 = vpop.f32.mrf.mxu0
  %v2504 = vadd.f32 %v2370, %v2503
  %v2505 = vpop.f32.mrf.mxu0
  %v2506 = vadd.f32 %v2372, %v2505
  %2507 = vdwg.mxu0
  %v2508 = vmax.f32 %v2384, 0.0
  %v2509 = vmax.f32 %v2386, 0.0
  %v2510 = vmax.f32 %v2389, 0.0
  %v2511 = vmax.f32 %v2391, 0.0
  %v2512 = vmax.f32 %v2394, 0.0
  %v2513 = vmax.f32 %v2396, 0.0
  %v2514 = vmax.f32 %v2399, 0.0
  %v2515 = vmax.f32 %v2401, 0.0
  %v2516 = vmax.f32 %v2404, 0.0
  %v2517 = vmax.f32 %v2406, 0.0
  %v2518 = vmax.f32 %v2409, 0.0
  %v2519 = vmax.f32 %v2411, 0.0
  %v2520 = vmax.f32 %v2414, 0.0
  %v2521 = vmax.f32 %v2416, 0.0
  %v2522 = vmax.f32 %v2419, 0.0
  %v2523 = vmax.f32 %v2421, 0.0
  %v2524 = vmax.f32 %v2424, 0.0
  %v2525 = vmax.f32 %v2426, 0.0
  %v2526 = vmax.f32 %v2429, 0.0
  %v2527 = vmax.f32 %v2431, 0.0
  %v2528 = vmax.f32 %v2434, 0.0
  %v2529 = vmax.f32 %v2436, 0.0
  %v2530 = vmax.f32 %v2439, 0.0
  %v2531 = vmax.f32 %v2441, 0.0
  %v2532 = vmax.f32 %v2444, 0.0
  %v2533 = vmax.f32 %v2446, 0.0
  %v2534 = vmax.f32 %v2449, 0.0
  %v2535 = vmax.f32 %v2451, 0.0
  %v2536 = vmax.f32 %v2454, 0.0
  %v2537 = vmax.f32 %v2456, 0.0
  %v2538 = vmax.f32 %v2459, 0.0
  %v2539 = vmax.f32 %v2461, 0.0
  %v2540 = vmax.f32 %v2464, 0.0
  %v2541 = vmax.f32 %v2466, 0.0
  %v2542 = vmax.f32 %v2469, 0.0
  %v2543 = vmax.f32 %v2471, 0.0
  %v2544 = vmax.f32 %v2474, 0.0
  %v2545 = vmax.f32 %v2476, 0.0
  %v2546 = vmax.f32 %v2479, 0.0
  %v2547 = vmax.f32 %v2481, 0.0
  %v2548 = vmax.f32 %v2484, 0.0
  %v2549 = vmax.f32 %v2486, 0.0
  %v2550 = vmax.f32 %v2489, 0.0
  %v2551 = vmax.f32 %v2491, 0.0
  %v2552 = vmax.f32 %v2494, 0.0
  %v2553 = vmax.f32 %v2496, 0.0
  %v2554 = vmax.f32 %v2499, 0.0
  %v2555 = vmax.f32 %v2501, 0.0
  %v2556 = vmax.f32 %v2504, 0.0
  %v2557 = vmax.f32 %v2506, 0.0
  %v2558 = vpack.c.bf16 %v2508, %v2508
  %v2559 = vpack.c.bf16 %v2509, %v2509
  %v2560 = vpack.c.bf16 %v2510, %v2510
  %v2561 = vpack.c.bf16 %v2511, %v2511
  %v2562 = vpack.c.bf16 %v2512, %v2512
  %v2563 = vpack.c.bf16 %v2513, %v2513
  %v2564 = vpack.c.bf16 %v2514, %v2514
  %v2565 = vpack.c.bf16 %v2515, %v2515
  %v2566 = vpack.c.bf16 %v2516, %v2516
  %v2567 = vpack.c.bf16 %v2517, %v2517
  %v2568 = vpack.c.bf16 %v2518, %v2518
  %v2569 = vpack.c.bf16 %v2519, %v2519
  %v2570 = vpack.c.bf16 %v2520, %v2520
  %v2571 = vpack.c.bf16 %v2521, %v2521
  %v2572 = vpack.c.bf16 %v2522, %v2522
  %v2573 = vpack.c.bf16 %v2523, %v2523
  %v2574 = vpack.c.bf16 %v2524, %v2524
  %v2575 = vpack.c.bf16 %v2525, %v2525
  %v2576 = vpack.c.bf16 %v2526, %v2526
  %v2577 = vpack.c.bf16 %v2527, %v2527
  %v2578 = vpack.c.bf16 %v2528, %v2528
  %v2579 = vpack.c.bf16 %v2529, %v2529
  %v2580 = vpack.c.bf16 %v2530, %v2530
  %v2581 = vpack.c.bf16 %v2531, %v2531
  %v2582 = vpack.c.bf16 %v2532, %v2532
  %v2583 = vpack.c.bf16 %v2533, %v2533
  %v2584 = vpack.c.bf16 %v2534, %v2534
  %v2585 = vpack.c.bf16 %v2535, %v2535
  %v2586 = vpack.c.bf16 %v2536, %v2536
  %v2587 = vpack.c.bf16 %v2537, %v2537
  %v2588 = vpack.c.bf16 %v2538, %v2538
  %v2589 = vpack.c.bf16 %v2539, %v2539
  %v2590 = vpack.c.bf16 %v2540, %v2540
  %v2591 = vpack.c.bf16 %v2541, %v2541
  %v2592 = vpack.c.bf16 %v2542, %v2542
  %v2593 = vpack.c.bf16 %v2543, %v2543
  %v2594 = vpack.c.bf16 %v2544, %v2544
  %v2595 = vpack.c.bf16 %v2545, %v2545
  %v2596 = vpack.c.bf16 %v2546, %v2546
  %v2597 = vpack.c.bf16 %v2547, %v2547
  %v2598 = vpack.c.bf16 %v2548, %v2548
  %v2599 = vpack.c.bf16 %v2549, %v2549
  %v2600 = vpack.c.bf16 %v2550, %v2550
  %v2601 = vpack.c.bf16 %v2551, %v2551
  %v2602 = vpack.c.bf16 %v2552, %v2552
  %v2603 = vpack.c.bf16 %v2553, %v2553
  %v2604 = vpack.c.bf16 %v2554, %v2554
  %v2605 = vpack.c.bf16 %v2555, %v2555
  %v2606 = vpack.c.bf16 %v2556, %v2556
  %v2607 = vpack.c.bf16 %v2557, %v2557
  %vm2608 = vcmask 519168
  %2609 = vst.msk [vmem:[%s3] sm:$0xf] %vm2608, %v2558
  %2610 = vst.msk [vmem:[%s3 + $0x4] sm:$0xf] %vm2608, %v2559
  %2611 = vst.msk [vmem:[%s3 + $0x8] sm:$0xf] %vm2608, %v2560
  %2612 = vst.msk [vmem:[%s3 + $0xc] sm:$0xf] %vm2608, %v2561
  %2613 = vst.msk [vmem:[%s3 + $0x10] sm:$0xf] %vm2608, %v2562
  %2614 = vst.msk [vmem:[%s3 + $0x14] sm:$0xf] %vm2608, %v2563
  %2615 = vst.msk [vmem:[%s3 + $0x18] sm:$0xf] %vm2608, %v2564
  %2616 = vst.msk [vmem:[%s3 + $0x1c] sm:$0xf] %vm2608, %v2565
  %2617 = vst.msk [vmem:[%s3 + $0x20] sm:$0xf] %vm2608, %v2566
  %2618 = vst.msk [vmem:[%s3 + $0x24] sm:$0xf] %vm2608, %v2567
  %2619 = vst.msk [vmem:[%s3 + $0x28] sm:$0xf] %vm2608, %v2568
  %2620 = vst.msk [vmem:[%s3 + $0x2c] sm:$0xf] %vm2608, %v2569
  %2621 = vst.msk [vmem:[%s3 + $0x30] sm:$0xf] %vm2608, %v2570
  %2622 = vst.msk [vmem:[%s3 + $0x34] sm:$0xf] %vm2608, %v2571
  %2623 = vst.msk [vmem:[%s3 + $0x38] sm:$0xf] %vm2608, %v2572
  %2624 = vst.msk [vmem:[%s3 + $0x3c] sm:$0xf] %vm2608, %v2573
  %2625 = vst.msk [vmem:[%s3 + $0x40] sm:$0xf] %vm2608, %v2574
  %2626 = vst.msk [vmem:[%s3 + $0x44] sm:$0xf] %vm2608, %v2575
  %2627 = vst.msk [vmem:[%s3 + $0x48] sm:$0xf] %vm2608, %v2576
  %2628 = vst.msk [vmem:[%s3 + $0x4c] sm:$0xf] %vm2608, %v2577
  %2629 = vst.msk [vmem:[%s3 + $0x50] sm:$0xf] %vm2608, %v2578
  %2630 = vst.msk [vmem:[%s3 + $0x54] sm:$0xf] %vm2608, %v2579
  %2631 = vst.msk [vmem:[%s3 + $0x58] sm:$0xf] %vm2608, %v2580
  %2632 = vst.msk [vmem:[%s3 + $0x5c] sm:$0xf] %vm2608, %v2581
  %2633 = vst.msk [vmem:[%s3 + $0x60] sm:$0xf] %vm2608, %v2582
  %2634 = vst.msk [vmem:[%s3 + $0x64] sm:$0xf] %vm2608, %v2583
  %2635 = vst.msk [vmem:[%s3 + $0x68] sm:$0xf] %vm2608, %v2584
  %2636 = vst.msk [vmem:[%s3 + $0x6c] sm:$0xf] %vm2608, %v2585
  %2637 = vst.msk [vmem:[%s3 + $0x70] sm:$0xf] %vm2608, %v2586
  %2638 = vst.msk [vmem:[%s3 + $0x74] sm:$0xf] %vm2608, %v2587
  %2639 = vst.msk [vmem:[%s3 + $0x78] sm:$0xf] %vm2608, %v2588
  %2640 = vst.msk [vmem:[%s3 + $0x7c] sm:$0xf] %vm2608, %v2589
  %2641 = vst.msk [vmem:[%s3 + $0x80] sm:$0xf] %vm2608, %v2590
  %2642 = vst.msk [vmem:[%s3 + $0x84] sm:$0xf] %vm2608, %v2591
  %2643 = vst.msk [vmem:[%s3 + $0x88] sm:$0xf] %vm2608, %v2592
  %2644 = vst.msk [vmem:[%s3 + $0x8c] sm:$0xf] %vm2608, %v2593
  %2645 = vst.msk [vmem:[%s3 + $0x90] sm:$0xf] %vm2608, %v2594
  %2646 = vst.msk [vmem:[%s3 + $0x94] sm:$0xf] %vm2608, %v2595
  %2647 = vst.msk [vmem:[%s3 + $0x98] sm:$0xf] %vm2608, %v2596
  %2648 = vst.msk [vmem:[%s3 + $0x9c] sm:$0xf] %vm2608, %v2597
  %2649 = vst.msk [vmem:[%s3 + $0xa0] sm:$0xf] %vm2608, %v2598
  %2650 = vst.msk [vmem:[%s3 + $0xa4] sm:$0xf] %vm2608, %v2599
  %2651 = vst.msk [vmem:[%s3 + $0xa8] sm:$0xf] %vm2608, %v2600
  %2652 = vst.msk [vmem:[%s3 + $0xac] sm:$0xf] %vm2608, %v2601
  %2653 = vst.msk [vmem:[%s3 + $0xb0] sm:$0xf] %vm2608, %v2602
  %2654 = vst.msk [vmem:[%s3 + $0xb4] sm:$0xf] %vm2608, %v2603
  %2655 = vst.msk [vmem:[%s3 + $0xb8] sm:$0xf] %vm2608, %v2604
  %2656 = vst.msk [vmem:[%s3 + $0xbc] sm:$0xf] %vm2608, %v2605
  %2657 = vst.msk [vmem:[%s3 + $0xc0] sm:$0xf] %vm2608, %v2606
  %2658 = vst.msk [vmem:[%s3 + $0xc4] sm:$0xf] %vm2608, %v2607
  // Predicated region
  $region14: #{initial_net_forward.7} parent=0 // pred_check
    _
  $region15: #{initial_net_forward.7} parent=0 // pred_check_branch
    %2660 = sbr.rel (0) target = $region17
  $region16: #{initial_net_forward.7} parent=0 // pred_region
    _
  $region17: #{initial_net_forward.7} parent=0 // pred_fallthru
    _
  // Predicated region
  $region18: #{initial_net_forward.7} parent=0 // pred_check
    _
  $region19: #{initial_net_forward.7} parent=0 // pred_check_branch
    %2662 = sbr.rel (0) target = $region21
  $region20: #{initial_net_forward.7} parent=0 // pred_region
    _
  $region21: #{initial_net_forward.7} parent=0 // pred_fallthru
    _

// kernel: initial_net_forward.8
$region0: #{initial_net_forward.8}
  #allocation0 [shape = 'u32[]', space=smem, size = 0x4, offset = 0x4, fixed_abs, tag = 'smem constant byte address 0x4 - core index']
  #allocation1 [shape = 'u32[72,128]{1,0:T(1,128)}', space=vmem, size = 0x9000, scoped, tag = 'internal scratch']
  %s0 = inlined_call_operand.vmem [shape: bf16[100,1600], index: 0, kind: input, shape index: {}]
  %s1 = inlined_call_operand.vmem [shape: bf16[1600,64], index: 1, kind: input, shape index: {}]
  %s2 = inlined_call_operand.vmem [shape: f32[1,64], index: 2, kind: input, shape index: {}]
  %s3 = inlined_call_operand.vmem [shape: bf16[100,64], index: 3, kind: output, shape index: {}]
  %s4 = sld [smem:[#allocation0]]
  $region22: #{initial_net_forward.8} parent=0
    _
  %s6 = ssub.s32 1, %s4
  %s7 = scalar_select 0, %s6, %s4
  // Predicated region
  $region2: #{initial_net_forward.8} parent=0 // pred_check
    _
  $region3: #{initial_net_forward.8} parent=0 // pred_check_branch
    %9 = sbr.rel (0) target = $region5
  $region4: #{initial_net_forward.8} parent=0 // pred_region
    _
  $region5: #{initial_net_forward.8} parent=0 // pred_fallthru
    _
  // Predicated region
  $region6: #{initial_net_forward.8} parent=0 // pred_check
    _
  $region7: #{initial_net_forward.8} parent=0 // pred_check_branch
    %11 = sbr.rel (0) target = $region9
  $region8: #{initial_net_forward.8} parent=0 // pred_region
    _
  $region9: #{initial_net_forward.8} parent=0 // pred_fallthru
    _
  // Predicated region
  $region10: #{initial_net_forward.8} parent=0 // pred_check
    _
  $region11: #{initial_net_forward.8} parent=0 // pred_check_branch
    %13 = sbr.rel (0) target = $region13
  $region12: #{initial_net_forward.8} parent=0 // pred_region
    _
  $region13: #{initial_net_forward.8} parent=0 // pred_fallthru
    _
  %v15 = vld [vmem:[%s0] sm:$0xff]
  %v16 = vld [vmem:[%s0 + $0x8] sm:$0xff]
  %v17 = vld [vmem:[%s0 + $0x10] sm:$0xff]
  %v18 = vld [vmem:[%s0 + $0x18] sm:$0xff]
  %v19 = vld [vmem:[%s0 + $0x20] sm:$0xff]
  %v20 = vld [vmem:[%s0 + $0x28] sm:$0xff]
  %v21 = vld [vmem:[%s0 + $0x30] sm:$0xf]
  %v22 = vld [vmem:[%s0 + $0x34] sm:$0xff]
  %v23 = vld [vmem:[%s0 + $0x3c] sm:$0xff]
  %v24 = vld [vmem:[%s0 + $0x44] sm:$0xff]
  %v25 = vld [vmem:[%s0 + $0x4c] sm:$0xff]
  %v26 = vld [vmem:[%s0 + $0x54] sm:$0xff]
  %v27 = vld [vmem:[%s0 + $0x5c] sm:$0xff]
  %v28 = vld [vmem:[%s0 + $0x64] sm:$0xf]
  %v29 = vld [vmem:[%s0 + $0x68] sm:$0xff]
  %v30 = vld [vmem:[%s0 + $0x70] sm:$0xff]
  %v31 = vld [vmem:[%s0 + $0x78] sm:$0xff]
  %v32 = vld [vmem:[%s0 + $0x80] sm:$0xff]
  %v33 = vld [vmem:[%s0 + $0x88] sm:$0xff]
  %v34 = vld [vmem:[%s0 + $0x90] sm:$0xff]
  %v35 = vld [vmem:[%s0 + $0x98] sm:$0xf]
  %v36 = vld [vmem:[%s0 + $0x9c] sm:$0xff]
  %v37 = vld [vmem:[%s0 + $0xa4] sm:$0xff]
  %v38 = vld [vmem:[%s0 + $0xac] sm:$0xff]
  %v39 = vld [vmem:[%s0 + $0xb4] sm:$0xff]
  %v40 = vld [vmem:[%s0 + $0xbc] sm:$0xff]
  %v41 = vld [vmem:[%s0 + $0xc4] sm:$0xff]
  %v42 = vld [vmem:[%s0 + $0xcc] sm:$0xf]
  %v43 = vld [vmem:[%s0 + $0xd0] sm:$0xff]
  %v44 = vld [vmem:[%s0 + $0xd8] sm:$0xff]
  %v45 = vld [vmem:[%s0 + $0xe0] sm:$0xff]
  %v46 = vld [vmem:[%s0 + $0xe8] sm:$0xff]
  %v47 = vld [vmem:[%s0 + $0xf0] sm:$0xff]
  %v48 = vld [vmem:[%s0 + $0xf8] sm:$0xff]
  %v49 = vld [vmem:[%s0 + $0x100] sm:$0xf]
  %v50 = vld [vmem:[%s0 + $0x104] sm:$0xff]
  %v51 = vld [vmem:[%s0 + $0x10c] sm:$0xff]
  %v52 = vld [vmem:[%s0 + $0x114] sm:$0xff]
  %v53 = vld [vmem:[%s0 + $0x11c] sm:$0xff]
  %v54 = vld [vmem:[%s0 + $0x124] sm:$0xff]
  %v55 = vld [vmem:[%s0 + $0x12c] sm:$0xff]
  %v56 = vld [vmem:[%s0 + $0x134] sm:$0xf]
  %v57 = vld [vmem:[%s0 + $0x138] sm:$0xff]
  %v58 = vld [vmem:[%s0 + $0x140] sm:$0xff]
  %v59 = vld [vmem:[%s0 + $0x148] sm:$0xff]
  %v60 = vld [vmem:[%s0 + $0x150] sm:$0xff]
  %v61 = vld [vmem:[%s0 + $0x158] sm:$0xff]
  %v62 = vld [vmem:[%s0 + $0x160] sm:$0xff]
  %v63 = vld [vmem:[%s0 + $0x168] sm:$0xf]
  %v64 = vld [vmem:[%s0 + $0x16c] sm:$0xff]
  %v65 = vld [vmem:[%s0 + $0x174] sm:$0xff]
  %v66 = vld [vmem:[%s0 + $0x17c] sm:$0xff]
  %v67 = vld [vmem:[%s0 + $0x184] sm:$0xff]
  %v68 = vld [vmem:[%s0 + $0x18c] sm:$0xff]
  %v69 = vld [vmem:[%s0 + $0x194] sm:$0xff]
  %v70 = vld [vmem:[%s0 + $0x19c] sm:$0xf]
  %v71 = vld [vmem:[%s0 + $0x1a0] sm:$0xff]
  %v72 = vld [vmem:[%s0 + $0x1a8] sm:$0xff]
  %v73 = vld [vmem:[%s0 + $0x1b0] sm:$0xff]
  %v74 = vld [vmem:[%s0 + $0x1b8] sm:$0xff]
  %v75 = vld [vmem:[%s0 + $0x1c0] sm:$0xff]
  %v76 = vld [vmem:[%s0 + $0x1c8] sm:$0xff]
  %v77 = vld [vmem:[%s0 + $0x1d0] sm:$0xf]
  %v78 = vld [vmem:[%s0 + $0x1d4] sm:$0xff]
  %v79 = vld [vmem:[%s0 + $0x1dc] sm:$0xff]
  %v80 = vld [vmem:[%s0 + $0x1e4] sm:$0xff]
  %v81 = vld [vmem:[%s0 + $0x1ec] sm:$0xff]
  %v82 = vld [vmem:[%s0 + $0x1f4] sm:$0xff]
  %v83 = vld [vmem:[%s0 + $0x1fc] sm:$0xff]
  %v84 = vld [vmem:[%s0 + $0x204] sm:$0xf]
  %v85 = vld [vmem:[%s0 + $0x208] sm:$0xff]
  %v86 = vld [vmem:[%s0 + $0x210] sm:$0xff]
  %v87 = vld [vmem:[%s0 + $0x218] sm:$0xff]
  %v88 = vld [vmem:[%s0 + $0x220] sm:$0xff]
  %v89 = vld [vmem:[%s0 + $0x228] sm:$0xff]
  %v90 = vld [vmem:[%s0 + $0x230] sm:$0xff]
  %v91 = vld [vmem:[%s0 + $0x238] sm:$0xf]
  %v92 = vld [vmem:[%s0 + $0x23c] sm:$0xff]
  %v93 = vld [vmem:[%s0 + $0x244] sm:$0xff]
  %v94 = vld [vmem:[%s0 + $0x24c] sm:$0xff]
  %v95 = vld [vmem:[%s0 + $0x254] sm:$0xff]
  %v96 = vld [vmem:[%s0 + $0x25c] sm:$0xff]
  %v97 = vld [vmem:[%s0 + $0x264] sm:$0xff]
  %v98 = vld [vmem:[%s0 + $0x26c] sm:$0xf]
  %v99 = vld [vmem:[%s0 + $0x270] sm:$0x33]
  %v100 = vld [vmem:[%s0 + $0x278] sm:$0x33]
  %v101 = vld [vmem:[%s0 + $0x280] sm:$0x33]
  %v102 = vld [vmem:[%s0 + $0x288] sm:$0x33]
  %v103 = vld [vmem:[%s0 + $0x290] sm:$0x33]
  %v104 = vld [vmem:[%s0 + $0x298] sm:$0x33]
  %v105 = vld [vmem:[%s0 + $0x2a0] sm:$0x3]
  %v106 = vld [vmem:[%s1] sm:$0xf]
  %v107 = vld [vmem:[%s1 + $0x4] sm:$0xf]
  %v108 = vld [vmem:[%s1 + $0x8] sm:$0xf]
  %v109 = vld [vmem:[%s1 + $0xc] sm:$0xf]
  %v110 = vld [vmem:[%s1 + $0x10] sm:$0xf]
  %v111 = vld [vmem:[%s1 + $0x14] sm:$0xf]
  %v112 = vld [vmem:[%s1 + $0x18] sm:$0xf]
  %v113 = vld [vmem:[%s1 + $0x1c] sm:$0xf]
  %v114 = vld [vmem:[%s1 + $0x20] sm:$0xf]
  %v115 = vld [vmem:[%s1 + $0x24] sm:$0xf]
  %v116 = vld [vmem:[%s1 + $0x28] sm:$0xf]
  %v117 = vld [vmem:[%s1 + $0x2c] sm:$0xf]
  %v118 = vld [vmem:[%s1 + $0x30] sm:$0xf]
  %v119 = vld [vmem:[%s1 + $0x34] sm:$0xf]
  %v120 = vld [vmem:[%s1 + $0x38] sm:$0xf]
  %v121 = vld [vmem:[%s1 + $0x3c] sm:$0xf]
  %v122 = vld [vmem:[%s1 + $0x40] sm:$0xf]
  %v123 = vld [vmem:[%s1 + $0x44] sm:$0xf]
  %v124 = vld [vmem:[%s1 + $0x48] sm:$0xf]
  %v125 = vld [vmem:[%s1 + $0x4c] sm:$0xf]
  %v126 = vld [vmem:[%s1 + $0x50] sm:$0xf]
  %v127 = vld [vmem:[%s1 + $0x54] sm:$0xf]
  %v128 = vld [vmem:[%s1 + $0x58] sm:$0xf]
  %v129 = vld [vmem:[%s1 + $0x5c] sm:$0xf]
  %v130 = vld [vmem:[%s1 + $0x60] sm:$0xf]
  %v131 = vld [vmem:[%s1 + $0x64] sm:$0xf]
  %v132 = vld [vmem:[%s1 + $0x68] sm:$0xf]
  %v133 = vld [vmem:[%s1 + $0x6c] sm:$0xf]
  %v134 = vld [vmem:[%s1 + $0x70] sm:$0xf]
  %v135 = vld [vmem:[%s1 + $0x74] sm:$0xf]
  %v136 = vld [vmem:[%s1 + $0x78] sm:$0xf]
  %v137 = vld [vmem:[%s1 + $0x7c] sm:$0xf]
  %v138 = vld [vmem:[%s1 + $0x80] sm:$0xf]
  %v139 = vld [vmem:[%s1 + $0x84] sm:$0xf]
  %v140 = vld [vmem:[%s1 + $0x88] sm:$0xf]
  %v141 = vld [vmem:[%s1 + $0x8c] sm:$0xf]
  %v142 = vld [vmem:[%s1 + $0x90] sm:$0xf]
  %v143 = vld [vmem:[%s1 + $0x94] sm:$0xf]
  %v144 = vld [vmem:[%s1 + $0x98] sm:$0xf]
  %v145 = vld [vmem:[%s1 + $0x9c] sm:$0xf]
  %v146 = vld [vmem:[%s1 + $0xa0] sm:$0xf]
  %v147 = vld [vmem:[%s1 + $0xa4] sm:$0xf]
  %v148 = vld [vmem:[%s1 + $0xa8] sm:$0xf]
  %v149 = vld [vmem:[%s1 + $0xac] sm:$0xf]
  %v150 = vld [vmem:[%s1 + $0xb0] sm:$0xf]
  %v151 = vld [vmem:[%s1 + $0xb4] sm:$0xf]
  %v152 = vld [vmem:[%s1 + $0xb8] sm:$0xf]
  %v153 = vld [vmem:[%s1 + $0xbc] sm:$0xf]
  %v154 = vld [vmem:[%s1 + $0xc0] sm:$0xf]
  %v155 = vld [vmem:[%s1 + $0xc4] sm:$0xf]
  %v156 = vld [vmem:[%s1 + $0xc8] sm:$0xf]
  %v157 = vld [vmem:[%s1 + $0xcc] sm:$0xf]
  %v158 = vld [vmem:[%s1 + $0xd0] sm:$0xf]
  %v159 = vld [vmem:[%s1 + $0xd4] sm:$0xf]
  %v160 = vld [vmem:[%s1 + $0xd8] sm:$0xf]
  %v161 = vld [vmem:[%s1 + $0xdc] sm:$0xf]
  %v162 = vld [vmem:[%s1 + $0xe0] sm:$0xf]
  %v163 = vld [vmem:[%s1 + $0xe4] sm:$0xf]
  %v164 = vld [vmem:[%s1 + $0xe8] sm:$0xf]
  %v165 = vld [vmem:[%s1 + $0xec] sm:$0xf]
  %v166 = vld [vmem:[%s1 + $0xf0] sm:$0xf]
  %v167 = vld [vmem:[%s1 + $0xf4] sm:$0xf]
  %v168 = vld [vmem:[%s1 + $0xf8] sm:$0xf]
  %v169 = vld [vmem:[%s1 + $0xfc] sm:$0xf]
  %v170 = vld [vmem:[%s1 + $0x100] sm:$0xf]
  %v171 = vld [vmem:[%s1 + $0x104] sm:$0xf]
  %v172 = vld [vmem:[%s1 + $0x108] sm:$0xf]
  %v173 = vld [vmem:[%s1 + $0x10c] sm:$0xf]
  %v174 = vld [vmem:[%s1 + $0x110] sm:$0xf]
  %v175 = vld [vmem:[%s1 + $0x114] sm:$0xf]
  %v176 = vld [vmem:[%s1 + $0x118] sm:$0xf]
  %v177 = vld [vmem:[%s1 + $0x11c] sm:$0xf]
  %v178 = vld [vmem:[%s1 + $0x120] sm:$0xf]
  %v179 = vld [vmem:[%s1 + $0x124] sm:$0xf]
  %v180 = vld [vmem:[%s1 + $0x128] sm:$0xf]
  %v181 = vld [vmem:[%s1 + $0x12c] sm:$0xf]
  %v182 = vld [vmem:[%s1 + $0x130] sm:$0xf]
  %v183 = vld [vmem:[%s1 + $0x134] sm:$0xf]
  %v184 = vld [vmem:[%s1 + $0x138] sm:$0xf]
  %v185 = vld [vmem:[%s1 + $0x13c] sm:$0xf]
  %v186 = vld [vmem:[%s1 + $0x140] sm:$0xf]
  %v187 = vld [vmem:[%s1 + $0x144] sm:$0xf]
  %v188 = vld [vmem:[%s1 + $0x148] sm:$0xf]
  %v189 = vld [vmem:[%s1 + $0x14c] sm:$0xf]
  %v190 = vld [vmem:[%s1 + $0x150] sm:$0xf]
  %v191 = vld [vmem:[%s1 + $0x154] sm:$0xf]
  %v192 = vld [vmem:[%s1 + $0x158] sm:$0xf]
  %v193 = vld [vmem:[%s1 + $0x15c] sm:$0xf]
  %v194 = vld [vmem:[%s1 + $0x160] sm:$0xf]
  %v195 = vld [vmem:[%s1 + $0x164] sm:$0xf]
  %v196 = vld [vmem:[%s1 + $0x168] sm:$0xf]
  %v197 = vld [vmem:[%s1 + $0x16c] sm:$0xf]
  %v198 = vld [vmem:[%s1 + $0x170] sm:$0xf]
  %v199 = vld [vmem:[%s1 + $0x174] sm:$0xf]
  %v200 = vld [vmem:[%s1 + $0x178] sm:$0xf]
  %v201 = vld [vmem:[%s1 + $0x17c] sm:$0xf]
  %v202 = vld [vmem:[%s1 + $0x180] sm:$0xf]
  %v203 = vld [vmem:[%s1 + $0x184] sm:$0xf]
  %v204 = vld [vmem:[%s1 + $0x188] sm:$0xf]
  %v205 = vld [vmem:[%s1 + $0x18c] sm:$0xf]
  %v206 = vld [vmem:[%s1 + $0x190] sm:$0xf]
  %v207 = vld [vmem:[%s1 + $0x194] sm:$0xf]
  %v208 = vld [vmem:[%s1 + $0x198] sm:$0xf]
  %v209 = vld [vmem:[%s1 + $0x19c] sm:$0xf]
  %v210 = vld [vmem:[%s1 + $0x1a0] sm:$0xf]
  %v211 = vld [vmem:[%s1 + $0x1a4] sm:$0xf]
  %v212 = vld [vmem:[%s1 + $0x1a8] sm:$0xf]
  %v213 = vld [vmem:[%s1 + $0x1ac] sm:$0xf]
  %v214 = vld [vmem:[%s1 + $0x1b0] sm:$0xf]
  %v215 = vld [vmem:[%s1 + $0x1b4] sm:$0xf]
  %v216 = vld [vmem:[%s1 + $0x1b8] sm:$0xf]
  %v217 = vld [vmem:[%s1 + $0x1bc] sm:$0xf]
  %v218 = vld [vmem:[%s1 + $0x1c0] sm:$0xf]
  %v219 = vld [vmem:[%s1 + $0x1c4] sm:$0xf]
  %v220 = vld [vmem:[%s1 + $0x1c8] sm:$0xf]
  %v221 = vld [vmem:[%s1 + $0x1cc] sm:$0xf]
  %v222 = vld [vmem:[%s1 + $0x1d0] sm:$0xf]
  %v223 = vld [vmem:[%s1 + $0x1d4] sm:$0xf]
  %v224 = vld [vmem:[%s1 + $0x1d8] sm:$0xf]
  %v225 = vld [vmem:[%s1 + $0x1dc] sm:$0xf]
  %v226 = vld [vmem:[%s1 + $0x1e0] sm:$0xf]
  %v227 = vld [vmem:[%s1 + $0x1e4] sm:$0xf]
  %v228 = vld [vmem:[%s1 + $0x1e8] sm:$0xf]
  %v229 = vld [vmem:[%s1 + $0x1ec] sm:$0xf]
  %v230 = vld [vmem:[%s1 + $0x1f0] sm:$0xf]
  %v231 = vld [vmem:[%s1 + $0x1f4] sm:$0xf]
  %v232 = vld [vmem:[%s1 + $0x1f8] sm:$0xf]
  %v233 = vld [vmem:[%s1 + $0x1fc] sm:$0xf]
  %v234 = vld [vmem:[%s1 + $0x200] sm:$0xf]
  %v235 = vld [vmem:[%s1 + $0x204] sm:$0xf]
  %v236 = vld [vmem:[%s1 + $0x208] sm:$0xf]
  %v237 = vld [vmem:[%s1 + $0x20c] sm:$0xf]
  %v238 = vld [vmem:[%s1 + $0x210] sm:$0xf]
  %v239 = vld [vmem:[%s1 + $0x214] sm:$0xf]
  %v240 = vld [vmem:[%s1 + $0x218] sm:$0xf]
  %v241 = vld [vmem:[%s1 + $0x21c] sm:$0xf]
  %v242 = vld [vmem:[%s1 + $0x220] sm:$0xf]
  %v243 = vld [vmem:[%s1 + $0x224] sm:$0xf]
  %v244 = vld [vmem:[%s1 + $0x228] sm:$0xf]
  %v245 = vld [vmem:[%s1 + $0x22c] sm:$0xf]
  %v246 = vld [vmem:[%s1 + $0x230] sm:$0xf]
  %v247 = vld [vmem:[%s1 + $0x234] sm:$0xf]
  %v248 = vld [vmem:[%s1 + $0x238] sm:$0xf]
  %v249 = vld [vmem:[%s1 + $0x23c] sm:$0xf]
  %v250 = vld [vmem:[%s1 + $0x240] sm:$0xf]
  %v251 = vld [vmem:[%s1 + $0x244] sm:$0xf]
  %v252 = vld [vmem:[%s1 + $0x248] sm:$0xf]
  %v253 = vld [vmem:[%s1 + $0x24c] sm:$0xf]
  %v254 = vld [vmem:[%s1 + $0x250] sm:$0xf]
  %v255 = vld [vmem:[%s1 + $0x254] sm:$0xf]
  %v256 = vld [vmem:[%s1 + $0x258] sm:$0xf]
  %v257 = vld [vmem:[%s1 + $0x25c] sm:$0xf]
  %v258 = vld [vmem:[%s1 + $0x260] sm:$0xf]
  %v259 = vld [vmem:[%s1 + $0x264] sm:$0xf]
  %v260 = vld [vmem:[%s1 + $0x268] sm:$0xf]
  %v261 = vld [vmem:[%s1 + $0x26c] sm:$0xf]
  %v262 = vld [vmem:[%s1 + $0x270] sm:$0xf]
  %v263 = vld [vmem:[%s1 + $0x274] sm:$0xf]
  %v264 = vld [vmem:[%s1 + $0x278] sm:$0xf]
  %v265 = vld [vmem:[%s1 + $0x27c] sm:$0xf]
  %v266 = vld [vmem:[%s1 + $0x280] sm:$0xf]
  %v267 = vld [vmem:[%s1 + $0x284] sm:$0xf]
  %v268 = vld [vmem:[%s1 + $0x288] sm:$0xf]
  %v269 = vld [vmem:[%s1 + $0x28c] sm:$0xf]
  %v270 = vld [vmem:[%s1 + $0x290] sm:$0xf]
  %v271 = vld [vmem:[%s1 + $0x294] sm:$0xf]
  %v272 = vld [vmem:[%s1 + $0x298] sm:$0xf]
  %v273 = vld [vmem:[%s1 + $0x29c] sm:$0xf]
  %v274 = vld [vmem:[%s1 + $0x2a0] sm:$0xf]
  %v275 = vld [vmem:[%s1 + $0x2a4] sm:$0xf]
  %v276 = vld [vmem:[%s1 + $0x2a8] sm:$0xf]
  %v277 = vld [vmem:[%s1 + $0x2ac] sm:$0xf]
  %v278 = vld [vmem:[%s1 + $0x2b0] sm:$0xf]
  %v279 = vld [vmem:[%s1 + $0x2b4] sm:$0xf]
  %v280 = vld [vmem:[%s1 + $0x2b8] sm:$0xf]
  %v281 = vld [vmem:[%s1 + $0x2bc] sm:$0xf]
  %v282 = vld [vmem:[%s1 + $0x2c0] sm:$0xf]
  %v283 = vld [vmem:[%s1 + $0x2c4] sm:$0xf]
  %v284 = vld [vmem:[%s1 + $0x2c8] sm:$0xf]
  %v285 = vld [vmem:[%s1 + $0x2cc] sm:$0xf]
  %v286 = vld [vmem:[%s1 + $0x2d0] sm:$0xf]
  %v287 = vld [vmem:[%s1 + $0x2d4] sm:$0xf]
  %v288 = vld [vmem:[%s1 + $0x2d8] sm:$0xf]
  %v289 = vld [vmem:[%s1 + $0x2dc] sm:$0xf]
  %v290 = vld [vmem:[%s1 + $0x2e0] sm:$0xf]
  %v291 = vld [vmem:[%s1 + $0x2e4] sm:$0xf]
  %v292 = vld [vmem:[%s1 + $0x2e8] sm:$0xf]
  %v293 = vld [vmem:[%s1 + $0x2ec] sm:$0xf]
  %v294 = vld [vmem:[%s1 + $0x2f0] sm:$0xf]
  %v295 = vld [vmem:[%s1 + $0x2f4] sm:$0xf]
  %v296 = vld [vmem:[%s1 + $0x2f8] sm:$0xf]
  %v297 = vld [vmem:[%s1 + $0x2fc] sm:$0xf]
  %v298 = vld [vmem:[%s1 + $0x300] sm:$0xf]
  %v299 = vld [vmem:[%s1 + $0x304] sm:$0xf]
  %v300 = vld [vmem:[%s1 + $0x308] sm:$0xf]
  %v301 = vld [vmem:[%s1 + $0x30c] sm:$0xf]
  %v302 = vld [vmem:[%s1 + $0x310] sm:$0xf]
  %v303 = vld [vmem:[%s1 + $0x314] sm:$0xf]
  %v304 = vld [vmem:[%s1 + $0x318] sm:$0xf]
  %v305 = vld [vmem:[%s1 + $0x31c] sm:$0xf]
  %v306 = vld [vmem:[%s2] sm:$0x1]
  %v308 = vperm.slane %v306, 0
  %v401 = vunpack.c.l.b16 %v15
  %v402 = vunpack.c.h.b16 %v15
  %v403 = vunpack.c.l.b16 %v16
  %v404 = vunpack.c.h.b16 %v16
  %v405 = vunpack.c.l.b16 %v17
  %v406 = vunpack.c.h.b16 %v17
  %v407 = vunpack.c.l.b16 %v18
  %v408 = vunpack.c.h.b16 %v18
  %v409 = vunpack.c.l.b16 %v19
  %v410 = vunpack.c.h.b16 %v19
  %v411 = vunpack.c.l.b16 %v20
  %v412 = vunpack.c.h.b16 %v20
  %v413 = vunpack.c.l.b16 %v21
  %v414 = vunpack.c.l.b16 %v22
  %v415 = vunpack.c.h.b16 %v22
  %v416 = vunpack.c.l.b16 %v23
  %v417 = vunpack.c.h.b16 %v23
  %v418 = vunpack.c.l.b16 %v24
  %v419 = vunpack.c.h.b16 %v24
  %v420 = vunpack.c.l.b16 %v25
  %v421 = vunpack.c.h.b16 %v25
  %v422 = vunpack.c.l.b16 %v26
  %v423 = vunpack.c.h.b16 %v26
  %v424 = vunpack.c.l.b16 %v27
  %v425 = vunpack.c.h.b16 %v27
  %v426 = vunpack.c.l.b16 %v28
  %v427 = vunpack.c.l.b16 %v29
  %v428 = vunpack.c.h.b16 %v29
  %v429 = vunpack.c.l.b16 %v30
  %v430 = vunpack.c.h.b16 %v30
  %v431 = vunpack.c.l.b16 %v31
  %v432 = vunpack.c.h.b16 %v31
  %v433 = vunpack.c.l.b16 %v32
  %v434 = vunpack.c.h.b16 %v32
  %v435 = vunpack.c.l.b16 %v33
  %v436 = vunpack.c.h.b16 %v33
  %v437 = vunpack.c.l.b16 %v34
  %v438 = vunpack.c.h.b16 %v34
  %v439 = vunpack.c.l.b16 %v35
  %v440 = vunpack.c.l.b16 %v36
  %v441 = vunpack.c.h.b16 %v36
  %v442 = vunpack.c.l.b16 %v37
  %v443 = vunpack.c.h.b16 %v37
  %v444 = vunpack.c.l.b16 %v38
  %v445 = vunpack.c.h.b16 %v38
  %v446 = vunpack.c.l.b16 %v39
  %v447 = vunpack.c.h.b16 %v39
  %v448 = vunpack.c.l.b16 %v40
  %v449 = vunpack.c.h.b16 %v40
  %v450 = vunpack.c.l.b16 %v41
  %v451 = vunpack.c.h.b16 %v41
  %v452 = vunpack.c.l.b16 %v42
  %v453 = vunpack.c.l.b16 %v43
  %v454 = vunpack.c.h.b16 %v43
  %v455 = vunpack.c.l.b16 %v44
  %v456 = vunpack.c.h.b16 %v44
  %v457 = vunpack.c.l.b16 %v45
  %v458 = vunpack.c.h.b16 %v45
  %v459 = vunpack.c.l.b16 %v46
  %v460 = vunpack.c.h.b16 %v46
  %v461 = vunpack.c.l.b16 %v47
  %v462 = vunpack.c.h.b16 %v47
  %v463 = vunpack.c.l.b16 %v48
  %v464 = vunpack.c.h.b16 %v48
  %v465 = vunpack.c.l.b16 %v49
  %v466 = vunpack.c.l.b16 %v50
  %v467 = vunpack.c.h.b16 %v50
  %v468 = vunpack.c.l.b16 %v51
  %v469 = vunpack.c.h.b16 %v51
  %v470 = vunpack.c.l.b16 %v52
  %v471 = vunpack.c.h.b16 %v52
  %v472 = vunpack.c.l.b16 %v53
  %v473 = vunpack.c.h.b16 %v53
  %v474 = vunpack.c.l.b16 %v54
  %v475 = vunpack.c.h.b16 %v54
  %v476 = vunpack.c.l.b16 %v55
  %v477 = vunpack.c.h.b16 %v55
  %v478 = vunpack.c.l.b16 %v56
  %v479 = vunpack.c.l.b16 %v57
  %v480 = vunpack.c.h.b16 %v57
  %v481 = vunpack.c.l.b16 %v58
  %v482 = vunpack.c.h.b16 %v58
  %v483 = vunpack.c.l.b16 %v59
  %v484 = vunpack.c.h.b16 %v59
  %v485 = vunpack.c.l.b16 %v60
  %v486 = vunpack.c.h.b16 %v60
  %v487 = vunpack.c.l.b16 %v61
  %v488 = vunpack.c.h.b16 %v61
  %v489 = vunpack.c.l.b16 %v62
  %v490 = vunpack.c.h.b16 %v62
  %v491 = vunpack.c.l.b16 %v63
  %v492 = vunpack.c.l.b16 %v64
  %v493 = vunpack.c.h.b16 %v64
  %v494 = vunpack.c.l.b16 %v65
  %v495 = vunpack.c.h.b16 %v65
  %v496 = vunpack.c.l.b16 %v66
  %v497 = vunpack.c.h.b16 %v66
  %v498 = vunpack.c.l.b16 %v67
  %v499 = vunpack.c.h.b16 %v67
  %v500 = vunpack.c.l.b16 %v68
  %v501 = vunpack.c.h.b16 %v68
  %v502 = vunpack.c.l.b16 %v69
  %v503 = vunpack.c.h.b16 %v69
  %v504 = vunpack.c.l.b16 %v70
  %v505 = vunpack.c.l.b16 %v71
  %v506 = vunpack.c.h.b16 %v71
  %v507 = vunpack.c.l.b16 %v72
  %v508 = vunpack.c.h.b16 %v72
  %v509 = vunpack.c.l.b16 %v73
  %v510 = vunpack.c.h.b16 %v73
  %v511 = vunpack.c.l.b16 %v74
  %v512 = vunpack.c.h.b16 %v74
  %v513 = vunpack.c.l.b16 %v75
  %v514 = vunpack.c.h.b16 %v75
  %v515 = vunpack.c.l.b16 %v76
  %v516 = vunpack.c.h.b16 %v76
  %v517 = vunpack.c.l.b16 %v77
  %v518 = vunpack.c.l.b16 %v78
  %v519 = vunpack.c.h.b16 %v78
  %v520 = vunpack.c.l.b16 %v79
  %v521 = vunpack.c.h.b16 %v79
  %v522 = vunpack.c.l.b16 %v80
  %v523 = vunpack.c.h.b16 %v80
  %v524 = vunpack.c.l.b16 %v81
  %v525 = vunpack.c.h.b16 %v81
  %v526 = vunpack.c.l.b16 %v82
  %v527 = vunpack.c.h.b16 %v82
  %v528 = vunpack.c.l.b16 %v83
  %v529 = vunpack.c.h.b16 %v83
  %v530 = vunpack.c.l.b16 %v84
  %v531 = vunpack.c.l.b16 %v85
  %v532 = vunpack.c.h.b16 %v85
  %v533 = vunpack.c.l.b16 %v86
  %v534 = vunpack.c.h.b16 %v86
  %v535 = vunpack.c.l.b16 %v87
  %v536 = vunpack.c.h.b16 %v87
  %v537 = vunpack.c.l.b16 %v88
  %v538 = vunpack.c.h.b16 %v88
  %v539 = vunpack.c.l.b16 %v89
  %v540 = vunpack.c.h.b16 %v89
  %v541 = vunpack.c.l.b16 %v90
  %v542 = vunpack.c.h.b16 %v90
  %v543 = vunpack.c.l.b16 %v91
  %v544 = vunpack.c.l.b16 %v92
  %v545 = vunpack.c.h.b16 %v92
  %v546 = vunpack.c.l.b16 %v93
  %v547 = vunpack.c.h.b16 %v93
  %v548 = vunpack.c.l.b16 %v94
  %v549 = vunpack.c.h.b16 %v94
  %v550 = vunpack.c.l.b16 %v95
  %v551 = vunpack.c.h.b16 %v95
  %v552 = vunpack.c.l.b16 %v96
  %v553 = vunpack.c.h.b16 %v96
  %v554 = vunpack.c.l.b16 %v97
  %v555 = vunpack.c.h.b16 %v97
  %v556 = vunpack.c.l.b16 %v98
  %v557 = vunpack.c.l.b16 %v99
  %v558 = vunpack.c.h.b16 %v99
  %v559 = vunpack.c.l.b16 %v100
  %v560 = vunpack.c.h.b16 %v100
  %v561 = vunpack.c.l.b16 %v101
  %v562 = vunpack.c.h.b16 %v101
  %v563 = vunpack.c.l.b16 %v102
  %v564 = vunpack.c.h.b16 %v102
  %v565 = vunpack.c.l.b16 %v103
  %v566 = vunpack.c.h.b16 %v103
  %v567 = vunpack.c.l.b16 %v104
  %v568 = vunpack.c.h.b16 %v104
  %v569 = vunpack.c.l.b16 %v105
  %v570 = vpack.c.b16 %v414, %v401
  %v571 = vpack.c.b16 %v415, %v402
  %v572 = vpack.c.b16 %v416, %v403
  %v573 = vpack.c.b16 %v417, %v404
  %v574 = vpack.c.b16 %v418, %v405
  %v575 = vpack.c.b16 %v419, %v406
  %v576 = vpack.c.b16 %v420, %v407
  %v577 = vpack.c.b16 %v421, %v408
  %v578 = vpack.c.b16 %v422, %v409
  %v579 = vpack.c.b16 %v423, %v410
  %v580 = vpack.c.b16 %v424, %v411
  %v581 = vpack.c.b16 %v425, %v412
  %v582 = vpack.c.b16 %v426, %v413
  %v583 = vpack.c.b16 %v440, %v427
  %v584 = vpack.c.b16 %v441, %v428
  %v585 = vpack.c.b16 %v442, %v429
  %v586 = vpack.c.b16 %v443, %v430
  %v587 = vpack.c.b16 %v444, %v431
  %v588 = vpack.c.b16 %v445, %v432
  %v589 = vpack.c.b16 %v446, %v433
  %v590 = vpack.c.b16 %v447, %v434
  %v591 = vpack.c.b16 %v448, %v435
  %v592 = vpack.c.b16 %v449, %v436
  %v593 = vpack.c.b16 %v450, %v437
  %v594 = vpack.c.b16 %v451, %v438
  %v595 = vpack.c.b16 %v452, %v439
  %v596 = vpack.c.b16 %v466, %v453
  %v597 = vpack.c.b16 %v467, %v454
  %v598 = vpack.c.b16 %v468, %v455
  %v599 = vpack.c.b16 %v469, %v456
  %v600 = vpack.c.b16 %v470, %v457
  %v601 = vpack.c.b16 %v471, %v458
  %v602 = vpack.c.b16 %v472, %v459
  %v603 = vpack.c.b16 %v473, %v460
  %v604 = vpack.c.b16 %v474, %v461
  %v605 = vpack.c.b16 %v475, %v462
  %v606 = vpack.c.b16 %v476, %v463
  %v607 = vpack.c.b16 %v477, %v464
  %v608 = vpack.c.b16 %v478, %v465
  %v609 = vpack.c.b16 %v492, %v479
  %v610 = vpack.c.b16 %v493, %v480
  %v611 = vpack.c.b16 %v494, %v481
  %v612 = vpack.c.b16 %v495, %v482
  %v613 = vpack.c.b16 %v496, %v483
  %v614 = vpack.c.b16 %v497, %v484
  %v615 = vpack.c.b16 %v498, %v485
  %v616 = vpack.c.b16 %v499, %v486
  %v617 = vpack.c.b16 %v500, %v487
  %v618 = vpack.c.b16 %v501, %v488
  %v619 = vpack.c.b16 %v502, %v489
  %v620 = vpack.c.b16 %v503, %v490
  %v621 = vpack.c.b16 %v504, %v491
  %v622 = vpack.c.b16 %v518, %v505
  %v623 = vpack.c.b16 %v519, %v506
  %v624 = vpack.c.b16 %v520, %v507
  %v625 = vpack.c.b16 %v521, %v508
  %v626 = vpack.c.b16 %v522, %v509
  %v627 = vpack.c.b16 %v523, %v510
  %v628 = vpack.c.b16 %v524, %v511
  %v629 = vpack.c.b16 %v525, %v512
  %v630 = vpack.c.b16 %v526, %v513
  %v631 = vpack.c.b16 %v527, %v514
  %v632 = vpack.c.b16 %v528, %v515
  %v633 = vpack.c.b16 %v529, %v516
  %v634 = vpack.c.b16 %v530, %v517
  %v635 = vpack.c.b16 %v544, %v531
  %v636 = vpack.c.b16 %v545, %v532
  %v637 = vpack.c.b16 %v546, %v533
  %v638 = vpack.c.b16 %v547, %v534
  %v639 = vpack.c.b16 %v548, %v535
  %v640 = vpack.c.b16 %v549, %v536
  %v641 = vpack.c.b16 %v550, %v537
  %v642 = vpack.c.b16 %v551, %v538
  %v643 = vpack.c.b16 %v552, %v539
  %v644 = vpack.c.b16 %v553, %v540
  %v645 = vpack.c.b16 %v554, %v541
  %v646 = vpack.c.b16 %v555, %v542
  %v647 = vpack.c.b16 %v556, %v543
  %v648 = vpack.c.b16 %v557, %v557
  %v649 = vpack.c.b16 %v558, %v558
  %v650 = vpack.c.b16 %v559, %v559
  %v651 = vpack.c.b16 %v560, %v560
  %v652 = vpack.c.b16 %v561, %v561
  %v653 = vpack.c.b16 %v562, %v562
  %v654 = vpack.c.b16 %v563, %v563
  %v655 = vpack.c.b16 %v564, %v564
  %v656 = vpack.c.b16 %v565, %v565
  %v657 = vpack.c.b16 %v566, %v566
  %v658 = vpack.c.b16 %v567, %v567
  %v659 = vpack.c.b16 %v568, %v568
  %v660 = vpack.c.b16 %v569, %v569
  %v945 = vunpack.c.l.b16 %v106
  %v946 = vunpack.c.l.b16 %v107
  %v947 = vunpack.c.l.b16 %v108
  %v948 = vunpack.c.l.b16 %v109
  %v949 = vunpack.c.l.b16 %v110
  %v950 = vunpack.c.l.b16 %v111
  %v951 = vunpack.c.l.b16 %v112
  %v952 = vunpack.c.l.b16 %v113
  %v953 = vunpack.c.l.b16 %v114
  %v954 = vunpack.c.l.b16 %v115
  %v955 = vunpack.c.l.b16 %v116
  %v956 = vunpack.c.l.b16 %v117
  %v957 = vunpack.c.l.b16 %v118
  %v958 = vunpack.c.l.b16 %v119
  %v959 = vunpack.c.l.b16 %v120
  %v960 = vunpack.c.l.b16 %v121
  %v961 = vunpack.c.l.b16 %v122
  %v962 = vunpack.c.l.b16 %v123
  %v963 = vunpack.c.l.b16 %v124
  %v964 = vunpack.c.l.b16 %v125
  %v965 = vunpack.c.l.b16 %v126
  %v966 = vunpack.c.l.b16 %v127
  %v967 = vunpack.c.l.b16 %v128
  %v968 = vunpack.c.l.b16 %v129
  %v969 = vunpack.c.l.b16 %v130
  %v970 = vunpack.c.l.b16 %v131
  %v971 = vunpack.c.l.b16 %v132
  %v972 = vunpack.c.l.b16 %v133
  %v973 = vunpack.c.l.b16 %v134
  %v974 = vunpack.c.l.b16 %v135
  %v975 = vunpack.c.l.b16 %v136
  %v976 = vunpack.c.l.b16 %v137
  %v977 = vunpack.c.l.b16 %v138
  %v978 = vunpack.c.l.b16 %v139
  %v979 = vunpack.c.l.b16 %v140
  %v980 = vunpack.c.l.b16 %v141
  %v981 = vunpack.c.l.b16 %v142
  %v982 = vunpack.c.l.b16 %v143
  %v983 = vunpack.c.l.b16 %v144
  %v984 = vunpack.c.l.b16 %v145
  %v985 = vunpack.c.l.b16 %v146
  %v986 = vunpack.c.l.b16 %v147
  %v987 = vunpack.c.l.b16 %v148
  %v988 = vunpack.c.l.b16 %v149
  %v989 = vunpack.c.l.b16 %v150
  %v990 = vunpack.c.l.b16 %v151
  %v991 = vunpack.c.l.b16 %v152
  %v992 = vunpack.c.l.b16 %v153
  %v993 = vunpack.c.l.b16 %v154
  %v994 = vunpack.c.l.b16 %v155
  %v995 = vunpack.c.l.b16 %v156
  %v996 = vunpack.c.l.b16 %v157
  %v997 = vunpack.c.l.b16 %v158
  %v998 = vunpack.c.l.b16 %v159
  %v999 = vunpack.c.l.b16 %v160
  %v1000 = vunpack.c.l.b16 %v161
  %v1001 = vunpack.c.l.b16 %v162
  %v1002 = vunpack.c.l.b16 %v163
  %v1003 = vunpack.c.l.b16 %v164
  %v1004 = vunpack.c.l.b16 %v165
  %v1005 = vunpack.c.l.b16 %v166
  %v1006 = vunpack.c.l.b16 %v167
  %v1007 = vunpack.c.l.b16 %v168
  %v1008 = vunpack.c.l.b16 %v169
  %v1009 = vunpack.c.l.b16 %v170
  %v1010 = vunpack.c.l.b16 %v171
  %v1011 = vunpack.c.l.b16 %v172
  %v1012 = vunpack.c.l.b16 %v173
  %v1013 = vunpack.c.l.b16 %v174
  %v1014 = vunpack.c.l.b16 %v175
  %v1015 = vunpack.c.l.b16 %v176
  %v1016 = vunpack.c.l.b16 %v177
  %v1017 = vunpack.c.l.b16 %v178
  %v1018 = vunpack.c.l.b16 %v179
  %v1019 = vunpack.c.l.b16 %v180
  %v1020 = vunpack.c.l.b16 %v181
  %v1021 = vunpack.c.l.b16 %v182
  %v1022 = vunpack.c.l.b16 %v183
  %v1023 = vunpack.c.l.b16 %v184
  %v1024 = vunpack.c.l.b16 %v185
  %v1025 = vunpack.c.l.b16 %v186
  %v1026 = vunpack.c.l.b16 %v187
  %v1027 = vunpack.c.l.b16 %v188
  %v1028 = vunpack.c.l.b16 %v189
  %v1029 = vunpack.c.l.b16 %v190
  %v1030 = vunpack.c.l.b16 %v191
  %v1031 = vunpack.c.l.b16 %v192
  %v1032 = vunpack.c.l.b16 %v193
  %v1033 = vunpack.c.l.b16 %v194
  %v1034 = vunpack.c.l.b16 %v195
  %v1035 = vunpack.c.l.b16 %v196
  %v1036 = vunpack.c.l.b16 %v197
  %v1037 = vunpack.c.l.b16 %v198
  %v1038 = vunpack.c.l.b16 %v199
  %v1039 = vunpack.c.l.b16 %v200
  %v1040 = vunpack.c.l.b16 %v201
  %v1041 = vunpack.c.l.b16 %v202
  %v1042 = vunpack.c.l.b16 %v203
  %v1043 = vunpack.c.l.b16 %v204
  %v1044 = vunpack.c.l.b16 %v205
  %v1045 = vunpack.c.l.b16 %v206
  %v1046 = vunpack.c.l.b16 %v207
  %v1047 = vunpack.c.l.b16 %v208
  %v1048 = vunpack.c.l.b16 %v209
  %v1049 = vunpack.c.l.b16 %v210
  %v1050 = vunpack.c.l.b16 %v211
  %v1051 = vunpack.c.l.b16 %v212
  %v1052 = vunpack.c.l.b16 %v213
  %v1053 = vunpack.c.l.b16 %v214
  %v1054 = vunpack.c.l.b16 %v215
  %v1055 = vunpack.c.l.b16 %v216
  %v1056 = vunpack.c.l.b16 %v217
  %v1057 = vunpack.c.l.b16 %v218
  %v1058 = vunpack.c.l.b16 %v219
  %v1059 = vunpack.c.l.b16 %v220
  %v1060 = vunpack.c.l.b16 %v221
  %v1061 = vunpack.c.l.b16 %v222
  %v1062 = vunpack.c.l.b16 %v223
  %v1063 = vunpack.c.l.b16 %v224
  %v1064 = vunpack.c.l.b16 %v225
  %v1065 = vunpack.c.l.b16 %v226
  %v1066 = vunpack.c.l.b16 %v227
  %v1067 = vunpack.c.l.b16 %v228
  %v1068 = vunpack.c.l.b16 %v229
  %v1069 = vunpack.c.l.b16 %v230
  %v1070 = vunpack.c.l.b16 %v231
  %v1071 = vunpack.c.l.b16 %v232
  %v1072 = vunpack.c.l.b16 %v233
  %v1073 = vunpack.c.l.b16 %v234
  %v1074 = vunpack.c.l.b16 %v235
  %v1075 = vunpack.c.l.b16 %v236
  %v1076 = vunpack.c.l.b16 %v237
  %v1077 = vunpack.c.l.b16 %v238
  %v1078 = vunpack.c.l.b16 %v239
  %v1079 = vunpack.c.l.b16 %v240
  %v1080 = vunpack.c.l.b16 %v241
  %v1081 = vunpack.c.l.b16 %v242
  %v1082 = vunpack.c.l.b16 %v243
  %v1083 = vunpack.c.l.b16 %v244
  %v1084 = vunpack.c.l.b16 %v245
  %v1085 = vunpack.c.l.b16 %v246
  %v1086 = vunpack.c.l.b16 %v247
  %v1087 = vunpack.c.l.b16 %v248
  %v1088 = vunpack.c.l.b16 %v249
  %v1089 = vunpack.c.l.b16 %v250
  %v1090 = vunpack.c.l.b16 %v251
  %v1091 = vunpack.c.l.b16 %v252
  %v1092 = vunpack.c.l.b16 %v253
  %v1093 = vunpack.c.l.b16 %v254
  %v1094 = vunpack.c.l.b16 %v255
  %v1095 = vunpack.c.l.b16 %v256
  %v1096 = vunpack.c.l.b16 %v257
  %v1097 = vunpack.c.l.b16 %v258
  %v1098 = vunpack.c.l.b16 %v259
  %v1099 = vunpack.c.l.b16 %v260
  %v1100 = vunpack.c.l.b16 %v261
  %v1101 = vunpack.c.l.b16 %v262
  %v1102 = vunpack.c.l.b16 %v263
  %v1103 = vunpack.c.l.b16 %v264
  %v1104 = vunpack.c.l.b16 %v265
  %v1105 = vunpack.c.l.b16 %v266
  %v1106 = vunpack.c.l.b16 %v267
  %v1107 = vunpack.c.l.b16 %v268
  %v1108 = vunpack.c.l.b16 %v269
  %v1109 = vunpack.c.l.b16 %v270
  %v1110 = vunpack.c.l.b16 %v271
  %v1111 = vunpack.c.l.b16 %v272
  %v1112 = vunpack.c.l.b16 %v273
  %v1113 = vunpack.c.l.b16 %v274
  %v1114 = vunpack.c.l.b16 %v275
  %v1115 = vunpack.c.l.b16 %v276
  %v1116 = vunpack.c.l.b16 %v277
  %v1117 = vunpack.c.l.b16 %v278
  %v1118 = vunpack.c.l.b16 %v279
  %v1119 = vunpack.c.l.b16 %v280
  %v1120 = vunpack.c.l.b16 %v281
  %v1121 = vunpack.c.l.b16 %v282
  %v1122 = vunpack.c.l.b16 %v283
  %v1123 = vunpack.c.l.b16 %v284
  %v1124 = vunpack.c.l.b16 %v285
  %v1125 = vunpack.c.l.b16 %v286
  %v1126 = vunpack.c.l.b16 %v287
  %v1127 = vunpack.c.l.b16 %v288
  %v1128 = vunpack.c.l.b16 %v289
  %v1129 = vunpack.c.l.b16 %v290
  %v1130 = vunpack.c.l.b16 %v291
  %v1131 = vunpack.c.l.b16 %v292
  %v1132 = vunpack.c.l.b16 %v293
  %v1133 = vunpack.c.l.b16 %v294
  %v1134 = vunpack.c.l.b16 %v295
  %v1135 = vunpack.c.l.b16 %v296
  %v1136 = vunpack.c.l.b16 %v297
  %v1137 = vunpack.c.l.b16 %v298
  %v1138 = vunpack.c.l.b16 %v299
  %v1139 = vunpack.c.l.b16 %v300
  %v1140 = vunpack.c.l.b16 %v301
  %v1141 = vunpack.c.l.b16 %v302
  %v1142 = vunpack.c.l.b16 %v303
  %v1143 = vunpack.c.l.b16 %v304
  %v1144 = vunpack.c.l.b16 %v305
  %v1145 = vpack.c.b16 %v946, %v945
  %v1146 = vpack.c.b16 %v948, %v947
  %v1147 = vpack.c.b16 %v950, %v949
  %v1148 = vpack.c.b16 %v952, %v951
  %v1149 = vpack.c.b16 %v954, %v953
  %v1150 = vpack.c.b16 %v956, %v955
  %v1151 = vpack.c.b16 %v958, %v957
  %v1152 = vpack.c.b16 %v960, %v959
  %v1153 = vpack.c.b16 %v962, %v961
  %v1154 = vpack.c.b16 %v964, %v963
  %v1155 = vpack.c.b16 %v966, %v965
  %v1156 = vpack.c.b16 %v968, %v967
  %v1157 = vpack.c.b16 %v970, %v969
  %v1158 = vpack.c.b16 %v972, %v971
  %v1159 = vpack.c.b16 %v974, %v973
  %v1160 = vpack.c.b16 %v976, %v975
  %v1161 = vpack.c.b16 %v978, %v977
  %v1162 = vpack.c.b16 %v980, %v979
  %v1163 = vpack.c.b16 %v982, %v981
  %v1164 = vpack.c.b16 %v984, %v983
  %v1165 = vpack.c.b16 %v986, %v985
  %v1166 = vpack.c.b16 %v988, %v987
  %v1167 = vpack.c.b16 %v990, %v989
  %v1168 = vpack.c.b16 %v992, %v991
  %v1169 = vpack.c.b16 %v994, %v993
  %v1170 = vpack.c.b16 %v996, %v995
  %v1171 = vpack.c.b16 %v998, %v997
  %v1172 = vpack.c.b16 %v1000, %v999
  %v1173 = vpack.c.b16 %v1002, %v1001
  %v1174 = vpack.c.b16 %v1004, %v1003
  %v1175 = vpack.c.b16 %v1006, %v1005
  %v1176 = vpack.c.b16 %v1008, %v1007
  %v1177 = vpack.c.b16 %v1010, %v1009
  %v1178 = vpack.c.b16 %v1012, %v1011
  %v1179 = vpack.c.b16 %v1014, %v1013
  %v1180 = vpack.c.b16 %v1016, %v1015
  %v1181 = vpack.c.b16 %v1018, %v1017
  %v1182 = vpack.c.b16 %v1020, %v1019
  %v1183 = vpack.c.b16 %v1022, %v1021
  %v1184 = vpack.c.b16 %v1024, %v1023
  %v1185 = vpack.c.b16 %v1026, %v1025
  %v1186 = vpack.c.b16 %v1028, %v1027
  %v1187 = vpack.c.b16 %v1030, %v1029
  %v1188 = vpack.c.b16 %v1032, %v1031
  %v1189 = vpack.c.b16 %v1034, %v1033
  %v1190 = vpack.c.b16 %v1036, %v1035
  %v1191 = vpack.c.b16 %v1038, %v1037
  %v1192 = vpack.c.b16 %v1040, %v1039
  %v1193 = vpack.c.b16 %v1042, %v1041
  %v1194 = vpack.c.b16 %v1044, %v1043
  %v1195 = vpack.c.b16 %v1046, %v1045
  %v1196 = vpack.c.b16 %v1048, %v1047
  %v1197 = vpack.c.b16 %v1050, %v1049
  %v1198 = vpack.c.b16 %v1052, %v1051
  %v1199 = vpack.c.b16 %v1054, %v1053
  %v1200 = vpack.c.b16 %v1056, %v1055
  %v1201 = vpack.c.b16 %v1058, %v1057
  %v1202 = vpack.c.b16 %v1060, %v1059
  %v1203 = vpack.c.b16 %v1062, %v1061
  %v1204 = vpack.c.b16 %v1064, %v1063
  %v1205 = vpack.c.b16 %v1066, %v1065
  %v1206 = vpack.c.b16 %v1068, %v1067
  %v1207 = vpack.c.b16 %v1070, %v1069
  %v1208 = vpack.c.b16 %v1072, %v1071
  %v1209 = vpack.c.b16 %v1074, %v1073
  %v1210 = vpack.c.b16 %v1076, %v1075
  %v1211 = vpack.c.b16 %v1078, %v1077
  %v1212 = vpack.c.b16 %v1080, %v1079
  %v1213 = vpack.c.b16 %v1082, %v1081
  %v1214 = vpack.c.b16 %v1084, %v1083
  %v1215 = vpack.c.b16 %v1086, %v1085
  %v1216 = vpack.c.b16 %v1088, %v1087
  %v1217 = vpack.c.b16 %v1090, %v1089
  %v1218 = vpack.c.b16 %v1092, %v1091
  %v1219 = vpack.c.b16 %v1094, %v1093
  %v1220 = vpack.c.b16 %v1096, %v1095
  %v1221 = vpack.c.b16 %v1098, %v1097
  %v1222 = vpack.c.b16 %v1100, %v1099
  %v1223 = vpack.c.b16 %v1102, %v1101
  %v1224 = vpack.c.b16 %v1104, %v1103
  %v1225 = vpack.c.b16 %v1106, %v1105
  %v1226 = vpack.c.b16 %v1108, %v1107
  %v1227 = vpack.c.b16 %v1110, %v1109
  %v1228 = vpack.c.b16 %v1112, %v1111
  %v1229 = vpack.c.b16 %v1114, %v1113
  %v1230 = vpack.c.b16 %v1116, %v1115
  %v1231 = vpack.c.b16 %v1118, %v1117
  %v1232 = vpack.c.b16 %v1120, %v1119
  %v1233 = vpack.c.b16 %v1122, %v1121
  %v1234 = vpack.c.b16 %v1124, %v1123
  %v1235 = vpack.c.b16 %v1126, %v1125
  %v1236 = vpack.c.b16 %v1128, %v1127
  %v1237 = vpack.c.b16 %v1130, %v1129
  %v1238 = vpack.c.b16 %v1132, %v1131
  %v1239 = vpack.c.b16 %v1134, %v1133
  %v1240 = vpack.c.b16 %v1136, %v1135
  %v1241 = vpack.c.b16 %v1138, %v1137
  %v1242 = vpack.c.b16 %v1140, %v1139
  %v1243 = vpack.c.b16 %v1142, %v1141
  %v1244 = vpack.c.b16 %v1144, %v1143
  %vm1345 = vcmask 523264
  %v1347 = vsel %vm1345, %v582, 0
  %v1350 = vsel %vm1345, %v595, 0
  %v1353 = vsel %vm1345, %v608, 0
  %v1356 = vsel %vm1345, %v621, 0
  %v1359 = vsel %vm1345, %v634, 0
  %v1362 = vsel %vm1345, %v647, 0
  %v1365 = vsel %vm1345, %v660, 0
  %1367 = vmatpush.bf16.msra.mxu0 %v1152
  %1368 = vmatpush.bf16.msra.mxu0 %v1151
  %1369 = vmatpush.bf16.msra.mxu0 %v1150
  %1370 = vmatpush.bf16.msra.mxu0 %v1149
  %1371 = vmatpush.bf16.msra.mxu0 %v1148
  %1372 = vmatpush.bf16.msra.mxu0 %v1147
  %1373 = vmatpush.bf16.msra.mxu0 %v1146
  %1374 = vmatpush.bf16.msra.mxu0 %v1145
  %1375 = vmatmul.bf16.gmra.mxu0 %v570
  %v1376 = vpop.f32.mrf.mxu0
  %v1377 = vadd.f32 %v308, %v1376
  %v1378 = vpop.f32.mrf.mxu0
  %v1379 = vadd.f32 %v308, %v1378
  %1380 = vmatmul.bf16.gmra.mxu0 %v583
  %v1381 = vpop.f32.mrf.mxu0
  %v1382 = vadd.f32 %v308, %v1381
  %v1383 = vpop.f32.mrf.mxu0
  %v1384 = vadd.f32 %v308, %v1383
  %1385 = vmatmul.bf16.gmra.mxu0 %v596
  %v1386 = vpop.f32.mrf.mxu0
  %v1387 = vadd.f32 %v308, %v1386
  %v1388 = vpop.f32.mrf.mxu0
  %v1389 = vadd.f32 %v308, %v1388
  %1390 = vmatmul.bf16.gmra.mxu0 %v609
  %v1391 = vpop.f32.mrf.mxu0
  %v1392 = vadd.f32 %v308, %v1391
  %v1393 = vpop.f32.mrf.mxu0
  %v1394 = vadd.f32 %v308, %v1393
  %1395 = vmatmul.bf16.gmra.mxu0 %v622
  %v1396 = vpop.f32.mrf.mxu0
  %v1397 = vadd.f32 %v308, %v1396
  %v1398 = vpop.f32.mrf.mxu0
  %v1399 = vadd.f32 %v308, %v1398
  %1400 = vmatmul.bf16.gmra.mxu0 %v635
  %v1401 = vpop.f32.mrf.mxu0
  %v1402 = vadd.f32 %v308, %v1401
  %v1403 = vpop.f32.mrf.mxu0
  %v1404 = vadd.f32 %v308, %v1403
  %1405 = vmatmul.bf16.gmra.mxu0 %v648
  %v1406 = vpop.f32.mrf.mxu0
  %v1407 = vadd.f32 %v308, %v1406
  %v1408 = vpop.f32.mrf.mxu0
  %1409 = vdwg.mxu0
  %1410 = vmatpush.bf16.msra.mxu0 %v1160
  %1411 = vmatpush.bf16.msra.mxu0 %v1159
  %1412 = vmatpush.bf16.msra.mxu0 %v1158
  %1413 = vmatpush.bf16.msra.mxu0 %v1157
  %1414 = vmatpush.bf16.msra.mxu0 %v1156
  %1415 = vmatpush.bf16.msra.mxu0 %v1155
  %1416 = vmatpush.bf16.msra.mxu0 %v1154
  %1417 = vmatpush.bf16.msra.mxu0 %v1153
  %1418 = vmatmul.bf16.gmra.mxu0 %v571
  %v1419 = vpop.f32.mrf.mxu0
  %v1420 = vadd.f32 %v1377, %v1419
  %v1421 = vpop.f32.mrf.mxu0
  %v1422 = vadd.f32 %v1379, %v1421
  %1423 = vmatmul.bf16.gmra.mxu0 %v584
  %v1424 = vpop.f32.mrf.mxu0
  %v1425 = vadd.f32 %v1382, %v1424
  %v1426 = vpop.f32.mrf.mxu0
  %v1427 = vadd.f32 %v1384, %v1426
  %1428 = vmatmul.bf16.gmra.mxu0 %v597
  %v1429 = vpop.f32.mrf.mxu0
  %v1430 = vadd.f32 %v1387, %v1429
  %v1431 = vpop.f32.mrf.mxu0
  %v1432 = vadd.f32 %v1389, %v1431
  %1433 = vmatmul.bf16.gmra.mxu0 %v610
  %v1434 = vpop.f32.mrf.mxu0
  %v1435 = vadd.f32 %v1392, %v1434
  %v1436 = vpop.f32.mrf.mxu0
  %v1437 = vadd.f32 %v1394, %v1436
  %1438 = vmatmul.bf16.gmra.mxu0 %v623
  %v1439 = vpop.f32.mrf.mxu0
  %v1440 = vadd.f32 %v1397, %v1439
  %v1441 = vpop.f32.mrf.mxu0
  %v1442 = vadd.f32 %v1399, %v1441
  %1443 = vmatmul.bf16.gmra.mxu0 %v636
  %v1444 = vpop.f32.mrf.mxu0
  %v1445 = vadd.f32 %v1402, %v1444
  %v1446 = vpop.f32.mrf.mxu0
  %v1447 = vadd.f32 %v1404, %v1446
  %1448 = vmatmul.bf16.gmra.mxu0 %v649
  %v1449 = vpop.f32.mrf.mxu0
  %v1450 = vadd.f32 %v1407, %v1449
  %v1451 = vpop.f32.mrf.mxu0
  %1452 = vdwg.mxu0
  %1453 = vmatpush.bf16.msra.mxu0 %v1168
  %1454 = vmatpush.bf16.msra.mxu0 %v1167
  %1455 = vmatpush.bf16.msra.mxu0 %v1166
  %1456 = vmatpush.bf16.msra.mxu0 %v1165
  %1457 = vmatpush.bf16.msra.mxu0 %v1164
  %1458 = vmatpush.bf16.msra.mxu0 %v1163
  %1459 = vmatpush.bf16.msra.mxu0 %v1162
  %1460 = vmatpush.bf16.msra.mxu0 %v1161
  %1461 = vmatmul.bf16.gmra.mxu0 %v572
  %v1462 = vpop.f32.mrf.mxu0
  %v1463 = vadd.f32 %v1420, %v1462
  %v1464 = vpop.f32.mrf.mxu0
  %v1465 = vadd.f32 %v1422, %v1464
  %1466 = vmatmul.bf16.gmra.mxu0 %v585
  %v1467 = vpop.f32.mrf.mxu0
  %v1468 = vadd.f32 %v1425, %v1467
  %v1469 = vpop.f32.mrf.mxu0
  %v1470 = vadd.f32 %v1427, %v1469
  %1471 = vmatmul.bf16.gmra.mxu0 %v598
  %v1472 = vpop.f32.mrf.mxu0
  %v1473 = vadd.f32 %v1430, %v1472
  %v1474 = vpop.f32.mrf.mxu0
  %v1475 = vadd.f32 %v1432, %v1474
  %1476 = vmatmul.bf16.gmra.mxu0 %v611
  %v1477 = vpop.f32.mrf.mxu0
  %v1478 = vadd.f32 %v1435, %v1477
  %v1479 = vpop.f32.mrf.mxu0
  %v1480 = vadd.f32 %v1437, %v1479
  %1481 = vmatmul.bf16.gmra.mxu0 %v624
  %v1482 = vpop.f32.mrf.mxu0
  %v1483 = vadd.f32 %v1440, %v1482
  %v1484 = vpop.f32.mrf.mxu0
  %v1485 = vadd.f32 %v1442, %v1484
  %1486 = vmatmul.bf16.gmra.mxu0 %v637
  %v1487 = vpop.f32.mrf.mxu0
  %v1488 = vadd.f32 %v1445, %v1487
  %v1489 = vpop.f32.mrf.mxu0
  %v1490 = vadd.f32 %v1447, %v1489
  %1491 = vmatmul.bf16.gmra.mxu0 %v650
  %v1492 = vpop.f32.mrf.mxu0
  %v1493 = vadd.f32 %v1450, %v1492
  %v1494 = vpop.f32.mrf.mxu0
  %1495 = vdwg.mxu0
  %1496 = vmatpush.bf16.msra.mxu0 %v1176
  %1497 = vmatpush.bf16.msra.mxu0 %v1175
  %1498 = vmatpush.bf16.msra.mxu0 %v1174
  %1499 = vmatpush.bf16.msra.mxu0 %v1173
  %1500 = vmatpush.bf16.msra.mxu0 %v1172
  %1501 = vmatpush.bf16.msra.mxu0 %v1171
  %1502 = vmatpush.bf16.msra.mxu0 %v1170
  %1503 = vmatpush.bf16.msra.mxu0 %v1169
  %1504 = vmatmul.bf16.gmra.mxu0 %v573
  %v1505 = vpop.f32.mrf.mxu0
  %v1506 = vadd.f32 %v1463, %v1505
  %v1507 = vpop.f32.mrf.mxu0
  %v1508 = vadd.f32 %v1465, %v1507
  %1509 = vmatmul.bf16.gmra.mxu0 %v586
  %v1510 = vpop.f32.mrf.mxu0
  %v1511 = vadd.f32 %v1468, %v1510
  %v1512 = vpop.f32.mrf.mxu0
  %v1513 = vadd.f32 %v1470, %v1512
  %1514 = vmatmul.bf16.gmra.mxu0 %v599
  %v1515 = vpop.f32.mrf.mxu0
  %v1516 = vadd.f32 %v1473, %v1515
  %v1517 = vpop.f32.mrf.mxu0
  %v1518 = vadd.f32 %v1475, %v1517
  %1519 = vmatmul.bf16.gmra.mxu0 %v612
  %v1520 = vpop.f32.mrf.mxu0
  %v1521 = vadd.f32 %v1478, %v1520
  %v1522 = vpop.f32.mrf.mxu0
  %v1523 = vadd.f32 %v1480, %v1522
  %1524 = vmatmul.bf16.gmra.mxu0 %v625
  %v1525 = vpop.f32.mrf.mxu0
  %v1526 = vadd.f32 %v1483, %v1525
  %v1527 = vpop.f32.mrf.mxu0
  %v1528 = vadd.f32 %v1485, %v1527
  %1529 = vmatmul.bf16.gmra.mxu0 %v638
  %v1530 = vpop.f32.mrf.mxu0
  %v1531 = vadd.f32 %v1488, %v1530
  %v1532 = vpop.f32.mrf.mxu0
  %v1533 = vadd.f32 %v1490, %v1532
  %1534 = vmatmul.bf16.gmra.mxu0 %v651
  %v1535 = vpop.f32.mrf.mxu0
  %v1536 = vadd.f32 %v1493, %v1535
  %v1537 = vpop.f32.mrf.mxu0
  %1538 = vdwg.mxu0
  %1539 = vmatpush.bf16.msra.mxu0 %v1184
  %1540 = vmatpush.bf16.msra.mxu0 %v1183
  %1541 = vmatpush.bf16.msra.mxu0 %v1182
  %1542 = vmatpush.bf16.msra.mxu0 %v1181
  %1543 = vmatpush.bf16.msra.mxu0 %v1180
  %1544 = vmatpush.bf16.msra.mxu0 %v1179
  %1545 = vmatpush.bf16.msra.mxu0 %v1178
  %1546 = vmatpush.bf16.msra.mxu0 %v1177
  %1547 = vmatmul.bf16.gmra.mxu0 %v574
  %v1548 = vpop.f32.mrf.mxu0
  %v1549 = vadd.f32 %v1506, %v1548
  %v1550 = vpop.f32.mrf.mxu0
  %v1551 = vadd.f32 %v1508, %v1550
  %1552 = vmatmul.bf16.gmra.mxu0 %v587
  %v1553 = vpop.f32.mrf.mxu0
  %v1554 = vadd.f32 %v1511, %v1553
  %v1555 = vpop.f32.mrf.mxu0
  %v1556 = vadd.f32 %v1513, %v1555
  %1557 = vmatmul.bf16.gmra.mxu0 %v600
  %v1558 = vpop.f32.mrf.mxu0
  %v1559 = vadd.f32 %v1516, %v1558
  %v1560 = vpop.f32.mrf.mxu0
  %v1561 = vadd.f32 %v1518, %v1560
  %1562 = vmatmul.bf16.gmra.mxu0 %v613
  %v1563 = vpop.f32.mrf.mxu0
  %v1564 = vadd.f32 %v1521, %v1563
  %v1565 = vpop.f32.mrf.mxu0
  %v1566 = vadd.f32 %v1523, %v1565
  %1567 = vmatmul.bf16.gmra.mxu0 %v626
  %v1568 = vpop.f32.mrf.mxu0
  %v1569 = vadd.f32 %v1526, %v1568
  %v1570 = vpop.f32.mrf.mxu0
  %v1571 = vadd.f32 %v1528, %v1570
  %1572 = vmatmul.bf16.gmra.mxu0 %v639
  %v1573 = vpop.f32.mrf.mxu0
  %v1574 = vadd.f32 %v1531, %v1573
  %v1575 = vpop.f32.mrf.mxu0
  %v1576 = vadd.f32 %v1533, %v1575
  %1577 = vmatmul.bf16.gmra.mxu0 %v652
  %v1578 = vpop.f32.mrf.mxu0
  %v1579 = vadd.f32 %v1536, %v1578
  %v1580 = vpop.f32.mrf.mxu0
  %1581 = vdwg.mxu0
  %1582 = vmatpush.bf16.msra.mxu0 %v1192
  %1583 = vmatpush.bf16.msra.mxu0 %v1191
  %1584 = vmatpush.bf16.msra.mxu0 %v1190
  %1585 = vmatpush.bf16.msra.mxu0 %v1189
  %1586 = vmatpush.bf16.msra.mxu0 %v1188
  %1587 = vmatpush.bf16.msra.mxu0 %v1187
  %1588 = vmatpush.bf16.msra.mxu0 %v1186
  %1589 = vmatpush.bf16.msra.mxu0 %v1185
  %1590 = vmatmul.bf16.gmra.mxu0 %v575
  %v1591 = vpop.f32.mrf.mxu0
  %v1592 = vadd.f32 %v1549, %v1591
  %v1593 = vpop.f32.mrf.mxu0
  %v1594 = vadd.f32 %v1551, %v1593
  %1595 = vmatmul.bf16.gmra.mxu0 %v588
  %v1596 = vpop.f32.mrf.mxu0
  %v1597 = vadd.f32 %v1554, %v1596
  %v1598 = vpop.f32.mrf.mxu0
  %v1599 = vadd.f32 %v1556, %v1598
  %1600 = vmatmul.bf16.gmra.mxu0 %v601
  %v1601 = vpop.f32.mrf.mxu0
  %v1602 = vadd.f32 %v1559, %v1601
  %v1603 = vpop.f32.mrf.mxu0
  %v1604 = vadd.f32 %v1561, %v1603
  %1605 = vmatmul.bf16.gmra.mxu0 %v614
  %v1606 = vpop.f32.mrf.mxu0
  %v1607 = vadd.f32 %v1564, %v1606
  %v1608 = vpop.f32.mrf.mxu0
  %v1609 = vadd.f32 %v1566, %v1608
  %1610 = vmatmul.bf16.gmra.mxu0 %v627
  %v1611 = vpop.f32.mrf.mxu0
  %v1612 = vadd.f32 %v1569, %v1611
  %v1613 = vpop.f32.mrf.mxu0
  %v1614 = vadd.f32 %v1571, %v1613
  %1615 = vmatmul.bf16.gmra.mxu0 %v640
  %v1616 = vpop.f32.mrf.mxu0
  %v1617 = vadd.f32 %v1574, %v1616
  %v1618 = vpop.f32.mrf.mxu0
  %v1619 = vadd.f32 %v1576, %v1618
  %1620 = vmatmul.bf16.gmra.mxu0 %v653
  %v1621 = vpop.f32.mrf.mxu0
  %v1622 = vadd.f32 %v1579, %v1621
  %v1623 = vpop.f32.mrf.mxu0
  %1624 = vdwg.mxu0
  %1625 = vmatpush.bf16.msra.mxu0 %v1200
  %1626 = vmatpush.bf16.msra.mxu0 %v1199
  %1627 = vmatpush.bf16.msra.mxu0 %v1198
  %1628 = vmatpush.bf16.msra.mxu0 %v1197
  %1629 = vmatpush.bf16.msra.mxu0 %v1196
  %1630 = vmatpush.bf16.msra.mxu0 %v1195
  %1631 = vmatpush.bf16.msra.mxu0 %v1194
  %1632 = vmatpush.bf16.msra.mxu0 %v1193
  %1633 = vmatmul.bf16.gmra.mxu0 %v576
  %v1634 = vpop.f32.mrf.mxu0
  %v1635 = vadd.f32 %v1592, %v1634
  %v1636 = vpop.f32.mrf.mxu0
  %v1637 = vadd.f32 %v1594, %v1636
  %1638 = vmatmul.bf16.gmra.mxu0 %v589
  %v1639 = vpop.f32.mrf.mxu0
  %v1640 = vadd.f32 %v1597, %v1639
  %v1641 = vpop.f32.mrf.mxu0
  %v1642 = vadd.f32 %v1599, %v1641
  %1643 = vmatmul.bf16.gmra.mxu0 %v602
  %v1644 = vpop.f32.mrf.mxu0
  %v1645 = vadd.f32 %v1602, %v1644
  %v1646 = vpop.f32.mrf.mxu0
  %v1647 = vadd.f32 %v1604, %v1646
  %1648 = vmatmul.bf16.gmra.mxu0 %v615
  %v1649 = vpop.f32.mrf.mxu0
  %v1650 = vadd.f32 %v1607, %v1649
  %v1651 = vpop.f32.mrf.mxu0
  %v1652 = vadd.f32 %v1609, %v1651
  %1653 = vmatmul.bf16.gmra.mxu0 %v628
  %v1654 = vpop.f32.mrf.mxu0
  %v1655 = vadd.f32 %v1612, %v1654
  %v1656 = vpop.f32.mrf.mxu0
  %v1657 = vadd.f32 %v1614, %v1656
  %1658 = vmatmul.bf16.gmra.mxu0 %v641
  %v1659 = vpop.f32.mrf.mxu0
  %v1660 = vadd.f32 %v1617, %v1659
  %v1661 = vpop.f32.mrf.mxu0
  %v1662 = vadd.f32 %v1619, %v1661
  %1663 = vmatmul.bf16.gmra.mxu0 %v654
  %v1664 = vpop.f32.mrf.mxu0
  %v1665 = vadd.f32 %v1622, %v1664
  %v1666 = vpop.f32.mrf.mxu0
  %1667 = vdwg.mxu0
  %1668 = vmatpush.bf16.msra.mxu0 %v1208
  %1669 = vmatpush.bf16.msra.mxu0 %v1207
  %1670 = vmatpush.bf16.msra.mxu0 %v1206
  %1671 = vmatpush.bf16.msra.mxu0 %v1205
  %1672 = vmatpush.bf16.msra.mxu0 %v1204
  %1673 = vmatpush.bf16.msra.mxu0 %v1203
  %1674 = vmatpush.bf16.msra.mxu0 %v1202
  %1675 = vmatpush.bf16.msra.mxu0 %v1201
  %1676 = vmatmul.bf16.gmra.mxu0 %v577
  %v1677 = vpop.f32.mrf.mxu0
  %v1678 = vadd.f32 %v1635, %v1677
  %v1679 = vpop.f32.mrf.mxu0
  %v1680 = vadd.f32 %v1637, %v1679
  %1681 = vmatmul.bf16.gmra.mxu0 %v590
  %v1682 = vpop.f32.mrf.mxu0
  %v1683 = vadd.f32 %v1640, %v1682
  %v1684 = vpop.f32.mrf.mxu0
  %v1685 = vadd.f32 %v1642, %v1684
  %1686 = vmatmul.bf16.gmra.mxu0 %v603
  %v1687 = vpop.f32.mrf.mxu0
  %v1688 = vadd.f32 %v1645, %v1687
  %v1689 = vpop.f32.mrf.mxu0
  %v1690 = vadd.f32 %v1647, %v1689
  %1691 = vmatmul.bf16.gmra.mxu0 %v616
  %v1692 = vpop.f32.mrf.mxu0
  %v1693 = vadd.f32 %v1650, %v1692
  %v1694 = vpop.f32.mrf.mxu0
  %v1695 = vadd.f32 %v1652, %v1694
  %1696 = vmatmul.bf16.gmra.mxu0 %v629
  %v1697 = vpop.f32.mrf.mxu0
  %v1698 = vadd.f32 %v1655, %v1697
  %v1699 = vpop.f32.mrf.mxu0
  %v1700 = vadd.f32 %v1657, %v1699
  %1701 = vmatmul.bf16.gmra.mxu0 %v642
  %v1702 = vpop.f32.mrf.mxu0
  %v1703 = vadd.f32 %v1660, %v1702
  %v1704 = vpop.f32.mrf.mxu0
  %v1705 = vadd.f32 %v1662, %v1704
  %1706 = vmatmul.bf16.gmra.mxu0 %v655
  %v1707 = vpop.f32.mrf.mxu0
  %v1708 = vadd.f32 %v1665, %v1707
  %v1709 = vpop.f32.mrf.mxu0
  %1710 = vdwg.mxu0
  %1711 = vmatpush.bf16.msra.mxu0 %v1216
  %1712 = vmatpush.bf16.msra.mxu0 %v1215
  %1713 = vmatpush.bf16.msra.mxu0 %v1214
  %1714 = vmatpush.bf16.msra.mxu0 %v1213
  %1715 = vmatpush.bf16.msra.mxu0 %v1212
  %1716 = vmatpush.bf16.msra.mxu0 %v1211
  %1717 = vmatpush.bf16.msra.mxu0 %v1210
  %1718 = vmatpush.bf16.msra.mxu0 %v1209
  %1719 = vmatmul.bf16.gmra.mxu0 %v578
  %v1720 = vpop.f32.mrf.mxu0
  %v1721 = vadd.f32 %v1678, %v1720
  %v1722 = vpop.f32.mrf.mxu0
  %v1723 = vadd.f32 %v1680, %v1722
  %1724 = vmatmul.bf16.gmra.mxu0 %v591
  %v1725 = vpop.f32.mrf.mxu0
  %v1726 = vadd.f32 %v1683, %v1725
  %v1727 = vpop.f32.mrf.mxu0
  %v1728 = vadd.f32 %v1685, %v1727
  %1729 = vmatmul.bf16.gmra.mxu0 %v604
  %v1730 = vpop.f32.mrf.mxu0
  %v1731 = vadd.f32 %v1688, %v1730
  %v1732 = vpop.f32.mrf.mxu0
  %v1733 = vadd.f32 %v1690, %v1732
  %1734 = vmatmul.bf16.gmra.mxu0 %v617
  %v1735 = vpop.f32.mrf.mxu0
  %v1736 = vadd.f32 %v1693, %v1735
  %v1737 = vpop.f32.mrf.mxu0
  %v1738 = vadd.f32 %v1695, %v1737
  %1739 = vmatmul.bf16.gmra.mxu0 %v630
  %v1740 = vpop.f32.mrf.mxu0
  %v1741 = vadd.f32 %v1698, %v1740
  %v1742 = vpop.f32.mrf.mxu0
  %v1743 = vadd.f32 %v1700, %v1742
  %1744 = vmatmul.bf16.gmra.mxu0 %v643
  %v1745 = vpop.f32.mrf.mxu0
  %v1746 = vadd.f32 %v1703, %v1745
  %v1747 = vpop.f32.mrf.mxu0
  %v1748 = vadd.f32 %v1705, %v1747
  %1749 = vmatmul.bf16.gmra.mxu0 %v656
  %v1750 = vpop.f32.mrf.mxu0
  %v1751 = vadd.f32 %v1708, %v1750
  %v1752 = vpop.f32.mrf.mxu0
  %1753 = vdwg.mxu0
  %1754 = vmatpush.bf16.msra.mxu0 %v1224
  %1755 = vmatpush.bf16.msra.mxu0 %v1223
  %1756 = vmatpush.bf16.msra.mxu0 %v1222
  %1757 = vmatpush.bf16.msra.mxu0 %v1221
  %1758 = vmatpush.bf16.msra.mxu0 %v1220
  %1759 = vmatpush.bf16.msra.mxu0 %v1219
  %1760 = vmatpush.bf16.msra.mxu0 %v1218
  %1761 = vmatpush.bf16.msra.mxu0 %v1217
  %1762 = vmatmul.bf16.gmra.mxu0 %v579
  %v1763 = vpop.f32.mrf.mxu0
  %v1764 = vadd.f32 %v1721, %v1763
  %v1765 = vpop.f32.mrf.mxu0
  %v1766 = vadd.f32 %v1723, %v1765
  %1767 = vmatmul.bf16.gmra.mxu0 %v592
  %v1768 = vpop.f32.mrf.mxu0
  %v1769 = vadd.f32 %v1726, %v1768
  %v1770 = vpop.f32.mrf.mxu0
  %v1771 = vadd.f32 %v1728, %v1770
  %1772 = vmatmul.bf16.gmra.mxu0 %v605
  %v1773 = vpop.f32.mrf.mxu0
  %v1774 = vadd.f32 %v1731, %v1773
  %v1775 = vpop.f32.mrf.mxu0
  %v1776 = vadd.f32 %v1733, %v1775
  %1777 = vmatmul.bf16.gmra.mxu0 %v618
  %v1778 = vpop.f32.mrf.mxu0
  %v1779 = vadd.f32 %v1736, %v1778
  %v1780 = vpop.f32.mrf.mxu0
  %v1781 = vadd.f32 %v1738, %v1780
  %1782 = vmatmul.bf16.gmra.mxu0 %v631
  %v1783 = vpop.f32.mrf.mxu0
  %v1784 = vadd.f32 %v1741, %v1783
  %v1785 = vpop.f32.mrf.mxu0
  %v1786 = vadd.f32 %v1743, %v1785
  %1787 = vmatmul.bf16.gmra.mxu0 %v644
  %v1788 = vpop.f32.mrf.mxu0
  %v1789 = vadd.f32 %v1746, %v1788
  %v1790 = vpop.f32.mrf.mxu0
  %v1791 = vadd.f32 %v1748, %v1790
  %1792 = vmatmul.bf16.gmra.mxu0 %v657
  %v1793 = vpop.f32.mrf.mxu0
  %v1794 = vadd.f32 %v1751, %v1793
  %v1795 = vpop.f32.mrf.mxu0
  %1796 = vdwg.mxu0
  %1797 = vmatpush.bf16.msra.mxu0 %v1232
  %1798 = vmatpush.bf16.msra.mxu0 %v1231
  %1799 = vmatpush.bf16.msra.mxu0 %v1230
  %1800 = vmatpush.bf16.msra.mxu0 %v1229
  %1801 = vmatpush.bf16.msra.mxu0 %v1228
  %1802 = vmatpush.bf16.msra.mxu0 %v1227
  %1803 = vmatpush.bf16.msra.mxu0 %v1226
  %1804 = vmatpush.bf16.msra.mxu0 %v1225
  %1805 = vmatmul.bf16.gmra.mxu0 %v580
  %v1806 = vpop.f32.mrf.mxu0
  %v1807 = vadd.f32 %v1764, %v1806
  %v1808 = vpop.f32.mrf.mxu0
  %v1809 = vadd.f32 %v1766, %v1808
  %1810 = vmatmul.bf16.gmra.mxu0 %v593
  %v1811 = vpop.f32.mrf.mxu0
  %v1812 = vadd.f32 %v1769, %v1811
  %v1813 = vpop.f32.mrf.mxu0
  %v1814 = vadd.f32 %v1771, %v1813
  %1815 = vmatmul.bf16.gmra.mxu0 %v606
  %v1816 = vpop.f32.mrf.mxu0
  %v1817 = vadd.f32 %v1774, %v1816
  %v1818 = vpop.f32.mrf.mxu0
  %v1819 = vadd.f32 %v1776, %v1818
  %1820 = vmatmul.bf16.gmra.mxu0 %v619
  %v1821 = vpop.f32.mrf.mxu0
  %v1822 = vadd.f32 %v1779, %v1821
  %v1823 = vpop.f32.mrf.mxu0
  %v1824 = vadd.f32 %v1781, %v1823
  %1825 = vmatmul.bf16.gmra.mxu0 %v632
  %v1826 = vpop.f32.mrf.mxu0
  %v1827 = vadd.f32 %v1784, %v1826
  %v1828 = vpop.f32.mrf.mxu0
  %v1829 = vadd.f32 %v1786, %v1828
  %1830 = vmatmul.bf16.gmra.mxu0 %v645
  %v1831 = vpop.f32.mrf.mxu0
  %v1832 = vadd.f32 %v1789, %v1831
  %v1833 = vpop.f32.mrf.mxu0
  %v1834 = vadd.f32 %v1791, %v1833
  %1835 = vmatmul.bf16.gmra.mxu0 %v658
  %v1836 = vpop.f32.mrf.mxu0
  %v1837 = vadd.f32 %v1794, %v1836
  %v1838 = vpop.f32.mrf.mxu0
  %1839 = vdwg.mxu0
  %1840 = vmatpush.bf16.msra.mxu0 %v1240
  %1841 = vmatpush.bf16.msra.mxu0 %v1239
  %1842 = vmatpush.bf16.msra.mxu0 %v1238
  %1843 = vmatpush.bf16.msra.mxu0 %v1237
  %1844 = vmatpush.bf16.msra.mxu0 %v1236
  %1845 = vmatpush.bf16.msra.mxu0 %v1235
  %1846 = vmatpush.bf16.msra.mxu0 %v1234
  %1847 = vmatpush.bf16.msra.mxu0 %v1233
  %1848 = vmatmul.bf16.gmra.mxu0 %v581
  %v1849 = vpop.f32.mrf.mxu0
  %v1850 = vadd.f32 %v1807, %v1849
  %v1851 = vpop.f32.mrf.mxu0
  %v1852 = vadd.f32 %v1809, %v1851
  %1853 = vmatmul.bf16.gmra.mxu0 %v594
  %v1854 = vpop.f32.mrf.mxu0
  %v1855 = vadd.f32 %v1812, %v1854
  %v1856 = vpop.f32.mrf.mxu0
  %v1857 = vadd.f32 %v1814, %v1856
  %1858 = vmatmul.bf16.gmra.mxu0 %v607
  %v1859 = vpop.f32.mrf.mxu0
  %v1860 = vadd.f32 %v1817, %v1859
  %v1861 = vpop.f32.mrf.mxu0
  %v1862 = vadd.f32 %v1819, %v1861
  %1863 = vmatmul.bf16.gmra.mxu0 %v620
  %v1864 = vpop.f32.mrf.mxu0
  %v1865 = vadd.f32 %v1822, %v1864
  %v1866 = vpop.f32.mrf.mxu0
  %v1867 = vadd.f32 %v1824, %v1866
  %1868 = vmatmul.bf16.gmra.mxu0 %v633
  %v1869 = vpop.f32.mrf.mxu0
  %v1870 = vadd.f32 %v1827, %v1869
  %v1871 = vpop.f32.mrf.mxu0
  %v1872 = vadd.f32 %v1829, %v1871
  %1873 = vmatmul.bf16.gmra.mxu0 %v646
  %v1874 = vpop.f32.mrf.mxu0
  %v1875 = vadd.f32 %v1832, %v1874
  %v1876 = vpop.f32.mrf.mxu0
  %v1877 = vadd.f32 %v1834, %v1876
  %1878 = vmatmul.bf16.gmra.mxu0 %v659
  %v1879 = vpop.f32.mrf.mxu0
  %v1880 = vadd.f32 %v1837, %v1879
  %v1881 = vpop.f32.mrf.mxu0
  %1882 = vdwg.mxu0
  %1883 = vmatpush.bf16.msra.mxu0 0
  %1884 = vmatpush.bf16.msra.mxu0 0
  %1885 = vmatpush.bf16.msra.mxu0 0
  %1886 = vmatpush.bf16.msra.mxu0 0
  %1887 = vmatpush.bf16.msra.mxu0 %v1244
  %1888 = vmatpush.bf16.msra.mxu0 %v1243
  %1889 = vmatpush.bf16.msra.mxu0 %v1242
  %1890 = vmatpush.bf16.msra.mxu0 %v1241
  %1891 = vmatmul.bf16.gmra.mxu0 %v1347
  %v1892 = vpop.f32.mrf.mxu0
  %v1893 = vadd.f32 %v1850, %v1892
  %v1894 = vpop.f32.mrf.mxu0
  %v1895 = vadd.f32 %v1852, %v1894
  %1896 = vmatmul.bf16.gmra.mxu0 %v1350
  %v1897 = vpop.f32.mrf.mxu0
  %v1898 = vadd.f32 %v1855, %v1897
  %v1899 = vpop.f32.mrf.mxu0
  %v1900 = vadd.f32 %v1857, %v1899
  %1901 = vmatmul.bf16.gmra.mxu0 %v1353
  %v1902 = vpop.f32.mrf.mxu0
  %v1903 = vadd.f32 %v1860, %v1902
  %v1904 = vpop.f32.mrf.mxu0
  %v1905 = vadd.f32 %v1862, %v1904
  %1906 = vmatmul.bf16.gmra.mxu0 %v1356
  %v1907 = vpop.f32.mrf.mxu0
  %v1908 = vadd.f32 %v1865, %v1907
  %v1909 = vpop.f32.mrf.mxu0
  %v1910 = vadd.f32 %v1867, %v1909
  %1911 = vmatmul.bf16.gmra.mxu0 %v1359
  %v1912 = vpop.f32.mrf.mxu0
  %v1913 = vadd.f32 %v1870, %v1912
  %v1914 = vpop.f32.mrf.mxu0
  %v1915 = vadd.f32 %v1872, %v1914
  %1916 = vmatmul.bf16.gmra.mxu0 %v1362
  %v1917 = vpop.f32.mrf.mxu0
  %v1918 = vadd.f32 %v1875, %v1917
  %v1919 = vpop.f32.mrf.mxu0
  %v1920 = vadd.f32 %v1877, %v1919
  %1921 = vmatmul.bf16.gmra.mxu0 %v1365
  %v1922 = vpop.f32.mrf.mxu0
  %v1923 = vadd.f32 %v1880, %v1922
  %v1924 = vpop.f32.mrf.mxu0
  %1925 = vdwg.mxu0
  %v1926 = vmax.f32 %v1893, 0.0
  %v1927 = vmax.f32 %v1895, 0.0
  %v1928 = vmax.f32 %v1898, 0.0
  %v1929 = vmax.f32 %v1900, 0.0
  %v1930 = vmax.f32 %v1903, 0.0
  %v1931 = vmax.f32 %v1905, 0.0
  %v1932 = vmax.f32 %v1908, 0.0
  %v1933 = vmax.f32 %v1910, 0.0
  %v1934 = vmax.f32 %v1913, 0.0
  %v1935 = vmax.f32 %v1915, 0.0
  %v1936 = vmax.f32 %v1918, 0.0
  %v1937 = vmax.f32 %v1920, 0.0
  %v1938 = vmax.f32 %v1923, 0.0
  %v1939 = vpack.c.bf16 %v1926, %v1926
  %v1940 = vpack.c.bf16 %v1927, %v1927
  %v1941 = vpack.c.bf16 %v1928, %v1928
  %v1942 = vpack.c.bf16 %v1929, %v1929
  %v1943 = vpack.c.bf16 %v1930, %v1930
  %v1944 = vpack.c.bf16 %v1931, %v1931
  %v1945 = vpack.c.bf16 %v1932, %v1932
  %v1946 = vpack.c.bf16 %v1933, %v1933
  %v1947 = vpack.c.bf16 %v1934, %v1934
  %v1948 = vpack.c.bf16 %v1935, %v1935
  %v1949 = vpack.c.bf16 %v1936, %v1936
  %v1950 = vpack.c.bf16 %v1937, %v1937
  %v1951 = vpack.c.bf16 %v1938, %v1938
  %vm1952 = vcmask 519168
  %1953 = vst.msk [vmem:[%s3] sm:$0xf] %vm1952, %v1939
  %1954 = vst.msk [vmem:[%s3 + $0x4] sm:$0xf] %vm1952, %v1940
  %1955 = vst.msk [vmem:[%s3 + $0x8] sm:$0xf] %vm1952, %v1941
  %1956 = vst.msk [vmem:[%s3 + $0xc] sm:$0xf] %vm1952, %v1942
  %1957 = vst.msk [vmem:[%s3 + $0x10] sm:$0xf] %vm1952, %v1943
  %1958 = vst.msk [vmem:[%s3 + $0x14] sm:$0xf] %vm1952, %v1944
  %1959 = vst.msk [vmem:[%s3 + $0x18] sm:$0xf] %vm1952, %v1945
  %1960 = vst.msk [vmem:[%s3 + $0x1c] sm:$0xf] %vm1952, %v1946
  %1961 = vst.msk [vmem:[%s3 + $0x20] sm:$0xf] %vm1952, %v1947
  %1962 = vst.msk [vmem:[%s3 + $0x24] sm:$0xf] %vm1952, %v1948
  %1963 = vst.msk [vmem:[%s3 + $0x28] sm:$0xf] %vm1952, %v1949
  %1964 = vst.msk [vmem:[%s3 + $0x2c] sm:$0xf] %vm1952, %v1950
  %vm1965 = vcmask 517120
  %1966 = vst.msk [vmem:[%s3 + $0x30] sm:$0x3] %vm1965, %v1951
  // Predicated region
  $region14: #{initial_net_forward.8} parent=0 // pred_check
    _
  $region15: #{initial_net_forward.8} parent=0 // pred_check_branch
    %1968 = sbr.rel (0) target = $region17
  $region16: #{initial_net_forward.8} parent=0 // pred_region
    _
  $region17: #{initial_net_forward.8} parent=0 // pred_fallthru
    _
  // Predicated region
  $region18: #{initial_net_forward.8} parent=0 // pred_check
    _
  $region19: #{initial_net_forward.8} parent=0 // pred_check_branch
    %1970 = sbr.rel (0) target = $region21
  $region20: #{initial_net_forward.8} parent=0 // pred_region
    _
  $region21: #{initial_net_forward.8} parent=0 // pred_fallthru
    _

// kernel: initial_net_forward.9
$region0: #{initial_net_forward.9}
  #allocation0 [shape = 'u32[]', space=smem, size = 0x4, offset = 0x4, fixed_abs, tag = 'smem constant byte address 0x4 - core index']
  #allocation1 [shape = 'u32[72,128]{1,0:T(1,128)}', space=vmem, size = 0x9000, scoped, tag = 'internal scratch']
  #allocation2 [shape = 'f32[2,1024]{1,0:T(2,128)}', space=vmem, size = 0x2000, scoped, tag = 'scratch operand']
  %s0 = inlined_call_operand.vmem [shape: bf16[2,3200], index: 0, kind: input, shape index: {}]
  %s1 = inlined_call_operand.vmem [shape: bf16[3200,1024], index: 1, kind: input, shape index: {}]
  %s2 = inlined_call_operand.vmem [shape: f32[1,1024], index: 2, kind: input, shape index: {}]
  %s3 = inlined_call_operand.vmem [shape: bf16[1024,2], index: 3, kind: input, shape index: {}]
  %s4 = inlined_call_operand.vmem [shape: f32[1,2], index: 4, kind: input, shape index: {}]
  %s5 = inlined_call_operand.hbm [shape: f32[2,2], index: 5, kind: output, shape index: {}]
  %s6 = sld [smem:[#allocation0]]
  $region61: #{initial_net_forward.9} parent=0
    _
  %s8 = ssub.s32 1, %s6
  %s9 = scalar_select 0, %s8, %s6
  $region1: #{initial_net_forward.9} parent=0
    #allocation3 [shape = 'u8[1024]{0}', space=vmem, size = 0x400, scoped, tag = 'output window, operand 0, single buffered']
    #allocation4 [shape = 's32[2]{0}', space=sflag, size = 0x8, scoped, tag = 'scoped memory for initial_net_forward.9']
    %10 = vsyncpa [#allocation4], 0
    loop: start=0, step=1, limit=7
    $region2: #{initial_net_forward.9} parent=1 // loop_pre_header
      _
    $region3: #{initial_net_forward.9} parent=1 // loop_header
      %s12 = sphi 0, %s16
      %p13 = scmp.ge.s32.totalorder %s12, 7
      %s22 = sphi 0, %s24
      %s25 = sphi 0, %s22
      %s26 = sphi 0, %s25
      %s42 = sphi 0, %s26
      %s48 = sphi 0, %s50
      %s51 = sphi 0, %s48
      %s52 = sphi 0, %s51
      %s68 = sphi 0, %s52
      %s72 = sphi 0, %s72
      %s74 = sphi 0, %s72
      %s75 = sphi 0, %s74
      %s89 = sphi 0, %s75
      %s93 = sphi 0, %s93
      %s95 = sphi 0, %s93
      %s96 = sphi 0, %s95
      %s110 = sphi 0, %s96
      %s114 = sphi 0, %s114
      %s116 = sphi 0, %s114
      %s117 = sphi 0, %s116
      %s131 = sphi 0, %s117
      %s135 = sphi 0, %s135
      %s137 = sphi 0, %s135
      %s138 = sphi 0, %s137
      %s152 = sphi 0, %s138
    $region4: #{initial_net_forward.9} parent=1 // loop_header_branch
      %15 = sbr.rel (%p13) target = $region8
    $region5: #{initial_net_forward.9} parent=1 // loop_body
      %s17 = ssub.s32 %s12, 1
      %s18 = ssub.s32 %s12, 2
      %s19 = sadd.s32 %s12, 1
      %s20 = ssub.s32 %s12, %s19
      %p21 = scmp.eq.s32.totalorder %s20, 0
      %s23 = sadd.s32 %s22, 1
      %s24 = scalar_select %p21, %s22, %s23
      %p27 = pneg %p21
      %p28 = scmp.eq.s32.totalorder %s12, 4
      %p29 = por %p27, %p28
      %p30 = scmp.ne.s32.totalorder %s22, %s25
      %p31 = scmp.eq.s32.totalorder %s12, 0
      %p32 = por %p30, %p31
      %p33 = scmp.ne.s32.totalorder %s22, %s25
      %p34 = scmp.eq.s32.totalorder %s17, 4
      %p35 = por %p33, %p34
      %p36 = scmp.ne.s32.totalorder %s25, %s26
      %p37 = scmp.eq.s32.totalorder %s17, 0
      %p38 = por %p36, %p37
      %p39 = scmp.ne.s32.totalorder %s25, %s26
      %p40 = scmp.eq.s32.totalorder %s18, 4
      %p41 = por %p39, %p40
      %p43 = scmp.ne.s32.totalorder %s26, %s42
      %p44 = scmp.eq.s32.totalorder %s18, 0
      %p45 = por %p43, %p44
      %s46 = ssub.s32 %s12, %s19
      %p47 = scmp.eq.s32.totalorder %s46, 0
      %s49 = sadd.s32 %s48, 1
      %s50 = scalar_select %p47, %s48, %s49
      %p53 = pneg %p47
      %p54 = scmp.eq.s32.totalorder %s12, 4
      %p55 = por %p53, %p54
      %p56 = scmp.ne.s32.totalorder %s48, %s51
      %p57 = scmp.eq.s32.totalorder %s12, 0
      %p58 = por %p56, %p57
      %p59 = scmp.ne.s32.totalorder %s48, %s51
      %p60 = scmp.eq.s32.totalorder %s17, 4
      %p61 = por %p59, %p60
      %p62 = scmp.ne.s32.totalorder %s51, %s52
      %p63 = scmp.eq.s32.totalorder %s17, 0
      %p64 = por %p62, %p63
      %p65 = scmp.ne.s32.totalorder %s51, %s52
      %p66 = scmp.eq.s32.totalorder %s18, 4
      %p67 = por %p65, %p66
      %p69 = scmp.ne.s32.totalorder %s52, %s68
      %p70 = scmp.eq.s32.totalorder %s18, 0
      %p71 = por %p69, %p70
      %s73 = sadd.s32 %s72, 1
      %p76 = scmp.eq.s32.totalorder %s12, 4
      %p77 = scmp.ne.s32.totalorder %s72, %s74
      %p78 = scmp.eq.s32.totalorder %s12, 0
      %p79 = por %p77, %p78
      %p80 = scmp.ne.s32.totalorder %s72, %s74
      %p81 = scmp.eq.s32.totalorder %s17, 4
      %p82 = por %p80, %p81
      %p83 = scmp.ne.s32.totalorder %s74, %s75
      %p84 = scmp.eq.s32.totalorder %s17, 0
      %p85 = por %p83, %p84
      %p86 = scmp.ne.s32.totalorder %s74, %s75
      %p87 = scmp.eq.s32.totalorder %s18, 4
      %p88 = por %p86, %p87
      %p90 = scmp.ne.s32.totalorder %s75, %s89
      %p91 = scmp.eq.s32.totalorder %s18, 0
      %p92 = por %p90, %p91
      %s94 = sadd.s32 %s93, 1
      %p97 = scmp.eq.s32.totalorder %s12, 4
      %p98 = scmp.ne.s32.totalorder %s93, %s95
      %p99 = scmp.eq.s32.totalorder %s12, 0
      %p100 = por %p98, %p99
      %p101 = scmp.ne.s32.totalorder %s93, %s95
      %p102 = scmp.eq.s32.totalorder %s17, 4
      %p103 = por %p101, %p102
      %p104 = scmp.ne.s32.totalorder %s95, %s96
      %p105 = scmp.eq.s32.totalorder %s17, 0
      %p106 = por %p104, %p105
      %p107 = scmp.ne.s32.totalorder %s95, %s96
      %p108 = scmp.eq.s32.totalorder %s18, 4
      %p109 = por %p107, %p108
      %p111 = scmp.ne.s32.totalorder %s96, %s110
      %p112 = scmp.eq.s32.totalorder %s18, 0
      %p113 = por %p111, %p112
      %s115 = sadd.s32 %s114, 1
      %p118 = scmp.eq.s32.totalorder %s12, 4
      %p119 = scmp.ne.s32.totalorder %s114, %s116
      %p120 = scmp.eq.s32.totalorder %s12, 0
      %p121 = por %p119, %p120
      %p122 = scmp.ne.s32.totalorder %s114, %s116
      %p123 = scmp.eq.s32.totalorder %s17, 4
      %p124 = por %p122, %p123
      %p125 = scmp.ne.s32.totalorder %s116, %s117
      %p126 = scmp.eq.s32.totalorder %s17, 0
      %p127 = por %p125, %p126
      %p128 = scmp.ne.s32.totalorder %s116, %s117
      %p129 = scmp.eq.s32.totalorder %s18, 4
      %p130 = por %p128, %p129
      %p132 = scmp.ne.s32.totalorder %s117, %s131
      %p133 = scmp.eq.s32.totalorder %s18, 0
      %p134 = por %p132, %p133
      %s136 = sadd.s32 %s135, 1
      %p139 = scmp.eq.s32.totalorder %s12, 4
      %p140 = scmp.ne.s32.totalorder %s135, %s137
      %p141 = scmp.eq.s32.totalorder %s12, 0
      %p142 = por %p140, %p141
      %p143 = scmp.ne.s32.totalorder %s135, %s137
      %p144 = scmp.eq.s32.totalorder %s17, 4
      %p145 = por %p143, %p144
      %p146 = scmp.ne.s32.totalorder %s137, %s138
      %p147 = scmp.eq.s32.totalorder %s17, 0
      %p148 = por %p146, %p147
      %p149 = scmp.ne.s32.totalorder %s137, %s138
      %p150 = scmp.eq.s32.totalorder %s18, 4
      %p151 = por %p149, %p150
      %p153 = scmp.ne.s32.totalorder %s138, %s152
      %p154 = scmp.eq.s32.totalorder %s18, 0
      %p155 = por %p153, %p154
      %p156 = scmp.le.s32.totalorder 1, %s12
      %p157 = scmp.lt.s32.totalorder %s12, 6
      %p158 = pnand %p156, %p157
      %p159 = pneg %p158
      // Predicated region
      $region9: #{initial_net_forward.9} parent=5 // pred_check
        _
      $region10: #{initial_net_forward.9} parent=5 // pred_check_branch
        %161 = sbr.rel (%p158) target = $region12
      $region11: #{initial_net_forward.9} parent=5 // pred_region
        %s162 = ssub.s32 %s12, 1
        // Predicated region
        $region13: #{initial_net_forward.9} parent=11 // pred_check
          %p163 = pneg %p85
        $region14: #{initial_net_forward.9} parent=11 // pred_check_branch
          %165 = sbr.rel (%p163) target = $region16
        $region15: #{initial_net_forward.9} parent=11 // pred_region
          _
        $region16: #{initial_net_forward.9} parent=11 // pred_fallthru
          _
        // Predicated region
        $region17: #{initial_net_forward.9} parent=11 // pred_check
          %p166 = pneg %p106
        $region18: #{initial_net_forward.9} parent=11 // pred_check_branch
          %168 = sbr.rel (%p166) target = $region20
        $region19: #{initial_net_forward.9} parent=11 // pred_region
          _
        $region20: #{initial_net_forward.9} parent=11 // pred_fallthru
          _
        // Predicated region
        $region21: #{initial_net_forward.9} parent=11 // pred_check
          %p169 = pneg %p127
        $region22: #{initial_net_forward.9} parent=11 // pred_check_branch
          %171 = sbr.rel (%p169) target = $region24
        $region23: #{initial_net_forward.9} parent=11 // pred_region
          _
        $region24: #{initial_net_forward.9} parent=11 // pred_fallthru
          _
      $region12: #{initial_net_forward.9} parent=5 // pred_fallthru
        _
      %p172 = scmp.lt.s32.totalorder %s12, 5
      // Predicated region
      $region25: #{initial_net_forward.9} parent=5 // pred_check
        %p173 = pneg %p172
      $region26: #{initial_net_forward.9} parent=5 // pred_check_branch
        %175 = sbr.rel (%p173) target = $region28
      $region27: #{initial_net_forward.9} parent=5 // pred_region
        // Predicated region
        $region29: #{initial_net_forward.9} parent=27 // pred_check
          %p176 = pneg %p32
        $region30: #{initial_net_forward.9} parent=27 // pred_check_branch
          %178 = sbr.rel (%p176) target = $region32
        $region31: #{initial_net_forward.9} parent=27 // pred_region
          %s179 = smul.u32 5, %s12
          %p180 = scmp.lt.s32.totalorder %s179, 24
          %s181 = scalar_select %p180, %s179, 24
          %s182 = scalar_lea.vmem %s0, %s181
          %s183 = smul.u32 5, %s12
        $region32: #{initial_net_forward.9} parent=27 // pred_fallthru
          _
        // Predicated region
        $region33: #{initial_net_forward.9} parent=27 // pred_check
          %p184 = pneg %p58
        $region34: #{initial_net_forward.9} parent=27 // pred_check_branch
          %186 = sbr.rel (%p184) target = $region36
        $region35: #{initial_net_forward.9} parent=27 // pred_region
          %s187 = smul.u32 80, %s12
          %p188 = scmp.lt.s32.totalorder %s187, 399
          %s189 = scalar_select %p188, %s187, 399
          %s190 = smul.addr %s189, 8
          %s191 = smul.addr %s190, 4
          %s192 = scalar_lea.vmem %s1, %s191
          %s193 = smul.u32 80, %s12
        $region36: #{initial_net_forward.9} parent=27 // pred_fallthru
          _
      $region28: #{initial_net_forward.9} parent=5 // pred_fallthru
        _
      %p194 = scmp.le.s32.totalorder 1, %s12
      %p195 = scmp.lt.s32.totalorder %s12, 6
      %p196 = pnand %p194, %p195
      %p197 = pneg %p196
      // Predicated region
      $region37: #{initial_net_forward.9} parent=5 // pred_check
        _
      $region38: #{initial_net_forward.9} parent=5 // pred_check_branch
        %199 = sbr.rel (%p196) target = $region40
      $region39: #{initial_net_forward.9} parent=5 // pred_region
        %s200 = ssub.s32 %s12, 1
        %s201 = smul.u32 5, %s17
        %p202 = scmp.lt.s32.totalorder %s201, 24
        %s203 = scalar_select %p202, %s201, 24
        %s204 = scalar_lea.vmem %s0, %s203
        %p205 = pneg %p38
        %p206 = pneg %p35
        %s207 = smul.u32 80, %s17
        %p208 = scmp.lt.s32.totalorder %s207, 399
        %s209 = scalar_select %p208, %s207, 399
        %s210 = smul.addr %s209, 8
        %s211 = smul.addr %s210, 4
        %s212 = scalar_lea.vmem %s1, %s211
        %p213 = pneg %p64
        %p214 = pneg %p61
        %p215 = pneg %p85
        %p216 = pneg %p82
        %p217 = pneg %p106
        %p218 = pneg %p103
        %p219 = pneg %p127
        %p220 = pneg %p124
        %p221 = pneg %p148
        %p222 = pneg %p145
        %s223 = smul.u32 5, %s17
        %p224 = scmp.lt.s32.totalorder %s223, 24
        %s225 = scalar_select %p224, %s223, 24
        %s226 = scalar_lea.vmem %s0, %s225
        %s227 = smul.u32 5, %s17
        %s228 = smul.u32 80, %s17
        %p229 = scmp.lt.s32.totalorder %s228, 399
        %s230 = scalar_select %p229, %s228, 399
        %s231 = smul.addr %s230, 8
        %s232 = smul.addr %s231, 4
        %s233 = scalar_lea.vmem %s1, %s232
        %s234 = smul.u32 80, %s17
        %p235 = scmp.eq.s32.totalorder %s17, 0
        // Predicated region
        $region41: #{initial_net_forward.9} parent=39 // pred_check
          %p236 = pneg %p235
        $region42: #{initial_net_forward.9} parent=39 // pred_check_branch
          %238 = sbr.rel (%p236) target = $region44
        $region43: #{initial_net_forward.9} parent=39 // pred_region
          %239 = vst [vmem:[#allocation2] sm:$0xff] 0.0
          %240 = vst [vmem:[#allocation2 + $0x8] sm:$0xff] 0.0
        $region44: #{initial_net_forward.9} parent=39 // pred_fallthru
          _
        %v241 = vld [vmem:[#allocation2] sm:$0xff]
        %v242 = vld [vmem:[#allocation2 + $0x8] sm:$0xff]
        %v243 = vld [vmem:[%s226] sm:$0x1f]
        %v244 = vld [vmem:[%s233] sm:$0xff]
        %v245 = vld [vmem:[%s233 + $0x8] sm:$0xff]
        %v246 = vld [vmem:[%s233 + $0x10] sm:$0xff]
        %v247 = vld [vmem:[%s233 + $0x18] sm:$0xff]
        %v248 = vld [vmem:[%s233 + $0x20] sm:$0xff]
        %v249 = vld [vmem:[%s233 + $0x28] sm:$0xff]
        %v250 = vld [vmem:[%s233 + $0x30] sm:$0xff]
        %v251 = vld [vmem:[%s233 + $0x38] sm:$0xff]
        %v252 = vld [vmem:[%s233 + $0x40] sm:$0xff]
        %v253 = vld [vmem:[%s233 + $0x48] sm:$0xff]
        %v254 = vld [vmem:[%s233 + $0x50] sm:$0xff]
        %v255 = vld [vmem:[%s233 + $0x58] sm:$0xff]
        %v256 = vld [vmem:[%s233 + $0x60] sm:$0xff]
        %v257 = vld [vmem:[%s233 + $0x68] sm:$0xff]
        %v258 = vld [vmem:[%s233 + $0x70] sm:$0xff]
        %v259 = vld [vmem:[%s233 + $0x78] sm:$0xff]
        %v260 = vld [vmem:[%s233 + $0x80] sm:$0xff]
        %v261 = vld [vmem:[%s233 + $0x88] sm:$0xff]
        %v262 = vld [vmem:[%s233 + $0x90] sm:$0xff]
        %v263 = vld [vmem:[%s233 + $0x98] sm:$0xff]
        %v264 = vld [vmem:[%s233 + $0xa0] sm:$0xff]
        %v265 = vld [vmem:[%s233 + $0xa8] sm:$0xff]
        %v266 = vld [vmem:[%s233 + $0xb0] sm:$0xff]
        %v267 = vld [vmem:[%s233 + $0xb8] sm:$0xff]
        %v268 = vld [vmem:[%s233 + $0xc0] sm:$0xff]
        %v269 = vld [vmem:[%s233 + $0xc8] sm:$0xff]
        %v270 = vld [vmem:[%s233 + $0xd0] sm:$0xff]
        %v271 = vld [vmem:[%s233 + $0xd8] sm:$0xff]
        %v272 = vld [vmem:[%s233 + $0xe0] sm:$0xff]
        %v273 = vld [vmem:[%s233 + $0xe8] sm:$0xff]
        %v274 = vld [vmem:[%s233 + $0xf0] sm:$0xff]
        %v275 = vld [vmem:[%s233 + $0xf8] sm:$0xff]
        %v276 = vld [vmem:[%s233 + $0x100] sm:$0xff]
        %v277 = vld [vmem:[%s233 + $0x108] sm:$0xff]
        %v278 = vld [vmem:[%s233 + $0x110] sm:$0xff]
        %v279 = vld [vmem:[%s233 + $0x118] sm:$0xff]
        %v280 = vld [vmem:[%s233 + $0x120] sm:$0xff]
        %v281 = vld [vmem:[%s233 + $0x128] sm:$0xff]
        %v282 = vld [vmem:[%s233 + $0x130] sm:$0xff]
        %v283 = vld [vmem:[%s233 + $0x138] sm:$0xff]
        %v284 = vld [vmem:[%s233 + $0x140] sm:$0xff]
        %v285 = vld [vmem:[%s233 + $0x148] sm:$0xff]
        %v286 = vld [vmem:[%s233 + $0x150] sm:$0xff]
        %v287 = vld [vmem:[%s233 + $0x158] sm:$0xff]
        %v288 = vld [vmem:[%s233 + $0x160] sm:$0xff]
        %v289 = vld [vmem:[%s233 + $0x168] sm:$0xff]
        %v290 = vld [vmem:[%s233 + $0x170] sm:$0xff]
        %v291 = vld [vmem:[%s233 + $0x178] sm:$0xff]
        %v292 = vld [vmem:[%s233 + $0x180] sm:$0xff]
        %v293 = vld [vmem:[%s233 + $0x188] sm:$0xff]
        %v294 = vld [vmem:[%s233 + $0x190] sm:$0xff]
        %v295 = vld [vmem:[%s233 + $0x198] sm:$0xff]
        %v296 = vld [vmem:[%s233 + $0x1a0] sm:$0xff]
        %v297 = vld [vmem:[%s233 + $0x1a8] sm:$0xff]
        %v298 = vld [vmem:[%s233 + $0x1b0] sm:$0xff]
        %v299 = vld [vmem:[%s233 + $0x1b8] sm:$0xff]
        %v300 = vld [vmem:[%s233 + $0x1c0] sm:$0xff]
        %v301 = vld [vmem:[%s233 + $0x1c8] sm:$0xff]
        %v302 = vld [vmem:[%s233 + $0x1d0] sm:$0xff]
        %v303 = vld [vmem:[%s233 + $0x1d8] sm:$0xff]
        %v304 = vld [vmem:[%s233 + $0x1e0] sm:$0xff]
        %v305 = vld [vmem:[%s233 + $0x1e8] sm:$0xff]
        %v306 = vld [vmem:[%s233 + $0x1f0] sm:$0xff]
        %v307 = vld [vmem:[%s233 + $0x1f8] sm:$0xff]
        %v308 = vld [vmem:[%s233 + $0x200] sm:$0xff]
        %v309 = vld [vmem:[%s233 + $0x208] sm:$0xff]
        %v310 = vld [vmem:[%s233 + $0x210] sm:$0xff]
        %v311 = vld [vmem:[%s233 + $0x218] sm:$0xff]
        %v312 = vld [vmem:[%s233 + $0x220] sm:$0xff]
        %v313 = vld [vmem:[%s233 + $0x228] sm:$0xff]
        %v314 = vld [vmem:[%s233 + $0x230] sm:$0xff]
        %v315 = vld [vmem:[%s233 + $0x238] sm:$0xff]
        %v316 = vld [vmem:[%s233 + $0x240] sm:$0xff]
        %v317 = vld [vmem:[%s233 + $0x248] sm:$0xff]
        %v318 = vld [vmem:[%s233 + $0x250] sm:$0xff]
        %v319 = vld [vmem:[%s233 + $0x258] sm:$0xff]
        %v320 = vld [vmem:[%s233 + $0x260] sm:$0xff]
        %v321 = vld [vmem:[%s233 + $0x268] sm:$0xff]
        %v322 = vld [vmem:[%s233 + $0x270] sm:$0xff]
        %v323 = vld [vmem:[%s233 + $0x278] sm:$0xff]
        %v324 = vld [vmem:[%s233 + $0x280] sm:$0xff]
        %v325 = vld [vmem:[%s233 + $0x288] sm:$0xff]
        %v326 = vld [vmem:[%s233 + $0x290] sm:$0xff]
        %v327 = vld [vmem:[%s233 + $0x298] sm:$0xff]
        %v328 = vld [vmem:[%s233 + $0x2a0] sm:$0xff]
        %v329 = vld [vmem:[%s233 + $0x2a8] sm:$0xff]
        %v330 = vld [vmem:[%s233 + $0x2b0] sm:$0xff]
        %v331 = vld [vmem:[%s233 + $0x2b8] sm:$0xff]
        %v332 = vld [vmem:[%s233 + $0x2c0] sm:$0xff]
        %v333 = vld [vmem:[%s233 + $0x2c8] sm:$0xff]
        %v334 = vld [vmem:[%s233 + $0x2d0] sm:$0xff]
        %v335 = vld [vmem:[%s233 + $0x2d8] sm:$0xff]
        %v336 = vld [vmem:[%s233 + $0x2e0] sm:$0xff]
        %v337 = vld [vmem:[%s233 + $0x2e8] sm:$0xff]
        %v338 = vld [vmem:[%s233 + $0x2f0] sm:$0xff]
        %v339 = vld [vmem:[%s233 + $0x2f8] sm:$0xff]
        %v340 = vld [vmem:[%s233 + $0x300] sm:$0xff]
        %v341 = vld [vmem:[%s233 + $0x308] sm:$0xff]
        %v342 = vld [vmem:[%s233 + $0x310] sm:$0xff]
        %v343 = vld [vmem:[%s233 + $0x318] sm:$0xff]
        %v344 = vld [vmem:[%s233 + $0x320] sm:$0xff]
        %v345 = vld [vmem:[%s233 + $0x328] sm:$0xff]
        %v346 = vld [vmem:[%s233 + $0x330] sm:$0xff]
        %v347 = vld [vmem:[%s233 + $0x338] sm:$0xff]
        %v348 = vld [vmem:[%s233 + $0x340] sm:$0xff]
        %v349 = vld [vmem:[%s233 + $0x348] sm:$0xff]
        %v350 = vld [vmem:[%s233 + $0x350] sm:$0xff]
        %v351 = vld [vmem:[%s233 + $0x358] sm:$0xff]
        %v352 = vld [vmem:[%s233 + $0x360] sm:$0xff]
        %v353 = vld [vmem:[%s233 + $0x368] sm:$0xff]
        %v354 = vld [vmem:[%s233 + $0x370] sm:$0xff]
        %v355 = vld [vmem:[%s233 + $0x378] sm:$0xff]
        %v356 = vld [vmem:[%s233 + $0x380] sm:$0xff]
        %v357 = vld [vmem:[%s233 + $0x388] sm:$0xff]
        %v358 = vld [vmem:[%s233 + $0x390] sm:$0xff]
        %v359 = vld [vmem:[%s233 + $0x398] sm:$0xff]
        %v360 = vld [vmem:[%s233 + $0x3a0] sm:$0xff]
        %v361 = vld [vmem:[%s233 + $0x3a8] sm:$0xff]
        %v362 = vld [vmem:[%s233 + $0x3b0] sm:$0xff]
        %v363 = vld [vmem:[%s233 + $0x3b8] sm:$0xff]
        %v364 = vld [vmem:[%s233 + $0x3c0] sm:$0xff]
        %v365 = vld [vmem:[%s233 + $0x3c8] sm:$0xff]
        %v366 = vld [vmem:[%s233 + $0x3d0] sm:$0xff]
        %v367 = vld [vmem:[%s233 + $0x3d8] sm:$0xff]
        %v368 = vld [vmem:[%s233 + $0x3e0] sm:$0xff]
        %v369 = vld [vmem:[%s233 + $0x3e8] sm:$0xff]
        %v370 = vld [vmem:[%s233 + $0x3f0] sm:$0xff]
        %v371 = vld [vmem:[%s233 + $0x3f8] sm:$0xff]
        %v372 = vld [vmem:[%s233 + $0x400] sm:$0xff]
        %v373 = vld [vmem:[%s233 + $0x408] sm:$0xff]
        %v374 = vld [vmem:[%s233 + $0x410] sm:$0xff]
        %v375 = vld [vmem:[%s233 + $0x418] sm:$0xff]
        %v376 = vld [vmem:[%s233 + $0x420] sm:$0xff]
        %v377 = vld [vmem:[%s233 + $0x428] sm:$0xff]
        %v378 = vld [vmem:[%s233 + $0x430] sm:$0xff]
        %v379 = vld [vmem:[%s233 + $0x438] sm:$0xff]
        %v380 = vld [vmem:[%s233 + $0x440] sm:$0xff]
        %v381 = vld [vmem:[%s233 + $0x448] sm:$0xff]
        %v382 = vld [vmem:[%s233 + $0x450] sm:$0xff]
        %v383 = vld [vmem:[%s233 + $0x458] sm:$0xff]
        %v384 = vld [vmem:[%s233 + $0x460] sm:$0xff]
        %v385 = vld [vmem:[%s233 + $0x468] sm:$0xff]
        %v386 = vld [vmem:[%s233 + $0x470] sm:$0xff]
        %v387 = vld [vmem:[%s233 + $0x478] sm:$0xff]
        %v388 = vld [vmem:[%s233 + $0x480] sm:$0xff]
        %v389 = vld [vmem:[%s233 + $0x488] sm:$0xff]
        %v390 = vld [vmem:[%s233 + $0x490] sm:$0xff]
        %v391 = vld [vmem:[%s233 + $0x498] sm:$0xff]
        %v392 = vld [vmem:[%s233 + $0x4a0] sm:$0xff]
        %v393 = vld [vmem:[%s233 + $0x4a8] sm:$0xff]
        %v394 = vld [vmem:[%s233 + $0x4b0] sm:$0xff]
        %v395 = vld [vmem:[%s233 + $0x4b8] sm:$0xff]
        %v396 = vld [vmem:[%s233 + $0x4c0] sm:$0xff]
        %v397 = vld [vmem:[%s233 + $0x4c8] sm:$0xff]
        %v398 = vld [vmem:[%s233 + $0x4d0] sm:$0xff]
        %v399 = vld [vmem:[%s233 + $0x4d8] sm:$0xff]
        %v400 = vld [vmem:[%s233 + $0x4e0] sm:$0xff]
        %v401 = vld [vmem:[%s233 + $0x4e8] sm:$0xff]
        %v402 = vld [vmem:[%s233 + $0x4f0] sm:$0xff]
        %v403 = vld [vmem:[%s233 + $0x4f8] sm:$0xff]
        %v404 = vld [vmem:[%s233 + $0x500] sm:$0xff]
        %v405 = vld [vmem:[%s233 + $0x508] sm:$0xff]
        %v406 = vld [vmem:[%s233 + $0x510] sm:$0xff]
        %v407 = vld [vmem:[%s233 + $0x518] sm:$0xff]
        %v408 = vld [vmem:[%s233 + $0x520] sm:$0xff]
        %v409 = vld [vmem:[%s233 + $0x528] sm:$0xff]
        %v410 = vld [vmem:[%s233 + $0x530] sm:$0xff]
        %v411 = vld [vmem:[%s233 + $0x538] sm:$0xff]
        %v412 = vld [vmem:[%s233 + $0x540] sm:$0xff]
        %v413 = vld [vmem:[%s233 + $0x548] sm:$0xff]
        %v414 = vld [vmem:[%s233 + $0x550] sm:$0xff]
        %v415 = vld [vmem:[%s233 + $0x558] sm:$0xff]
        %v416 = vld [vmem:[%s233 + $0x560] sm:$0xff]
        %v417 = vld [vmem:[%s233 + $0x568] sm:$0xff]
        %v418 = vld [vmem:[%s233 + $0x570] sm:$0xff]
        %v419 = vld [vmem:[%s233 + $0x578] sm:$0xff]
        %v420 = vld [vmem:[%s233 + $0x580] sm:$0xff]
        %v421 = vld [vmem:[%s233 + $0x588] sm:$0xff]
        %v422 = vld [vmem:[%s233 + $0x590] sm:$0xff]
        %v423 = vld [vmem:[%s233 + $0x598] sm:$0xff]
        %v424 = vld [vmem:[%s233 + $0x5a0] sm:$0xff]
        %v425 = vld [vmem:[%s233 + $0x5a8] sm:$0xff]
        %v426 = vld [vmem:[%s233 + $0x5b0] sm:$0xff]
        %v427 = vld [vmem:[%s233 + $0x5b8] sm:$0xff]
        %v428 = vld [vmem:[%s233 + $0x5c0] sm:$0xff]
        %v429 = vld [vmem:[%s233 + $0x5c8] sm:$0xff]
        %v430 = vld [vmem:[%s233 + $0x5d0] sm:$0xff]
        %v431 = vld [vmem:[%s233 + $0x5d8] sm:$0xff]
        %v432 = vld [vmem:[%s233 + $0x5e0] sm:$0xff]
        %v433 = vld [vmem:[%s233 + $0x5e8] sm:$0xff]
        %v434 = vld [vmem:[%s233 + $0x5f0] sm:$0xff]
        %v435 = vld [vmem:[%s233 + $0x5f8] sm:$0xff]
        %v436 = vld [vmem:[%s233 + $0x600] sm:$0xff]
        %v437 = vld [vmem:[%s233 + $0x608] sm:$0xff]
        %v438 = vld [vmem:[%s233 + $0x610] sm:$0xff]
        %v439 = vld [vmem:[%s233 + $0x618] sm:$0xff]
        %v440 = vld [vmem:[%s233 + $0x620] sm:$0xff]
        %v441 = vld [vmem:[%s233 + $0x628] sm:$0xff]
        %v442 = vld [vmem:[%s233 + $0x630] sm:$0xff]
        %v443 = vld [vmem:[%s233 + $0x638] sm:$0xff]
        %v444 = vld [vmem:[%s233 + $0x640] sm:$0xff]
        %v445 = vld [vmem:[%s233 + $0x648] sm:$0xff]
        %v446 = vld [vmem:[%s233 + $0x650] sm:$0xff]
        %v447 = vld [vmem:[%s233 + $0x658] sm:$0xff]
        %v448 = vld [vmem:[%s233 + $0x660] sm:$0xff]
        %v449 = vld [vmem:[%s233 + $0x668] sm:$0xff]
        %v450 = vld [vmem:[%s233 + $0x670] sm:$0xff]
        %v451 = vld [vmem:[%s233 + $0x678] sm:$0xff]
        %v452 = vld [vmem:[%s233 + $0x680] sm:$0xff]
        %v453 = vld [vmem:[%s233 + $0x688] sm:$0xff]
        %v454 = vld [vmem:[%s233 + $0x690] sm:$0xff]
        %v455 = vld [vmem:[%s233 + $0x698] sm:$0xff]
        %v456 = vld [vmem:[%s233 + $0x6a0] sm:$0xff]
        %v457 = vld [vmem:[%s233 + $0x6a8] sm:$0xff]
        %v458 = vld [vmem:[%s233 + $0x6b0] sm:$0xff]
        %v459 = vld [vmem:[%s233 + $0x6b8] sm:$0xff]
        %v460 = vld [vmem:[%s233 + $0x6c0] sm:$0xff]
        %v461 = vld [vmem:[%s233 + $0x6c8] sm:$0xff]
        %v462 = vld [vmem:[%s233 + $0x6d0] sm:$0xff]
        %v463 = vld [vmem:[%s233 + $0x6d8] sm:$0xff]
        %v464 = vld [vmem:[%s233 + $0x6e0] sm:$0xff]
        %v465 = vld [vmem:[%s233 + $0x6e8] sm:$0xff]
        %v466 = vld [vmem:[%s233 + $0x6f0] sm:$0xff]
        %v467 = vld [vmem:[%s233 + $0x6f8] sm:$0xff]
        %v468 = vld [vmem:[%s233 + $0x700] sm:$0xff]
        %v469 = vld [vmem:[%s233 + $0x708] sm:$0xff]
        %v470 = vld [vmem:[%s233 + $0x710] sm:$0xff]
        %v471 = vld [vmem:[%s233 + $0x718] sm:$0xff]
        %v472 = vld [vmem:[%s233 + $0x720] sm:$0xff]
        %v473 = vld [vmem:[%s233 + $0x728] sm:$0xff]
        %v474 = vld [vmem:[%s233 + $0x730] sm:$0xff]
        %v475 = vld [vmem:[%s233 + $0x738] sm:$0xff]
        %v476 = vld [vmem:[%s233 + $0x740] sm:$0xff]
        %v477 = vld [vmem:[%s233 + $0x748] sm:$0xff]
        %v478 = vld [vmem:[%s233 + $0x750] sm:$0xff]
        %v479 = vld [vmem:[%s233 + $0x758] sm:$0xff]
        %v480 = vld [vmem:[%s233 + $0x760] sm:$0xff]
        %v481 = vld [vmem:[%s233 + $0x768] sm:$0xff]
        %v482 = vld [vmem:[%s233 + $0x770] sm:$0xff]
        %v483 = vld [vmem:[%s233 + $0x778] sm:$0xff]
        %v484 = vld [vmem:[%s233 + $0x780] sm:$0xff]
        %v485 = vld [vmem:[%s233 + $0x788] sm:$0xff]
        %v486 = vld [vmem:[%s233 + $0x790] sm:$0xff]
        %v487 = vld [vmem:[%s233 + $0x798] sm:$0xff]
        %v488 = vld [vmem:[%s233 + $0x7a0] sm:$0xff]
        %v489 = vld [vmem:[%s233 + $0x7a8] sm:$0xff]
        %v490 = vld [vmem:[%s233 + $0x7b0] sm:$0xff]
        %v491 = vld [vmem:[%s233 + $0x7b8] sm:$0xff]
        %v492 = vld [vmem:[%s233 + $0x7c0] sm:$0xff]
        %v493 = vld [vmem:[%s233 + $0x7c8] sm:$0xff]
        %v494 = vld [vmem:[%s233 + $0x7d0] sm:$0xff]
        %v495 = vld [vmem:[%s233 + $0x7d8] sm:$0xff]
        %v496 = vld [vmem:[%s233 + $0x7e0] sm:$0xff]
        %v497 = vld [vmem:[%s233 + $0x7e8] sm:$0xff]
        %v498 = vld [vmem:[%s233 + $0x7f0] sm:$0xff]
        %v499 = vld [vmem:[%s233 + $0x7f8] sm:$0xff]
        %v500 = vld [vmem:[%s233 + $0x800] sm:$0xff]
        %v501 = vld [vmem:[%s233 + $0x808] sm:$0xff]
        %v502 = vld [vmem:[%s233 + $0x810] sm:$0xff]
        %v503 = vld [vmem:[%s233 + $0x818] sm:$0xff]
        %v504 = vld [vmem:[%s233 + $0x820] sm:$0xff]
        %v505 = vld [vmem:[%s233 + $0x828] sm:$0xff]
        %v506 = vld [vmem:[%s233 + $0x830] sm:$0xff]
        %v507 = vld [vmem:[%s233 + $0x838] sm:$0xff]
        %v508 = vld [vmem:[%s233 + $0x840] sm:$0xff]
        %v509 = vld [vmem:[%s233 + $0x848] sm:$0xff]
        %v510 = vld [vmem:[%s233 + $0x850] sm:$0xff]
        %v511 = vld [vmem:[%s233 + $0x858] sm:$0xff]
        %v512 = vld [vmem:[%s233 + $0x860] sm:$0xff]
        %v513 = vld [vmem:[%s233 + $0x868] sm:$0xff]
        %v514 = vld [vmem:[%s233 + $0x870] sm:$0xff]
        %v515 = vld [vmem:[%s233 + $0x878] sm:$0xff]
        %v516 = vld [vmem:[%s233 + $0x880] sm:$0xff]
        %v517 = vld [vmem:[%s233 + $0x888] sm:$0xff]
        %v518 = vld [vmem:[%s233 + $0x890] sm:$0xff]
        %v519 = vld [vmem:[%s233 + $0x898] sm:$0xff]
        %v520 = vld [vmem:[%s233 + $0x8a0] sm:$0xff]
        %v521 = vld [vmem:[%s233 + $0x8a8] sm:$0xff]
        %v522 = vld [vmem:[%s233 + $0x8b0] sm:$0xff]
        %v523 = vld [vmem:[%s233 + $0x8b8] sm:$0xff]
        %v524 = vld [vmem:[%s233 + $0x8c0] sm:$0xff]
        %v525 = vld [vmem:[%s233 + $0x8c8] sm:$0xff]
        %v526 = vld [vmem:[%s233 + $0x8d0] sm:$0xff]
        %v527 = vld [vmem:[%s233 + $0x8d8] sm:$0xff]
        %v528 = vld [vmem:[%s233 + $0x8e0] sm:$0xff]
        %v529 = vld [vmem:[%s233 + $0x8e8] sm:$0xff]
        %v530 = vld [vmem:[%s233 + $0x8f0] sm:$0xff]
        %v531 = vld [vmem:[%s233 + $0x8f8] sm:$0xff]
        %v532 = vld [vmem:[%s233 + $0x900] sm:$0xff]
        %v533 = vld [vmem:[%s233 + $0x908] sm:$0xff]
        %v534 = vld [vmem:[%s233 + $0x910] sm:$0xff]
        %v535 = vld [vmem:[%s233 + $0x918] sm:$0xff]
        %v536 = vld [vmem:[%s233 + $0x920] sm:$0xff]
        %v537 = vld [vmem:[%s233 + $0x928] sm:$0xff]
        %v538 = vld [vmem:[%s233 + $0x930] sm:$0xff]
        %v539 = vld [vmem:[%s233 + $0x938] sm:$0xff]
        %v540 = vld [vmem:[%s233 + $0x940] sm:$0xff]
        %v541 = vld [vmem:[%s233 + $0x948] sm:$0xff]
        %v542 = vld [vmem:[%s233 + $0x950] sm:$0xff]
        %v543 = vld [vmem:[%s233 + $0x958] sm:$0xff]
        %v544 = vld [vmem:[%s233 + $0x960] sm:$0xff]
        %v545 = vld [vmem:[%s233 + $0x968] sm:$0xff]
        %v546 = vld [vmem:[%s233 + $0x970] sm:$0xff]
        %v547 = vld [vmem:[%s233 + $0x978] sm:$0xff]
        %v548 = vld [vmem:[%s233 + $0x980] sm:$0xff]
        %v549 = vld [vmem:[%s233 + $0x988] sm:$0xff]
        %v550 = vld [vmem:[%s233 + $0x990] sm:$0xff]
        %v551 = vld [vmem:[%s233 + $0x998] sm:$0xff]
        %v552 = vld [vmem:[%s233 + $0x9a0] sm:$0xff]
        %v553 = vld [vmem:[%s233 + $0x9a8] sm:$0xff]
        %v554 = vld [vmem:[%s233 + $0x9b0] sm:$0xff]
        %v555 = vld [vmem:[%s233 + $0x9b8] sm:$0xff]
        %v556 = vld [vmem:[%s233 + $0x9c0] sm:$0xff]
        %v557 = vld [vmem:[%s233 + $0x9c8] sm:$0xff]
        %v558 = vld [vmem:[%s233 + $0x9d0] sm:$0xff]
        %v559 = vld [vmem:[%s233 + $0x9d8] sm:$0xff]
        %v560 = vld [vmem:[%s233 + $0x9e0] sm:$0xff]
        %v561 = vld [vmem:[%s233 + $0x9e8] sm:$0xff]
        %v562 = vld [vmem:[%s233 + $0x9f0] sm:$0xff]
        %v563 = vld [vmem:[%s233 + $0x9f8] sm:$0xff]
        %565 = vst [vmem:[#allocation1] ss:$9 sm:$0xff] %v243
        %v566 = vld [vmem:[#allocation1] sm:$0xff]
        %v567 = vld [vmem:[#allocation1 + $0x9] sm:$0xff]
        %v568 = vld [vmem:[#allocation1 + $0x12] sm:$0xff]
        %v569 = vld [vmem:[#allocation1 + $0x1b] sm:$0xff]
        %v570 = vld [vmem:[#allocation1 + $0x24] sm:$0xff]
        %v896 = vunpack.c.l.b16 %v244
        %v897 = vunpack.c.h.b16 %v244
        %v898 = vunpack.c.l.b16 %v245
        %v899 = vunpack.c.h.b16 %v245
        %v900 = vunpack.c.l.b16 %v246
        %v901 = vunpack.c.h.b16 %v246
        %v902 = vunpack.c.l.b16 %v247
        %v903 = vunpack.c.h.b16 %v247
        %v904 = vunpack.c.l.b16 %v248
        %v905 = vunpack.c.h.b16 %v248
        %v906 = vunpack.c.l.b16 %v249
        %v907 = vunpack.c.h.b16 %v249
        %v908 = vunpack.c.l.b16 %v250
        %v909 = vunpack.c.h.b16 %v250
        %v910 = vunpack.c.l.b16 %v251
        %v911 = vunpack.c.h.b16 %v251
        %v912 = vunpack.c.l.b16 %v252
        %v913 = vunpack.c.h.b16 %v252
        %v914 = vunpack.c.l.b16 %v253
        %v915 = vunpack.c.h.b16 %v253
        %v916 = vunpack.c.l.b16 %v254
        %v917 = vunpack.c.h.b16 %v254
        %v918 = vunpack.c.l.b16 %v255
        %v919 = vunpack.c.h.b16 %v255
        %v920 = vunpack.c.l.b16 %v256
        %v921 = vunpack.c.h.b16 %v256
        %v922 = vunpack.c.l.b16 %v257
        %v923 = vunpack.c.h.b16 %v257
        %v924 = vunpack.c.l.b16 %v258
        %v925 = vunpack.c.h.b16 %v258
        %v926 = vunpack.c.l.b16 %v259
        %v927 = vunpack.c.h.b16 %v259
        %v928 = vunpack.c.l.b16 %v260
        %v929 = vunpack.c.h.b16 %v260
        %v930 = vunpack.c.l.b16 %v261
        %v931 = vunpack.c.h.b16 %v261
        %v932 = vunpack.c.l.b16 %v262
        %v933 = vunpack.c.h.b16 %v262
        %v934 = vunpack.c.l.b16 %v263
        %v935 = vunpack.c.h.b16 %v263
        %v936 = vunpack.c.l.b16 %v264
        %v937 = vunpack.c.h.b16 %v264
        %v938 = vunpack.c.l.b16 %v265
        %v939 = vunpack.c.h.b16 %v265
        %v940 = vunpack.c.l.b16 %v266
        %v941 = vunpack.c.h.b16 %v266
        %v942 = vunpack.c.l.b16 %v267
        %v943 = vunpack.c.h.b16 %v267
        %v944 = vunpack.c.l.b16 %v268
        %v945 = vunpack.c.h.b16 %v268
        %v946 = vunpack.c.l.b16 %v269
        %v947 = vunpack.c.h.b16 %v269
        %v948 = vunpack.c.l.b16 %v270
        %v949 = vunpack.c.h.b16 %v270
        %v950 = vunpack.c.l.b16 %v271
        %v951 = vunpack.c.h.b16 %v271
        %v952 = vunpack.c.l.b16 %v272
        %v953 = vunpack.c.h.b16 %v272
        %v954 = vunpack.c.l.b16 %v273
        %v955 = vunpack.c.h.b16 %v273
        %v956 = vunpack.c.l.b16 %v274
        %v957 = vunpack.c.h.b16 %v274
        %v958 = vunpack.c.l.b16 %v275
        %v959 = vunpack.c.h.b16 %v275
        %v960 = vunpack.c.l.b16 %v276
        %v961 = vunpack.c.h.b16 %v276
        %v962 = vunpack.c.l.b16 %v277
        %v963 = vunpack.c.h.b16 %v277
        %v964 = vunpack.c.l.b16 %v278
        %v965 = vunpack.c.h.b16 %v278
        %v966 = vunpack.c.l.b16 %v279
        %v967 = vunpack.c.h.b16 %v279
        %v968 = vunpack.c.l.b16 %v280
        %v969 = vunpack.c.h.b16 %v280
        %v970 = vunpack.c.l.b16 %v281
        %v971 = vunpack.c.h.b16 %v281
        %v972 = vunpack.c.l.b16 %v282
        %v973 = vunpack.c.h.b16 %v282
        %v974 = vunpack.c.l.b16 %v283
        %v975 = vunpack.c.h.b16 %v283
        %v976 = vunpack.c.l.b16 %v284
        %v977 = vunpack.c.h.b16 %v284
        %v978 = vunpack.c.l.b16 %v285
        %v979 = vunpack.c.h.b16 %v285
        %v980 = vunpack.c.l.b16 %v286
        %v981 = vunpack.c.h.b16 %v286
        %v982 = vunpack.c.l.b16 %v287
        %v983 = vunpack.c.h.b16 %v287
        %v984 = vunpack.c.l.b16 %v288
        %v985 = vunpack.c.h.b16 %v288
        %v986 = vunpack.c.l.b16 %v289
        %v987 = vunpack.c.h.b16 %v289
        %v988 = vunpack.c.l.b16 %v290
        %v989 = vunpack.c.h.b16 %v290
        %v990 = vunpack.c.l.b16 %v291
        %v991 = vunpack.c.h.b16 %v291
        %v992 = vunpack.c.l.b16 %v292
        %v993 = vunpack.c.h.b16 %v292
        %v994 = vunpack.c.l.b16 %v293
        %v995 = vunpack.c.h.b16 %v293
        %v996 = vunpack.c.l.b16 %v294
        %v997 = vunpack.c.h.b16 %v294
        %v998 = vunpack.c.l.b16 %v295
        %v999 = vunpack.c.h.b16 %v295
        %v1000 = vunpack.c.l.b16 %v296
        %v1001 = vunpack.c.h.b16 %v296
        %v1002 = vunpack.c.l.b16 %v297
        %v1003 = vunpack.c.h.b16 %v297
        %v1004 = vunpack.c.l.b16 %v298
        %v1005 = vunpack.c.h.b16 %v298
        %v1006 = vunpack.c.l.b16 %v299
        %v1007 = vunpack.c.h.b16 %v299
        %v1008 = vunpack.c.l.b16 %v300
        %v1009 = vunpack.c.h.b16 %v300
        %v1010 = vunpack.c.l.b16 %v301
        %v1011 = vunpack.c.h.b16 %v301
        %v1012 = vunpack.c.l.b16 %v302
        %v1013 = vunpack.c.h.b16 %v302
        %v1014 = vunpack.c.l.b16 %v303
        %v1015 = vunpack.c.h.b16 %v303
        %v1016 = vunpack.c.l.b16 %v304
        %v1017 = vunpack.c.h.b16 %v304
        %v1018 = vunpack.c.l.b16 %v305
        %v1019 = vunpack.c.h.b16 %v305
        %v1020 = vunpack.c.l.b16 %v306
        %v1021 = vunpack.c.h.b16 %v306
        %v1022 = vunpack.c.l.b16 %v307
        %v1023 = vunpack.c.h.b16 %v307
        %v1024 = vunpack.c.l.b16 %v308
        %v1025 = vunpack.c.h.b16 %v308
        %v1026 = vunpack.c.l.b16 %v309
        %v1027 = vunpack.c.h.b16 %v309
        %v1028 = vunpack.c.l.b16 %v310
        %v1029 = vunpack.c.h.b16 %v310
        %v1030 = vunpack.c.l.b16 %v311
        %v1031 = vunpack.c.h.b16 %v311
        %v1032 = vunpack.c.l.b16 %v312
        %v1033 = vunpack.c.h.b16 %v312
        %v1034 = vunpack.c.l.b16 %v313
        %v1035 = vunpack.c.h.b16 %v313
        %v1036 = vunpack.c.l.b16 %v314
        %v1037 = vunpack.c.h.b16 %v314
        %v1038 = vunpack.c.l.b16 %v315
        %v1039 = vunpack.c.h.b16 %v315
        %v1040 = vunpack.c.l.b16 %v316
        %v1041 = vunpack.c.h.b16 %v316
        %v1042 = vunpack.c.l.b16 %v317
        %v1043 = vunpack.c.h.b16 %v317
        %v1044 = vunpack.c.l.b16 %v318
        %v1045 = vunpack.c.h.b16 %v318
        %v1046 = vunpack.c.l.b16 %v319
        %v1047 = vunpack.c.h.b16 %v319
        %v1048 = vunpack.c.l.b16 %v320
        %v1049 = vunpack.c.h.b16 %v320
        %v1050 = vunpack.c.l.b16 %v321
        %v1051 = vunpack.c.h.b16 %v321
        %v1052 = vunpack.c.l.b16 %v322
        %v1053 = vunpack.c.h.b16 %v322
        %v1054 = vunpack.c.l.b16 %v323
        %v1055 = vunpack.c.h.b16 %v323
        %v1056 = vunpack.c.l.b16 %v324
        %v1057 = vunpack.c.h.b16 %v324
        %v1058 = vunpack.c.l.b16 %v325
        %v1059 = vunpack.c.h.b16 %v325
        %v1060 = vunpack.c.l.b16 %v326
        %v1061 = vunpack.c.h.b16 %v326
        %v1062 = vunpack.c.l.b16 %v327
        %v1063 = vunpack.c.h.b16 %v327
        %v1064 = vunpack.c.l.b16 %v328
        %v1065 = vunpack.c.h.b16 %v328
        %v1066 = vunpack.c.l.b16 %v329
        %v1067 = vunpack.c.h.b16 %v329
        %v1068 = vunpack.c.l.b16 %v330
        %v1069 = vunpack.c.h.b16 %v330
        %v1070 = vunpack.c.l.b16 %v331
        %v1071 = vunpack.c.h.b16 %v331
        %v1072 = vunpack.c.l.b16 %v332
        %v1073 = vunpack.c.h.b16 %v332
        %v1074 = vunpack.c.l.b16 %v333
        %v1075 = vunpack.c.h.b16 %v333
        %v1076 = vunpack.c.l.b16 %v334
        %v1077 = vunpack.c.h.b16 %v334
        %v1078 = vunpack.c.l.b16 %v335
        %v1079 = vunpack.c.h.b16 %v335
        %v1080 = vunpack.c.l.b16 %v336
        %v1081 = vunpack.c.h.b16 %v336
        %v1082 = vunpack.c.l.b16 %v337
        %v1083 = vunpack.c.h.b16 %v337
        %v1084 = vunpack.c.l.b16 %v338
        %v1085 = vunpack.c.h.b16 %v338
        %v1086 = vunpack.c.l.b16 %v339
        %v1087 = vunpack.c.h.b16 %v339
        %v1088 = vunpack.c.l.b16 %v340
        %v1089 = vunpack.c.h.b16 %v340
        %v1090 = vunpack.c.l.b16 %v341
        %v1091 = vunpack.c.h.b16 %v341
        %v1092 = vunpack.c.l.b16 %v342
        %v1093 = vunpack.c.h.b16 %v342
        %v1094 = vunpack.c.l.b16 %v343
        %v1095 = vunpack.c.h.b16 %v343
        %v1096 = vunpack.c.l.b16 %v344
        %v1097 = vunpack.c.h.b16 %v344
        %v1098 = vunpack.c.l.b16 %v345
        %v1099 = vunpack.c.h.b16 %v345
        %v1100 = vunpack.c.l.b16 %v346
        %v1101 = vunpack.c.h.b16 %v346
        %v1102 = vunpack.c.l.b16 %v347
        %v1103 = vunpack.c.h.b16 %v347
        %v1104 = vunpack.c.l.b16 %v348
        %v1105 = vunpack.c.h.b16 %v348
        %v1106 = vunpack.c.l.b16 %v349
        %v1107 = vunpack.c.h.b16 %v349
        %v1108 = vunpack.c.l.b16 %v350
        %v1109 = vunpack.c.h.b16 %v350
        %v1110 = vunpack.c.l.b16 %v351
        %v1111 = vunpack.c.h.b16 %v351
        %v1112 = vunpack.c.l.b16 %v352
        %v1113 = vunpack.c.h.b16 %v352
        %v1114 = vunpack.c.l.b16 %v353
        %v1115 = vunpack.c.h.b16 %v353
        %v1116 = vunpack.c.l.b16 %v354
        %v1117 = vunpack.c.h.b16 %v354
        %v1118 = vunpack.c.l.b16 %v355
        %v1119 = vunpack.c.h.b16 %v355
        %v1120 = vunpack.c.l.b16 %v356
        %v1121 = vunpack.c.h.b16 %v356
        %v1122 = vunpack.c.l.b16 %v357
        %v1123 = vunpack.c.h.b16 %v357
        %v1124 = vunpack.c.l.b16 %v358
        %v1125 = vunpack.c.h.b16 %v358
        %v1126 = vunpack.c.l.b16 %v359
        %v1127 = vunpack.c.h.b16 %v359
        %v1128 = vunpack.c.l.b16 %v360
        %v1129 = vunpack.c.h.b16 %v360
        %v1130 = vunpack.c.l.b16 %v361
        %v1131 = vunpack.c.h.b16 %v361
        %v1132 = vunpack.c.l.b16 %v362
        %v1133 = vunpack.c.h.b16 %v362
        %v1134 = vunpack.c.l.b16 %v363
        %v1135 = vunpack.c.h.b16 %v363
        %v1136 = vunpack.c.l.b16 %v364
        %v1137 = vunpack.c.h.b16 %v364
        %v1138 = vunpack.c.l.b16 %v365
        %v1139 = vunpack.c.h.b16 %v365
        %v1140 = vunpack.c.l.b16 %v366
        %v1141 = vunpack.c.h.b16 %v366
        %v1142 = vunpack.c.l.b16 %v367
        %v1143 = vunpack.c.h.b16 %v367
        %v1144 = vunpack.c.l.b16 %v368
        %v1145 = vunpack.c.h.b16 %v368
        %v1146 = vunpack.c.l.b16 %v369
        %v1147 = vunpack.c.h.b16 %v369
        %v1148 = vunpack.c.l.b16 %v370
        %v1149 = vunpack.c.h.b16 %v370
        %v1150 = vunpack.c.l.b16 %v371
        %v1151 = vunpack.c.h.b16 %v371
        %v1152 = vunpack.c.l.b16 %v372
        %v1153 = vunpack.c.h.b16 %v372
        %v1154 = vunpack.c.l.b16 %v373
        %v1155 = vunpack.c.h.b16 %v373
        %v1156 = vunpack.c.l.b16 %v374
        %v1157 = vunpack.c.h.b16 %v374
        %v1158 = vunpack.c.l.b16 %v375
        %v1159 = vunpack.c.h.b16 %v375
        %v1160 = vunpack.c.l.b16 %v376
        %v1161 = vunpack.c.h.b16 %v376
        %v1162 = vunpack.c.l.b16 %v377
        %v1163 = vunpack.c.h.b16 %v377
        %v1164 = vunpack.c.l.b16 %v378
        %v1165 = vunpack.c.h.b16 %v378
        %v1166 = vunpack.c.l.b16 %v379
        %v1167 = vunpack.c.h.b16 %v379
        %v1168 = vunpack.c.l.b16 %v380
        %v1169 = vunpack.c.h.b16 %v380
        %v1170 = vunpack.c.l.b16 %v381
        %v1171 = vunpack.c.h.b16 %v381
        %v1172 = vunpack.c.l.b16 %v382
        %v1173 = vunpack.c.h.b16 %v382
        %v1174 = vunpack.c.l.b16 %v383
        %v1175 = vunpack.c.h.b16 %v383
        %v1176 = vunpack.c.l.b16 %v384
        %v1177 = vunpack.c.h.b16 %v384
        %v1178 = vunpack.c.l.b16 %v385
        %v1179 = vunpack.c.h.b16 %v385
        %v1180 = vunpack.c.l.b16 %v386
        %v1181 = vunpack.c.h.b16 %v386
        %v1182 = vunpack.c.l.b16 %v387
        %v1183 = vunpack.c.h.b16 %v387
        %v1184 = vunpack.c.l.b16 %v388
        %v1185 = vunpack.c.h.b16 %v388
        %v1186 = vunpack.c.l.b16 %v389
        %v1187 = vunpack.c.h.b16 %v389
        %v1188 = vunpack.c.l.b16 %v390
        %v1189 = vunpack.c.h.b16 %v390
        %v1190 = vunpack.c.l.b16 %v391
        %v1191 = vunpack.c.h.b16 %v391
        %v1192 = vunpack.c.l.b16 %v392
        %v1193 = vunpack.c.h.b16 %v392
        %v1194 = vunpack.c.l.b16 %v393
        %v1195 = vunpack.c.h.b16 %v393
        %v1196 = vunpack.c.l.b16 %v394
        %v1197 = vunpack.c.h.b16 %v394
        %v1198 = vunpack.c.l.b16 %v395
        %v1199 = vunpack.c.h.b16 %v395
        %v1200 = vunpack.c.l.b16 %v396
        %v1201 = vunpack.c.h.b16 %v396
        %v1202 = vunpack.c.l.b16 %v397
        %v1203 = vunpack.c.h.b16 %v397
        %v1204 = vunpack.c.l.b16 %v398
        %v1205 = vunpack.c.h.b16 %v398
        %v1206 = vunpack.c.l.b16 %v399
        %v1207 = vunpack.c.h.b16 %v399
        %v1208 = vunpack.c.l.b16 %v400
        %v1209 = vunpack.c.h.b16 %v400
        %v1210 = vunpack.c.l.b16 %v401
        %v1211 = vunpack.c.h.b16 %v401
        %v1212 = vunpack.c.l.b16 %v402
        %v1213 = vunpack.c.h.b16 %v402
        %v1214 = vunpack.c.l.b16 %v403
        %v1215 = vunpack.c.h.b16 %v403
        %v1216 = vunpack.c.l.b16 %v404
        %v1217 = vunpack.c.h.b16 %v404
        %v1218 = vunpack.c.l.b16 %v405
        %v1219 = vunpack.c.h.b16 %v405
        %v1220 = vunpack.c.l.b16 %v406
        %v1221 = vunpack.c.h.b16 %v406
        %v1222 = vunpack.c.l.b16 %v407
        %v1223 = vunpack.c.h.b16 %v407
        %v1224 = vunpack.c.l.b16 %v408
        %v1225 = vunpack.c.h.b16 %v408
        %v1226 = vunpack.c.l.b16 %v409
        %v1227 = vunpack.c.h.b16 %v409
        %v1228 = vunpack.c.l.b16 %v410
        %v1229 = vunpack.c.h.b16 %v410
        %v1230 = vunpack.c.l.b16 %v411
        %v1231 = vunpack.c.h.b16 %v411
        %v1232 = vunpack.c.l.b16 %v412
        %v1233 = vunpack.c.h.b16 %v412
        %v1234 = vunpack.c.l.b16 %v413
        %v1235 = vunpack.c.h.b16 %v413
        %v1236 = vunpack.c.l.b16 %v414
        %v1237 = vunpack.c.h.b16 %v414
        %v1238 = vunpack.c.l.b16 %v415
        %v1239 = vunpack.c.h.b16 %v415
        %v1240 = vunpack.c.l.b16 %v416
        %v1241 = vunpack.c.h.b16 %v416
        %v1242 = vunpack.c.l.b16 %v417
        %v1243 = vunpack.c.h.b16 %v417
        %v1244 = vunpack.c.l.b16 %v418
        %v1245 = vunpack.c.h.b16 %v418
        %v1246 = vunpack.c.l.b16 %v419
        %v1247 = vunpack.c.h.b16 %v419
        %v1248 = vunpack.c.l.b16 %v420
        %v1249 = vunpack.c.h.b16 %v420
        %v1250 = vunpack.c.l.b16 %v421
        %v1251 = vunpack.c.h.b16 %v421
        %v1252 = vunpack.c.l.b16 %v422
        %v1253 = vunpack.c.h.b16 %v422
        %v1254 = vunpack.c.l.b16 %v423
        %v1255 = vunpack.c.h.b16 %v423
        %v1256 = vunpack.c.l.b16 %v424
        %v1257 = vunpack.c.h.b16 %v424
        %v1258 = vunpack.c.l.b16 %v425
        %v1259 = vunpack.c.h.b16 %v425
        %v1260 = vunpack.c.l.b16 %v426
        %v1261 = vunpack.c.h.b16 %v426
        %v1262 = vunpack.c.l.b16 %v427
        %v1263 = vunpack.c.h.b16 %v427
        %v1264 = vunpack.c.l.b16 %v428
        %v1265 = vunpack.c.h.b16 %v428
        %v1266 = vunpack.c.l.b16 %v429
        %v1267 = vunpack.c.h.b16 %v429
        %v1268 = vunpack.c.l.b16 %v430
        %v1269 = vunpack.c.h.b16 %v430
        %v1270 = vunpack.c.l.b16 %v431
        %v1271 = vunpack.c.h.b16 %v431
        %v1272 = vunpack.c.l.b16 %v432
        %v1273 = vunpack.c.h.b16 %v432
        %v1274 = vunpack.c.l.b16 %v433
        %v1275 = vunpack.c.h.b16 %v433
        %v1276 = vunpack.c.l.b16 %v434
        %v1277 = vunpack.c.h.b16 %v434
        %v1278 = vunpack.c.l.b16 %v435
        %v1279 = vunpack.c.h.b16 %v435
        %v1280 = vunpack.c.l.b16 %v436
        %v1281 = vunpack.c.h.b16 %v436
        %v1282 = vunpack.c.l.b16 %v437
        %v1283 = vunpack.c.h.b16 %v437
        %v1284 = vunpack.c.l.b16 %v438
        %v1285 = vunpack.c.h.b16 %v438
        %v1286 = vunpack.c.l.b16 %v439
        %v1287 = vunpack.c.h.b16 %v439
        %v1288 = vunpack.c.l.b16 %v440
        %v1289 = vunpack.c.h.b16 %v440
        %v1290 = vunpack.c.l.b16 %v441
        %v1291 = vunpack.c.h.b16 %v441
        %v1292 = vunpack.c.l.b16 %v442
        %v1293 = vunpack.c.h.b16 %v442
        %v1294 = vunpack.c.l.b16 %v443
        %v1295 = vunpack.c.h.b16 %v443
        %v1296 = vunpack.c.l.b16 %v444
        %v1297 = vunpack.c.h.b16 %v444
        %v1298 = vunpack.c.l.b16 %v445
        %v1299 = vunpack.c.h.b16 %v445
        %v1300 = vunpack.c.l.b16 %v446
        %v1301 = vunpack.c.h.b16 %v446
        %v1302 = vunpack.c.l.b16 %v447
        %v1303 = vunpack.c.h.b16 %v447
        %v1304 = vunpack.c.l.b16 %v448
        %v1305 = vunpack.c.h.b16 %v448
        %v1306 = vunpack.c.l.b16 %v449
        %v1307 = vunpack.c.h.b16 %v449
        %v1308 = vunpack.c.l.b16 %v450
        %v1309 = vunpack.c.h.b16 %v450
        %v1310 = vunpack.c.l.b16 %v451
        %v1311 = vunpack.c.h.b16 %v451
        %v1312 = vunpack.c.l.b16 %v452
        %v1313 = vunpack.c.h.b16 %v452
        %v1314 = vunpack.c.l.b16 %v453
        %v1315 = vunpack.c.h.b16 %v453
        %v1316 = vunpack.c.l.b16 %v454
        %v1317 = vunpack.c.h.b16 %v454
        %v1318 = vunpack.c.l.b16 %v455
        %v1319 = vunpack.c.h.b16 %v455
        %v1320 = vunpack.c.l.b16 %v456
        %v1321 = vunpack.c.h.b16 %v456
        %v1322 = vunpack.c.l.b16 %v457
        %v1323 = vunpack.c.h.b16 %v457
        %v1324 = vunpack.c.l.b16 %v458
        %v1325 = vunpack.c.h.b16 %v458
        %v1326 = vunpack.c.l.b16 %v459
        %v1327 = vunpack.c.h.b16 %v459
        %v1328 = vunpack.c.l.b16 %v460
        %v1329 = vunpack.c.h.b16 %v460
        %v1330 = vunpack.c.l.b16 %v461
        %v1331 = vunpack.c.h.b16 %v461
        %v1332 = vunpack.c.l.b16 %v462
        %v1333 = vunpack.c.h.b16 %v462
        %v1334 = vunpack.c.l.b16 %v463
        %v1335 = vunpack.c.h.b16 %v463
        %v1336 = vunpack.c.l.b16 %v464
        %v1337 = vunpack.c.h.b16 %v464
        %v1338 = vunpack.c.l.b16 %v465
        %v1339 = vunpack.c.h.b16 %v465
        %v1340 = vunpack.c.l.b16 %v466
        %v1341 = vunpack.c.h.b16 %v466
        %v1342 = vunpack.c.l.b16 %v467
        %v1343 = vunpack.c.h.b16 %v467
        %v1344 = vunpack.c.l.b16 %v468
        %v1345 = vunpack.c.h.b16 %v468
        %v1346 = vunpack.c.l.b16 %v469
        %v1347 = vunpack.c.h.b16 %v469
        %v1348 = vunpack.c.l.b16 %v470
        %v1349 = vunpack.c.h.b16 %v470
        %v1350 = vunpack.c.l.b16 %v471
        %v1351 = vunpack.c.h.b16 %v471
        %v1352 = vunpack.c.l.b16 %v472
        %v1353 = vunpack.c.h.b16 %v472
        %v1354 = vunpack.c.l.b16 %v473
        %v1355 = vunpack.c.h.b16 %v473
        %v1356 = vunpack.c.l.b16 %v474
        %v1357 = vunpack.c.h.b16 %v474
        %v1358 = vunpack.c.l.b16 %v475
        %v1359 = vunpack.c.h.b16 %v475
        %v1360 = vunpack.c.l.b16 %v476
        %v1361 = vunpack.c.h.b16 %v476
        %v1362 = vunpack.c.l.b16 %v477
        %v1363 = vunpack.c.h.b16 %v477
        %v1364 = vunpack.c.l.b16 %v478
        %v1365 = vunpack.c.h.b16 %v478
        %v1366 = vunpack.c.l.b16 %v479
        %v1367 = vunpack.c.h.b16 %v479
        %v1368 = vunpack.c.l.b16 %v480
        %v1369 = vunpack.c.h.b16 %v480
        %v1370 = vunpack.c.l.b16 %v481
        %v1371 = vunpack.c.h.b16 %v481
        %v1372 = vunpack.c.l.b16 %v482
        %v1373 = vunpack.c.h.b16 %v482
        %v1374 = vunpack.c.l.b16 %v483
        %v1375 = vunpack.c.h.b16 %v483
        %v1376 = vunpack.c.l.b16 %v484
        %v1377 = vunpack.c.h.b16 %v484
        %v1378 = vunpack.c.l.b16 %v485
        %v1379 = vunpack.c.h.b16 %v485
        %v1380 = vunpack.c.l.b16 %v486
        %v1381 = vunpack.c.h.b16 %v486
        %v1382 = vunpack.c.l.b16 %v487
        %v1383 = vunpack.c.h.b16 %v487
        %v1384 = vunpack.c.l.b16 %v488
        %v1385 = vunpack.c.h.b16 %v488
        %v1386 = vunpack.c.l.b16 %v489
        %v1387 = vunpack.c.h.b16 %v489
        %v1388 = vunpack.c.l.b16 %v490
        %v1389 = vunpack.c.h.b16 %v490
        %v1390 = vunpack.c.l.b16 %v491
        %v1391 = vunpack.c.h.b16 %v491
        %v1392 = vunpack.c.l.b16 %v492
        %v1393 = vunpack.c.h.b16 %v492
        %v1394 = vunpack.c.l.b16 %v493
        %v1395 = vunpack.c.h.b16 %v493
        %v1396 = vunpack.c.l.b16 %v494
        %v1397 = vunpack.c.h.b16 %v494
        %v1398 = vunpack.c.l.b16 %v495
        %v1399 = vunpack.c.h.b16 %v495
        %v1400 = vunpack.c.l.b16 %v496
        %v1401 = vunpack.c.h.b16 %v496
        %v1402 = vunpack.c.l.b16 %v497
        %v1403 = vunpack.c.h.b16 %v497
        %v1404 = vunpack.c.l.b16 %v498
        %v1405 = vunpack.c.h.b16 %v498
        %v1406 = vunpack.c.l.b16 %v499
        %v1407 = vunpack.c.h.b16 %v499
        %v1408 = vunpack.c.l.b16 %v500
        %v1409 = vunpack.c.h.b16 %v500
        %v1410 = vunpack.c.l.b16 %v501
        %v1411 = vunpack.c.h.b16 %v501
        %v1412 = vunpack.c.l.b16 %v502
        %v1413 = vunpack.c.h.b16 %v502
        %v1414 = vunpack.c.l.b16 %v503
        %v1415 = vunpack.c.h.b16 %v503
        %v1416 = vunpack.c.l.b16 %v504
        %v1417 = vunpack.c.h.b16 %v504
        %v1418 = vunpack.c.l.b16 %v505
        %v1419 = vunpack.c.h.b16 %v505
        %v1420 = vunpack.c.l.b16 %v506
        %v1421 = vunpack.c.h.b16 %v506
        %v1422 = vunpack.c.l.b16 %v507
        %v1423 = vunpack.c.h.b16 %v507
        %v1424 = vunpack.c.l.b16 %v508
        %v1425 = vunpack.c.h.b16 %v508
        %v1426 = vunpack.c.l.b16 %v509
        %v1427 = vunpack.c.h.b16 %v509
        %v1428 = vunpack.c.l.b16 %v510
        %v1429 = vunpack.c.h.b16 %v510
        %v1430 = vunpack.c.l.b16 %v511
        %v1431 = vunpack.c.h.b16 %v511
        %v1432 = vunpack.c.l.b16 %v512
        %v1433 = vunpack.c.h.b16 %v512
        %v1434 = vunpack.c.l.b16 %v513
        %v1435 = vunpack.c.h.b16 %v513
        %v1436 = vunpack.c.l.b16 %v514
        %v1437 = vunpack.c.h.b16 %v514
        %v1438 = vunpack.c.l.b16 %v515
        %v1439 = vunpack.c.h.b16 %v515
        %v1440 = vunpack.c.l.b16 %v516
        %v1441 = vunpack.c.h.b16 %v516
        %v1442 = vunpack.c.l.b16 %v517
        %v1443 = vunpack.c.h.b16 %v517
        %v1444 = vunpack.c.l.b16 %v518
        %v1445 = vunpack.c.h.b16 %v518
        %v1446 = vunpack.c.l.b16 %v519
        %v1447 = vunpack.c.h.b16 %v519
        %v1448 = vunpack.c.l.b16 %v520
        %v1449 = vunpack.c.h.b16 %v520
        %v1450 = vunpack.c.l.b16 %v521
        %v1451 = vunpack.c.h.b16 %v521
        %v1452 = vunpack.c.l.b16 %v522
        %v1453 = vunpack.c.h.b16 %v522
        %v1454 = vunpack.c.l.b16 %v523
        %v1455 = vunpack.c.h.b16 %v523
        %v1456 = vunpack.c.l.b16 %v524
        %v1457 = vunpack.c.h.b16 %v524
        %v1458 = vunpack.c.l.b16 %v525
        %v1459 = vunpack.c.h.b16 %v525
        %v1460 = vunpack.c.l.b16 %v526
        %v1461 = vunpack.c.h.b16 %v526
        %v1462 = vunpack.c.l.b16 %v527
        %v1463 = vunpack.c.h.b16 %v527
        %v1464 = vunpack.c.l.b16 %v528
        %v1465 = vunpack.c.h.b16 %v528
        %v1466 = vunpack.c.l.b16 %v529
        %v1467 = vunpack.c.h.b16 %v529
        %v1468 = vunpack.c.l.b16 %v530
        %v1469 = vunpack.c.h.b16 %v530
        %v1470 = vunpack.c.l.b16 %v531
        %v1471 = vunpack.c.h.b16 %v531
        %v1472 = vunpack.c.l.b16 %v532
        %v1473 = vunpack.c.h.b16 %v532
        %v1474 = vunpack.c.l.b16 %v533
        %v1475 = vunpack.c.h.b16 %v533
        %v1476 = vunpack.c.l.b16 %v534
        %v1477 = vunpack.c.h.b16 %v534
        %v1478 = vunpack.c.l.b16 %v535
        %v1479 = vunpack.c.h.b16 %v535
        %v1480 = vunpack.c.l.b16 %v536
        %v1481 = vunpack.c.h.b16 %v536
        %v1482 = vunpack.c.l.b16 %v537
        %v1483 = vunpack.c.h.b16 %v537
        %v1484 = vunpack.c.l.b16 %v538
        %v1485 = vunpack.c.h.b16 %v538
        %v1486 = vunpack.c.l.b16 %v539
        %v1487 = vunpack.c.h.b16 %v539
        %v1488 = vunpack.c.l.b16 %v540
        %v1489 = vunpack.c.h.b16 %v540
        %v1490 = vunpack.c.l.b16 %v541
        %v1491 = vunpack.c.h.b16 %v541
        %v1492 = vunpack.c.l.b16 %v542
        %v1493 = vunpack.c.h.b16 %v542
        %v1494 = vunpack.c.l.b16 %v543
        %v1495 = vunpack.c.h.b16 %v543
        %v1496 = vunpack.c.l.b16 %v544
        %v1497 = vunpack.c.h.b16 %v544
        %v1498 = vunpack.c.l.b16 %v545
        %v1499 = vunpack.c.h.b16 %v545
        %v1500 = vunpack.c.l.b16 %v546
        %v1501 = vunpack.c.h.b16 %v546
        %v1502 = vunpack.c.l.b16 %v547
        %v1503 = vunpack.c.h.b16 %v547
        %v1504 = vunpack.c.l.b16 %v548
        %v1505 = vunpack.c.h.b16 %v548
        %v1506 = vunpack.c.l.b16 %v549
        %v1507 = vunpack.c.h.b16 %v549
        %v1508 = vunpack.c.l.b16 %v550
        %v1509 = vunpack.c.h.b16 %v550
        %v1510 = vunpack.c.l.b16 %v551
        %v1511 = vunpack.c.h.b16 %v551
        %v1512 = vunpack.c.l.b16 %v552
        %v1513 = vunpack.c.h.b16 %v552
        %v1514 = vunpack.c.l.b16 %v553
        %v1515 = vunpack.c.h.b16 %v553
        %v1516 = vunpack.c.l.b16 %v554
        %v1517 = vunpack.c.h.b16 %v554
        %v1518 = vunpack.c.l.b16 %v555
        %v1519 = vunpack.c.h.b16 %v555
        %v1520 = vunpack.c.l.b16 %v556
        %v1521 = vunpack.c.h.b16 %v556
        %v1522 = vunpack.c.l.b16 %v557
        %v1523 = vunpack.c.h.b16 %v557
        %v1524 = vunpack.c.l.b16 %v558
        %v1525 = vunpack.c.h.b16 %v558
        %v1526 = vunpack.c.l.b16 %v559
        %v1527 = vunpack.c.h.b16 %v559
        %v1528 = vunpack.c.l.b16 %v560
        %v1529 = vunpack.c.h.b16 %v560
        %v1530 = vunpack.c.l.b16 %v561
        %v1531 = vunpack.c.h.b16 %v561
        %v1532 = vunpack.c.l.b16 %v562
        %v1533 = vunpack.c.h.b16 %v562
        %v1534 = vunpack.c.l.b16 %v563
        %v1535 = vunpack.c.h.b16 %v563
        %v1536 = vpack.c.b16 %v904, %v896
        %v1537 = vpack.c.b16 %v905, %v897
        %v1538 = vpack.c.b16 %v906, %v898
        %v1539 = vpack.c.b16 %v907, %v899
        %v1540 = vpack.c.b16 %v908, %v900
        %v1541 = vpack.c.b16 %v909, %v901
        %v1542 = vpack.c.b16 %v910, %v902
        %v1543 = vpack.c.b16 %v911, %v903
        %v1544 = vpack.c.b16 %v920, %v912
        %v1545 = vpack.c.b16 %v921, %v913
        %v1546 = vpack.c.b16 %v922, %v914
        %v1547 = vpack.c.b16 %v923, %v915
        %v1548 = vpack.c.b16 %v924, %v916
        %v1549 = vpack.c.b16 %v925, %v917
        %v1550 = vpack.c.b16 %v926, %v918
        %v1551 = vpack.c.b16 %v927, %v919
        %v1552 = vpack.c.b16 %v936, %v928
        %v1553 = vpack.c.b16 %v937, %v929
        %v1554 = vpack.c.b16 %v938, %v930
        %v1555 = vpack.c.b16 %v939, %v931
        %v1556 = vpack.c.b16 %v940, %v932
        %v1557 = vpack.c.b16 %v941, %v933
        %v1558 = vpack.c.b16 %v942, %v934
        %v1559 = vpack.c.b16 %v943, %v935
        %v1560 = vpack.c.b16 %v952, %v944
        %v1561 = vpack.c.b16 %v953, %v945
        %v1562 = vpack.c.b16 %v954, %v946
        %v1563 = vpack.c.b16 %v955, %v947
        %v1564 = vpack.c.b16 %v956, %v948
        %v1565 = vpack.c.b16 %v957, %v949
        %v1566 = vpack.c.b16 %v958, %v950
        %v1567 = vpack.c.b16 %v959, %v951
        %v1568 = vpack.c.b16 %v968, %v960
        %v1569 = vpack.c.b16 %v969, %v961
        %v1570 = vpack.c.b16 %v970, %v962
        %v1571 = vpack.c.b16 %v971, %v963
        %v1572 = vpack.c.b16 %v972, %v964
        %v1573 = vpack.c.b16 %v973, %v965
        %v1574 = vpack.c.b16 %v974, %v966
        %v1575 = vpack.c.b16 %v975, %v967
        %v1576 = vpack.c.b16 %v984, %v976
        %v1577 = vpack.c.b16 %v985, %v977
        %v1578 = vpack.c.b16 %v986, %v978
        %v1579 = vpack.c.b16 %v987, %v979
        %v1580 = vpack.c.b16 %v988, %v980
        %v1581 = vpack.c.b16 %v989, %v981
        %v1582 = vpack.c.b16 %v990, %v982
        %v1583 = vpack.c.b16 %v991, %v983
        %v1584 = vpack.c.b16 %v1000, %v992
        %v1585 = vpack.c.b16 %v1001, %v993
        %v1586 = vpack.c.b16 %v1002, %v994
        %v1587 = vpack.c.b16 %v1003, %v995
        %v1588 = vpack.c.b16 %v1004, %v996
        %v1589 = vpack.c.b16 %v1005, %v997
        %v1590 = vpack.c.b16 %v1006, %v998
        %v1591 = vpack.c.b16 %v1007, %v999
        %v1592 = vpack.c.b16 %v1016, %v1008
        %v1593 = vpack.c.b16 %v1017, %v1009
        %v1594 = vpack.c.b16 %v1018, %v1010
        %v1595 = vpack.c.b16 %v1019, %v1011
        %v1596 = vpack.c.b16 %v1020, %v1012
        %v1597 = vpack.c.b16 %v1021, %v1013
        %v1598 = vpack.c.b16 %v1022, %v1014
        %v1599 = vpack.c.b16 %v1023, %v1015
        %v1600 = vpack.c.b16 %v1032, %v1024
        %v1601 = vpack.c.b16 %v1033, %v1025
        %v1602 = vpack.c.b16 %v1034, %v1026
        %v1603 = vpack.c.b16 %v1035, %v1027
        %v1604 = vpack.c.b16 %v1036, %v1028
        %v1605 = vpack.c.b16 %v1037, %v1029
        %v1606 = vpack.c.b16 %v1038, %v1030
        %v1607 = vpack.c.b16 %v1039, %v1031
        %v1608 = vpack.c.b16 %v1048, %v1040
        %v1609 = vpack.c.b16 %v1049, %v1041
        %v1610 = vpack.c.b16 %v1050, %v1042
        %v1611 = vpack.c.b16 %v1051, %v1043
        %v1612 = vpack.c.b16 %v1052, %v1044
        %v1613 = vpack.c.b16 %v1053, %v1045
        %v1614 = vpack.c.b16 %v1054, %v1046
        %v1615 = vpack.c.b16 %v1055, %v1047
        %v1616 = vpack.c.b16 %v1064, %v1056
        %v1617 = vpack.c.b16 %v1065, %v1057
        %v1618 = vpack.c.b16 %v1066, %v1058
        %v1619 = vpack.c.b16 %v1067, %v1059
        %v1620 = vpack.c.b16 %v1068, %v1060
        %v1621 = vpack.c.b16 %v1069, %v1061
        %v1622 = vpack.c.b16 %v1070, %v1062
        %v1623 = vpack.c.b16 %v1071, %v1063
        %v1624 = vpack.c.b16 %v1080, %v1072
        %v1625 = vpack.c.b16 %v1081, %v1073
        %v1626 = vpack.c.b16 %v1082, %v1074
        %v1627 = vpack.c.b16 %v1083, %v1075
        %v1628 = vpack.c.b16 %v1084, %v1076
        %v1629 = vpack.c.b16 %v1085, %v1077
        %v1630 = vpack.c.b16 %v1086, %v1078
        %v1631 = vpack.c.b16 %v1087, %v1079
        %v1632 = vpack.c.b16 %v1096, %v1088
        %v1633 = vpack.c.b16 %v1097, %v1089
        %v1634 = vpack.c.b16 %v1098, %v1090
        %v1635 = vpack.c.b16 %v1099, %v1091
        %v1636 = vpack.c.b16 %v1100, %v1092
        %v1637 = vpack.c.b16 %v1101, %v1093
        %v1638 = vpack.c.b16 %v1102, %v1094
        %v1639 = vpack.c.b16 %v1103, %v1095
        %v1640 = vpack.c.b16 %v1112, %v1104
        %v1641 = vpack.c.b16 %v1113, %v1105
        %v1642 = vpack.c.b16 %v1114, %v1106
        %v1643 = vpack.c.b16 %v1115, %v1107
        %v1644 = vpack.c.b16 %v1116, %v1108
        %v1645 = vpack.c.b16 %v1117, %v1109
        %v1646 = vpack.c.b16 %v1118, %v1110
        %v1647 = vpack.c.b16 %v1119, %v1111
        %v1648 = vpack.c.b16 %v1128, %v1120
        %v1649 = vpack.c.b16 %v1129, %v1121
        %v1650 = vpack.c.b16 %v1130, %v1122
        %v1651 = vpack.c.b16 %v1131, %v1123
        %v1652 = vpack.c.b16 %v1132, %v1124
        %v1653 = vpack.c.b16 %v1133, %v1125
        %v1654 = vpack.c.b16 %v1134, %v1126
        %v1655 = vpack.c.b16 %v1135, %v1127
        %v1656 = vpack.c.b16 %v1144, %v1136
        %v1657 = vpack.c.b16 %v1145, %v1137
        %v1658 = vpack.c.b16 %v1146, %v1138
        %v1659 = vpack.c.b16 %v1147, %v1139
        %v1660 = vpack.c.b16 %v1148, %v1140
        %v1661 = vpack.c.b16 %v1149, %v1141
        %v1662 = vpack.c.b16 %v1150, %v1142
        %v1663 = vpack.c.b16 %v1151, %v1143
        %v1664 = vpack.c.b16 %v1160, %v1152
        %v1665 = vpack.c.b16 %v1161, %v1153
        %v1666 = vpack.c.b16 %v1162, %v1154
        %v1667 = vpack.c.b16 %v1163, %v1155
        %v1668 = vpack.c.b16 %v1164, %v1156
        %v1669 = vpack.c.b16 %v1165, %v1157
        %v1670 = vpack.c.b16 %v1166, %v1158
        %v1671 = vpack.c.b16 %v1167, %v1159
        %v1672 = vpack.c.b16 %v1176, %v1168
        %v1673 = vpack.c.b16 %v1177, %v1169
        %v1674 = vpack.c.b16 %v1178, %v1170
        %v1675 = vpack.c.b16 %v1179, %v1171
        %v1676 = vpack.c.b16 %v1180, %v1172
        %v1677 = vpack.c.b16 %v1181, %v1173
        %v1678 = vpack.c.b16 %v1182, %v1174
        %v1679 = vpack.c.b16 %v1183, %v1175
        %v1680 = vpack.c.b16 %v1192, %v1184
        %v1681 = vpack.c.b16 %v1193, %v1185
        %v1682 = vpack.c.b16 %v1194, %v1186
        %v1683 = vpack.c.b16 %v1195, %v1187
        %v1684 = vpack.c.b16 %v1196, %v1188
        %v1685 = vpack.c.b16 %v1197, %v1189
        %v1686 = vpack.c.b16 %v1198, %v1190
        %v1687 = vpack.c.b16 %v1199, %v1191
        %v1688 = vpack.c.b16 %v1208, %v1200
        %v1689 = vpack.c.b16 %v1209, %v1201
        %v1690 = vpack.c.b16 %v1210, %v1202
        %v1691 = vpack.c.b16 %v1211, %v1203
        %v1692 = vpack.c.b16 %v1212, %v1204
        %v1693 = vpack.c.b16 %v1213, %v1205
        %v1694 = vpack.c.b16 %v1214, %v1206
        %v1695 = vpack.c.b16 %v1215, %v1207
        %v1696 = vpack.c.b16 %v1224, %v1216
        %v1697 = vpack.c.b16 %v1225, %v1217
        %v1698 = vpack.c.b16 %v1226, %v1218
        %v1699 = vpack.c.b16 %v1227, %v1219
        %v1700 = vpack.c.b16 %v1228, %v1220
        %v1701 = vpack.c.b16 %v1229, %v1221
        %v1702 = vpack.c.b16 %v1230, %v1222
        %v1703 = vpack.c.b16 %v1231, %v1223
        %v1704 = vpack.c.b16 %v1240, %v1232
        %v1705 = vpack.c.b16 %v1241, %v1233
        %v1706 = vpack.c.b16 %v1242, %v1234
        %v1707 = vpack.c.b16 %v1243, %v1235
        %v1708 = vpack.c.b16 %v1244, %v1236
        %v1709 = vpack.c.b16 %v1245, %v1237
        %v1710 = vpack.c.b16 %v1246, %v1238
        %v1711 = vpack.c.b16 %v1247, %v1239
        %v1712 = vpack.c.b16 %v1256, %v1248
        %v1713 = vpack.c.b16 %v1257, %v1249
        %v1714 = vpack.c.b16 %v1258, %v1250
        %v1715 = vpack.c.b16 %v1259, %v1251
        %v1716 = vpack.c.b16 %v1260, %v1252
        %v1717 = vpack.c.b16 %v1261, %v1253
        %v1718 = vpack.c.b16 %v1262, %v1254
        %v1719 = vpack.c.b16 %v1263, %v1255
        %v1720 = vpack.c.b16 %v1272, %v1264
        %v1721 = vpack.c.b16 %v1273, %v1265
        %v1722 = vpack.c.b16 %v1274, %v1266
        %v1723 = vpack.c.b16 %v1275, %v1267
        %v1724 = vpack.c.b16 %v1276, %v1268
        %v1725 = vpack.c.b16 %v1277, %v1269
        %v1726 = vpack.c.b16 %v1278, %v1270
        %v1727 = vpack.c.b16 %v1279, %v1271
        %v1728 = vpack.c.b16 %v1288, %v1280
        %v1729 = vpack.c.b16 %v1289, %v1281
        %v1730 = vpack.c.b16 %v1290, %v1282
        %v1731 = vpack.c.b16 %v1291, %v1283
        %v1732 = vpack.c.b16 %v1292, %v1284
        %v1733 = vpack.c.b16 %v1293, %v1285
        %v1734 = vpack.c.b16 %v1294, %v1286
        %v1735 = vpack.c.b16 %v1295, %v1287
        %v1736 = vpack.c.b16 %v1304, %v1296
        %v1737 = vpack.c.b16 %v1305, %v1297
        %v1738 = vpack.c.b16 %v1306, %v1298
        %v1739 = vpack.c.b16 %v1307, %v1299
        %v1740 = vpack.c.b16 %v1308, %v1300
        %v1741 = vpack.c.b16 %v1309, %v1301
        %v1742 = vpack.c.b16 %v1310, %v1302
        %v1743 = vpack.c.b16 %v1311, %v1303
        %v1744 = vpack.c.b16 %v1320, %v1312
        %v1745 = vpack.c.b16 %v1321, %v1313
        %v1746 = vpack.c.b16 %v1322, %v1314
        %v1747 = vpack.c.b16 %v1323, %v1315
        %v1748 = vpack.c.b16 %v1324, %v1316
        %v1749 = vpack.c.b16 %v1325, %v1317
        %v1750 = vpack.c.b16 %v1326, %v1318
        %v1751 = vpack.c.b16 %v1327, %v1319
        %v1752 = vpack.c.b16 %v1336, %v1328
        %v1753 = vpack.c.b16 %v1337, %v1329
        %v1754 = vpack.c.b16 %v1338, %v1330
        %v1755 = vpack.c.b16 %v1339, %v1331
        %v1756 = vpack.c.b16 %v1340, %v1332
        %v1757 = vpack.c.b16 %v1341, %v1333
        %v1758 = vpack.c.b16 %v1342, %v1334
        %v1759 = vpack.c.b16 %v1343, %v1335
        %v1760 = vpack.c.b16 %v1352, %v1344
        %v1761 = vpack.c.b16 %v1353, %v1345
        %v1762 = vpack.c.b16 %v1354, %v1346
        %v1763 = vpack.c.b16 %v1355, %v1347
        %v1764 = vpack.c.b16 %v1356, %v1348
        %v1765 = vpack.c.b16 %v1357, %v1349
        %v1766 = vpack.c.b16 %v1358, %v1350
        %v1767 = vpack.c.b16 %v1359, %v1351
        %v1768 = vpack.c.b16 %v1368, %v1360
        %v1769 = vpack.c.b16 %v1369, %v1361
        %v1770 = vpack.c.b16 %v1370, %v1362
        %v1771 = vpack.c.b16 %v1371, %v1363
        %v1772 = vpack.c.b16 %v1372, %v1364
        %v1773 = vpack.c.b16 %v1373, %v1365
        %v1774 = vpack.c.b16 %v1374, %v1366
        %v1775 = vpack.c.b16 %v1375, %v1367
        %v1776 = vpack.c.b16 %v1384, %v1376
        %v1777 = vpack.c.b16 %v1385, %v1377
        %v1778 = vpack.c.b16 %v1386, %v1378
        %v1779 = vpack.c.b16 %v1387, %v1379
        %v1780 = vpack.c.b16 %v1388, %v1380
        %v1781 = vpack.c.b16 %v1389, %v1381
        %v1782 = vpack.c.b16 %v1390, %v1382
        %v1783 = vpack.c.b16 %v1391, %v1383
        %v1784 = vpack.c.b16 %v1400, %v1392
        %v1785 = vpack.c.b16 %v1401, %v1393
        %v1786 = vpack.c.b16 %v1402, %v1394
        %v1787 = vpack.c.b16 %v1403, %v1395
        %v1788 = vpack.c.b16 %v1404, %v1396
        %v1789 = vpack.c.b16 %v1405, %v1397
        %v1790 = vpack.c.b16 %v1406, %v1398
        %v1791 = vpack.c.b16 %v1407, %v1399
        %v1792 = vpack.c.b16 %v1416, %v1408
        %v1793 = vpack.c.b16 %v1417, %v1409
        %v1794 = vpack.c.b16 %v1418, %v1410
        %v1795 = vpack.c.b16 %v1419, %v1411
        %v1796 = vpack.c.b16 %v1420, %v1412
        %v1797 = vpack.c.b16 %v1421, %v1413
        %v1798 = vpack.c.b16 %v1422, %v1414
        %v1799 = vpack.c.b16 %v1423, %v1415
        %v1800 = vpack.c.b16 %v1432, %v1424
        %v1801 = vpack.c.b16 %v1433, %v1425
        %v1802 = vpack.c.b16 %v1434, %v1426
        %v1803 = vpack.c.b16 %v1435, %v1427
        %v1804 = vpack.c.b16 %v1436, %v1428
        %v1805 = vpack.c.b16 %v1437, %v1429
        %v1806 = vpack.c.b16 %v1438, %v1430
        %v1807 = vpack.c.b16 %v1439, %v1431
        %v1808 = vpack.c.b16 %v1448, %v1440
        %v1809 = vpack.c.b16 %v1449, %v1441
        %v1810 = vpack.c.b16 %v1450, %v1442
        %v1811 = vpack.c.b16 %v1451, %v1443
        %v1812 = vpack.c.b16 %v1452, %v1444
        %v1813 = vpack.c.b16 %v1453, %v1445
        %v1814 = vpack.c.b16 %v1454, %v1446
        %v1815 = vpack.c.b16 %v1455, %v1447
        %v1816 = vpack.c.b16 %v1464, %v1456
        %v1817 = vpack.c.b16 %v1465, %v1457
        %v1818 = vpack.c.b16 %v1466, %v1458
        %v1819 = vpack.c.b16 %v1467, %v1459
        %v1820 = vpack.c.b16 %v1468, %v1460
        %v1821 = vpack.c.b16 %v1469, %v1461
        %v1822 = vpack.c.b16 %v1470, %v1462
        %v1823 = vpack.c.b16 %v1471, %v1463
        %v1824 = vpack.c.b16 %v1480, %v1472
        %v1825 = vpack.c.b16 %v1481, %v1473
        %v1826 = vpack.c.b16 %v1482, %v1474
        %v1827 = vpack.c.b16 %v1483, %v1475
        %v1828 = vpack.c.b16 %v1484, %v1476
        %v1829 = vpack.c.b16 %v1485, %v1477
        %v1830 = vpack.c.b16 %v1486, %v1478
        %v1831 = vpack.c.b16 %v1487, %v1479
        %v1832 = vpack.c.b16 %v1496, %v1488
        %v1833 = vpack.c.b16 %v1497, %v1489
        %v1834 = vpack.c.b16 %v1498, %v1490
        %v1835 = vpack.c.b16 %v1499, %v1491
        %v1836 = vpack.c.b16 %v1500, %v1492
        %v1837 = vpack.c.b16 %v1501, %v1493
        %v1838 = vpack.c.b16 %v1502, %v1494
        %v1839 = vpack.c.b16 %v1503, %v1495
        %v1840 = vpack.c.b16 %v1512, %v1504
        %v1841 = vpack.c.b16 %v1513, %v1505
        %v1842 = vpack.c.b16 %v1514, %v1506
        %v1843 = vpack.c.b16 %v1515, %v1507
        %v1844 = vpack.c.b16 %v1516, %v1508
        %v1845 = vpack.c.b16 %v1517, %v1509
        %v1846 = vpack.c.b16 %v1518, %v1510
        %v1847 = vpack.c.b16 %v1519, %v1511
        %v1848 = vpack.c.b16 %v1528, %v1520
        %v1849 = vpack.c.b16 %v1529, %v1521
        %v1850 = vpack.c.b16 %v1530, %v1522
        %v1851 = vpack.c.b16 %v1531, %v1523
        %v1852 = vpack.c.b16 %v1532, %v1524
        %v1853 = vpack.c.b16 %v1533, %v1525
        %v1854 = vpack.c.b16 %v1534, %v1526
        %v1855 = vpack.c.b16 %v1535, %v1527
        %2176 = vmatpush.bf16.msra.mxu0 %v1592
        %2177 = vmatpush.bf16.msra.mxu0 %v1584
        %2178 = vmatpush.bf16.msra.mxu0 %v1576
        %2179 = vmatpush.bf16.msra.mxu0 %v1568
        %2180 = vmatpush.bf16.msra.mxu0 %v1560
        %2181 = vmatpush.bf16.msra.mxu0 %v1552
        %2182 = vmatpush.bf16.msra.mxu0 %v1544
        %2183 = vmatpush.bf16.msra.mxu0 %v1536
        %2184 = vmatmul.bf16.gmra.mxu0 %v566
        %v2185 = vpop.f32.mrf.mxu0
        %v2186 = vadd.f32 0.0, %v2185
        %v2187 = vpop.f32.mrf.mxu0
        %2188 = vdwg.mxu0
        %2189 = vmatpush.bf16.msra.mxu0 %v1656
        %2190 = vmatpush.bf16.msra.mxu0 %v1648
        %2191 = vmatpush.bf16.msra.mxu0 %v1640
        %2192 = vmatpush.bf16.msra.mxu0 %v1632
        %2193 = vmatpush.bf16.msra.mxu0 %v1624
        %2194 = vmatpush.bf16.msra.mxu0 %v1616
        %2195 = vmatpush.bf16.msra.mxu0 %v1608
        %2196 = vmatpush.bf16.msra.mxu0 %v1600
        %2197 = vmatmul.bf16.gmra.mxu0 %v567
        %v2198 = vpop.f32.mrf.mxu0
        %v2199 = vadd.f32 %v2186, %v2198
        %v2200 = vpop.f32.mrf.mxu0
        %2201 = vdwg.mxu0
        %2202 = vmatpush.bf16.msra.mxu0 %v1720
        %2203 = vmatpush.bf16.msra.mxu0 %v1712
        %2204 = vmatpush.bf16.msra.mxu0 %v1704
        %2205 = vmatpush.bf16.msra.mxu0 %v1696
        %2206 = vmatpush.bf16.msra.mxu0 %v1688
        %2207 = vmatpush.bf16.msra.mxu0 %v1680
        %2208 = vmatpush.bf16.msra.mxu0 %v1672
        %2209 = vmatpush.bf16.msra.mxu0 %v1664
        %2210 = vmatmul.bf16.gmra.mxu0 %v568
        %v2211 = vpop.f32.mrf.mxu0
        %v2212 = vadd.f32 %v2199, %v2211
        %v2213 = vpop.f32.mrf.mxu0
        %2214 = vdwg.mxu0
        %2215 = vmatpush.bf16.msra.mxu0 %v1784
        %2216 = vmatpush.bf16.msra.mxu0 %v1776
        %2217 = vmatpush.bf16.msra.mxu0 %v1768
        %2218 = vmatpush.bf16.msra.mxu0 %v1760
        %2219 = vmatpush.bf16.msra.mxu0 %v1752
        %2220 = vmatpush.bf16.msra.mxu0 %v1744
        %2221 = vmatpush.bf16.msra.mxu0 %v1736
        %2222 = vmatpush.bf16.msra.mxu0 %v1728
        %2223 = vmatmul.bf16.gmra.mxu0 %v569
        %v2224 = vpop.f32.mrf.mxu0
        %v2225 = vadd.f32 %v2212, %v2224
        %v2226 = vpop.f32.mrf.mxu0
        %2227 = vdwg.mxu0
        %2228 = vmatpush.bf16.msra.mxu0 %v1848
        %2229 = vmatpush.bf16.msra.mxu0 %v1840
        %2230 = vmatpush.bf16.msra.mxu0 %v1832
        %2231 = vmatpush.bf16.msra.mxu0 %v1824
        %2232 = vmatpush.bf16.msra.mxu0 %v1816
        %2233 = vmatpush.bf16.msra.mxu0 %v1808
        %2234 = vmatpush.bf16.msra.mxu0 %v1800
        %2235 = vmatpush.bf16.msra.mxu0 %v1792
        %2236 = vmatmul.bf16.gmra.mxu0 %v570
        %v2237 = vpop.f32.mrf.mxu0
        %v2238 = vadd.f32 %v2225, %v2237
        %v2239 = vpop.f32.mrf.mxu0
        %2240 = vdwg.mxu0
        %2241 = vmatpush.bf16.msra.mxu0 %v1593
        %2242 = vmatpush.bf16.msra.mxu0 %v1585
        %2243 = vmatpush.bf16.msra.mxu0 %v1577
        %2244 = vmatpush.bf16.msra.mxu0 %v1569
        %2245 = vmatpush.bf16.msra.mxu0 %v1561
        %2246 = vmatpush.bf16.msra.mxu0 %v1553
        %2247 = vmatpush.bf16.msra.mxu0 %v1545
        %2248 = vmatpush.bf16.msra.mxu0 %v1537
        %2249 = vmatmul.bf16.gmra.mxu0 %v566
        %v2250 = vpop.f32.mrf.mxu0
        %v2251 = vadd.f32 0.0, %v2250
        %v2252 = vpop.f32.mrf.mxu0
        %2253 = vdwg.mxu0
        %2254 = vmatpush.bf16.msra.mxu0 %v1657
        %2255 = vmatpush.bf16.msra.mxu0 %v1649
        %2256 = vmatpush.bf16.msra.mxu0 %v1641
        %2257 = vmatpush.bf16.msra.mxu0 %v1633
        %2258 = vmatpush.bf16.msra.mxu0 %v1625
        %2259 = vmatpush.bf16.msra.mxu0 %v1617
        %2260 = vmatpush.bf16.msra.mxu0 %v1609
        %2261 = vmatpush.bf16.msra.mxu0 %v1601
        %2262 = vmatmul.bf16.gmra.mxu0 %v567
        %v2263 = vpop.f32.mrf.mxu0
        %v2264 = vadd.f32 %v2251, %v2263
        %v2265 = vpop.f32.mrf.mxu0
        %2266 = vdwg.mxu0
        %2267 = vmatpush.bf16.msra.mxu0 %v1721
        %2268 = vmatpush.bf16.msra.mxu0 %v1713
        %2269 = vmatpush.bf16.msra.mxu0 %v1705
        %2270 = vmatpush.bf16.msra.mxu0 %v1697
        %2271 = vmatpush.bf16.msra.mxu0 %v1689
        %2272 = vmatpush.bf16.msra.mxu0 %v1681
        %2273 = vmatpush.bf16.msra.mxu0 %v1673
        %2274 = vmatpush.bf16.msra.mxu0 %v1665
        %2275 = vmatmul.bf16.gmra.mxu0 %v568
        %v2276 = vpop.f32.mrf.mxu0
        %v2277 = vadd.f32 %v2264, %v2276
        %v2278 = vpop.f32.mrf.mxu0
        %2279 = vdwg.mxu0
        %2280 = vmatpush.bf16.msra.mxu0 %v1785
        %2281 = vmatpush.bf16.msra.mxu0 %v1777
        %2282 = vmatpush.bf16.msra.mxu0 %v1769
        %2283 = vmatpush.bf16.msra.mxu0 %v1761
        %2284 = vmatpush.bf16.msra.mxu0 %v1753
        %2285 = vmatpush.bf16.msra.mxu0 %v1745
        %2286 = vmatpush.bf16.msra.mxu0 %v1737
        %2287 = vmatpush.bf16.msra.mxu0 %v1729
        %2288 = vmatmul.bf16.gmra.mxu0 %v569
        %v2289 = vpop.f32.mrf.mxu0
        %v2290 = vadd.f32 %v2277, %v2289
        %v2291 = vpop.f32.mrf.mxu0
        %2292 = vdwg.mxu0
        %2293 = vmatpush.bf16.msra.mxu0 %v1849
        %2294 = vmatpush.bf16.msra.mxu0 %v1841
        %2295 = vmatpush.bf16.msra.mxu0 %v1833
        %2296 = vmatpush.bf16.msra.mxu0 %v1825
        %2297 = vmatpush.bf16.msra.mxu0 %v1817
        %2298 = vmatpush.bf16.msra.mxu0 %v1809
        %2299 = vmatpush.bf16.msra.mxu0 %v1801
        %2300 = vmatpush.bf16.msra.mxu0 %v1793
        %2301 = vmatmul.bf16.gmra.mxu0 %v570
        %v2302 = vpop.f32.mrf.mxu0
        %v2303 = vadd.f32 %v2290, %v2302
        %v2304 = vpop.f32.mrf.mxu0
        %2305 = vdwg.mxu0
        %2306 = vmatpush.bf16.msra.mxu0 %v1594
        %2307 = vmatpush.bf16.msra.mxu0 %v1586
        %2308 = vmatpush.bf16.msra.mxu0 %v1578
        %2309 = vmatpush.bf16.msra.mxu0 %v1570
        %2310 = vmatpush.bf16.msra.mxu0 %v1562
        %2311 = vmatpush.bf16.msra.mxu0 %v1554
        %2312 = vmatpush.bf16.msra.mxu0 %v1546
        %2313 = vmatpush.bf16.msra.mxu0 %v1538
        %2314 = vmatmul.bf16.gmra.mxu0 %v566
        %v2315 = vpop.f32.mrf.mxu0
        %v2316 = vadd.f32 0.0, %v2315
        %v2317 = vpop.f32.mrf.mxu0
        %2318 = vdwg.mxu0
        %2319 = vmatpush.bf16.msra.mxu0 %v1658
        %2320 = vmatpush.bf16.msra.mxu0 %v1650
        %2321 = vmatpush.bf16.msra.mxu0 %v1642
        %2322 = vmatpush.bf16.msra.mxu0 %v1634
        %2323 = vmatpush.bf16.msra.mxu0 %v1626
        %2324 = vmatpush.bf16.msra.mxu0 %v1618
        %2325 = vmatpush.bf16.msra.mxu0 %v1610
        %2326 = vmatpush.bf16.msra.mxu0 %v1602
        %2327 = vmatmul.bf16.gmra.mxu0 %v567
        %v2328 = vpop.f32.mrf.mxu0
        %v2329 = vadd.f32 %v2316, %v2328
        %v2330 = vpop.f32.mrf.mxu0
        %2331 = vdwg.mxu0
        %2332 = vmatpush.bf16.msra.mxu0 %v1722
        %2333 = vmatpush.bf16.msra.mxu0 %v1714
        %2334 = vmatpush.bf16.msra.mxu0 %v1706
        %2335 = vmatpush.bf16.msra.mxu0 %v1698
        %2336 = vmatpush.bf16.msra.mxu0 %v1690
        %2337 = vmatpush.bf16.msra.mxu0 %v1682
        %2338 = vmatpush.bf16.msra.mxu0 %v1674
        %2339 = vmatpush.bf16.msra.mxu0 %v1666
        %2340 = vmatmul.bf16.gmra.mxu0 %v568
        %v2341 = vpop.f32.mrf.mxu0
        %v2342 = vadd.f32 %v2329, %v2341
        %v2343 = vpop.f32.mrf.mxu0
        %2344 = vdwg.mxu0
        %2345 = vmatpush.bf16.msra.mxu0 %v1786
        %2346 = vmatpush.bf16.msra.mxu0 %v1778
        %2347 = vmatpush.bf16.msra.mxu0 %v1770
        %2348 = vmatpush.bf16.msra.mxu0 %v1762
        %2349 = vmatpush.bf16.msra.mxu0 %v1754
        %2350 = vmatpush.bf16.msra.mxu0 %v1746
        %2351 = vmatpush.bf16.msra.mxu0 %v1738
        %2352 = vmatpush.bf16.msra.mxu0 %v1730
        %2353 = vmatmul.bf16.gmra.mxu0 %v569
        %v2354 = vpop.f32.mrf.mxu0
        %v2355 = vadd.f32 %v2342, %v2354
        %v2356 = vpop.f32.mrf.mxu0
        %2357 = vdwg.mxu0
        %2358 = vmatpush.bf16.msra.mxu0 %v1850
        %2359 = vmatpush.bf16.msra.mxu0 %v1842
        %2360 = vmatpush.bf16.msra.mxu0 %v1834
        %2361 = vmatpush.bf16.msra.mxu0 %v1826
        %2362 = vmatpush.bf16.msra.mxu0 %v1818
        %2363 = vmatpush.bf16.msra.mxu0 %v1810
        %2364 = vmatpush.bf16.msra.mxu0 %v1802
        %2365 = vmatpush.bf16.msra.mxu0 %v1794
        %2366 = vmatmul.bf16.gmra.mxu0 %v570
        %v2367 = vpop.f32.mrf.mxu0
        %v2368 = vadd.f32 %v2355, %v2367
        %v2369 = vpop.f32.mrf.mxu0
        %2370 = vdwg.mxu0
        %2371 = vmatpush.bf16.msra.mxu0 %v1595
        %2372 = vmatpush.bf16.msra.mxu0 %v1587
        %2373 = vmatpush.bf16.msra.mxu0 %v1579
        %2374 = vmatpush.bf16.msra.mxu0 %v1571
        %2375 = vmatpush.bf16.msra.mxu0 %v1563
        %2376 = vmatpush.bf16.msra.mxu0 %v1555
        %2377 = vmatpush.bf16.msra.mxu0 %v1547
        %2378 = vmatpush.bf16.msra.mxu0 %v1539
        %2379 = vmatmul.bf16.gmra.mxu0 %v566
        %v2380 = vpop.f32.mrf.mxu0
        %v2381 = vadd.f32 0.0, %v2380
        %v2382 = vpop.f32.mrf.mxu0
        %2383 = vdwg.mxu0
        %2384 = vmatpush.bf16.msra.mxu0 %v1659
        %2385 = vmatpush.bf16.msra.mxu0 %v1651
        %2386 = vmatpush.bf16.msra.mxu0 %v1643
        %2387 = vmatpush.bf16.msra.mxu0 %v1635
        %2388 = vmatpush.bf16.msra.mxu0 %v1627
        %2389 = vmatpush.bf16.msra.mxu0 %v1619
        %2390 = vmatpush.bf16.msra.mxu0 %v1611
        %2391 = vmatpush.bf16.msra.mxu0 %v1603
        %2392 = vmatmul.bf16.gmra.mxu0 %v567
        %v2393 = vpop.f32.mrf.mxu0
        %v2394 = vadd.f32 %v2381, %v2393
        %v2395 = vpop.f32.mrf.mxu0
        %2396 = vdwg.mxu0
        %2397 = vmatpush.bf16.msra.mxu0 %v1723
        %2398 = vmatpush.bf16.msra.mxu0 %v1715
        %2399 = vmatpush.bf16.msra.mxu0 %v1707
        %2400 = vmatpush.bf16.msra.mxu0 %v1699
        %2401 = vmatpush.bf16.msra.mxu0 %v1691
        %2402 = vmatpush.bf16.msra.mxu0 %v1683
        %2403 = vmatpush.bf16.msra.mxu0 %v1675
        %2404 = vmatpush.bf16.msra.mxu0 %v1667
        %2405 = vmatmul.bf16.gmra.mxu0 %v568
        %v2406 = vpop.f32.mrf.mxu0
        %v2407 = vadd.f32 %v2394, %v2406
        %v2408 = vpop.f32.mrf.mxu0
        %2409 = vdwg.mxu0
        %2410 = vmatpush.bf16.msra.mxu0 %v1787
        %2411 = vmatpush.bf16.msra.mxu0 %v1779
        %2412 = vmatpush.bf16.msra.mxu0 %v1771
        %2413 = vmatpush.bf16.msra.mxu0 %v1763
        %2414 = vmatpush.bf16.msra.mxu0 %v1755
        %2415 = vmatpush.bf16.msra.mxu0 %v1747
        %2416 = vmatpush.bf16.msra.mxu0 %v1739
        %2417 = vmatpush.bf16.msra.mxu0 %v1731
        %2418 = vmatmul.bf16.gmra.mxu0 %v569
        %v2419 = vpop.f32.mrf.mxu0
        %v2420 = vadd.f32 %v2407, %v2419
        %v2421 = vpop.f32.mrf.mxu0
        %2422 = vdwg.mxu0
        %2423 = vmatpush.bf16.msra.mxu0 %v1851
        %2424 = vmatpush.bf16.msra.mxu0 %v1843
        %2425 = vmatpush.bf16.msra.mxu0 %v1835
        %2426 = vmatpush.bf16.msra.mxu0 %v1827
        %2427 = vmatpush.bf16.msra.mxu0 %v1819
        %2428 = vmatpush.bf16.msra.mxu0 %v1811
        %2429 = vmatpush.bf16.msra.mxu0 %v1803
        %2430 = vmatpush.bf16.msra.mxu0 %v1795
        %2431 = vmatmul.bf16.gmra.mxu0 %v570
        %v2432 = vpop.f32.mrf.mxu0
        %v2433 = vadd.f32 %v2420, %v2432
        %v2434 = vpop.f32.mrf.mxu0
        %2435 = vdwg.mxu0
        %2436 = vmatpush.bf16.msra.mxu0 %v1596
        %2437 = vmatpush.bf16.msra.mxu0 %v1588
        %2438 = vmatpush.bf16.msra.mxu0 %v1580
        %2439 = vmatpush.bf16.msra.mxu0 %v1572
        %2440 = vmatpush.bf16.msra.mxu0 %v1564
        %2441 = vmatpush.bf16.msra.mxu0 %v1556
        %2442 = vmatpush.bf16.msra.mxu0 %v1548
        %2443 = vmatpush.bf16.msra.mxu0 %v1540
        %2444 = vmatmul.bf16.gmra.mxu0 %v566
        %v2445 = vpop.f32.mrf.mxu0
        %v2446 = vadd.f32 0.0, %v2445
        %v2447 = vpop.f32.mrf.mxu0
        %2448 = vdwg.mxu0
        %2449 = vmatpush.bf16.msra.mxu0 %v1660
        %2450 = vmatpush.bf16.msra.mxu0 %v1652
        %2451 = vmatpush.bf16.msra.mxu0 %v1644
        %2452 = vmatpush.bf16.msra.mxu0 %v1636
        %2453 = vmatpush.bf16.msra.mxu0 %v1628
        %2454 = vmatpush.bf16.msra.mxu0 %v1620
        %2455 = vmatpush.bf16.msra.mxu0 %v1612
        %2456 = vmatpush.bf16.msra.mxu0 %v1604
        %2457 = vmatmul.bf16.gmra.mxu0 %v567
        %v2458 = vpop.f32.mrf.mxu0
        %v2459 = vadd.f32 %v2446, %v2458
        %v2460 = vpop.f32.mrf.mxu0
        %2461 = vdwg.mxu0
        %2462 = vmatpush.bf16.msra.mxu0 %v1724
        %2463 = vmatpush.bf16.msra.mxu0 %v1716
        %2464 = vmatpush.bf16.msra.mxu0 %v1708
        %2465 = vmatpush.bf16.msra.mxu0 %v1700
        %2466 = vmatpush.bf16.msra.mxu0 %v1692
        %2467 = vmatpush.bf16.msra.mxu0 %v1684
        %2468 = vmatpush.bf16.msra.mxu0 %v1676
        %2469 = vmatpush.bf16.msra.mxu0 %v1668
        %2470 = vmatmul.bf16.gmra.mxu0 %v568
        %v2471 = vpop.f32.mrf.mxu0
        %v2472 = vadd.f32 %v2459, %v2471
        %v2473 = vpop.f32.mrf.mxu0
        %2474 = vdwg.mxu0
        %2475 = vmatpush.bf16.msra.mxu0 %v1788
        %2476 = vmatpush.bf16.msra.mxu0 %v1780
        %2477 = vmatpush.bf16.msra.mxu0 %v1772
        %2478 = vmatpush.bf16.msra.mxu0 %v1764
        %2479 = vmatpush.bf16.msra.mxu0 %v1756
        %2480 = vmatpush.bf16.msra.mxu0 %v1748
        %2481 = vmatpush.bf16.msra.mxu0 %v1740
        %2482 = vmatpush.bf16.msra.mxu0 %v1732
        %2483 = vmatmul.bf16.gmra.mxu0 %v569
        %v2484 = vpop.f32.mrf.mxu0
        %v2485 = vadd.f32 %v2472, %v2484
        %v2486 = vpop.f32.mrf.mxu0
        %2487 = vdwg.mxu0
        %2488 = vmatpush.bf16.msra.mxu0 %v1852
        %2489 = vmatpush.bf16.msra.mxu0 %v1844
        %2490 = vmatpush.bf16.msra.mxu0 %v1836
        %2491 = vmatpush.bf16.msra.mxu0 %v1828
        %2492 = vmatpush.bf16.msra.mxu0 %v1820
        %2493 = vmatpush.bf16.msra.mxu0 %v1812
        %2494 = vmatpush.bf16.msra.mxu0 %v1804
        %2495 = vmatpush.bf16.msra.mxu0 %v1796
        %2496 = vmatmul.bf16.gmra.mxu0 %v570
        %v2497 = vpop.f32.mrf.mxu0
        %v2498 = vadd.f32 %v2485, %v2497
        %v2499 = vpop.f32.mrf.mxu0
        %2500 = vdwg.mxu0
        %2501 = vmatpush.bf16.msra.mxu0 %v1597
        %2502 = vmatpush.bf16.msra.mxu0 %v1589
        %2503 = vmatpush.bf16.msra.mxu0 %v1581
        %2504 = vmatpush.bf16.msra.mxu0 %v1573
        %2505 = vmatpush.bf16.msra.mxu0 %v1565
        %2506 = vmatpush.bf16.msra.mxu0 %v1557
        %2507 = vmatpush.bf16.msra.mxu0 %v1549
        %2508 = vmatpush.bf16.msra.mxu0 %v1541
        %2509 = vmatmul.bf16.gmra.mxu0 %v566
        %v2510 = vpop.f32.mrf.mxu0
        %v2511 = vadd.f32 0.0, %v2510
        %v2512 = vpop.f32.mrf.mxu0
        %2513 = vdwg.mxu0
        %2514 = vmatpush.bf16.msra.mxu0 %v1661
        %2515 = vmatpush.bf16.msra.mxu0 %v1653
        %2516 = vmatpush.bf16.msra.mxu0 %v1645
        %2517 = vmatpush.bf16.msra.mxu0 %v1637
        %2518 = vmatpush.bf16.msra.mxu0 %v1629
        %2519 = vmatpush.bf16.msra.mxu0 %v1621
        %2520 = vmatpush.bf16.msra.mxu0 %v1613
        %2521 = vmatpush.bf16.msra.mxu0 %v1605
        %2522 = vmatmul.bf16.gmra.mxu0 %v567
        %v2523 = vpop.f32.mrf.mxu0
        %v2524 = vadd.f32 %v2511, %v2523
        %v2525 = vpop.f32.mrf.mxu0
        %2526 = vdwg.mxu0
        %2527 = vmatpush.bf16.msra.mxu0 %v1725
        %2528 = vmatpush.bf16.msra.mxu0 %v1717
        %2529 = vmatpush.bf16.msra.mxu0 %v1709
        %2530 = vmatpush.bf16.msra.mxu0 %v1701
        %2531 = vmatpush.bf16.msra.mxu0 %v1693
        %2532 = vmatpush.bf16.msra.mxu0 %v1685
        %2533 = vmatpush.bf16.msra.mxu0 %v1677
        %2534 = vmatpush.bf16.msra.mxu0 %v1669
        %2535 = vmatmul.bf16.gmra.mxu0 %v568
        %v2536 = vpop.f32.mrf.mxu0
        %v2537 = vadd.f32 %v2524, %v2536
        %v2538 = vpop.f32.mrf.mxu0
        %2539 = vdwg.mxu0
        %2540 = vmatpush.bf16.msra.mxu0 %v1789
        %2541 = vmatpush.bf16.msra.mxu0 %v1781
        %2542 = vmatpush.bf16.msra.mxu0 %v1773
        %2543 = vmatpush.bf16.msra.mxu0 %v1765
        %2544 = vmatpush.bf16.msra.mxu0 %v1757
        %2545 = vmatpush.bf16.msra.mxu0 %v1749
        %2546 = vmatpush.bf16.msra.mxu0 %v1741
        %2547 = vmatpush.bf16.msra.mxu0 %v1733
        %2548 = vmatmul.bf16.gmra.mxu0 %v569
        %v2549 = vpop.f32.mrf.mxu0
        %v2550 = vadd.f32 %v2537, %v2549
        %v2551 = vpop.f32.mrf.mxu0
        %2552 = vdwg.mxu0
        %2553 = vmatpush.bf16.msra.mxu0 %v1853
        %2554 = vmatpush.bf16.msra.mxu0 %v1845
        %2555 = vmatpush.bf16.msra.mxu0 %v1837
        %2556 = vmatpush.bf16.msra.mxu0 %v1829
        %2557 = vmatpush.bf16.msra.mxu0 %v1821
        %2558 = vmatpush.bf16.msra.mxu0 %v1813
        %2559 = vmatpush.bf16.msra.mxu0 %v1805
        %2560 = vmatpush.bf16.msra.mxu0 %v1797
        %2561 = vmatmul.bf16.gmra.mxu0 %v570
        %v2562 = vpop.f32.mrf.mxu0
        %v2563 = vadd.f32 %v2550, %v2562
        %v2564 = vpop.f32.mrf.mxu0
        %2565 = vdwg.mxu0
        %2566 = vmatpush.bf16.msra.mxu0 %v1598
        %2567 = vmatpush.bf16.msra.mxu0 %v1590
        %2568 = vmatpush.bf16.msra.mxu0 %v1582
        %2569 = vmatpush.bf16.msra.mxu0 %v1574
        %2570 = vmatpush.bf16.msra.mxu0 %v1566
        %2571 = vmatpush.bf16.msra.mxu0 %v1558
        %2572 = vmatpush.bf16.msra.mxu0 %v1550
        %2573 = vmatpush.bf16.msra.mxu0 %v1542
        %2574 = vmatmul.bf16.gmra.mxu0 %v566
        %v2575 = vpop.f32.mrf.mxu0
        %v2576 = vadd.f32 0.0, %v2575
        %v2577 = vpop.f32.mrf.mxu0
        %2578 = vdwg.mxu0
        %2579 = vmatpush.bf16.msra.mxu0 %v1662
        %2580 = vmatpush.bf16.msra.mxu0 %v1654
        %2581 = vmatpush.bf16.msra.mxu0 %v1646
        %2582 = vmatpush.bf16.msra.mxu0 %v1638
        %2583 = vmatpush.bf16.msra.mxu0 %v1630
        %2584 = vmatpush.bf16.msra.mxu0 %v1622
        %2585 = vmatpush.bf16.msra.mxu0 %v1614
        %2586 = vmatpush.bf16.msra.mxu0 %v1606
        %2587 = vmatmul.bf16.gmra.mxu0 %v567
        %v2588 = vpop.f32.mrf.mxu0
        %v2589 = vadd.f32 %v2576, %v2588
        %v2590 = vpop.f32.mrf.mxu0
        %2591 = vdwg.mxu0
        %2592 = vmatpush.bf16.msra.mxu0 %v1726
        %2593 = vmatpush.bf16.msra.mxu0 %v1718
        %2594 = vmatpush.bf16.msra.mxu0 %v1710
        %2595 = vmatpush.bf16.msra.mxu0 %v1702
        %2596 = vmatpush.bf16.msra.mxu0 %v1694
        %2597 = vmatpush.bf16.msra.mxu0 %v1686
        %2598 = vmatpush.bf16.msra.mxu0 %v1678
        %2599 = vmatpush.bf16.msra.mxu0 %v1670
        %2600 = vmatmul.bf16.gmra.mxu0 %v568
        %v2601 = vpop.f32.mrf.mxu0
        %v2602 = vadd.f32 %v2589, %v2601
        %v2603 = vpop.f32.mrf.mxu0
        %2604 = vdwg.mxu0
        %2605 = vmatpush.bf16.msra.mxu0 %v1790
        %2606 = vmatpush.bf16.msra.mxu0 %v1782
        %2607 = vmatpush.bf16.msra.mxu0 %v1774
        %2608 = vmatpush.bf16.msra.mxu0 %v1766
        %2609 = vmatpush.bf16.msra.mxu0 %v1758
        %2610 = vmatpush.bf16.msra.mxu0 %v1750
        %2611 = vmatpush.bf16.msra.mxu0 %v1742
        %2612 = vmatpush.bf16.msra.mxu0 %v1734
        %2613 = vmatmul.bf16.gmra.mxu0 %v569
        %v2614 = vpop.f32.mrf.mxu0
        %v2615 = vadd.f32 %v2602, %v2614
        %v2616 = vpop.f32.mrf.mxu0
        %2617 = vdwg.mxu0
        %2618 = vmatpush.bf16.msra.mxu0 %v1854
        %2619 = vmatpush.bf16.msra.mxu0 %v1846
        %2620 = vmatpush.bf16.msra.mxu0 %v1838
        %2621 = vmatpush.bf16.msra.mxu0 %v1830
        %2622 = vmatpush.bf16.msra.mxu0 %v1822
        %2623 = vmatpush.bf16.msra.mxu0 %v1814
        %2624 = vmatpush.bf16.msra.mxu0 %v1806
        %2625 = vmatpush.bf16.msra.mxu0 %v1798
        %2626 = vmatmul.bf16.gmra.mxu0 %v570
        %v2627 = vpop.f32.mrf.mxu0
        %v2628 = vadd.f32 %v2615, %v2627
        %v2629 = vpop.f32.mrf.mxu0
        %2630 = vdwg.mxu0
        %2631 = vmatpush.bf16.msra.mxu0 %v1599
        %2632 = vmatpush.bf16.msra.mxu0 %v1591
        %2633 = vmatpush.bf16.msra.mxu0 %v1583
        %2634 = vmatpush.bf16.msra.mxu0 %v1575
        %2635 = vmatpush.bf16.msra.mxu0 %v1567
        %2636 = vmatpush.bf16.msra.mxu0 %v1559
        %2637 = vmatpush.bf16.msra.mxu0 %v1551
        %2638 = vmatpush.bf16.msra.mxu0 %v1543
        %2639 = vmatmul.bf16.gmra.mxu0 %v566
        %v2640 = vpop.f32.mrf.mxu0
        %v2641 = vadd.f32 0.0, %v2640
        %v2642 = vpop.f32.mrf.mxu0
        %2643 = vdwg.mxu0
        %2644 = vmatpush.bf16.msra.mxu0 %v1663
        %2645 = vmatpush.bf16.msra.mxu0 %v1655
        %2646 = vmatpush.bf16.msra.mxu0 %v1647
        %2647 = vmatpush.bf16.msra.mxu0 %v1639
        %2648 = vmatpush.bf16.msra.mxu0 %v1631
        %2649 = vmatpush.bf16.msra.mxu0 %v1623
        %2650 = vmatpush.bf16.msra.mxu0 %v1615
        %2651 = vmatpush.bf16.msra.mxu0 %v1607
        %2652 = vmatmul.bf16.gmra.mxu0 %v567
        %v2653 = vpop.f32.mrf.mxu0
        %v2654 = vadd.f32 %v2641, %v2653
        %v2655 = vpop.f32.mrf.mxu0
        %2656 = vdwg.mxu0
        %2657 = vmatpush.bf16.msra.mxu0 %v1727
        %2658 = vmatpush.bf16.msra.mxu0 %v1719
        %2659 = vmatpush.bf16.msra.mxu0 %v1711
        %2660 = vmatpush.bf16.msra.mxu0 %v1703
        %2661 = vmatpush.bf16.msra.mxu0 %v1695
        %2662 = vmatpush.bf16.msra.mxu0 %v1687
        %2663 = vmatpush.bf16.msra.mxu0 %v1679
        %2664 = vmatpush.bf16.msra.mxu0 %v1671
        %2665 = vmatmul.bf16.gmra.mxu0 %v568
        %v2666 = vpop.f32.mrf.mxu0
        %v2667 = vadd.f32 %v2654, %v2666
        %v2668 = vpop.f32.mrf.mxu0
        %2669 = vdwg.mxu0
        %2670 = vmatpush.bf16.msra.mxu0 %v1791
        %2671 = vmatpush.bf16.msra.mxu0 %v1783
        %2672 = vmatpush.bf16.msra.mxu0 %v1775
        %2673 = vmatpush.bf16.msra.mxu0 %v1767
        %2674 = vmatpush.bf16.msra.mxu0 %v1759
        %2675 = vmatpush.bf16.msra.mxu0 %v1751
        %2676 = vmatpush.bf16.msra.mxu0 %v1743
        %2677 = vmatpush.bf16.msra.mxu0 %v1735
        %2678 = vmatmul.bf16.gmra.mxu0 %v569
        %v2679 = vpop.f32.mrf.mxu0
        %v2680 = vadd.f32 %v2667, %v2679
        %v2681 = vpop.f32.mrf.mxu0
        %2682 = vdwg.mxu0
        %2683 = vmatpush.bf16.msra.mxu0 %v1855
        %2684 = vmatpush.bf16.msra.mxu0 %v1847
        %2685 = vmatpush.bf16.msra.mxu0 %v1839
        %2686 = vmatpush.bf16.msra.mxu0 %v1831
        %2687 = vmatpush.bf16.msra.mxu0 %v1823
        %2688 = vmatpush.bf16.msra.mxu0 %v1815
        %2689 = vmatpush.bf16.msra.mxu0 %v1807
        %2690 = vmatpush.bf16.msra.mxu0 %v1799
        %2691 = vmatmul.bf16.gmra.mxu0 %v570
        %v2692 = vpop.f32.mrf.mxu0
        %v2693 = vadd.f32 %v2680, %v2692
        %v2694 = vpop.f32.mrf.mxu0
        %2695 = vdwg.mxu0
        %v2704 = vrot.slane %v2303, 6
        %v2705 = vrot.slane %v2368, 4
        %v2706 = vrot.slane %v2433, 2
        %v2707 = vrot.slane %v2563, 6
        %v2708 = vrot.slane %v2628, 4
        %v2709 = vrot.slane %v2693, 2
        %vm2710 = vcmask 1041408
        %v2711 = vsel %vm2710, %v2238, %v2704
        %vm2712 = vcmask 1045508
        %v2713 = vsel %vm2712, %v2705, %v2706
        %vm2714 = vcmask 1043456
        %v2715 = vsel %vm2714, %v2711, %v2713
        %v2716 = vsel %vm2710, %v2498, %v2707
        %v2717 = vsel %vm2712, %v2708, %v2709
        %v2718 = vsel %vm2714, %v2716, %v2717
        %v2721 = vadd.f32 %v241, %v2715
        %v2722 = vadd.f32 %v242, %v2718
        %2723 = vst [vmem:[#allocation2] sm:$0xff] %v2721
        %2724 = vst [vmem:[#allocation2 + $0x8] sm:$0xff] %v2722
        %p2725 = scmp.eq.s32.totalorder %s17, 4
        // Predicated region
        $region45: #{initial_net_forward.9} parent=39 // pred_check
          %p2726 = pneg %p2725
        $region46: #{initial_net_forward.9} parent=39 // pred_check_branch
          %2728 = sbr.rel (%p2726) target = $region48
        $region47: #{initial_net_forward.9} parent=39 // pred_region
          %v2729 = vld [vmem:[#allocation2] sm:$0xff]
          %v2730 = vld [vmem:[#allocation2 + $0x8] sm:$0xff]
          %v2731 = vld [vmem:[%s2] sm:$0xff]
          %v2733 = vperm.slane %v2731, 0
          %v2734 = vperm.slane %v2731, 1
          %v2735 = vperm.slane %v2731, 2
          %v2736 = vperm.slane %v2731, 3
          %v2737 = vperm.slane %v2731, 4
          %v2738 = vperm.slane %v2731, 5
          %v2739 = vperm.slane %v2731, 6
          %v2740 = vperm.slane %v2731, 7
          %v2741 = vrot.slane %v2734, 6
          %v2742 = vrot.slane %v2735, 4
          %v2743 = vrot.slane %v2736, 2
          %v2744 = vrot.slane %v2738, 6
          %v2745 = vrot.slane %v2739, 4
          %v2746 = vrot.slane %v2740, 2
          %v2747 = vsel %vm2710, %v2733, %v2741
          %v2748 = vsel %vm2712, %v2742, %v2743
          %v2749 = vsel %vm2714, %v2747, %v2748
          %v2750 = vsel %vm2710, %v2737, %v2744
          %v2751 = vsel %vm2712, %v2745, %v2746
          %v2752 = vsel %vm2714, %v2750, %v2751
          %v2755 = vadd.f32 %v2729, %v2749
          %v2756 = vadd.f32 %v2730, %v2752
          %v2757 = vmax.f32 %v2755, 0.0
          %v2758 = vmax.f32 %v2756, 0.0
          %2761 = vst [vmem:[#allocation1] ss:$4 sm:$0xff] %v2757
          %s2762 = scalar_lea.vmem [#allocation1], 32
          %2763 = vst [vmem:[%s2762] ss:$4 sm:$0xff] %v2758
          %v2764 = vld.sshfl [vmem:[#allocation1] sm:$0xff pattern:$0x73625140]
          %v2765 = vld.sshfl [vmem:[#allocation1 + $0x8] sm:$0xff pattern:$0x73625140]
          %v2766 = vld.sshfl [vmem:[#allocation1 + $0x10] sm:$0xff pattern:$0x73625140]
          %v2767 = vld.sshfl [vmem:[#allocation1 + $0x18] sm:$0xff pattern:$0x73625140]
          %v2768 = vld.sshfl [vmem:[#allocation1 + $0x20] sm:$0xff pattern:$0x73625140]
          %v2769 = vld.sshfl [vmem:[#allocation1 + $0x28] sm:$0xff pattern:$0x73625140]
          %v2770 = vld.sshfl [vmem:[#allocation1 + $0x30] sm:$0xff pattern:$0x73625140]
          %v2771 = vld.sshfl [vmem:[#allocation1 + $0x38] sm:$0xff pattern:$0x73625140]
          %v2780 = vpack.c.bf16 %v2764, %v2764
          %v2781 = vpack.c.bf16 %v2765, %v2765
          %v2782 = vpack.c.bf16 %v2766, %v2766
          %v2783 = vpack.c.bf16 %v2767, %v2767
          %v2784 = vpack.c.bf16 %v2768, %v2768
          %v2785 = vpack.c.bf16 %v2769, %v2769
          %v2786 = vpack.c.bf16 %v2770, %v2770
          %v2787 = vpack.c.bf16 %v2771, %v2771
          %v2788 = vld [vmem:[%s3] sm:$0xf]
          %v2789 = vld [vmem:[%s3 + $0x4] sm:$0xf]
          %v2790 = vld [vmem:[%s3 + $0x8] sm:$0xf]
          %v2791 = vld [vmem:[%s3 + $0xc] sm:$0xf]
          %v2792 = vld [vmem:[%s3 + $0x10] sm:$0xf]
          %v2793 = vld [vmem:[%s3 + $0x14] sm:$0xf]
          %v2794 = vld [vmem:[%s3 + $0x18] sm:$0xf]
          %v2795 = vld [vmem:[%s3 + $0x1c] sm:$0xf]
          %v2796 = vld [vmem:[%s3 + $0x20] sm:$0xf]
          %v2797 = vld [vmem:[%s3 + $0x24] sm:$0xf]
          %v2798 = vld [vmem:[%s3 + $0x28] sm:$0xf]
          %v2799 = vld [vmem:[%s3 + $0x2c] sm:$0xf]
          %v2800 = vld [vmem:[%s3 + $0x30] sm:$0xf]
          %v2801 = vld [vmem:[%s3 + $0x34] sm:$0xf]
          %v2802 = vld [vmem:[%s3 + $0x38] sm:$0xf]
          %v2803 = vld [vmem:[%s3 + $0x3c] sm:$0xf]
          %v2804 = vld [vmem:[%s3 + $0x40] sm:$0xf]
          %v2805 = vld [vmem:[%s3 + $0x44] sm:$0xf]
          %v2806 = vld [vmem:[%s3 + $0x48] sm:$0xf]
          %v2807 = vld [vmem:[%s3 + $0x4c] sm:$0xf]
          %v2808 = vld [vmem:[%s3 + $0x50] sm:$0xf]
          %v2809 = vld [vmem:[%s3 + $0x54] sm:$0xf]
          %v2810 = vld [vmem:[%s3 + $0x58] sm:$0xf]
          %v2811 = vld [vmem:[%s3 + $0x5c] sm:$0xf]
          %v2812 = vld [vmem:[%s3 + $0x60] sm:$0xf]
          %v2813 = vld [vmem:[%s3 + $0x64] sm:$0xf]
          %v2814 = vld [vmem:[%s3 + $0x68] sm:$0xf]
          %v2815 = vld [vmem:[%s3 + $0x6c] sm:$0xf]
          %v2816 = vld [vmem:[%s3 + $0x70] sm:$0xf]
          %v2817 = vld [vmem:[%s3 + $0x74] sm:$0xf]
          %v2818 = vld [vmem:[%s3 + $0x78] sm:$0xf]
          %v2819 = vld [vmem:[%s3 + $0x7c] sm:$0xf]
          %v2820 = vld [vmem:[%s3 + $0x80] sm:$0xf]
          %v2821 = vld [vmem:[%s3 + $0x84] sm:$0xf]
          %v2822 = vld [vmem:[%s3 + $0x88] sm:$0xf]
          %v2823 = vld [vmem:[%s3 + $0x8c] sm:$0xf]
          %v2824 = vld [vmem:[%s3 + $0x90] sm:$0xf]
          %v2825 = vld [vmem:[%s3 + $0x94] sm:$0xf]
          %v2826 = vld [vmem:[%s3 + $0x98] sm:$0xf]
          %v2827 = vld [vmem:[%s3 + $0x9c] sm:$0xf]
          %v2828 = vld [vmem:[%s3 + $0xa0] sm:$0xf]
          %v2829 = vld [vmem:[%s3 + $0xa4] sm:$0xf]
          %v2830 = vld [vmem:[%s3 + $0xa8] sm:$0xf]
          %v2831 = vld [vmem:[%s3 + $0xac] sm:$0xf]
          %v2832 = vld [vmem:[%s3 + $0xb0] sm:$0xf]
          %v2833 = vld [vmem:[%s3 + $0xb4] sm:$0xf]
          %v2834 = vld [vmem:[%s3 + $0xb8] sm:$0xf]
          %v2835 = vld [vmem:[%s3 + $0xbc] sm:$0xf]
          %v2836 = vld [vmem:[%s3 + $0xc0] sm:$0xf]
          %v2837 = vld [vmem:[%s3 + $0xc4] sm:$0xf]
          %v2838 = vld [vmem:[%s3 + $0xc8] sm:$0xf]
          %v2839 = vld [vmem:[%s3 + $0xcc] sm:$0xf]
          %v2840 = vld [vmem:[%s3 + $0xd0] sm:$0xf]
          %v2841 = vld [vmem:[%s3 + $0xd4] sm:$0xf]
          %v2842 = vld [vmem:[%s3 + $0xd8] sm:$0xf]
          %v2843 = vld [vmem:[%s3 + $0xdc] sm:$0xf]
          %v2844 = vld [vmem:[%s3 + $0xe0] sm:$0xf]
          %v2845 = vld [vmem:[%s3 + $0xe4] sm:$0xf]
          %v2846 = vld [vmem:[%s3 + $0xe8] sm:$0xf]
          %v2847 = vld [vmem:[%s3 + $0xec] sm:$0xf]
          %v2848 = vld [vmem:[%s3 + $0xf0] sm:$0xf]
          %v2849 = vld [vmem:[%s3 + $0xf4] sm:$0xf]
          %v2850 = vld [vmem:[%s3 + $0xf8] sm:$0xf]
          %v2851 = vld [vmem:[%s3 + $0xfc] sm:$0xf]
          %v2852 = vld [vmem:[%s3 + $0x100] sm:$0xf]
          %v2853 = vld [vmem:[%s3 + $0x104] sm:$0xf]
          %v2854 = vld [vmem:[%s3 + $0x108] sm:$0xf]
          %v2855 = vld [vmem:[%s3 + $0x10c] sm:$0xf]
          %v2856 = vld [vmem:[%s3 + $0x110] sm:$0xf]
          %v2857 = vld [vmem:[%s3 + $0x114] sm:$0xf]
          %v2858 = vld [vmem:[%s3 + $0x118] sm:$0xf]
          %v2859 = vld [vmem:[%s3 + $0x11c] sm:$0xf]
          %v2860 = vld [vmem:[%s3 + $0x120] sm:$0xf]
          %v2861 = vld [vmem:[%s3 + $0x124] sm:$0xf]
          %v2862 = vld [vmem:[%s3 + $0x128] sm:$0xf]
          %v2863 = vld [vmem:[%s3 + $0x12c] sm:$0xf]
          %v2864 = vld [vmem:[%s3 + $0x130] sm:$0xf]
          %v2865 = vld [vmem:[%s3 + $0x134] sm:$0xf]
          %v2866 = vld [vmem:[%s3 + $0x138] sm:$0xf]
          %v2867 = vld [vmem:[%s3 + $0x13c] sm:$0xf]
          %v2868 = vld [vmem:[%s3 + $0x140] sm:$0xf]
          %v2869 = vld [vmem:[%s3 + $0x144] sm:$0xf]
          %v2870 = vld [vmem:[%s3 + $0x148] sm:$0xf]
          %v2871 = vld [vmem:[%s3 + $0x14c] sm:$0xf]
          %v2872 = vld [vmem:[%s3 + $0x150] sm:$0xf]
          %v2873 = vld [vmem:[%s3 + $0x154] sm:$0xf]
          %v2874 = vld [vmem:[%s3 + $0x158] sm:$0xf]
          %v2875 = vld [vmem:[%s3 + $0x15c] sm:$0xf]
          %v2876 = vld [vmem:[%s3 + $0x160] sm:$0xf]
          %v2877 = vld [vmem:[%s3 + $0x164] sm:$0xf]
          %v2878 = vld [vmem:[%s3 + $0x168] sm:$0xf]
          %v2879 = vld [vmem:[%s3 + $0x16c] sm:$0xf]
          %v2880 = vld [vmem:[%s3 + $0x170] sm:$0xf]
          %v2881 = vld [vmem:[%s3 + $0x174] sm:$0xf]
          %v2882 = vld [vmem:[%s3 + $0x178] sm:$0xf]
          %v2883 = vld [vmem:[%s3 + $0x17c] sm:$0xf]
          %v2884 = vld [vmem:[%s3 + $0x180] sm:$0xf]
          %v2885 = vld [vmem:[%s3 + $0x184] sm:$0xf]
          %v2886 = vld [vmem:[%s3 + $0x188] sm:$0xf]
          %v2887 = vld [vmem:[%s3 + $0x18c] sm:$0xf]
          %v2888 = vld [vmem:[%s3 + $0x190] sm:$0xf]
          %v2889 = vld [vmem:[%s3 + $0x194] sm:$0xf]
          %v2890 = vld [vmem:[%s3 + $0x198] sm:$0xf]
          %v2891 = vld [vmem:[%s3 + $0x19c] sm:$0xf]
          %v2892 = vld [vmem:[%s3 + $0x1a0] sm:$0xf]
          %v2893 = vld [vmem:[%s3 + $0x1a4] sm:$0xf]
          %v2894 = vld [vmem:[%s3 + $0x1a8] sm:$0xf]
          %v2895 = vld [vmem:[%s3 + $0x1ac] sm:$0xf]
          %v2896 = vld [vmem:[%s3 + $0x1b0] sm:$0xf]
          %v2897 = vld [vmem:[%s3 + $0x1b4] sm:$0xf]
          %v2898 = vld [vmem:[%s3 + $0x1b8] sm:$0xf]
          %v2899 = vld [vmem:[%s3 + $0x1bc] sm:$0xf]
          %v2900 = vld [vmem:[%s3 + $0x1c0] sm:$0xf]
          %v2901 = vld [vmem:[%s3 + $0x1c4] sm:$0xf]
          %v2902 = vld [vmem:[%s3 + $0x1c8] sm:$0xf]
          %v2903 = vld [vmem:[%s3 + $0x1cc] sm:$0xf]
          %v2904 = vld [vmem:[%s3 + $0x1d0] sm:$0xf]
          %v2905 = vld [vmem:[%s3 + $0x1d4] sm:$0xf]
          %v2906 = vld [vmem:[%s3 + $0x1d8] sm:$0xf]
          %v2907 = vld [vmem:[%s3 + $0x1dc] sm:$0xf]
          %v2908 = vld [vmem:[%s3 + $0x1e0] sm:$0xf]
          %v2909 = vld [vmem:[%s3 + $0x1e4] sm:$0xf]
          %v2910 = vld [vmem:[%s3 + $0x1e8] sm:$0xf]
          %v2911 = vld [vmem:[%s3 + $0x1ec] sm:$0xf]
          %v2912 = vld [vmem:[%s3 + $0x1f0] sm:$0xf]
          %v2913 = vld [vmem:[%s3 + $0x1f4] sm:$0xf]
          %v2914 = vld [vmem:[%s3 + $0x1f8] sm:$0xf]
          %v2915 = vld [vmem:[%s3 + $0x1fc] sm:$0xf]
          %v2916 = vld [vmem:[%s4] sm:$0x1]
          %v2918 = vperm.slane %v2916, 0
          %v3048 = vunpack.c.l.b16 %v2788
          %v3049 = vunpack.c.l.b16 %v2789
          %v3050 = vunpack.c.l.b16 %v2790
          %v3051 = vunpack.c.l.b16 %v2791
          %v3052 = vunpack.c.l.b16 %v2792
          %v3053 = vunpack.c.l.b16 %v2793
          %v3054 = vunpack.c.l.b16 %v2794
          %v3055 = vunpack.c.l.b16 %v2795
          %v3056 = vunpack.c.l.b16 %v2796
          %v3057 = vunpack.c.l.b16 %v2797
          %v3058 = vunpack.c.l.b16 %v2798
          %v3059 = vunpack.c.l.b16 %v2799
          %v3060 = vunpack.c.l.b16 %v2800
          %v3061 = vunpack.c.l.b16 %v2801
          %v3062 = vunpack.c.l.b16 %v2802
          %v3063 = vunpack.c.l.b16 %v2803
          %v3064 = vunpack.c.l.b16 %v2804
          %v3065 = vunpack.c.l.b16 %v2805
          %v3066 = vunpack.c.l.b16 %v2806
          %v3067 = vunpack.c.l.b16 %v2807
          %v3068 = vunpack.c.l.b16 %v2808
          %v3069 = vunpack.c.l.b16 %v2809
          %v3070 = vunpack.c.l.b16 %v2810
          %v3071 = vunpack.c.l.b16 %v2811
          %v3072 = vunpack.c.l.b16 %v2812
          %v3073 = vunpack.c.l.b16 %v2813
          %v3074 = vunpack.c.l.b16 %v2814
          %v3075 = vunpack.c.l.b16 %v2815
          %v3076 = vunpack.c.l.b16 %v2816
          %v3077 = vunpack.c.l.b16 %v2817
          %v3078 = vunpack.c.l.b16 %v2818
          %v3079 = vunpack.c.l.b16 %v2819
          %v3080 = vunpack.c.l.b16 %v2820
          %v3081 = vunpack.c.l.b16 %v2821
          %v3082 = vunpack.c.l.b16 %v2822
          %v3083 = vunpack.c.l.b16 %v2823
          %v3084 = vunpack.c.l.b16 %v2824
          %v3085 = vunpack.c.l.b16 %v2825
          %v3086 = vunpack.c.l.b16 %v2826
          %v3087 = vunpack.c.l.b16 %v2827
          %v3088 = vunpack.c.l.b16 %v2828
          %v3089 = vunpack.c.l.b16 %v2829
          %v3090 = vunpack.c.l.b16 %v2830
          %v3091 = vunpack.c.l.b16 %v2831
          %v3092 = vunpack.c.l.b16 %v2832
          %v3093 = vunpack.c.l.b16 %v2833
          %v3094 = vunpack.c.l.b16 %v2834
          %v3095 = vunpack.c.l.b16 %v2835
          %v3096 = vunpack.c.l.b16 %v2836
          %v3097 = vunpack.c.l.b16 %v2837
          %v3098 = vunpack.c.l.b16 %v2838
          %v3099 = vunpack.c.l.b16 %v2839
          %v3100 = vunpack.c.l.b16 %v2840
          %v3101 = vunpack.c.l.b16 %v2841
          %v3102 = vunpack.c.l.b16 %v2842
          %v3103 = vunpack.c.l.b16 %v2843
          %v3104 = vunpack.c.l.b16 %v2844
          %v3105 = vunpack.c.l.b16 %v2845
          %v3106 = vunpack.c.l.b16 %v2846
          %v3107 = vunpack.c.l.b16 %v2847
          %v3108 = vunpack.c.l.b16 %v2848
          %v3109 = vunpack.c.l.b16 %v2849
          %v3110 = vunpack.c.l.b16 %v2850
          %v3111 = vunpack.c.l.b16 %v2851
          %v3112 = vunpack.c.l.b16 %v2852
          %v3113 = vunpack.c.l.b16 %v2853
          %v3114 = vunpack.c.l.b16 %v2854
          %v3115 = vunpack.c.l.b16 %v2855
          %v3116 = vunpack.c.l.b16 %v2856
          %v3117 = vunpack.c.l.b16 %v2857
          %v3118 = vunpack.c.l.b16 %v2858
          %v3119 = vunpack.c.l.b16 %v2859
          %v3120 = vunpack.c.l.b16 %v2860
          %v3121 = vunpack.c.l.b16 %v2861
          %v3122 = vunpack.c.l.b16 %v2862
          %v3123 = vunpack.c.l.b16 %v2863
          %v3124 = vunpack.c.l.b16 %v2864
          %v3125 = vunpack.c.l.b16 %v2865
          %v3126 = vunpack.c.l.b16 %v2866
          %v3127 = vunpack.c.l.b16 %v2867
          %v3128 = vunpack.c.l.b16 %v2868
          %v3129 = vunpack.c.l.b16 %v2869
          %v3130 = vunpack.c.l.b16 %v2870
          %v3131 = vunpack.c.l.b16 %v2871
          %v3132 = vunpack.c.l.b16 %v2872
          %v3133 = vunpack.c.l.b16 %v2873
          %v3134 = vunpack.c.l.b16 %v2874
          %v3135 = vunpack.c.l.b16 %v2875
          %v3136 = vunpack.c.l.b16 %v2876
          %v3137 = vunpack.c.l.b16 %v2877
          %v3138 = vunpack.c.l.b16 %v2878
          %v3139 = vunpack.c.l.b16 %v2879
          %v3140 = vunpack.c.l.b16 %v2880
          %v3141 = vunpack.c.l.b16 %v2881
          %v3142 = vunpack.c.l.b16 %v2882
          %v3143 = vunpack.c.l.b16 %v2883
          %v3144 = vunpack.c.l.b16 %v2884
          %v3145 = vunpack.c.l.b16 %v2885
          %v3146 = vunpack.c.l.b16 %v2886
          %v3147 = vunpack.c.l.b16 %v2887
          %v3148 = vunpack.c.l.b16 %v2888
          %v3149 = vunpack.c.l.b16 %v2889
          %v3150 = vunpack.c.l.b16 %v2890
          %v3151 = vunpack.c.l.b16 %v2891
          %v3152 = vunpack.c.l.b16 %v2892
          %v3153 = vunpack.c.l.b16 %v2893
          %v3154 = vunpack.c.l.b16 %v2894
          %v3155 = vunpack.c.l.b16 %v2895
          %v3156 = vunpack.c.l.b16 %v2896
          %v3157 = vunpack.c.l.b16 %v2897
          %v3158 = vunpack.c.l.b16 %v2898
          %v3159 = vunpack.c.l.b16 %v2899
          %v3160 = vunpack.c.l.b16 %v2900
          %v3161 = vunpack.c.l.b16 %v2901
          %v3162 = vunpack.c.l.b16 %v2902
          %v3163 = vunpack.c.l.b16 %v2903
          %v3164 = vunpack.c.l.b16 %v2904
          %v3165 = vunpack.c.l.b16 %v2905
          %v3166 = vunpack.c.l.b16 %v2906
          %v3167 = vunpack.c.l.b16 %v2907
          %v3168 = vunpack.c.l.b16 %v2908
          %v3169 = vunpack.c.l.b16 %v2909
          %v3170 = vunpack.c.l.b16 %v2910
          %v3171 = vunpack.c.l.b16 %v2911
          %v3172 = vunpack.c.l.b16 %v2912
          %v3173 = vunpack.c.l.b16 %v2913
          %v3174 = vunpack.c.l.b16 %v2914
          %v3175 = vunpack.c.l.b16 %v2915
          %v3176 = vpack.c.b16 %v3049, %v3048
          %v3177 = vpack.c.b16 %v3051, %v3050
          %v3178 = vpack.c.b16 %v3053, %v3052
          %v3179 = vpack.c.b16 %v3055, %v3054
          %v3180 = vpack.c.b16 %v3057, %v3056
          %v3181 = vpack.c.b16 %v3059, %v3058
          %v3182 = vpack.c.b16 %v3061, %v3060
          %v3183 = vpack.c.b16 %v3063, %v3062
          %v3184 = vpack.c.b16 %v3065, %v3064
          %v3185 = vpack.c.b16 %v3067, %v3066
          %v3186 = vpack.c.b16 %v3069, %v3068
          %v3187 = vpack.c.b16 %v3071, %v3070
          %v3188 = vpack.c.b16 %v3073, %v3072
          %v3189 = vpack.c.b16 %v3075, %v3074
          %v3190 = vpack.c.b16 %v3077, %v3076
          %v3191 = vpack.c.b16 %v3079, %v3078
          %v3192 = vpack.c.b16 %v3081, %v3080
          %v3193 = vpack.c.b16 %v3083, %v3082
          %v3194 = vpack.c.b16 %v3085, %v3084
          %v3195 = vpack.c.b16 %v3087, %v3086
          %v3196 = vpack.c.b16 %v3089, %v3088
          %v3197 = vpack.c.b16 %v3091, %v3090
          %v3198 = vpack.c.b16 %v3093, %v3092
          %v3199 = vpack.c.b16 %v3095, %v3094
          %v3200 = vpack.c.b16 %v3097, %v3096
          %v3201 = vpack.c.b16 %v3099, %v3098
          %v3202 = vpack.c.b16 %v3101, %v3100
          %v3203 = vpack.c.b16 %v3103, %v3102
          %v3204 = vpack.c.b16 %v3105, %v3104
          %v3205 = vpack.c.b16 %v3107, %v3106
          %v3206 = vpack.c.b16 %v3109, %v3108
          %v3207 = vpack.c.b16 %v3111, %v3110
          %v3208 = vpack.c.b16 %v3113, %v3112
          %v3209 = vpack.c.b16 %v3115, %v3114
          %v3210 = vpack.c.b16 %v3117, %v3116
          %v3211 = vpack.c.b16 %v3119, %v3118
          %v3212 = vpack.c.b16 %v3121, %v3120
          %v3213 = vpack.c.b16 %v3123, %v3122
          %v3214 = vpack.c.b16 %v3125, %v3124
          %v3215 = vpack.c.b16 %v3127, %v3126
          %v3216 = vpack.c.b16 %v3129, %v3128
          %v3217 = vpack.c.b16 %v3131, %v3130
          %v3218 = vpack.c.b16 %v3133, %v3132
          %v3219 = vpack.c.b16 %v3135, %v3134
          %v3220 = vpack.c.b16 %v3137, %v3136
          %v3221 = vpack.c.b16 %v3139, %v3138
          %v3222 = vpack.c.b16 %v3141, %v3140
          %v3223 = vpack.c.b16 %v3143, %v3142
          %v3224 = vpack.c.b16 %v3145, %v3144
          %v3225 = vpack.c.b16 %v3147, %v3146
          %v3226 = vpack.c.b16 %v3149, %v3148
          %v3227 = vpack.c.b16 %v3151, %v3150
          %v3228 = vpack.c.b16 %v3153, %v3152
          %v3229 = vpack.c.b16 %v3155, %v3154
          %v3230 = vpack.c.b16 %v3157, %v3156
          %v3231 = vpack.c.b16 %v3159, %v3158
          %v3232 = vpack.c.b16 %v3161, %v3160
          %v3233 = vpack.c.b16 %v3163, %v3162
          %v3234 = vpack.c.b16 %v3165, %v3164
          %v3235 = vpack.c.b16 %v3167, %v3166
          %v3236 = vpack.c.b16 %v3169, %v3168
          %v3237 = vpack.c.b16 %v3171, %v3170
          %v3238 = vpack.c.b16 %v3173, %v3172
          %v3239 = vpack.c.b16 %v3175, %v3174
          %3304 = vmatpush.bf16.msra.mxu0 %v3183
          %3305 = vmatpush.bf16.msra.mxu0 %v3182
          %3306 = vmatpush.bf16.msra.mxu0 %v3181
          %3307 = vmatpush.bf16.msra.mxu0 %v3180
          %3308 = vmatpush.bf16.msra.mxu0 %v3179
          %3309 = vmatpush.bf16.msra.mxu0 %v3178
          %3310 = vmatpush.bf16.msra.mxu0 %v3177
          %3311 = vmatpush.bf16.msra.mxu0 %v3176
          %3312 = vmatmul.bf16.gmra.mxu0 %v2780
          %v3313 = vpop.f32.mrf.mxu0
          %v3314 = vadd.f32 %v2918, %v3313
          %v3315 = vpop.f32.mrf.mxu0
          %3316 = vdwg.mxu0
          %3317 = vmatpush.bf16.msra.mxu0 %v3191
          %3318 = vmatpush.bf16.msra.mxu0 %v3190
          %3319 = vmatpush.bf16.msra.mxu0 %v3189
          %3320 = vmatpush.bf16.msra.mxu0 %v3188
          %3321 = vmatpush.bf16.msra.mxu0 %v3187
          %3322 = vmatpush.bf16.msra.mxu0 %v3186
          %3323 = vmatpush.bf16.msra.mxu0 %v3185
          %3324 = vmatpush.bf16.msra.mxu0 %v3184
          %3325 = vmatmul.bf16.gmra.mxu0 %v2781
          %v3326 = vpop.f32.mrf.mxu0
          %v3327 = vadd.f32 %v3314, %v3326
          %v3328 = vpop.f32.mrf.mxu0
          %3329 = vdwg.mxu0
          %3330 = vmatpush.bf16.msra.mxu0 %v3199
          %3331 = vmatpush.bf16.msra.mxu0 %v3198
          %3332 = vmatpush.bf16.msra.mxu0 %v3197
          %3333 = vmatpush.bf16.msra.mxu0 %v3196
          %3334 = vmatpush.bf16.msra.mxu0 %v3195
          %3335 = vmatpush.bf16.msra.mxu0 %v3194
          %3336 = vmatpush.bf16.msra.mxu0 %v3193
          %3337 = vmatpush.bf16.msra.mxu0 %v3192
          %3338 = vmatmul.bf16.gmra.mxu0 %v2782
          %v3339 = vpop.f32.mrf.mxu0
          %v3340 = vadd.f32 %v3327, %v3339
          %v3341 = vpop.f32.mrf.mxu0
          %3342 = vdwg.mxu0
          %3343 = vmatpush.bf16.msra.mxu0 %v3207
          %3344 = vmatpush.bf16.msra.mxu0 %v3206
          %3345 = vmatpush.bf16.msra.mxu0 %v3205
          %3346 = vmatpush.bf16.msra.mxu0 %v3204
          %3347 = vmatpush.bf16.msra.mxu0 %v3203
          %3348 = vmatpush.bf16.msra.mxu0 %v3202
          %3349 = vmatpush.bf16.msra.mxu0 %v3201
          %3350 = vmatpush.bf16.msra.mxu0 %v3200
          %3351 = vmatmul.bf16.gmra.mxu0 %v2783
          %v3352 = vpop.f32.mrf.mxu0
          %v3353 = vadd.f32 %v3340, %v3352
          %v3354 = vpop.f32.mrf.mxu0
          %3355 = vdwg.mxu0
          %3356 = vmatpush.bf16.msra.mxu0 %v3215
          %3357 = vmatpush.bf16.msra.mxu0 %v3214
          %3358 = vmatpush.bf16.msra.mxu0 %v3213
          %3359 = vmatpush.bf16.msra.mxu0 %v3212
          %3360 = vmatpush.bf16.msra.mxu0 %v3211
          %3361 = vmatpush.bf16.msra.mxu0 %v3210
          %3362 = vmatpush.bf16.msra.mxu0 %v3209
          %3363 = vmatpush.bf16.msra.mxu0 %v3208
          %3364 = vmatmul.bf16.gmra.mxu0 %v2784
          %v3365 = vpop.f32.mrf.mxu0
          %v3366 = vadd.f32 %v3353, %v3365
          %v3367 = vpop.f32.mrf.mxu0
          %3368 = vdwg.mxu0
          %3369 = vmatpush.bf16.msra.mxu0 %v3223
          %3370 = vmatpush.bf16.msra.mxu0 %v3222
          %3371 = vmatpush.bf16.msra.mxu0 %v3221
          %3372 = vmatpush.bf16.msra.mxu0 %v3220
          %3373 = vmatpush.bf16.msra.mxu0 %v3219
          %3374 = vmatpush.bf16.msra.mxu0 %v3218
          %3375 = vmatpush.bf16.msra.mxu0 %v3217
          %3376 = vmatpush.bf16.msra.mxu0 %v3216
          %3377 = vmatmul.bf16.gmra.mxu0 %v2785
          %v3378 = vpop.f32.mrf.mxu0
          %v3379 = vadd.f32 %v3366, %v3378
          %v3380 = vpop.f32.mrf.mxu0
          %3381 = vdwg.mxu0
          %3382 = vmatpush.bf16.msra.mxu0 %v3231
          %3383 = vmatpush.bf16.msra.mxu0 %v3230
          %3384 = vmatpush.bf16.msra.mxu0 %v3229
          %3385 = vmatpush.bf16.msra.mxu0 %v3228
          %3386 = vmatpush.bf16.msra.mxu0 %v3227
          %3387 = vmatpush.bf16.msra.mxu0 %v3226
          %3388 = vmatpush.bf16.msra.mxu0 %v3225
          %3389 = vmatpush.bf16.msra.mxu0 %v3224
          %3390 = vmatmul.bf16.gmra.mxu0 %v2786
          %v3391 = vpop.f32.mrf.mxu0
          %v3392 = vadd.f32 %v3379, %v3391
          %v3393 = vpop.f32.mrf.mxu0
          %3394 = vdwg.mxu0
          %3395 = vmatpush.bf16.msra.mxu0 %v3239
          %3396 = vmatpush.bf16.msra.mxu0 %v3238
          %3397 = vmatpush.bf16.msra.mxu0 %v3237
          %3398 = vmatpush.bf16.msra.mxu0 %v3236
          %3399 = vmatpush.bf16.msra.mxu0 %v3235
          %3400 = vmatpush.bf16.msra.mxu0 %v3234
          %3401 = vmatpush.bf16.msra.mxu0 %v3233
          %3402 = vmatpush.bf16.msra.mxu0 %v3232
          %3403 = vmatmul.bf16.gmra.mxu0 %v2787
          %v3404 = vpop.f32.mrf.mxu0
          %v3405 = vadd.f32 %v3392, %v3404
          %v3406 = vpop.f32.mrf.mxu0
          %3407 = vdwg.mxu0
          %vm3408 = vcmask 9216
          %3409 = vst.msk [vmem:[#allocation3] sm:$0x3] %vm3408, %v3405
        $region48: #{initial_net_forward.9} parent=39 // pred_fallthru
          _
        // Predicated region
        $region49: #{initial_net_forward.9} parent=39 // pred_check
          %p3410 = pneg %p145
        $region50: #{initial_net_forward.9} parent=39 // pred_check_branch
          %3412 = sbr.rel (%p3410) target = $region52
        $region51: #{initial_net_forward.9} parent=39 // pred_region
          %3414 = vsyncadd [#allocation4], 0
          %s3416 = sshll.u32 [#allocation3], 4
          %s3417 = int_to_ptr.vmem [resolvable:$true] %s3416
          %s3418 = sshll.u32 %s5, 4
          %s3419 = int_to_ptr.hbm [resolvable:$true] %s3418
          %3421 = dma.vmem_to_hbm [thread:$0]  %s3417, 32, %s3419, [#allocation4]
        $region52: #{initial_net_forward.9} parent=39 // pred_fallthru
          _
        // Predicated region
        $region53: #{initial_net_forward.9} parent=39 // pred_check
          %p3422 = pneg %p145
        $region54: #{initial_net_forward.9} parent=39 // pred_check_branch
          %3424 = sbr.rel (%p3422) target = $region56
        $region55: #{initial_net_forward.9} parent=39 // pred_region
          %3426 = dma.done [#allocation4], 32
        $region56: #{initial_net_forward.9} parent=39 // pred_fallthru
          _
      $region40: #{initial_net_forward.9} parent=5 // pred_fallthru
        _
      %p3427 = scmp.le.s32.totalorder 2, %s12
      // Predicated region
      $region57: #{initial_net_forward.9} parent=5 // pred_check
        %p3428 = pneg %p3427
      $region58: #{initial_net_forward.9} parent=5 // pred_check_branch
        %3430 = sbr.rel (%p3428) target = $region60
      $region59: #{initial_net_forward.9} parent=5 // pred_region
        %s3431 = ssub.s32 %s12, 2
      $region60: #{initial_net_forward.9} parent=5 // pred_fallthru
        _
    $region6: #{initial_net_forward.9} parent=1 // loop_footer
      %s16 = sadd.s32 1, %s12
    $region7: #{initial_net_forward.9} parent=1 // loop_footer_branch
      %11 = sbr.rel target = $region3
    $region8: #{initial_net_forward.9} parent=1 // loop_exit
      _
    %3432 = vsyncpa [#allocation4], 1
    %s3433 = scalar_lea.sflag [#allocation4], 1
    %3434 = vsyncpa %s3433, 1

</llo_original>
